<compile_context>
chip_gen: v6e
topology: v6e:2x2x1
jax: 0.10.0
libtpu: 0.0.40
codegen_flags: <defaults>
</compile_context>

<pallas_src>
import functools

import jax
import jax.numpy as jnp
from jax.experimental import pallas as pl
from jax.experimental.pallas import tpu as pltpu

_EPS = 1e-5  # PyTorch BatchNorm2d default


def _vmem_capacity_bytes():
    try:
        return int(pltpu.get_tpu_info().vmem_capacity_bytes)
    except Exception:
        return 64 * 1024 * 1024  # conservative (v7x has 64 MiB / TensorCore)


_VMEM_CAP = _vmem_capacity_bytes()
_VMEM_LIMIT = _VMEM_CAP * 3 // 4
# activation budget used for strip sizing: ~21 MiB on v7x, ~42 MiB on v5e/v6e
_STRIP_BUDGET = max(_VMEM_CAP // 3, 12 * 1024 * 1024)
_BLOCK_BUDGET = 4 * 1024 * 1024          # row-group budget for pool / up-conv blocks


# ----------------------------------------------------------------------------
# Feature probe: single-buffered constant blocks (pl.Buffered(1))
# ----------------------------------------------------------------------------
def _probe_buffered1():
    try:
        def k(x_ref, o_ref):
            o_ref[...] = x_ref[...] + 1.0

        out = pl.pallas_call(
            k,
            out_shape=jax.ShapeDtypeStruct((8, 128), jnp.float32),
            grid_spec=pltpu.PrefetchScalarGridSpec(
                num_scalar_prefetch=0,
                grid=(1,),
                in_specs=[pl.BlockSpec((8, 128), lambda i: (0, 0),
                                       pipeline_mode=pl.Buffered(1))],
                out_specs=pl.BlockSpec((8, 128), lambda i: (0, 0))),
        )(jnp.zeros((8, 128), jnp.float32))
        jax.block_until_ready(out)
        return True
    except Exception:
        return False


_HAS_BUFFERED1 = _probe_buffered1()


def _const_spec(shape, index_map):
    """BlockSpec for grid-constant operands (weights / shifts): single-buffered."""
    if _HAS_BUFFERED1:
        return pl.BlockSpec(shape, index_map, pipeline_mode=pl.Buffered(1))
    return pl.BlockSpec(shape, index_map)


def _divisors(n):
    return [d for d in range(1, n + 1) if n % d == 0]


# ----------------------------------------------------------------------------
# Fused double-conv (Conv3x3 + BN(eval) + ReLU, twice) Pallas kernel
# ----------------------------------------------------------------------------
def _dc_kernel(*refs, n_in, n_strips, R, W):
    """Ref layout: x_main_0..x_main_{n-1}, [top_0, bot_0, top_1, bot_1 (if strips)],
    w1_0..w1_{n-1}, shift1, w2, shift2, out, pad1_0..pad1_{n-1}, pad2.

    The strip's (R rows) output is computed from R+4 input rows staged into a
    zero-padded flat VMEM scratch; conv1 produces R+2 intermediate rows (its own
    +/-1-row halo for conv2) that never leave VMEM.
    """
    L1 = (R + 2) * W                 # conv1 output extent (rows sR-1 .. sR+R)
    L2 = R * W                       # conv2 / block output extent
    LP1 = (R + 4) * W + 2            # padded input scratch length
    LP2 = (R + 2) * W + 2            # padded intermediate scratch length

    idx = 0
    x_main = refs[idx:idx + n_in]; idx += n_in
    if n_strips > 1:
        halo = refs[idx:idx + 2 * n_in]; idx += 2 * n_in
    else:
        halo = None
    w1_refs = refs[idx:idx + n_in]; idx += n_in
    s1_ref = refs[idx]; idx += 1
    w2_ref = refs[idx]; idx += 1
    s2_ref = refs[idx]; idx += 1
    o_ref = refs[idx]; idx += 1
    pad1 = refs[idx:idx + n_in]; idx += n_in
    pad2 = refs[idx]

    cmid = w2_ref.shape[2]
    s = pl.program_id(1)

    # left/right column-validity masks, (L1, 1) f32, shared by both convs
    if W > 1:
        wpos = jax.lax.broadcasted_iota(jnp.int32, (L1, 1), 0) % W
        ml = (wpos > 0).astype(jnp.float32)          # dx = -1 valid when w > 0
        mr = (wpos < W - 1).astype(jnp.float32)      # dx = +1 valid when w < W-1

    # ---- stage (strip + 2-row halo) input into the padded scratch ------------
    for i in range(n_in):
        ci = pad1[i].shape[-1]
        dt = pad1[i].dtype
        pad1[i][1 + 2 * W:1 + 2 * W + L2, :] = x_main[i][0]
        if n_strips > 1:
            pad1[i][0:1, :] = jnp.zeros((1, ci), dt)
            pad1[i][LP1 - 1:LP1, :] = jnp.zeros((1, ci), dt)
            pad1[i][1:1 + 2 * W, :] = halo[2 * i][0]
            pad1[i][1 + 2 * W + L2:LP1 - 1, :] = halo[2 * i + 1][0]

            @pl.when(s == 0)
            def _(i=i, ci=ci, dt=dt):
                pad1[i][1:1 + 2 * W, :] = jnp.zeros((2 * W, ci), dt)

            @pl.when(s == n_strips - 1)
            def _(i=i, ci=ci, dt=dt):
                pad1[i][1 + 2 * W + L2:LP1 - 1, :] = jnp.zeros((2 * W, ci), dt)
        else:
            pad1[i][0:1 + 2 * W, :] = jnp.zeros((1 + 2 * W, ci), dt)
            pad1[i][1 + 2 * W + L2:LP1, :] = jnp.zeros((2 * W + 1, ci), dt)

    # ---- 3x3 conv as shifted-window matmuls, 3 accumulators (c / left / right)
    def conv(pads_and_weights, L):
        acc_c = acc_l = acc_r = None
        for pad_ref, w_ref in pads_and_weights:
            for dy in range(3):
                for dx in range(3):
                    if W == 1 and dx != 1:
                        continue   # side columns never valid for 1-wide images
                    start = (W + 1) + (dy - 1) * W + (dx - 1)
                    win = pad_ref[start:start + L, :]          # (L, Ci) bf16
                    part = jnp.dot(win, w_ref[dy, dx],
                                   preferred_element_type=jnp.float32)
                    if dx == 0:
                        acc_l = part if acc_l is None else acc_l + part
                    elif dx == 2:
                        acc_r = part if acc_r is None else acc_r + part
                    else:
                        acc_c = part if acc_c is None else acc_c + part
        if W > 1:
            return acc_c + ml[:L] * acc_l + mr[:L] * acc_r
        return acc_c

    # ---- conv1 (BN scale folded into weights) + ReLU --------------------------
    acc1 = conv([(pad1[i], w1_refs[i]) for i in range(n_in)], L1)
    y1 = jnp.maximum(acc1 + s1_ref[...], 0.0).astype(jnp.bfloat16)

    # ---- stage conv1 output (incl. +/-1-row halo) for conv2 -------------------
    pad2[0:1, :] = jnp.zeros((1, cmid), pad2.dtype)
    pad2[LP2 - 1:LP2, :] = jnp.zeros((1, cmid), pad2.dtype)
    pad2[1:1 + L1, :] = y1
    if n_strips > 1:
        @pl.when(s == 0)
        def _():
            pad2[1:1 + W, :] = jnp.zeros((W, cmid), pad2.dtype)

        @pl.when(s == n_strips - 1)
        def _():
            pad2[1 + W + L2:1 + L1, :] = jnp.zeros((W, cmid), pad2.dtype)
    else:
        pad2[1:1 + W, :] = jnp.zeros((W, cmid), pad2.dtype)
        pad2[1 + W + L2:1 + L1, :] = jnp.zeros((W, cmid), pad2.dtype)

    # ---- conv2 + ReLU (Dropout = identity in eval mode) -----------------------
    acc2 = conv([(pad2, w2_ref)], L2)
    y2 = jnp.maximum(acc2 + s2_ref[...], 0.0)
    o_ref[0] = y2.astype(o_ref.dtype)


def _fold_bn(w, b, gamma, beta, mean, var):
    """Fold conv bias + eval-mode BatchNorm into (bf16 weight, f32 shift)."""
    inv = jax.lax.rsqrt(var + _EPS)
    scale = gamma * inv
    shift = (beta - mean * scale + b * scale).astype(jnp.float32)
    w_eff = (w * scale).astype(jnp.bfloat16)          # (3,3,Cin,Cout) * (Cout,)
    return w_eff, shift


def _dc_footprint(R, W, cins, cmid, cout):
    bf, f32 = 2, 4
    L1, L2 = (R + 2) * W, R * W
    b = 2 * sum(cins) * L2 * bf                      # double-buffered input strips
    b += 2 * cout * L2 * bf                          # double-buffered output strips
    b += sum(cins) * ((R + 4) * W + 2) * bf          # padded input scratch
    b += cmid * ((R + 2) * W + 2) * bf               # padded intermediate scratch
    b += 3 * L1 * cmid * f32                         # conv accumulators (c/l/r)
    b += L1 * cmid * bf                              # intermediate activation
    b += 9 * (sum(cins) * cmid + cmid * cout) * bf   # weights (single-buffered)
    return b


def _pick_strip_rows(H, W, cins, cmid, cout):
    """Largest strip height (divisor of H) whose per-step footprint fits budget."""
    if _dc_footprint(H, W, cins, cmid, cout) <= _STRIP_BUDGET:
        return H
    cands = [r for r in _divisors(H)
             if r < H and r % 2 == 0 and (r * W) % 8 == 0 and (2 * W) % 8 == 0]
    if not cands:
        return H
    fit = [r for r in cands if _dc_footprint(r, W, cins, cmid, cout) <= _STRIP_BUDGET]
    return max(fit) if fit else min(cands)


def double_conv_drop(xs, H, W, p, force_rows=None):
    """PyTorch double_conv_drop (eval mode) as one fused Pallas call.

    xs: list of (N, H*W, Ci) bf16 activations (2 entries = implicit channel concat
    in order [xs[0], xs[1]], matching torch.cat((up, skip), dim=1)).
    """
    N = xs[0].shape[0]
    HW = H * W
    cins = [int(x.shape[-1]) for x in xs]

    w1, s1 = _fold_bn(p["w1"], p["b1"], p["g1"], p["be1"], p["m1"], p["v1"])
    w2, s2 = _fold_bn(p["w2"], p["b2"], p["g2"], p["be2"], p["m2"], p["v2"])
    cmid, cout = w1.shape[-1], w2.shape[-1]

    if len(xs) == 1:
        w1s = [w1]
    else:  # concat-free skip connection: K-split the first conv's weight
        w1s = [w1[:, :, :cins[0], :], w1[:, :, cins[0]:, :]]
    n_in = len(xs)

    R = _pick_strip_rows(H, W, cins, cmid, cout) if force_rows is None else force_rows
    n_strips = H // R

    kern = functools.partial(_dc_kernel, n_in=n_in, n_strips=n_strips, R=R, W=W)

    in_specs = [pl.BlockSpec((1, R * W, c), lambda n, s: (n, s, 0)) for c in cins]
    args = list(xs)
    if n_strips > 1:
        Rb = R // 2

        def top_map(n, s):
            return (n, jnp.maximum(s * Rb - 1, 0), 0)

        def bot_map(n, s):
            return (n, jnp.minimum((s + 1) * Rb, H // 2 - 1), 0)

        for x, c in zip(xs, cins):
            in_specs += [pl.BlockSpec((1, 2 * W, c), top_map),
                         pl.BlockSpec((1, 2 * W, c), bot_map)]
            args += [x, x]
    in_specs += [_const_spec(wi.shape, lambda n, s: (0, 0, 0, 0)) for wi in w1s]
    in_specs += [_const_spec((1, cmid), lambda n, s: (0, 0)),
                 _const_spec(w2.shape, lambda n, s: (0, 0, 0, 0)),
                 _const_spec((1, cout), lambda n, s: (0, 0))]
    args += w1s + [s1.reshape(1, cmid), w2, s2.reshape(1, cout)]

    scratch = ([pltpu.VMEM(((R + 4) * W + 2, c), jnp.bfloat16) for c in cins]
               + [pltpu.VMEM(((R + 2) * W + 2, cmid), jnp.bfloat16)])

    return pl.pallas_call(
        kern,
        out_shape=jax.ShapeDtypeStruct((N, HW, cout), jnp.bfloat16),
        grid_spec=pltpu.PrefetchScalarGridSpec(
            num_scalar_prefetch=0,
            grid=(N, n_strips),
            in_specs=in_specs,
            out_specs=pl.BlockSpec((1, R * W, cout), lambda n, s: (n, s, 0)),
            scratch_shapes=scratch),
        compiler_params=pltpu.CompilerParams(
            dimension_semantics=("parallel", "parallel"),
            vmem_limit_bytes=_VMEM_LIMIT),
    )(*args)


# ----------------------------------------------------------------------------
# MaxPool2d(2): one grid step per (image, row-group); lane-slice w-pair max
# ----------------------------------------------------------------------------
def _pool_kernel(x_ref, o_ref, *, C):
    v = x_ref[0]                                        # (hg, 2, Wo, 2C)
    m = jnp.maximum(v[:, 0], v[:, 1])                   # h-pair max
    o_ref[0] = jnp.maximum(m[..., :C], m[..., C:])      # w-pair max via lane slice


def max_pool_2x2(x, H, W):
    """x: (N, H*W, C) -> (N, (H//2)*(W//2), C)."""
    N, HW, C = x.shape
    assert H % 2 == 0 and W % 2 == 0, "MaxPool2d(2) expects even H/W"
    Ho, Wo = H // 2, W // 2
    row_bytes = (2 * Wo * 2 * C + Wo * C) * 2 * 2       # in + out blocks, 2x buffered
    fit = [r for r in _divisors(Ho) if r * row_bytes <= _BLOCK_BUDGET]
    hg = max(fit) if fit else 1
    xr = x.reshape(N, Ho, 2, Wo, 2 * C)                 # free re-view of NHWC layout
    out = pl.pallas_call(
        functools.partial(_pool_kernel, C=C),
        out_shape=jax.ShapeDtypeStruct((N, Ho, Wo, C), x.dtype),
        grid_spec=pltpu.PrefetchScalarGridSpec(
            num_scalar_prefetch=0,
            grid=(N, Ho // hg),
            in_specs=[pl.BlockSpec((1, hg, 2, Wo, 2 * C),
                                   lambda n, t: (n, t, 0, 0, 0))],
            out_specs=pl.BlockSpec((1, hg, Wo, C), lambda n, t: (n, t, 0, 0))),
        compiler_params=pltpu.CompilerParams(
            dimension_semantics=("parallel", "parallel"),
            vmem_limit_bytes=_VMEM_LIMIT),
    )(xr)
    return out.reshape(N, Ho * Wo, C)


# ----------------------------------------------------------------------------
# ConvTranspose2d(k=2, s=2): bf16 matmul + bias with pixel shuffle fused into the
# output store (no XLA transpose / HBM round trip)
# ----------------------------------------------------------------------------
def _upconv_kernel(x_ref, w_ref, b_ref, o_ref, *, rows, W, cout):
    y = jnp.dot(x_ref[0], w_ref[...], preferred_element_type=jnp.float32)
    y = (y + b_ref[...]).astype(o_ref.dtype)            # (rows*W, 4*cout), order (i,j,c)
    for r in range(rows):
        row = y[r * W:(r + 1) * W, :]                    # (W, 4*cout)
        o_ref[0, r, 0] = row[:, :2 * cout]               # output row 2h   : (w, j, c)
        o_ref[0, r, 1] = row[:, 2 * cout:]               # output row 2h+1 : (w, j, c)


def conv_transpose_2x2(x, H, W, w, b):
    """x: (N, H*W, Cin) -> (N, (2H)*(2W), Cout).   w: (Cin, 2, 2, Cout)."""
    N, HW, Cin = x.shape
    Cout = w.shape[-1]
    w_mat = w.reshape(Cin, 4 * Cout).astype(jnp.bfloat16)
    bias = jnp.tile(b, 4).reshape(1, 4 * Cout).astype(jnp.float32)

    row_bytes = W * (Cin + 8 * Cout) * 2 * 2
    cands = [r for r in _divisors(H)
             if r <= 32 and ((r * W) % 8 == 0 or r * W == HW)]
    if not cands:
        cands = [H]
    fit = [r for r in cands if r * row_bytes <= _BLOCK_BUDGET]
    rows = max(fit) if fit else min(cands)

    out = pl.pallas_call(
        functools.partial(_upconv_kernel, rows=rows, W=W, cout=Cout),
        out_shape=jax.ShapeDtypeStruct((N, H, 2, W, 2 * Cout), jnp.bfloat16),
        grid_spec=pltpu.PrefetchScalarGridSpec(
            num_scalar_prefetch=0,
            grid=(N, H // rows),
            in_specs=[pl.BlockSpec((1, rows * W, Cin), lambda n, t: (n, t, 0)),
                      _const_spec((Cin, 4 * Cout), lambda n, t: (0, 0)),
                      _const_spec((1, 4 * Cout), lambda n, t: (0, 0))],
            out_specs=pl.BlockSpec((1, rows, 2, W, 2 * Cout),
                                   lambda n, t: (n, t, 0, 0, 0))),
        compiler_params=pltpu.CompilerParams(
            dimension_semantics=("parallel", "parallel"),
            vmem_limit_bytes=_VMEM_LIMIT),
    )(x.astype(jnp.bfloat16), w_mat, bias)
    # (N, H, 2, W, 2*Cout) already has the NHWC-flat order of the 2x upsampled map
    return out.reshape(N, (2 * H) * (2 * W), Cout)


# ----------------------------------------------------------------------------
# Parameters (deterministic init, PyTorch-style uniform(-1/sqrt(fan_in), ...))
# ----------------------------------------------------------------------------
def _uniform(key, shape, fan_in):
    bound = 1.0 / jnp.sqrt(jnp.float32(fan_in))
    return jax.random.uniform(key, shape, jnp.float32, -bound, bound)


def init_double_conv(key, cin, cout):
    k = jax.random.split(key, 4)
    return {
        "w1": _uniform(k[0], (3, 3, cin, cout), cin * 9),
        "b1": _uniform(k[1], (cout,), cin * 9),
        "g1": jnp.ones((cout,), jnp.float32),
        "be1": jnp.zeros((cout,), jnp.float32),
        "m1": jnp.zeros((cout,), jnp.float32),
        "v1": jnp.ones((cout,), jnp.float32),
        "w2": _uniform(k[2], (3, 3, cout, cout), cout * 9),
        "b2": _uniform(k[3], (cout,), cout * 9),
        "g2": jnp.ones((cout,), jnp.float32),
        "be2": jnp.zeros((cout,), jnp.float32),
        "m2": jnp.zeros((cout,), jnp.float32),
        "v2": jnp.ones((cout,), jnp.float32),
    }


def init_params(key, num_classes):
    ks = jax.random.split(key, 16)
    p = {}
    p["down1"] = init_double_conv(ks[0], 3, 32)
    p["down2"] = init_double_conv(ks[1], 32, 64)
    p["down3"] = init_double_conv(ks[2], 64, 128)
    p["down4"] = init_double_conv(ks[3], 128, 256)
    p["fc"] = init_double_conv(ks[4], 256, 512)
    p["up1_w"] = _uniform(ks[5], (512, 2, 2, 256), 256 * 4)
    p["up1_b"] = _uniform(ks[6], (256,), 256 * 4)
    p["upc1"] = init_double_conv(ks[7], 512, 256)
    p["up2_w"] = _uniform(ks[8], (256, 2, 2, 128), 128 * 4)
    p["up2_b"] = _uniform(ks[9], (128,), 128 * 4)
    p["upc2"] = init_double_conv(ks[10], 256, 128)
    p["up3_w"] = _uniform(ks[11], (128, 2, 2, 64), 64 * 4)
    p["up3_b"] = _uniform(ks[12], (64,), 64 * 4)
    p["upc3"] = init_double_conv(ks[13], 128, 64)
    p["up4_w"] = _uniform(ks[14], (64, 2, 2, 32), 32 * 4)
    p["up4_b"] = _uniform(ks[15], (32,), 32 * 4)
    kk = jax.random.split(jax.random.fold_in(key, 123), 3)
    p["upc4"] = init_double_conv(kk[0], 64, 32)
    p["out_w"] = _uniform(kk[1], (32, num_classes), 32)
    p["out_b"] = _uniform(kk[2], (num_classes,), 32)
    return p


# ----------------------------------------------------------------------------
# UNet forward
# ----------------------------------------------------------------------------
def unet_forward(params, x_nchw):
    N, _, H, W = x_nchw.shape
    x = jnp.transpose(x_nchw, (0, 2, 3, 1)).astype(jnp.bfloat16)     # NHWC
    # pad input channels 3 -> 8 (MXU-friendly K); first-layer weight padded to match
    x = jnp.pad(x, ((0, 0), (0, 0), (0, 0), (0, 5))).reshape(N, H * W, 8)
    p1 = {**params["down1"],
          "w1": jnp.pad(params["down1"]["w1"], ((0, 0), (0, 0), (0, 5), (0, 0)))}

    x1 = double_conv_drop([x], H, W, p1)                              # (N, HW, 32)
    x = max_pool_2x2(x1, H, W)
    H2, W2 = H // 2, W // 2
    x2 = double_conv_drop([x], H2, W2, params["down2"])
    x = max_pool_2x2(x2, H2, W2)
    H3, W3 = H2 // 2, W2 // 2
    x3 = double_conv_drop([x], H3, W3, params["down3"])
    x = max_pool_2x2(x3, H3, W3)
    H4, W4 = H3 // 2, W3 // 2
    x4 = double_conv_drop([x], H4, W4, params["down4"])
    x = max_pool_2x2(x4, H4, W4)
    H5, W5 = H4 // 2, W4 // 2
    x = double_conv_drop([x], H5, W5, params["fc"])                   # (N, 1, 512)

    x = conv_transpose_2x2(x, H5, W5, params["up1_w"], params["up1_b"])
    x = double_conv_drop([x, x4], H4, W4, params["upc1"])
    x = conv_transpose_2x2(x, H4, W4, params["up2_w"], params["up2_b"])
    x = double_conv_drop([x, x3], H3, W3, params["upc2"])
    x = conv_transpose_2x2(x, H3, W3, params["up3_w"], params["up3_b"])
    x = double_conv_drop([x, x2], H2, W2, params["upc3"])
    x = conv_transpose_2x2(x, H2, W2, params["up4_w"], params["up4_b"])
    x = double_conv_drop([x, x1], H, W, params["upc4"])               # (N, HW, 32)

    # final 1x1 conv: num_classes output is far too narrow for the MXU -> XLA,
    # bf16 input, f32 accumulate/output (no f32 activation copy in HBM).
    o = jnp.dot(x, params["out_w"].astype(jnp.bfloat16),
                preferred_element_type=jnp.float32) + params["out_b"]
    o = o.reshape(N, H, W, -1)
    return jnp.transpose(o, (0, 3, 1, 2))                             # NCHW, f32


if __name__ == "__main__":
    num_classes = 5
    key = jax.random.PRNGKey(0)
    kx, kp, ka, kb, kc = jax.random.split(key, 5)

    # --- self-check: row-strip (halo) path must match the whole-image path ----
    xa = jax.random.normal(ka, (1, 16 * 16, 16), jnp.float32).astype(jnp.bfloat16)
    xb = jax.random.normal(kb, (1, 16 * 16, 16), jnp.float32).astype(jnp.bfloat16)
    pc = init_double_conv(kc, 32, 32)
    ref = double_conv_drop([xa, xb], 16, 16, pc, force_rows=16)   # 1 block / image
    tst = double_conv_drop([xa, xb], 16, 16, pc, force_rows=4)    # 4 strips + halos
    assert bool(jnp.allclose(ref.astype(jnp.float32), tst.astype(jnp.float32),
                             atol=1e-2, rtol=1e-2)), "strip tiling mismatch"

    x = jax.random.normal(kx, (2, 3, 16, 16), jnp.float32)            # NCHW
    params = init_params(kp, num_classes)

    fwd = jax.jit(unet_forward)
    out = fwd(params, x)
    out = jax.block_until_ready(out)
    assert out.shape == (2, num_classes, 16, 16)
    assert bool(jnp.all(jnp.isfinite(out)))
    print("KERNEL_OK")
</pallas_src>

<mosaic_0001>
module attributes {stable_mosaic.version = 11 : i64} {
  func.func @k(%arg0: i32, %arg1: memref<8x128xf32, #tpu.memory_space<vmem>>, %arg2: memref<8x128xf32, #tpu.memory_space<vmem>>) attributes {dimension_semantics = [#tpu.dimension_semantics<arbitrary>], iteration_bounds = array<i64: 1>, scalar_prefetch = 0 : i64, scratch_operands = 0 : i64, tpu.core_type = #tpu.core_type<tc>, window_params = [{pipeline_mode = #tpu.pipeline_mode<synchronous>, transform_indices = @transform_0, window_bounds = array<i64: 8, 128>}, {pipeline_mode = #tpu.pipeline_mode<synchronous>, transform_indices = @transform_1, window_bounds = array<i64: 8, 128>}]} {
    %c0 = arith.constant 0 : index
    %c0_0 = arith.constant 0 : index
    %0 = vector.load %arg1[%c0, %c0_0] : memref<8x128xf32, #tpu.memory_space<vmem>>, vector<8x128xf32>
    %cst = arith.constant 1.000000e+00 : f32
    %1 = vector.broadcast %cst : f32 to vector<8x128xf32>
    %2 = arith.addf %0, %1 : vector<8x128xf32>
    %c0_1 = arith.constant 0 : index
    %c0_2 = arith.constant 0 : index
    %3 = vector.load %arg2[%c0_1, %c0_2] : memref<8x128xf32, #tpu.memory_space<vmem>>, vector<8x128xf32>
    tpu.vector_store %arg2[%c0_1, %c0_2], %2 {strides = array<i32>} : memref<8x128xf32, #tpu.memory_space<vmem>>, vector<8x128xf32>,
    return
  }
  func.func @transform_0(%arg0: i32) -> (i32, i32) {
    %c0_i32 = arith.constant 0 : i32
    %c0_i32_0 = arith.constant 0 : i32
    %c0_i32_1 = arith.constant 0 : i32
    return %c0_i32, %c0_i32_0 : i32, i32
  }
  func.func @transform_1(%arg0: i32) -> (i32, i32) {
    %c0_i32 = arith.constant 0 : i32
    %c0_i32_0 = arith.constant 0 : i32
    %c0_i32_1 = arith.constant 0 : i32
    return %c0_i32, %c0_i32_0 : i32, i32
  }
}

module attributes {stable_mosaic.version = 11 : i64} {
  func.func @_dc_kernel(%arg0: i32, %arg1: i32, %arg2: memref<1x256x16xbf16, #tpu.memory_space<vmem>>, %arg3: memref<1x256x16xbf16, #tpu.memory_space<vmem>>, %arg4: memref<3x3x16x32xbf16, #tpu.memory_space<vmem>>, %arg5: memref<3x3x16x32xbf16, #tpu.memory_space<vmem>>, %arg6: memref<1x32xf32, #tpu.memory_space<vmem>>, %arg7: memref<3x3x32x32xbf16, #tpu.memory_space<vmem>>, %arg8: memref<1x32xf32, #tpu.memory_space<vmem>>, %arg9: memref<1x256x32xbf16, #tpu.memory_space<vmem>>, %arg10: memref<322x16xbf16, #tpu.memory_space<vmem>>, %arg11: memref<322x16xbf16, #tpu.memory_space<vmem>>, %arg12: memref<290x32xbf16, #tpu.memory_space<vmem>>) attributes {dimension_semantics = [#tpu.dimension_semantics<parallel>, #tpu.dimension_semantics<parallel>], iteration_bounds = array<i64: 1, 1>, scalar_prefetch = 0 : i64, scratch_operands = 3 : i64, tpu.core_type = #tpu.core_type<tc>, window_params = [{transform_indices = @transform_0, window_bounds = array<i64: 1, 256, 16>}, {transform_indices = @transform_1, window_bounds = array<i64: 1, 256, 16>}, {pipeline_mode = #tpu.pipeline_mode<synchronous>, transform_indices = @transform_2, window_bounds = array<i64: 3, 3, 16, 32>}, {pipeline_mode = #tpu.pipeline_mode<synchronous>, transform_indices = @transform_3, window_bounds = array<i64: 3, 3, 16, 32>}, {pipeline_mode = #tpu.pipeline_mode<synchronous>, transform_indices = @transform_4, window_bounds = array<i64: 1, 32>}, {pipeline_mode = #tpu.pipeline_mode<synchronous>, transform_indices = @transform_5, window_bounds = array<i64: 3, 3, 32, 32>}, {pipeline_mode = #tpu.pipeline_mode<synchronous>, transform_indices = @transform_6, window_bounds = array<i64: 1, 32>}, {transform_indices = @transform_7, window_bounds = array<i64: 1, 256, 32>}]} {
    %0 = tpu.iota {dimensions = array<i32: 0>} : vector<288x1xi32>
    %c16_i32 = arith.constant 16 : i32
    %c0_i32 = arith.constant 0 : i32
    %1 = arith.cmpi eq, %c16_i32, %c0_i32 : i32
    %c1_i32 = arith.constant 1 : i32
    %2 = arith.select %1, %c1_i32, %c16_i32 : i32
    %3 = vector.broadcast %2 : i32 to vector<288x1xi32>
    %4 = arith.remsi %0, %3 : vector<288x1xi32>
    %c0_i32_0 = arith.constant 0 : i32
    %5 = vector.broadcast %c0_i32_0 : i32 to vector<288x1xi32>
    %6 = arith.cmpi ne, %4, %5 : vector<288x1xi32>
    %c0_i32_1 = arith.constant 0 : i32
    %7 = vector.broadcast %c0_i32_1 : i32 to vector<288x1xi32>
    %8 = arith.cmpi slt, %4, %7 : vector<288x1xi32>
    %c0_i32_2 = arith.constant 0 : i32
    %9 = arith.cmpi slt, %2, %c0_i32_2 : i32
    %10 = vector.broadcast %9 : i1 to vector<288x1xi1>
    %11 = vector.broadcast %10 : vector<288x1xi1> to vector<288x1xi1>
    %12 = arith.xori %8, %11 : vector<288x1xi1>
    %13 = arith.andi %12, %6 : vector<288x1xi1>
    %14 = vector.broadcast %2 : i32 to vector<288x1xi32>
    %15 = arith.addi %4, %14 : vector<288x1xi32>
    %16 = arith.select %13, %15, %4 : vector<288x1xi1>, vector<288x1xi32>
    %c0_i32_3 = arith.constant 0 : i32
    %17 = vector.broadcast %c0_i32_3 : i32 to vector<288x1xi32>
    %18 = arith.cmpi sgt, %16, %17 : vector<288x1xi32>
    %19 = arith.extui %18 : vector<288x1xi1> to vector<288x1xi32>
    %20 = arith.sitofp %19 : vector<288x1xi32> to vector<288x1xf32>
    %c15_i32 = arith.constant 15 : i32
    %21 = vector.broadcast %c15_i32 : i32 to vector<288x1xi32>
    %22 = arith.cmpi slt, %16, %21 : vector<288x1xi32>
    %23 = arith.extui %22 : vector<288x1xi1> to vector<288x1xi32>
    %24 = arith.sitofp %23 : vector<288x1xi32> to vector<288x1xf32>
    %c0 = arith.constant 0 : index
    %c0_4 = arith.constant 0 : index
    %c0_5 = arith.constant 0 : index
    %25 = vector.load %arg2[%c0, %c0_4, %c0_5] : memref<1x256x16xbf16, #tpu.memory_space<vmem>>, vector<1x256x16xbf16>
    %26 = vector.shape_cast %25 : vector<1x256x16xbf16> to vector<256x16xbf16>
    %c33 = arith.constant 33 : index
    %c0_6 = arith.constant 0 : index
    %27 = vector.load %arg10[%c33, %c0_6] : memref<322x16xbf16, #tpu.memory_space<vmem>>, vector<256x16xbf16>
    tpu.vector_store %arg10[%c33, %c0_6], %26 {strides = array<i32>} : memref<322x16xbf16, #tpu.memory_space<vmem>>, vector<256x16xbf16>,
    %cst = arith.constant 0.000000e+00 : bf16
    %28 = vector.broadcast %cst : bf16 to vector<33x16xbf16>
    %c0_7 = arith.constant 0 : index
    %c0_8 = arith.constant 0 : index
    %29 = vector.load %arg10[%c0_7, %c0_8] : memref<322x16xbf16, #tpu.memory_space<vmem>>, vector<33x16xbf16>
    tpu.vector_store %arg10[%c0_7, %c0_8], %28 {strides = array<i32>} : memref<322x16xbf16, #tpu.memory_space<vmem>>, vector<33x16xbf16>,
    %cst_9 = arith.constant 0.000000e+00 : bf16
    %30 = vector.broadcast %cst_9 : bf16 to vector<33x16xbf16>
    %c289 = arith.constant 289 : index
    %c0_10 = arith.constant 0 : index
    %31 = vector.load %arg10[%c289, %c0_10] : memref<322x16xbf16, #tpu.memory_space<vmem>>, vector<33x16xbf16>
    tpu.vector_store %arg10[%c289, %c0_10], %30 {strides = array<i32>} : memref<322x16xbf16, #tpu.memory_space<vmem>>, vector<33x16xbf16>,
    %c0_11 = arith.constant 0 : index
    %c0_12 = arith.constant 0 : index
    %c0_13 = arith.constant 0 : index
    %32 = vector.load %arg3[%c0_11, %c0_12, %c0_13] : memref<1x256x16xbf16, #tpu.memory_space<vmem>>, vector<1x256x16xbf16>
    %33 = vector.shape_cast %32 : vector<1x256x16xbf16> to vector<256x16xbf16>
    %c33_14 = arith.constant 33 : index
    %c0_15 = arith.constant 0 : index
    %34 = vector.load %arg11[%c33_14, %c0_15] : memref<322x16xbf16, #tpu.memory_space<vmem>>, vector<256x16xbf16>
    tpu.vector_store %arg11[%c33_14, %c0_15], %33 {strides = array<i32>} : memref<322x16xbf16, #tpu.memory_space<vmem>>, vector<256x16xbf16>,
    %cst_16 = arith.constant 0.000000e+00 : bf16
    %35 = vector.broadcast %cst_16 : bf16 to vector<33x16xbf16>
    %c0_17 = arith.constant 0 : index
    %c0_18 = arith.constant 0 : index
    %36 = vector.load %arg11[%c0_17, %c0_18] : memref<322x16xbf16, #tpu.memory_space<vmem>>, vector<33x16xbf16>
    tpu.vector_store %arg11[%c0_17, %c0_18], %35 {strides = array<i32>} : memref<322x16xbf16, #tpu.memory_space<vmem>>, vector<33x16xbf16>,
    %cst_19 = arith.constant 0.000000e+00 : bf16
    %37 = vector.broadcast %cst_19 : bf16 to vector<33x16xbf16>
    %c289_20 = arith.constant 289 : index
    %c0_21 = arith.constant 0 : index
    %38 = vector.load %arg11[%c289_20, %c0_21] : memref<322x16xbf16, #tpu.memory_space<vmem>>, vector<33x16xbf16>
    tpu.vector_store %arg11[%c289_20, %c0_21], %37 {strides = array<i32>} : memref<322x16xbf16, #tpu.memory_space<vmem>>, vector<33x16xbf16>,
    %c0_22 = arith.constant 0 : index
    %c0_23 = arith.constant 0 : index
    %39 = vector.load %arg10[%c0_22, %c0_23] : memref<322x16xbf16, #tpu.memory_space<vmem>>, vector<288x16xbf16>
    %c0_24 = arith.constant 0 : index
    %c0_25 = arith.constant 0 : index
    %c0_26 = arith.constant 0 : index
    %c0_27 = arith.constant 0 : index
    %40 = vector.load %arg4[%c0_24, %c0_25, %c0_26, %c0_27] : memref<3x3x16x32xbf16, #tpu.memory_space<vmem>>, vector<1x1x16x32xbf16>
    %41 = vector.shape_cast %40 : vector<1x1x16x32xbf16> to vector<16x32xbf16>
    %cst_28 = arith.constant dense<0.000000e+00> : vector<288x32xf32>
    %42 = tpu.matmul %39, %41, %cst_28 {dimension_numbers = #tpu.dot_dimension_numbers<[1], [0], [0], [1], [0, 0, 1, 1], [], []>} : vector<288x16xbf16>, vector<16x32xbf16>, vector<288x32xf32> -> vector<288x32xf32>
    %c1 = arith.constant 1 : index
    %c0_29 = arith.constant 0 : index
    %43 = vector.load %arg10[%c1, %c0_29] : memref<322x16xbf16, #tpu.memory_space<vmem>>, vector<288x16xbf16>
    %c0_30 = arith.constant 0 : index
    %c1_31 = arith.constant 1 : index
    %c0_32 = arith.constant 0 : index
    %c0_33 = arith.constant 0 : index
    %44 = vector.load %arg4[%c0_30, %c1_31, %c0_32, %c0_33] : memref<3x3x16x32xbf16, #tpu.memory_space<vmem>>, vector<1x1x16x32xbf16>
    %45 = vector.shape_cast %44 : vector<1x1x16x32xbf16> to vector<16x32xbf16>
    %cst_34 = arith.constant dense<0.000000e+00> : vector<288x32xf32>
    %46 = tpu.matmul %43, %45, %cst_34 {dimension_numbers = #tpu.dot_dimension_numbers<[1], [0], [0], [1], [0, 0, 1, 1], [], []>} : vector<288x16xbf16>, vector<16x32xbf16>, vector<288x32xf32> -> vector<288x32xf32>
    %c2 = arith.constant 2 : index
    %c0_35 = arith.constant 0 : index
    %47 = vector.load %arg10[%c2, %c0_35] : memref<322x16xbf16, #tpu.memory_space<vmem>>, vector<288x16xbf16>
    %c0_36 = arith.constant 0 : index
    %c2_37 = arith.constant 2 : index
    %c0_38 = arith.constant 0 : index
    %c0_39 = arith.constant 0 : index
    %48 = vector.load %arg4[%c0_36, %c2_37, %c0_38, %c0_39] : memref<3x3x16x32xbf16, #tpu.memory_space<vmem>>, vector<1x1x16x32xbf16>
    %49 = vector.shape_cast %48 : vector<1x1x16x32xbf16> to vector<16x32xbf16>
    %cst_40 = arith.constant dense<0.000000e+00> : vector<288x32xf32>
    %50 = tpu.matmul %47, %49, %cst_40 {dimension_numbers = #tpu.dot_dimension_numbers<[1], [0], [0], [1], [0, 0, 1, 1], [], []>} : vector<288x16xbf16>, vector<16x32xbf16>, vector<288x32xf32> -> vector<288x32xf32>
    %c16 = arith.constant 16 : index
    %c0_41 = arith.constant 0 : index
    %51 = vector.load %arg10[%c16, %c0_41] : memref<322x16xbf16, #tpu.memory_space<vmem>>, vector<288x16xbf16>
    %c1_42 = arith.constant 1 : index
    %c0_43 = arith.constant 0 : index
    %c0_44 = arith.constant 0 : index
    %c0_45 = arith.constant 0 : index
    %52 = vector.load %arg4[%c1_42, %c0_43, %c0_44, %c0_45] : memref<3x3x16x32xbf16, #tpu.memory_space<vmem>>, vector<1x1x16x32xbf16>
    %53 = vector.shape_cast %52 : vector<1x1x16x32xbf16> to vector<16x32xbf16>
    %cst_46 = arith.constant dense<0.000000e+00> : vector<288x32xf32>
    %54 = tpu.matmul %51, %53, %cst_46 {dimension_numbers = #tpu.dot_dimension_numbers<[1], [0], [0], [1], [0, 0, 1, 1], [], []>} : vector<288x16xbf16>, vector<16x32xbf16>, vector<288x32xf32> -> vector<288x32xf32>
    %55 = arith.addf %42, %54 : vector<288x32xf32>
    %c17 = arith.constant 17 : index
    %c0_47 = arith.constant 0 : index
    %56 = vector.load %arg10[%c17, %c0_47] : memref<322x16xbf16, #tpu.memory_space<vmem>>, vector<288x16xbf16>
    %c1_48 = arith.constant 1 : index
    %c1_49 = arith.constant 1 : index
    %c0_50 = arith.constant 0 : index
    %c0_51 = arith.constant 0 : index
    %57 = vector.load %arg4[%c1_48, %c1_49, %c0_50, %c0_51] : memref<3x3x16x32xbf16, #tpu.memory_space<vmem>>, vector<1x1x16x32xbf16>
    %58 = vector.shape_cast %57 : vector<1x1x16x32xbf16> to vector<16x32xbf16>
    %cst_52 = arith.constant dense<0.000000e+00> : vector<288x32xf32>
    %59 = tpu.matmul %56, %58, %cst_52 {dimension_numbers = #tpu.dot_dimension_numbers<[1], [0], [0], [1], [0, 0, 1, 1], [], []>} : vector<288x16xbf16>, vector<16x32xbf16>, vector<288x32xf32> -> vector<288x32xf32>
    %60 = arith.addf %46, %59 : vector<288x32xf32>
    %c18 = arith.constant 18 : index
    %c0_53 = arith.constant 0 : index
    %61 = vector.load %arg10[%c18, %c0_53] : memref<322x16xbf16, #tpu.memory_space<vmem>>, vector<288x16xbf16>
    %c1_54 = arith.constant 1 : index
    %c2_55 = arith.constant 2 : index
    %c0_56 = arith.constant 0 : index
    %c0_57 = arith.constant 0 : index
    %62 = vector.load %arg4[%c1_54, %c2_55, %c0_56, %c0_57] : memref<3x3x16x32xbf16, #tpu.memory_space<vmem>>, vector<1x1x16x32xbf16>
    %63 = vector.shape_cast %62 : vector<1x1x16x32xbf16> to vector<16x32xbf16>
    %cst_58 = arith.constant dense<0.000000e+00> : vector<288x32xf32>
    %64 = tpu.matmul %61, %63, %cst_58 {dimension_numbers = #tpu.dot_dimension_numbers<[1], [0], [0], [1], [0, 0, 1, 1], [], []>} : vector<288x16xbf16>, vector<16x32xbf16>, vector<288x32xf32> -> vector<288x32xf32>
    %65 = arith.addf %50, %64 : vector<288x32xf32>
    %c32 = arith.constant 32 : index
    %c0_59 = arith.constant 0 : index
    %66 = vector.load %arg10[%c32, %c0_59] : memref<322x16xbf16, #tpu.memory_space<vmem>>, vector<288x16xbf16>
    %c2_60 = arith.constant 2 : index
    %c0_61 = arith.constant 0 : index
    %c0_62 = arith.constant 0 : index
    %c0_63 = arith.constant 0 : index
    %67 = vector.load %arg4[%c2_60, %c0_61, %c0_62, %c0_63] : memref<3x3x16x32xbf16, #tpu.memory_space<vmem>>, vector<1x1x16x32xbf16>
    %68 = vector.shape_cast %67 : vector<1x1x16x32xbf16> to vector<16x32xbf16>
    %cst_64 = arith.constant dense<0.000000e+00> : vector<288x32xf32>
    %69 = tpu.matmul %66, %68, %cst_64 {dimension_numbers = #tpu.dot_dimension_numbers<[1], [0], [0], [1], [0, 0, 1, 1], [], []>} : vector<288x16xbf16>, vector<16x32xbf16>, vector<288x32xf32> -> vector<288x32xf32>
    %70 = arith.addf %55, %69 : vector<288x32xf32>
    %c33_65 = arith.constant 33 : index
    %c0_66 = arith.constant 0 : index
    %71 = vector.load %arg10[%c33_65, %c0_66] : memref<322x16xbf16, #tpu.memory_space<vmem>>, vector<288x16xbf16>
    %c2_67 = arith.constant 2 : index
    %c1_68 = arith.constant 1 : index
    %c0_69 = arith.constant 0 : index
    %c0_70 = arith.constant 0 : index
    %72 = vector.load %arg4[%c2_67, %c1_68, %c0_69, %c0_70] : memref<3x3x16x32xbf16, #tpu.memory_space<vmem>>, vector<1x1x16x32xbf16>
    %73 = vector.shape_cast %72 : vector<1x1x16x32xbf16> to vector<16x32xbf16>
    %cst_71 = arith.constant dense<0.000000e+00> : vector<288x32xf32>
    %74 = tpu.matmul %71, %73, %cst_71 {dimension_numbers = #tpu.dot_dimension_numbers<[1], [0], [0], [1], [0, 0, 1, 1], [], []>} : vector<288x16xbf16>, vector<16x32xbf16>, vector<288x32xf32> -> vector<288x32xf32>
    %75 = arith.addf %60, %74 : vector<288x32xf32>
    %c34 = arith.constant 34 : index
    %c0_72 = arith.constant 0 : index
    %76 = vector.load %arg10[%c34, %c0_72] : memref<322x16xbf16, #tpu.memory_space<vmem>>, vector<288x16xbf16>
    %c2_73 = arith.constant 2 : index
    %c2_74 = arith.constant 2 : index
    %c0_75 = arith.constant 0 : index
    %c0_76 = arith.constant 0 : index
    %77 = vector.load %arg4[%c2_73, %c2_74, %c0_75, %c0_76] : memref<3x3x16x32xbf16, #tpu.memory_space<vmem>>, vector<1x1x16x32xbf16>
    %78 = vector.shape_cast %77 : vector<1x1x16x32xbf16> to vector<16x32xbf16>
    %cst_77 = arith.constant dense<0.000000e+00> : vector<288x32xf32>
    %79 = tpu.matmul %76, %78, %cst_77 {dimension_numbers = #tpu.dot_dimension_numbers<[1], [0], [0], [1], [0, 0, 1, 1], [], []>} : vector<288x16xbf16>, vector<16x32xbf16>, vector<288x32xf32> -> vector<288x32xf32>
    %80 = arith.addf %65, %79 : vector<288x32xf32>
    %c0_78 = arith.constant 0 : index
    %c0_79 = arith.constant 0 : index
    %81 = vector.load %arg11[%c0_78, %c0_79] : memref<322x16xbf16, #tpu.memory_space<vmem>>, vector<288x16xbf16>
    %c0_80 = arith.constant 0 : index
    %c0_81 = arith.constant 0 : index
    %c0_82 = arith.constant 0 : index
    %c0_83 = arith.constant 0 : index
    %82 = vector.load %arg5[%c0_80, %c0_81, %c0_82, %c0_83] : memref<3x3x16x32xbf16, #tpu.memory_space<vmem>>, vector<1x1x16x32xbf16>
    %83 = vector.shape_cast %82 : vector<1x1x16x32xbf16> to vector<16x32xbf16>
    %cst_84 = arith.constant dense<0.000000e+00> : vector<288x32xf32>
    %84 = tpu.matmul %81, %83, %cst_84 {dimension_numbers = #tpu.dot_dimension_numbers<[1], [0], [0], [1], [0, 0, 1, 1], [], []>} : vector<288x16xbf16>, vector<16x32xbf16>, vector<288x32xf32> -> vector<288x32xf32>
    %85 = arith.addf %70, %84 : vector<288x32xf32>
    %c1_85 = arith.constant 1 : index
    %c0_86 = arith.constant 0 : index
    %86 = vector.load %arg11[%c1_85, %c0_86] : memref<322x16xbf16, #tpu.memory_space<vmem>>, vector<288x16xbf16>
    %c0_87 = arith.constant 0 : index
    %c1_88 = arith.constant 1 : index
    %c0_89 = arith.constant 0 : index
    %c0_90 = arith.constant 0 : index
    %87 = vector.load %arg5[%c0_87, %c1_88, %c0_89, %c0_90] : memref<3x3x16x32xbf16, #tpu.memory_space<vmem>>, vector<1x1x16x32xbf16>
    %88 = vector.shape_cast %87 : vector<1x1x16x32xbf16> to vector<16x32xbf16>
    %cst_91 = arith.constant dense<0.000000e+00> : vector<288x32xf32>
    %89 = tpu.matmul %86, %88, %cst_91 {dimension_numbers = #tpu.dot_dimension_numbers<[1], [0], [0], [1], [0, 0, 1, 1], [], []>} : vector<288x16xbf16>, vector<16x32xbf16>, vector<288x32xf32> -> vector<288x32xf32>
    %90 = arith.addf %75, %89 : vector<288x32xf32>
    %c2_92 = arith.constant 2 : index
    %c0_93 = arith.constant 0 : index
    %91 = vector.load %arg11[%c2_92, %c0_93] : memref<322x16xbf16, #tpu.memory_space<vmem>>, vector<288x16xbf16>
    %c0_94 = arith.constant 0 : index
    %c2_95 = arith.constant 2 : index
    %c0_96 = arith.constant 0 : index
    %c0_97 = arith.constant 0 : index
    %92 = vector.load %arg5[%c0_94, %c2_95, %c0_96, %c0_97] : memref<3x3x16x32xbf16, #tpu.memory_space<vmem>>, vector<1x1x16x32xbf16>
    %93 = vector.shape_cast %92 : vector<1x1x16x32xbf16> to vector<16x32xbf16>
    %cst_98 = arith.constant dense<0.000000e+00> : vector<288x32xf32>
    %94 = tpu.matmul %91, %93, %cst_98 {dimension_numbers = #tpu.dot_dimension_numbers<[1], [0], [0], [1], [0, 0, 1, 1], [], []>} : vector<288x16xbf16>, vector<16x32xbf16>, vector<288x32xf32> -> vector<288x32xf32>
    %95 = arith.addf %80, %94 : vector<288x32xf32>
    %c16_99 = arith.constant 16 : index
    %c0_100 = arith.constant 0 : index
    %96 = vector.load %arg11[%c16_99, %c0_100] : memref<322x16xbf16, #tpu.memory_space<vmem>>, vector<288x16xbf16>
    %c1_101 = arith.constant 1 : index
    %c0_102 = arith.constant 0 : index
    %c0_103 = arith.constant 0 : index
    %c0_104 = arith.constant 0 : index
    %97 = vector.load %arg5[%c1_101, %c0_102, %c0_103, %c0_104] : memref<3x3x16x32xbf16, #tpu.memory_space<vmem>>, vector<1x1x16x32xbf16>
    %98 = vector.shape_cast %97 : vector<1x1x16x32xbf16> to vector<16x32xbf16>
    %cst_105 = arith.constant dense<0.000000e+00> : vector<288x32xf32>
    %99 = tpu.matmul %96, %98, %cst_105 {dimension_numbers = #tpu.dot_dimension_numbers<[1], [0], [0], [1], [0, 0, 1, 1], [], []>} : vector<288x16xbf16>, vector<16x32xbf16>, vector<288x32xf32> -> vector<288x32xf32>
    %100 = arith.addf %85, %99 : vector<288x32xf32>
    %c17_106 = arith.constant 17 : index
    %c0_107 = arith.constant 0 : index
    %101 = vector.load %arg11[%c17_106, %c0_107] : memref<322x16xbf16, #tpu.memory_space<vmem>>, vector<288x16xbf16>
    %c1_108 = arith.constant 1 : index
    %c1_109 = arith.constant 1 : index
    %c0_110 = arith.constant 0 : index
    %c0_111 = arith.constant 0 : index
    %102 = vector.load %arg5[%c1_108, %c1_109, %c0_110, %c0_111] : memref<3x3x16x32xbf16, #tpu.memory_space<vmem>>, vector<1x1x16x32xbf16>
    %103 = vector.shape_cast %102 : vector<1x1x16x32xbf16> to vector<16x32xbf16>
    %cst_112 = arith.constant dense<0.000000e+00> : vector<288x32xf32>
    %104 = tpu.matmul %101, %103, %cst_112 {dimension_numbers = #tpu.dot_dimension_numbers<[1], [0], [0], [1], [0, 0, 1, 1], [], []>} : vector<288x16xbf16>, vector<16x32xbf16>, vector<288x32xf32> -> vector<288x32xf32>
    %105 = arith.addf %90, %104 : vector<288x32xf32>
    %c18_113 = arith.constant 18 : index
    %c0_114 = arith.constant 0 : index
    %106 = vector.load %arg11[%c18_113, %c0_114] : memref<322x16xbf16, #tpu.memory_space<vmem>>, vector<288x16xbf16>
    %c1_115 = arith.constant 1 : index
    %c2_116 = arith.constant 2 : index
    %c0_117 = arith.constant 0 : index
    %c0_118 = arith.constant 0 : index
    %107 = vector.load %arg5[%c1_115, %c2_116, %c0_117, %c0_118] : memref<3x3x16x32xbf16, #tpu.memory_space<vmem>>, vector<1x1x16x32xbf16>
    %108 = vector.shape_cast %107 : vector<1x1x16x32xbf16> to vector<16x32xbf16>
    %cst_119 = arith.constant dense<0.000000e+00> : vector<288x32xf32>
    %109 = tpu.matmul %106, %108, %cst_119 {dimension_numbers = #tpu.dot_dimension_numbers<[1], [0], [0], [1], [0, 0, 1, 1], [], []>} : vector<288x16xbf16>, vector<16x32xbf16>, vector<288x32xf32> -> vector<288x32xf32>
    %110 = arith.addf %95, %109 : vector<288x32xf32>
    %c32_120 = arith.constant 32 : index
    %c0_121 = arith.constant 0 : index
    %111 = vector.load %arg11[%c32_120, %c0_121] : memref<322x16xbf16, #tpu.memory_space<vmem>>, vector<288x16xbf16>
    %c2_122 = arith.constant 2 : index
    %c0_123 = arith.constant 0 : index
    %c0_124 = arith.constant 0 : index
    %c0_125 = arith.constant 0 : index
    %112 = vector.load %arg5[%c2_122, %c0_123, %c0_124, %c0_125] : memref<3x3x16x32xbf16, #tpu.memory_space<vmem>>, vector<1x1x16x32xbf16>
    %113 = vector.shape_cast %112 : vector<1x1x16x32xbf16> to vector<16x32xbf16>
    %cst_126 = arith.constant dense<0.000000e+00> : vector<288x32xf32>
    %114 = tpu.matmul %111, %113, %cst_126 {dimension_numbers = #tpu.dot_dimension_numbers<[1], [0], [0], [1], [0, 0, 1, 1], [], []>} : vector<288x16xbf16>, vector<16x32xbf16>, vector<288x32xf32> -> vector<288x32xf32>
    %115 = arith.addf %100, %114 : vector<288x32xf32>
    %c33_127 = arith.constant 33 : index
    %c0_128 = arith.constant 0 : index
    %116 = vector.load %arg11[%c33_127, %c0_128] : memref<322x16xbf16, #tpu.memory_space<vmem>>, vector<288x16xbf16>
    %c2_129 = arith.constant 2 : index
    %c1_130 = arith.constant 1 : index
    %c0_131 = arith.constant 0 : index
    %c0_132 = arith.constant 0 : index
    %117 = vector.load %arg5[%c2_129, %c1_130, %c0_131, %c0_132] : memref<3x3x16x32xbf16, #tpu.memory_space<vmem>>, vector<1x1x16x32xbf16>
    %118 = vector.shape_cast %117 : vector<1x1x16x32xbf16> to vector<16x32xbf16>
    %cst_133 = arith.constant dense<0.000000e+00> : vector<288x32xf32>
    %119 = tpu.matmul %116, %118, %cst_133 {dimension_numbers = #tpu.dot_dimension_numbers<[1], [0], [0], [1], [0, 0, 1, 1], [], []>} : vector<288x16xbf16>, vector<16x32xbf16>, vector<288x32xf32> -> vector<288x32xf32>
    %120 = arith.addf %105, %119 : vector<288x32xf32>
    %c34_134 = arith.constant 34 : index
    %c0_135 = arith.constant 0 : index
    %121 = vector.load %arg11[%c34_134, %c0_135] : memref<322x16xbf16, #tpu.memory_space<vmem>>, vector<288x16xbf16>
    %c2_136 = arith.constant 2 : index
    %c2_137 = arith.constant 2 : index
    %c0_138 = arith.constant 0 : index
    %c0_139 = arith.constant 0 : index
    %122 = vector.load %arg5[%c2_136, %c2_137, %c0_138, %c0_139] : memref<3x3x16x32xbf16, #tpu.memory_space<vmem>>, vector<1x1x16x32xbf16>
    %123 = vector.shape_cast %122 : vector<1x1x16x32xbf16> to vector<16x32xbf16>
    %cst_140 = arith.constant dense<0.000000e+00> : vector<288x32xf32>
    %124 = tpu.matmul %121, %123, %cst_140 {dimension_numbers = #tpu.dot_dimension_numbers<[1], [0], [0], [1], [0, 0, 1, 1], [], []>} : vector<288x16xbf16>, vector<16x32xbf16>, vector<288x32xf32> -> vector<288x32xf32>
    %125 = arith.addf %110, %124 : vector<288x32xf32>
    %126 = vector.broadcast %20 : vector<288x1xf32> to vector<288x32xf32>
    %127 = arith.mulf %126, %115 : vector<288x32xf32>
    %128 = arith.addf %120, %127 : vector<288x32xf32>
    %129 = vector.broadcast %24 : vector<288x1xf32> to vector<288x32xf32>
    %130 = arith.mulf %129, %125 : vector<288x32xf32>
    %131 = arith.addf %128, %130 : vector<288x32xf32>
    %c0_141 = arith.constant 0 : index
    %c0_142 = arith.constant 0 : index
    %132 = vector.load %arg6[%c0_141, %c0_142] : memref<1x32xf32, #tpu.memory_space<vmem>>, vector<1x32xf32>
    %133 = vector.broadcast %132 : vector<1x32xf32> to vector<288x32xf32>
    %134 = arith.addf %131, %133 : vector<288x32xf32>
    %cst_143 = arith.constant 0.000000e+00 : f32
    %135 = vector.broadcast %cst_143 : f32 to vector<288x32xf32>
    %136 = arith.maximumf %134, %135 : vector<288x32xf32>
    %137 = arith.truncf %136 : vector<288x32xf32> to vector<288x32xbf16>
    %cst_144 = arith.constant 0.000000e+00 : bf16
    %138 = vector.broadcast %cst_144 : bf16 to vector<1x32xbf16>
    %c0_145 = arith.constant 0 : index
    %c0_146 = arith.constant 0 : index
    %139 = vector.load %arg12[%c0_145, %c0_146] : memref<290x32xbf16, #tpu.memory_space<vmem>>, vector<1x32xbf16>
    tpu.vector_store %arg12[%c0_145, %c0_146], %138 {strides = array<i32>} : memref<290x32xbf16, #tpu.memory_space<vmem>>, vector<1x32xbf16>,
    %cst_147 = arith.constant 0.000000e+00 : bf16
    %140 = vector.broadcast %cst_147 : bf16 to vector<1x32xbf16>
    %c289_148 = arith.constant 289 : index
    %c0_149 = arith.constant 0 : index
    %141 = vector.load %arg12[%c289_148, %c0_149] : memref<290x32xbf16, #tpu.memory_space<vmem>>, vector<1x32xbf16>
    tpu.vector_store %arg12[%c289_148, %c0_149], %140 {strides = array<i32>} : memref<290x32xbf16, #tpu.memory_space<vmem>>, vector<1x32xbf16>,
    %c1_150 = arith.constant 1 : index
    %c0_151 = arith.constant 0 : index
    %142 = vector.load %arg12[%c1_150, %c0_151] : memref<290x32xbf16, #tpu.memory_space<vmem>>, vector<288x32xbf16>
    tpu.vector_store %arg12[%c1_150, %c0_151], %137 {strides = array<i32>} : memref<290x32xbf16, #tpu.memory_space<vmem>>, vector<288x32xbf16>,
    %cst_152 = arith.constant 0.000000e+00 : bf16
    %143 = vector.broadcast %cst_152 : bf16 to vector<16x32xbf16>
    %c1_153 = arith.constant 1 : index
    %c0_154 = arith.constant 0 : index
    %144 = vector.load %arg12[%c1_153, %c0_154] : memref<290x32xbf16, #tpu.memory_space<vmem>>, vector<16x32xbf16>
    tpu.vector_store %arg12[%c1_153, %c0_154], %143 {strides = array<i32>} : memref<290x32xbf16, #tpu.memory_space<vmem>>, vector<16x32xbf16>,
    %cst_155 = arith.constant 0.000000e+00 : bf16
    %145 = vector.broadcast %cst_155 : bf16 to vector<16x32xbf16>
    %c273 = arith.constant 273 : index
    %c0_156 = arith.constant 0 : index
    %146 = vector.load %arg12[%c273, %c0_156] : memref<290x32xbf16, #tpu.memory_space<vmem>>, vector<16x32xbf16>
    tpu.vector_store %arg12[%c273, %c0_156], %145 {strides = array<i32>} : memref<290x32xbf16, #tpu.memory_space<vmem>>, vector<16x32xbf16>,
    %c0_157 = arith.constant 0 : index
    %c0_158 = arith.constant 0 : index
    %147 = vector.load %arg12[%c0_157, %c0_158] : memref<290x32xbf16, #tpu.memory_space<vmem>>, vector<256x32xbf16>
    %c0_159 = arith.constant 0 : index
    %c0_160 = arith.constant 0 : index
    %c0_161 = arith.constant 0 : index
    %c0_162 = arith.constant 0 : index
    %148 = vector.load %arg7[%c0_159, %c0_160, %c0_161, %c0_162] : memref<3x3x32x32xbf16, #tpu.memory_space<vmem>>, vector<1x1x32x32xbf16>
    %149 = vector.shape_cast %148 : vector<1x1x32x32xbf16> to vector<32x32xbf16>
    %cst_163 = arith.constant dense<0.000000e+00> : vector<256x32xf32>
    %150 = tpu.matmul %147, %149, %cst_163 {dimension_numbers = #tpu.dot_dimension_numbers<[1], [0], [0], [1], [0, 0, 1, 1], [], []>} : vector<256x32xbf16>, vector<32x32xbf16>, vector<256x32xf32> -> vector<256x32xf32>
    %c1_164 = arith.constant 1 : index
    %c0_165 = arith.constant 0 : index
    %151 = vector.load %arg12[%c1_164, %c0_165] : memref<290x32xbf16, #tpu.memory_space<vmem>>, vector<256x32xbf16>
    %c0_166 = arith.constant 0 : index
    %c1_167 = arith.constant 1 : index
    %c0_168 = arith.constant 0 : index
    %c0_169 = arith.constant 0 : index
    %152 = vector.load %arg7[%c0_166, %c1_167, %c0_168, %c0_169] : memref<3x3x32x32xbf16, #tpu.memory_space<vmem>>, vector<1x1x32x32xbf16>
    %153 = vector.shape_cast %152 : vector<1x1x32x32xbf16> to vector<32x32xbf16>
    %cst_170 = arith.constant dense<0.000000e+00> : vector<256x32xf32>
    %154 = tpu.matmul %151, %153, %cst_170 {dimension_numbers = #tpu.dot_dimension_numbers<[1], [0], [0], [1], [0, 0, 1, 1], [], []>} : vector<256x32xbf16>, vector<32x32xbf16>, vector<256x32xf32> -> vector<256x32xf32>
    %c2_171 = arith.constant 2 : index
    %c0_172 = arith.constant 0 : index
    %155 = vector.load %arg12[%c2_171, %c0_172] : memref<290x32xbf16, #tpu.memory_space<vmem>>, vector<256x32xbf16>
    %c0_173 = arith.constant 0 : index
    %c2_174 = arith.constant 2 : index
    %c0_175 = arith.constant 0 : index
    %c0_176 = arith.constant 0 : index
    %156 = vector.load %arg7[%c0_173, %c2_174, %c0_175, %c0_176] : memref<3x3x32x32xbf16, #tpu.memory_space<vmem>>, vector<1x1x32x32xbf16>
    %157 = vector.shape_cast %156 : vector<1x1x32x32xbf16> to vector<32x32xbf16>
    %cst_177 = arith.constant dense<0.000000e+00> : vector<256x32xf32>
    %158 = tpu.matmul %155, %157, %cst_177 {dimension_numbers = #tpu.dot_dimension_numbers<[1], [0], [0], [1], [0, 0, 1, 1], [], []>} : vector<256x32xbf16>, vector<32x32xbf16>, vector<256x32xf32> -> vector<256x32xf32>
    %c16_178 = arith.constant 16 : index
    %c0_179 = arith.constant 0 : index
    %159 = vector.load %arg12[%c16_178, %c0_179] : memref<290x32xbf16, #tpu.memory_space<vmem>>, vector<256x32xbf16>
    %c1_180 = arith.constant 1 : index
    %c0_181 = arith.constant 0 : index
    %c0_182 = arith.constant 0 : index
    %c0_183 = arith.constant 0 : index
    %160 = vector.load %arg7[%c1_180, %c0_181, %c0_182, %c0_183] : memref<3x3x32x32xbf16, #tpu.memory_space<vmem>>, vector<1x1x32x32xbf16>
    %161 = vector.shape_cast %160 : vector<1x1x32x32xbf16> to vector<32x32xbf16>
    %cst_184 = arith.constant dense<0.000000e+00> : vector<256x32xf32>
    %162 = tpu.matmul %159, %161, %cst_184 {dimension_numbers = #tpu.dot_dimension_numbers<[1], [0], [0], [1], [0, 0, 1, 1], [], []>} : vector<256x32xbf16>, vector<32x32xbf16>, vector<256x32xf32> -> vector<256x32xf32>
    %163 = arith.addf %150, %162 : vector<256x32xf32>
    %c17_185 = arith.constant 17 : index
    %c0_186 = arith.constant 0 : index
    %164 = vector.load %arg12[%c17_185, %c0_186] : memref<290x32xbf16, #tpu.memory_space<vmem>>, vector<256x32xbf16>
    %c1_187 = arith.constant 1 : index
    %c1_188 = arith.constant 1 : index
    %c0_189 = arith.constant 0 : index
    %c0_190 = arith.constant 0 : index
    %165 = vector.load %arg7[%c1_187, %c1_188, %c0_189, %c0_190] : memref<3x3x32x32xbf16, #tpu.memory_space<vmem>>, vector<1x1x32x32xbf16>
    %166 = vector.shape_cast %165 : vector<1x1x32x32xbf16> to vector<32x32xbf16>
    %cst_191 = arith.constant dense<0.000000e+00> : vector<256x32xf32>
    %167 = tpu.matmul %164, %166, %cst_191 {dimension_numbers = #tpu.dot_dimension_numbers<[1], [0], [0], [1], [0, 0, 1, 1], [], []>} : vector<256x32xbf16>, vector<32x32xbf16>, vector<256x32xf32> -> vector<256x32xf32>
    %168 = arith.addf %154, %167 : vector<256x32xf32>
    %c18_192 = arith.constant 18 : index
    %c0_193 = arith.constant 0 : index
    %169 = vector.load %arg12[%c18_192, %c0_193] : memref<290x32xbf16, #tpu.memory_space<vmem>>, vector<256x32xbf16>
    %c1_194 = arith.constant 1 : index
    %c2_195 = arith.constant 2 : index
    %c0_196 = arith.constant 0 : index
    %c0_197 = arith.constant 0 : index
    %170 = vector.load %arg7[%c1_194, %c2_195, %c0_196, %c0_197] : memref<3x3x32x32xbf16, #tpu.memory_space<vmem>>, vector<1x1x32x32xbf16>
    %171 = vector.shape_cast %170 : vector<1x1x32x32xbf16> to vector<32x32xbf16>
    %cst_198 = arith.constant dense<0.000000e+00> : vector<256x32xf32>
    %172 = tpu.matmul %169, %171, %cst_198 {dimension_numbers = #tpu.dot_dimension_numbers<[1], [0], [0], [1], [0, 0, 1, 1], [], []>} : vector<256x32xbf16>, vector<32x32xbf16>, vector<256x32xf32> -> vector<256x32xf32>
    %173 = arith.addf %158, %172 : vector<256x32xf32>
    %c32_199 = arith.constant 32 : index
    %c0_200 = arith.constant 0 : index
    %174 = vector.load %arg12[%c32_199, %c0_200] : memref<290x32xbf16, #tpu.memory_space<vmem>>, vector<256x32xbf16>
    %c2_201 = arith.constant 2 : index
    %c0_202 = arith.constant 0 : index
    %c0_203 = arith.constant 0 : index
    %c0_204 = arith.constant 0 : index
    %175 = vector.load %arg7[%c2_201, %c0_202, %c0_203, %c0_204] : memref<3x3x32x32xbf16, #tpu.memory_space<vmem>>, vector<1x1x32x32xbf16>
    %176 = vector.shape_cast %175 : vector<1x1x32x32xbf16> to vector<32x32xbf16>
    %cst_205 = arith.constant dense<0.000000e+00> : vector<256x32xf32>
    %177 = tpu.matmul %174, %176, %cst_205 {dimension_numbers = #tpu.dot_dimension_numbers<[1], [0], [0], [1], [0, 0, 1, 1], [], []>} : vector<256x32xbf16>, vector<32x32xbf16>, vector<256x32xf32> -> vector<256x32xf32>
    %178 = arith.addf %163, %177 : vector<256x32xf32>
    %c33_206 = arith.constant 33 : index
    %c0_207 = arith.constant 0 : index
    %179 = vector.load %arg12[%c33_206, %c0_207] : memref<290x32xbf16, #tpu.memory_space<vmem>>, vector<256x32xbf16>
    %c2_208 = arith.constant 2 : index
    %c1_209 = arith.constant 1 : index
    %c0_210 = arith.constant 0 : index
    %c0_211 = arith.constant 0 : index
    %180 = vector.load %arg7[%c2_208, %c1_209, %c0_210, %c0_211] : memref<3x3x32x32xbf16, #tpu.memory_space<vmem>>, vector<1x1x32x32xbf16>
    %181 = vector.shape_cast %180 : vector<1x1x32x32xbf16> to vector<32x32xbf16>
    %cst_212 = arith.constant dense<0.000000e+00> : vector<256x32xf32>
    %182 = tpu.matmul %179, %181, %cst_212 {dimension_numbers = #tpu.dot_dimension_numbers<[1], [0], [0], [1], [0, 0, 1, 1], [], []>} : vector<256x32xbf16>, vector<32x32xbf16>, vector<256x32xf32> -> vector<256x32xf32>
    %183 = arith.addf %168, %182 : vector<256x32xf32>
    %c34_213 = arith.constant 34 : index
    %c0_214 = arith.constant 0 : index
    %184 = vector.load %arg12[%c34_213, %c0_214] : memref<290x32xbf16, #tpu.memory_space<vmem>>, vector<256x32xbf16>
    %c2_215 = arith.constant 2 : index
    %c2_216 = arith.constant 2 : index
    %c0_217 = arith.constant 0 : index
    %c0_218 = arith.constant 0 : index
    %185 = vector.load %arg7[%c2_215, %c2_216, %c0_217, %c0_218] : memref<3x3x32x32xbf16, #tpu.memory_space<vmem>>, vector<1x1x32x32xbf16>
    %186 = vector.shape_cast %185 : vector<1x1x32x32xbf16> to vector<32x32xbf16>
    %cst_219 = arith.constant dense<0.000000e+00> : vector<256x32xf32>
    %187 = tpu.matmul %184, %186, %cst_219 {dimension_numbers = #tpu.dot_dimension_numbers<[1], [0], [0], [1], [0, 0, 1, 1], [], []>} : vector<256x32xbf16>, vector<32x32xbf16>, vector<256x32xf32> -> vector<256x32xf32>
    %188 = arith.addf %173, %187 : vector<256x32xf32>
    %189 = vector.extract_strided_slice %20 {offsets = [0, 0], sizes = [256, 1], strides = [1, 1]} : vector<288x1xf32> to vector<256x1xf32>
    %190 = vector.broadcast %189 : vector<256x1xf32> to vector<256x32xf32>
    %191 = arith.mulf %190, %178 : vector<256x32xf32>
    %192 = arith.addf %183, %191 : vector<256x32xf32>
    %193 = vector.extract_strided_slice %24 {offsets = [0, 0], sizes = [256, 1], strides = [1, 1]} : vector<288x1xf32> to vector<256x1xf32>
    %194 = vector.broadcast %193 : vector<256x1xf32> to vector<256x32xf32>
    %195 = arith.mulf %194, %188 : vector<256x32xf32>
    %196 = arith.addf %192, %195 : vector<256x32xf32>
    %c0_220 = arith.constant 0 : index
    %c0_221 = arith.constant 0 : index
    %197 = vector.load %arg8[%c0_220, %c0_221] : memref<1x32xf32, #tpu.memory_space<vmem>>, vector<1x32xf32>
    %198 = vector.broadcast %197 : vector<1x32xf32> to vector<256x32xf32>
    %199 = arith.addf %196, %198 : vector<256x32xf32>
    %cst_222 = arith.constant 0.000000e+00 : f32
    %200 = vector.broadcast %cst_222 : f32 to vector<256x32xf32>
    %201 = arith.maximumf %199, %200 : vector<256x32xf32>
    %202 = arith.truncf %201 : vector<256x32xf32> to vector<256x32xbf16>
    %c0_223 = arith.constant 0 : index
    %c0_224 = arith.constant 0 : index
    %c0_225 = arith.constant 0 : index
    %203 = vector.load %arg9[%c0_223, %c0_224, %c0_225] : memref<1x256x32xbf16, #tpu.memory_space<vmem>>, vector<1x256x32xbf16>
    %204 = vector.shape_cast %203 : vector<1x256x32xbf16> to vector<256x32xbf16>
    %205 = vector.shape_cast %202 : vector<256x32xbf16> to vector<1x256x32xbf16>
    tpu.vector_store %arg9[%c0_223, %c0_224, %c0_225], %205 {strides = array<i32>} : memref<1x256x32xbf16, #tpu.memory_space<vmem>>, vector<1x256x32xbf16>,
    return
  }
  func.func @transform_0(%arg0: i32, %arg1: i32) -> (i32, i32, i32) {
    %c0_i32 = arith.constant 0 : i32
    %c0_i32_0 = arith.constant 0 : i32
    return %arg0, %arg1, %c0_i32 : i32, i32, i32
  }
  func.func @transform_1(%arg0: i32, %arg1: i32) -> (i32, i32, i32) {
    %c0_i32 = arith.constant 0 : i32
    %c0_i32_0 = arith.constant 0 : i32
    return %arg0, %arg1, %c0_i32 : i32, i32, i32
  }
  func.func @transform_2(%arg0: i32, %arg1: i32) -> (i32, i32, i32, i32) {
    %c0_i32 = arith.constant 0 : i32
    %c0_i32_0 = arith.constant 0 : i32
    %c0_i32_1 = arith.constant 0 : i32
    %c0_i32_2 = arith.constant 0 : i32
    %c0_i32_3 = arith.constant 0 : i32
    return %c0_i32, %c0_i32_0, %c0_i32_1, %c0_i32_2 : i32, i32, i32, i32
  }
  func.func @transform_3(%arg0: i32, %arg1: i32) -> (i32, i32, i32, i32) {
    %c0_i32 = arith.constant 0 : i32
    %c0_i32_0 = arith.constant 0 : i32
    %c0_i32_1 = arith.constant 0 : i32
    %c0_i32_2 = arith.constant 0 : i32
    %c0_i32_3 = arith.constant 0 : i32
    return %c0_i32, %c0_i32_0, %c0_i32_1, %c0_i32_2 : i32, i32, i32, i32
  }
  func.func @transform_4(%arg0: i32, %arg1: i32) -> (i32, i32) {
    %c0_i32 = arith.constant 0 : i32
    %c0_i32_0 = arith.constant 0 : i32
    %c0_i32_1 = arith.constant 0 : i32
    return %c0_i32, %c0_i32_0 : i32, i32
  }
  func.func @transform_5(%arg0: i32, %arg1: i32) -> (i32, i32, i32, i32) {
    %c0_i32 = arith.constant 0 : i32
    %c0_i32_0 = arith.constant 0 : i32
    %c0_i32_1 = arith.constant 0 : i32
    %c0_i32_2 = arith.constant 0 : i32
    %c0_i32_3 = arith.constant 0 : i32
    return %c0_i32, %c0_i32_0, %c0_i32_1, %c0_i32_2 : i32, i32, i32, i32
  }
  func.func @transform_6(%arg0: i32, %arg1: i32) -> (i32, i32) {
    %c0_i32 = arith.constant 0 : i32
    %c0_i32_0 = arith.constant 0 : i32
    %c0_i32_1 = arith.constant 0 : i32
    return %c0_i32, %c0_i32_0 : i32, i32
  }
  func.func @transform_7(%arg0: i32, %arg1: i32) -> (i32, i32, i32) {
    %c0_i32 = arith.constant 0 : i32
    %c0_i32_0 = arith.constant 0 : i32
    return %arg0, %arg1, %c0_i32 : i32, i32, i32
  }
}

</mosaic_0001>

<llo_original>
// kernel: tpu_custom_call.1
$region0: #{tpu_custom_call.1}
  #allocation0 [shape = 'u32[]', space=smem, size = 0x4, offset = 0x4, fixed_abs, tag = 'smem constant byte address 0x4 - core index']
  #allocation1 [shape = 'u32[144,128]{1,0:T(1,128)}', space=vmem, size = 0x12000, scoped, tag = 'internal scratch']
  %s0 = inlined_call_operand.hbm [shape: f32[8,128], index: 0, kind: input, shape index: {}]
  %s1 = inlined_call_operand.hbm [shape: f32[8,128], index: 1, kind: output, shape index: {}]
  %s2 = sld [smem:[#allocation0]]
  $region18: #{tpu_custom_call.1} parent=0
    _
  %s4 = ssub.s32 1, %s2
  %s5 = scalar_select 0, %s4, %s2
  $region1: #{tpu_custom_call.1} parent=0
    #allocation2 [shape = 'u8[4096]{0}', space=vmem, size = 0x1000, scoped, tag = 'input window, operand 0, single buffered']
    #allocation3 [shape = 's32[1]{0}', space=sflag, size = 0x4, scoped, tag = 'scoped memory for tpu_custom_call.1']
    #allocation4 [shape = 's32[1]{0}', space=sflag, size = 0x4, scoped, tag = 'scoped memory for tpu_custom_call.1']
    #allocation5 [shape = 'u8[4096]{0}', space=vmem, size = 0x1000, scoped, tag = 'output window, operand 0, single buffered']
    %6 = vsyncpa [#allocation3], 0
    %7 = vsyncpa [#allocation4], 0
    // Predicated region
    $region2: #{tpu_custom_call.1} parent=1 // pred_check
      _
    $region3: #{tpu_custom_call.1} parent=1 // pred_check_branch
      %9 = sbr.rel (0) target = $region5
    $region4: #{tpu_custom_call.1} parent=1 // pred_region
      %s11 = ssub.s32 128, 128
      %12 = vsyncadd [#allocation3], %s11
      %s14 = sshll.u32 [#allocation2], 4
      %s15 = int_to_ptr.vmem [resolvable:$true] %s14
      %17 = dma.hbm_to_vmem [thread:$0]  %s0, 128, %s15, [#allocation3]
    $region5: #{tpu_custom_call.1} parent=1 // pred_fallthru
      _
    // Predicated region
    $region6: #{tpu_custom_call.1} parent=1 // pred_check
      _
    $region7: #{tpu_custom_call.1} parent=1 // pred_check_branch
      %19 = sbr.rel (0) target = $region9
    $region8: #{tpu_custom_call.1} parent=1 // pred_region
      %20 = dma.done [#allocation3], 128
    $region9: #{tpu_custom_call.1} parent=1 // pred_fallthru
      _
    %v21 = vld [vmem:[#allocation2] sm:$0xff]
    %v22 = vadd.f32 %v21, 1.0
    %23 = vst [vmem:[#allocation5] sm:$0xff] %v22
    // Predicated region
    $region10: #{tpu_custom_call.1} parent=1 // pred_check
      _
    $region11: #{tpu_custom_call.1} parent=1 // pred_check_branch
      %25 = sbr.rel (0) target = $region13
    $region12: #{tpu_custom_call.1} parent=1 // pred_region
      %s27 = ssub.s32 128, 128
      %28 = vsyncadd [#allocation4], %s27
      %s30 = sshll.u32 [#allocation5], 4
      %s31 = int_to_ptr.vmem [resolvable:$true] %s30
      %33 = dma.vmem_to_hbm [thread:$0]  %s31, 128, %s1, [#allocation4]
    $region13: #{tpu_custom_call.1} parent=1 // pred_fallthru
      _
    // Predicated region
    $region14: #{tpu_custom_call.1} parent=1 // pred_check
      _
    $region15: #{tpu_custom_call.1} parent=1 // pred_check_branch
      %35 = sbr.rel (0) target = $region17
    $region16: #{tpu_custom_call.1} parent=1 // pred_region
      %36 = dma.done [#allocation4], 128
    $region17: #{tpu_custom_call.1} parent=1 // pred_fallthru
      _
    %37 = vsyncpa [#allocation3], 1
    %38 = vsyncpa [#allocation4], 1

// kernel: tpu_custom_call.1
$region0: #{tpu_custom_call.1}
  #allocation0 [shape = 'u32[]', space=smem, size = 0x4, offset = 0x4, fixed_abs, tag = 'smem constant byte address 0x4 - core index']
  #allocation1 [shape = 'u32[144,128]{1,0:T(1,128)}', space=vmem, size = 0x12000, scoped, tag = 'internal scratch']
  #allocation2 [shape = 'bf16[322,16]{1,0:T(8,128)(2,1)}', space=vmem, size = 0x14800, scoped, tag = 'scratch operand']
  #allocation3 [shape = 'bf16[322,16]{1,0:T(8,128)(2,1)}', space=vmem, size = 0x14800, scoped, tag = 'scratch operand']
  #allocation4 [shape = 'bf16[290,32]{1,0:T(8,128)(2,1)}', space=vmem, size = 0x12800, scoped, tag = 'scratch operand']
  %s0 = inlined_call_operand.vmem [shape: bf16[1,256,16], index: 0, kind: input, shape index: {}]
  %s1 = inlined_call_operand.vmem [shape: bf16[1,256,16], index: 1, kind: input, shape index: {}]
  %s2 = inlined_call_operand.vmem [shape: bf16[3,3,16,32], index: 2, kind: input, shape index: {}]
  %s3 = inlined_call_operand.vmem [shape: bf16[3,3,16,32], index: 3, kind: input, shape index: {}]
  %s4 = inlined_call_operand.vmem [shape: f32[1,32], index: 4, kind: input, shape index: {}]
  %s5 = inlined_call_operand.vmem [shape: bf16[3,3,32,32], index: 5, kind: input, shape index: {}]
  %s6 = inlined_call_operand.vmem [shape: f32[1,32], index: 6, kind: input, shape index: {}]
  %s7 = inlined_call_operand.vmem [shape: bf16[1,256,32], index: 7, kind: output, shape index: {}]
  %s8 = sld [smem:[#allocation0]]
  $region38: #{tpu_custom_call.1} parent=0
    _
  %s10 = ssub.s32 1, %s8
  %s11 = scalar_select 0, %s10, %s8
  // Predicated region
  $region2: #{tpu_custom_call.1} parent=0 // pred_check
    _
  $region3: #{tpu_custom_call.1} parent=0 // pred_check_branch
    %13 = sbr.rel (0) target = $region5
  $region4: #{tpu_custom_call.1} parent=0 // pred_region
    _
  $region5: #{tpu_custom_call.1} parent=0 // pred_fallthru
    _
  // Predicated region
  $region6: #{tpu_custom_call.1} parent=0 // pred_check
    _
  $region7: #{tpu_custom_call.1} parent=0 // pred_check_branch
    %15 = sbr.rel (0) target = $region9
  $region8: #{tpu_custom_call.1} parent=0 // pred_region
    _
  $region9: #{tpu_custom_call.1} parent=0 // pred_fallthru
    _
  // Predicated region
  $region10: #{tpu_custom_call.1} parent=0 // pred_check
    _
  $region11: #{tpu_custom_call.1} parent=0 // pred_check_branch
    %17 = sbr.rel (0) target = $region13
  $region12: #{tpu_custom_call.1} parent=0 // pred_region
    _
  $region13: #{tpu_custom_call.1} parent=0 // pred_fallthru
    _
  // Predicated region
  $region14: #{tpu_custom_call.1} parent=0 // pred_check
    _
  $region15: #{tpu_custom_call.1} parent=0 // pred_check_branch
    %19 = sbr.rel (0) target = $region17
  $region16: #{tpu_custom_call.1} parent=0 // pred_region
    _
  $region17: #{tpu_custom_call.1} parent=0 // pred_fallthru
    _
  // Predicated region
  $region18: #{tpu_custom_call.1} parent=0 // pred_check
    _
  $region19: #{tpu_custom_call.1} parent=0 // pred_check_branch
    %21 = sbr.rel (0) target = $region21
  $region20: #{tpu_custom_call.1} parent=0 // pred_region
    _
  $region21: #{tpu_custom_call.1} parent=0 // pred_fallthru
    _
  // Predicated region
  $region22: #{tpu_custom_call.1} parent=0 // pred_check
    _
  $region23: #{tpu_custom_call.1} parent=0 // pred_check_branch
    %23 = sbr.rel (0) target = $region25
  $region24: #{tpu_custom_call.1} parent=0 // pred_region
    _
  $region25: #{tpu_custom_call.1} parent=0 // pred_fallthru
    _
  // Predicated region
  $region26: #{tpu_custom_call.1} parent=0 // pred_check
    _
  $region27: #{tpu_custom_call.1} parent=0 // pred_check_branch
    %25 = sbr.rel (0) target = $region29
  $region28: #{tpu_custom_call.1} parent=0 // pred_region
    _
  $region29: #{tpu_custom_call.1} parent=0 // pred_fallthru
    _
  %v27 = vlaneseq
  %v28 = vshrl.u32 %v27, 7
  %v29 = vadd.s32 %v28, 8
  %v30 = vadd.s32 %v28, 16
  %v31 = vadd.s32 %v28, 24
  %v32 = vadd.s32 %v28, 32
  %v33 = vadd.s32 %v28, 40
  %v34 = vadd.s32 %v28, 48
  %v35 = vadd.s32 %v28, 56
  %v36 = vadd.s32 %v28, 64
  %v37 = vadd.s32 %v28, 72
  %v38 = vadd.s32 %v28, 80
  %v39 = vadd.s32 %v28, 88
  %v40 = vadd.s32 %v28, 96
  %v41 = vadd.s32 %v28, 104
  %v42 = vadd.s32 %v28, 112
  %v43 = vadd.s32 %v28, 120
  %v44 = vadd.s32 %v28, 128
  %v45 = vadd.s32 %v28, 136
  %v46 = vadd.s32 %v28, 144
  %v47 = vadd.s32 %v28, 152
  %v48 = vadd.s32 %v28, 160
  %v49 = vadd.s32 %v28, 168
  %v50 = vadd.s32 %v28, 176
  %v51 = vadd.s32 %v28, 184
  %v52 = vadd.s32 %v28, 192
  %v53 = vadd.s32 %v28, 200
  %v54 = vadd.s32 %v28, 208
  %v55 = vadd.s32 %v28, 216
  %v56 = vadd.s32 %v28, 224
  %v57 = vadd.s32 %v28, 232
  %v58 = vadd.s32 %v28, 240
  %v59 = vadd.s32 %v28, 248
  %v60 = vadd.s32 %v28, 256
  %v61 = vadd.s32 %v28, 264
  %v62 = vadd.s32 %v28, 272
  %v63 = vadd.s32 %v28, 280
  %vm64 = vcmp.lt.s32.totalorder %v28, 0
  %v65 = vsub.s32 0, %v28
  %v66 = vsel %vm64, %v65, %v28
  %v67 = vshrl.u32 %v66, 4
  %v68 = vand.u32 %v66, 15
  %v69 = vsub.s32 0, %v68
  %v70 = vsel %vm64, %v69, %v68
  %vm71 = vcmp.lt.s32.totalorder %v29, 0
  %v72 = vsub.s32 0, %v29
  %v73 = vsel %vm71, %v72, %v29
  %v74 = vshrl.u32 %v73, 4
  %v75 = vand.u32 %v73, 15
  %v76 = vsub.s32 0, %v75
  %v77 = vsel %vm71, %v76, %v75
  %vm78 = vcmp.lt.s32.totalorder %v30, 0
  %v79 = vsub.s32 0, %v30
  %v80 = vsel %vm78, %v79, %v30
  %v81 = vshrl.u32 %v80, 4
  %v82 = vand.u32 %v80, 15
  %v83 = vsub.s32 0, %v82
  %v84 = vsel %vm78, %v83, %v82
  %vm85 = vcmp.lt.s32.totalorder %v31, 0
  %v86 = vsub.s32 0, %v31
  %v87 = vsel %vm85, %v86, %v31
  %v88 = vshrl.u32 %v87, 4
  %v89 = vand.u32 %v87, 15
  %v90 = vsub.s32 0, %v89
  %v91 = vsel %vm85, %v90, %v89
  %vm92 = vcmp.lt.s32.totalorder %v32, 0
  %v93 = vsub.s32 0, %v32
  %v94 = vsel %vm92, %v93, %v32
  %v95 = vshrl.u32 %v94, 4
  %v96 = vand.u32 %v94, 15
  %v97 = vsub.s32 0, %v96
  %v98 = vsel %vm92, %v97, %v96
  %vm99 = vcmp.lt.s32.totalorder %v33, 0
  %v100 = vsub.s32 0, %v33
  %v101 = vsel %vm99, %v100, %v33
  %v102 = vshrl.u32 %v101, 4
  %v103 = vand.u32 %v101, 15
  %v104 = vsub.s32 0, %v103
  %v105 = vsel %vm99, %v104, %v103
  %vm106 = vcmp.lt.s32.totalorder %v34, 0
  %v107 = vsub.s32 0, %v34
  %v108 = vsel %vm106, %v107, %v34
  %v109 = vshrl.u32 %v108, 4
  %v110 = vand.u32 %v108, 15
  %v111 = vsub.s32 0, %v110
  %v112 = vsel %vm106, %v111, %v110
  %vm113 = vcmp.lt.s32.totalorder %v35, 0
  %v114 = vsub.s32 0, %v35
  %v115 = vsel %vm113, %v114, %v35
  %v116 = vshrl.u32 %v115, 4
  %v117 = vand.u32 %v115, 15
  %v118 = vsub.s32 0, %v117
  %v119 = vsel %vm113, %v118, %v117
  %vm120 = vcmp.lt.s32.totalorder %v36, 0
  %v121 = vsub.s32 0, %v36
  %v122 = vsel %vm120, %v121, %v36
  %v123 = vshrl.u32 %v122, 4
  %v124 = vand.u32 %v122, 15
  %v125 = vsub.s32 0, %v124
  %v126 = vsel %vm120, %v125, %v124
  %vm127 = vcmp.lt.s32.totalorder %v37, 0
  %v128 = vsub.s32 0, %v37
  %v129 = vsel %vm127, %v128, %v37
  %v130 = vshrl.u32 %v129, 4
  %v131 = vand.u32 %v129, 15
  %v132 = vsub.s32 0, %v131
  %v133 = vsel %vm127, %v132, %v131
  %vm134 = vcmp.lt.s32.totalorder %v38, 0
  %v135 = vsub.s32 0, %v38
  %v136 = vsel %vm134, %v135, %v38
  %v137 = vshrl.u32 %v136, 4
  %v138 = vand.u32 %v136, 15
  %v139 = vsub.s32 0, %v138
  %v140 = vsel %vm134, %v139, %v138
  %vm141 = vcmp.lt.s32.totalorder %v39, 0
  %v142 = vsub.s32 0, %v39
  %v143 = vsel %vm141, %v142, %v39
  %v144 = vshrl.u32 %v143, 4
  %v145 = vand.u32 %v143, 15
  %v146 = vsub.s32 0, %v145
  %v147 = vsel %vm141, %v146, %v145
  %vm148 = vcmp.lt.s32.totalorder %v40, 0
  %v149 = vsub.s32 0, %v40
  %v150 = vsel %vm148, %v149, %v40
  %v151 = vshrl.u32 %v150, 4
  %v152 = vand.u32 %v150, 15
  %v153 = vsub.s32 0, %v152
  %v154 = vsel %vm148, %v153, %v152
  %vm155 = vcmp.lt.s32.totalorder %v41, 0
  %v156 = vsub.s32 0, %v41
  %v157 = vsel %vm155, %v156, %v41
  %v158 = vshrl.u32 %v157, 4
  %v159 = vand.u32 %v157, 15
  %v160 = vsub.s32 0, %v159
  %v161 = vsel %vm155, %v160, %v159
  %vm162 = vcmp.lt.s32.totalorder %v42, 0
  %v163 = vsub.s32 0, %v42
  %v164 = vsel %vm162, %v163, %v42
  %v165 = vshrl.u32 %v164, 4
  %v166 = vand.u32 %v164, 15
  %v167 = vsub.s32 0, %v166
  %v168 = vsel %vm162, %v167, %v166
  %vm169 = vcmp.lt.s32.totalorder %v43, 0
  %v170 = vsub.s32 0, %v43
  %v171 = vsel %vm169, %v170, %v43
  %v172 = vshrl.u32 %v171, 4
  %v173 = vand.u32 %v171, 15
  %v174 = vsub.s32 0, %v173
  %v175 = vsel %vm169, %v174, %v173
  %vm176 = vcmp.lt.s32.totalorder %v44, 0
  %v177 = vsub.s32 0, %v44
  %v178 = vsel %vm176, %v177, %v44
  %v179 = vshrl.u32 %v178, 4
  %v180 = vand.u32 %v178, 15
  %v181 = vsub.s32 0, %v180
  %v182 = vsel %vm176, %v181, %v180
  %vm183 = vcmp.lt.s32.totalorder %v45, 0
  %v184 = vsub.s32 0, %v45
  %v185 = vsel %vm183, %v184, %v45
  %v186 = vshrl.u32 %v185, 4
  %v187 = vand.u32 %v185, 15
  %v188 = vsub.s32 0, %v187
  %v189 = vsel %vm183, %v188, %v187
  %vm190 = vcmp.lt.s32.totalorder %v46, 0
  %v191 = vsub.s32 0, %v46
  %v192 = vsel %vm190, %v191, %v46
  %v193 = vshrl.u32 %v192, 4
  %v194 = vand.u32 %v192, 15
  %v195 = vsub.s32 0, %v194
  %v196 = vsel %vm190, %v195, %v194
  %vm197 = vcmp.lt.s32.totalorder %v47, 0
  %v198 = vsub.s32 0, %v47
  %v199 = vsel %vm197, %v198, %v47
  %v200 = vshrl.u32 %v199, 4
  %v201 = vand.u32 %v199, 15
  %v202 = vsub.s32 0, %v201
  %v203 = vsel %vm197, %v202, %v201
  %vm204 = vcmp.lt.s32.totalorder %v48, 0
  %v205 = vsub.s32 0, %v48
  %v206 = vsel %vm204, %v205, %v48
  %v207 = vshrl.u32 %v206, 4
  %v208 = vand.u32 %v206, 15
  %v209 = vsub.s32 0, %v208
  %v210 = vsel %vm204, %v209, %v208
  %vm211 = vcmp.lt.s32.totalorder %v49, 0
  %v212 = vsub.s32 0, %v49
  %v213 = vsel %vm211, %v212, %v49
  %v214 = vshrl.u32 %v213, 4
  %v215 = vand.u32 %v213, 15
  %v216 = vsub.s32 0, %v215
  %v217 = vsel %vm211, %v216, %v215
  %vm218 = vcmp.lt.s32.totalorder %v50, 0
  %v219 = vsub.s32 0, %v50
  %v220 = vsel %vm218, %v219, %v50
  %v221 = vshrl.u32 %v220, 4
  %v222 = vand.u32 %v220, 15
  %v223 = vsub.s32 0, %v222
  %v224 = vsel %vm218, %v223, %v222
  %vm225 = vcmp.lt.s32.totalorder %v51, 0
  %v226 = vsub.s32 0, %v51
  %v227 = vsel %vm225, %v226, %v51
  %v228 = vshrl.u32 %v227, 4
  %v229 = vand.u32 %v227, 15
  %v230 = vsub.s32 0, %v229
  %v231 = vsel %vm225, %v230, %v229
  %vm232 = vcmp.lt.s32.totalorder %v52, 0
  %v233 = vsub.s32 0, %v52
  %v234 = vsel %vm232, %v233, %v52
  %v235 = vshrl.u32 %v234, 4
  %v236 = vand.u32 %v234, 15
  %v237 = vsub.s32 0, %v236
  %v238 = vsel %vm232, %v237, %v236
  %vm239 = vcmp.lt.s32.totalorder %v53, 0
  %v240 = vsub.s32 0, %v53
  %v241 = vsel %vm239, %v240, %v53
  %v242 = vshrl.u32 %v241, 4
  %v243 = vand.u32 %v241, 15
  %v244 = vsub.s32 0, %v243
  %v245 = vsel %vm239, %v244, %v243
  %vm246 = vcmp.lt.s32.totalorder %v54, 0
  %v247 = vsub.s32 0, %v54
  %v248 = vsel %vm246, %v247, %v54
  %v249 = vshrl.u32 %v248, 4
  %v250 = vand.u32 %v248, 15
  %v251 = vsub.s32 0, %v250
  %v252 = vsel %vm246, %v251, %v250
  %vm253 = vcmp.lt.s32.totalorder %v55, 0
  %v254 = vsub.s32 0, %v55
  %v255 = vsel %vm253, %v254, %v55
  %v256 = vshrl.u32 %v255, 4
  %v257 = vand.u32 %v255, 15
  %v258 = vsub.s32 0, %v257
  %v259 = vsel %vm253, %v258, %v257
  %vm260 = vcmp.lt.s32.totalorder %v56, 0
  %v261 = vsub.s32 0, %v56
  %v262 = vsel %vm260, %v261, %v56
  %v263 = vshrl.u32 %v262, 4
  %v264 = vand.u32 %v262, 15
  %v265 = vsub.s32 0, %v264
  %v266 = vsel %vm260, %v265, %v264
  %vm267 = vcmp.lt.s32.totalorder %v57, 0
  %v268 = vsub.s32 0, %v57
  %v269 = vsel %vm267, %v268, %v57
  %v270 = vshrl.u32 %v269, 4
  %v271 = vand.u32 %v269, 15
  %v272 = vsub.s32 0, %v271
  %v273 = vsel %vm267, %v272, %v271
  %vm274 = vcmp.lt.s32.totalorder %v58, 0
  %v275 = vsub.s32 0, %v58
  %v276 = vsel %vm274, %v275, %v58
  %v277 = vshrl.u32 %v276, 4
  %v278 = vand.u32 %v276, 15
  %v279 = vsub.s32 0, %v278
  %v280 = vsel %vm274, %v279, %v278
  %vm281 = vcmp.lt.s32.totalorder %v59, 0
  %v282 = vsub.s32 0, %v59
  %v283 = vsel %vm281, %v282, %v59
  %v284 = vshrl.u32 %v283, 4
  %v285 = vand.u32 %v283, 15
  %v286 = vsub.s32 0, %v285
  %v287 = vsel %vm281, %v286, %v285
  %vm288 = vcmp.lt.s32.totalorder %v60, 0
  %v289 = vsub.s32 0, %v60
  %v290 = vsel %vm288, %v289, %v60
  %v291 = vshrl.u32 %v290, 4
  %v292 = vand.u32 %v290, 15
  %v293 = vsub.s32 0, %v292
  %v294 = vsel %vm288, %v293, %v292
  %vm295 = vcmp.lt.s32.totalorder %v61, 0
  %v296 = vsub.s32 0, %v61
  %v297 = vsel %vm295, %v296, %v61
  %v298 = vshrl.u32 %v297, 4
  %v299 = vand.u32 %v297, 15
  %v300 = vsub.s32 0, %v299
  %v301 = vsel %vm295, %v300, %v299
  %vm302 = vcmp.lt.s32.totalorder %v62, 0
  %v303 = vsub.s32 0, %v62
  %v304 = vsel %vm302, %v303, %v62
  %v305 = vshrl.u32 %v304, 4
  %v306 = vand.u32 %v304, 15
  %v307 = vsub.s32 0, %v306
  %v308 = vsel %vm302, %v307, %v306
  %vm309 = vcmp.lt.s32.totalorder %v63, 0
  %v310 = vsub.s32 0, %v63
  %v311 = vsel %vm309, %v310, %v63
  %v312 = vshrl.u32 %v311, 4
  %v313 = vand.u32 %v311, 15
  %v314 = vsub.s32 0, %v313
  %v315 = vsel %vm309, %v314, %v313
  %vm316 = vcmp.ne.s32.totalorder %v70, 0
  %vm317 = vcmp.ne.s32.totalorder %v77, 0
  %vm318 = vcmp.ne.s32.totalorder %v84, 0
  %vm319 = vcmp.ne.s32.totalorder %v91, 0
  %vm320 = vcmp.ne.s32.totalorder %v98, 0
  %vm321 = vcmp.ne.s32.totalorder %v105, 0
  %vm322 = vcmp.ne.s32.totalorder %v112, 0
  %vm323 = vcmp.ne.s32.totalorder %v119, 0
  %vm324 = vcmp.ne.s32.totalorder %v126, 0
  %vm325 = vcmp.ne.s32.totalorder %v133, 0
  %vm326 = vcmp.ne.s32.totalorder %v140, 0
  %vm327 = vcmp.ne.s32.totalorder %v147, 0
  %vm328 = vcmp.ne.s32.totalorder %v154, 0
  %vm329 = vcmp.ne.s32.totalorder %v161, 0
  %vm330 = vcmp.ne.s32.totalorder %v168, 0
  %vm331 = vcmp.ne.s32.totalorder %v175, 0
  %vm332 = vcmp.ne.s32.totalorder %v182, 0
  %vm333 = vcmp.ne.s32.totalorder %v189, 0
  %vm334 = vcmp.ne.s32.totalorder %v196, 0
  %vm335 = vcmp.ne.s32.totalorder %v203, 0
  %vm336 = vcmp.ne.s32.totalorder %v210, 0
  %vm337 = vcmp.ne.s32.totalorder %v217, 0
  %vm338 = vcmp.ne.s32.totalorder %v224, 0
  %vm339 = vcmp.ne.s32.totalorder %v231, 0
  %vm340 = vcmp.ne.s32.totalorder %v238, 0
  %vm341 = vcmp.ne.s32.totalorder %v245, 0
  %vm342 = vcmp.ne.s32.totalorder %v252, 0
  %vm343 = vcmp.ne.s32.totalorder %v259, 0
  %vm344 = vcmp.ne.s32.totalorder %v266, 0
  %vm345 = vcmp.ne.s32.totalorder %v273, 0
  %vm346 = vcmp.ne.s32.totalorder %v280, 0
  %vm347 = vcmp.ne.s32.totalorder %v287, 0
  %vm348 = vcmp.ne.s32.totalorder %v294, 0
  %vm349 = vcmp.ne.s32.totalorder %v301, 0
  %vm350 = vcmp.ne.s32.totalorder %v308, 0
  %vm351 = vcmp.ne.s32.totalorder %v315, 0
  %vm352 = vcmp.lt.s32.totalorder %v70, 0
  %vm353 = vcmp.lt.s32.totalorder %v77, 0
  %vm354 = vcmp.lt.s32.totalorder %v84, 0
  %vm355 = vcmp.lt.s32.totalorder %v91, 0
  %vm356 = vcmp.lt.s32.totalorder %v98, 0
  %vm357 = vcmp.lt.s32.totalorder %v105, 0
  %vm358 = vcmp.lt.s32.totalorder %v112, 0
  %vm359 = vcmp.lt.s32.totalorder %v119, 0
  %vm360 = vcmp.lt.s32.totalorder %v126, 0
  %vm361 = vcmp.lt.s32.totalorder %v133, 0
  %vm362 = vcmp.lt.s32.totalorder %v140, 0
  %vm363 = vcmp.lt.s32.totalorder %v147, 0
  %vm364 = vcmp.lt.s32.totalorder %v154, 0
  %vm365 = vcmp.lt.s32.totalorder %v161, 0
  %vm366 = vcmp.lt.s32.totalorder %v168, 0
  %vm367 = vcmp.lt.s32.totalorder %v175, 0
  %vm368 = vcmp.lt.s32.totalorder %v182, 0
  %vm369 = vcmp.lt.s32.totalorder %v189, 0
  %vm370 = vcmp.lt.s32.totalorder %v196, 0
  %vm371 = vcmp.lt.s32.totalorder %v203, 0
  %vm372 = vcmp.lt.s32.totalorder %v210, 0
  %vm373 = vcmp.lt.s32.totalorder %v217, 0
  %vm374 = vcmp.lt.s32.totalorder %v224, 0
  %vm375 = vcmp.lt.s32.totalorder %v231, 0
  %vm376 = vcmp.lt.s32.totalorder %v238, 0
  %vm377 = vcmp.lt.s32.totalorder %v245, 0
  %vm378 = vcmp.lt.s32.totalorder %v252, 0
  %vm379 = vcmp.lt.s32.totalorder %v259, 0
  %vm380 = vcmp.lt.s32.totalorder %v266, 0
  %vm381 = vcmp.lt.s32.totalorder %v273, 0
  %vm382 = vcmp.lt.s32.totalorder %v280, 0
  %vm383 = vcmp.lt.s32.totalorder %v287, 0
  %vm384 = vcmp.lt.s32.totalorder %v294, 0
  %vm385 = vcmp.lt.s32.totalorder %v301, 0
  %vm386 = vcmp.lt.s32.totalorder %v308, 0
  %vm387 = vcmp.lt.s32.totalorder %v315, 0
  %vm388 = vmand %vm352, %vm316
  %vm389 = vmand %vm353, %vm317
  %vm390 = vmand %vm354, %vm318
  %vm391 = vmand %vm355, %vm319
  %vm392 = vmand %vm356, %vm320
  %vm393 = vmand %vm357, %vm321
  %vm394 = vmand %vm358, %vm322
  %vm395 = vmand %vm359, %vm323
  %vm396 = vmand %vm360, %vm324
  %vm397 = vmand %vm361, %vm325
  %vm398 = vmand %vm362, %vm326
  %vm399 = vmand %vm363, %vm327
  %vm400 = vmand %vm364, %vm328
  %vm401 = vmand %vm365, %vm329
  %vm402 = vmand %vm366, %vm330
  %vm403 = vmand %vm367, %vm331
  %vm404 = vmand %vm368, %vm332
  %vm405 = vmand %vm369, %vm333
  %vm406 = vmand %vm370, %vm334
  %vm407 = vmand %vm371, %vm335
  %vm408 = vmand %vm372, %vm336
  %vm409 = vmand %vm373, %vm337
  %vm410 = vmand %vm374, %vm338
  %vm411 = vmand %vm375, %vm339
  %vm412 = vmand %vm376, %vm340
  %vm413 = vmand %vm377, %vm341
  %vm414 = vmand %vm378, %vm342
  %vm415 = vmand %vm379, %vm343
  %vm416 = vmand %vm380, %vm344
  %vm417 = vmand %vm381, %vm345
  %vm418 = vmand %vm382, %vm346
  %vm419 = vmand %vm383, %vm347
  %vm420 = vmand %vm384, %vm348
  %vm421 = vmand %vm385, %vm349
  %vm422 = vmand %vm386, %vm350
  %vm423 = vmand %vm387, %vm351
  %v424 = vadd.s32 %v70, 16
  %v425 = vadd.s32 %v77, 16
  %v426 = vadd.s32 %v84, 16
  %v427 = vadd.s32 %v91, 16
  %v428 = vadd.s32 %v98, 16
  %v429 = vadd.s32 %v105, 16
  %v430 = vadd.s32 %v112, 16
  %v431 = vadd.s32 %v119, 16
  %v432 = vadd.s32 %v126, 16
  %v433 = vadd.s32 %v133, 16
  %v434 = vadd.s32 %v140, 16
  %v435 = vadd.s32 %v147, 16
  %v436 = vadd.s32 %v154, 16
  %v437 = vadd.s32 %v161, 16
  %v438 = vadd.s32 %v168, 16
  %v439 = vadd.s32 %v175, 16
  %v440 = vadd.s32 %v182, 16
  %v441 = vadd.s32 %v189, 16
  %v442 = vadd.s32 %v196, 16
  %v443 = vadd.s32 %v203, 16
  %v444 = vadd.s32 %v210, 16
  %v445 = vadd.s32 %v217, 16
  %v446 = vadd.s32 %v224, 16
  %v447 = vadd.s32 %v231, 16
  %v448 = vadd.s32 %v238, 16
  %v449 = vadd.s32 %v245, 16
  %v450 = vadd.s32 %v252, 16
  %v451 = vadd.s32 %v259, 16
  %v452 = vadd.s32 %v266, 16
  %v453 = vadd.s32 %v273, 16
  %v454 = vadd.s32 %v280, 16
  %v455 = vadd.s32 %v287, 16
  %v456 = vadd.s32 %v294, 16
  %v457 = vadd.s32 %v301, 16
  %v458 = vadd.s32 %v308, 16
  %v459 = vadd.s32 %v315, 16
  %v460 = vsel %vm388, %v424, %v70
  %v461 = vsel %vm389, %v425, %v77
  %v462 = vsel %vm390, %v426, %v84
  %v463 = vsel %vm391, %v427, %v91
  %v464 = vsel %vm392, %v428, %v98
  %v465 = vsel %vm393, %v429, %v105
  %v466 = vsel %vm394, %v430, %v112
  %v467 = vsel %vm395, %v431, %v119
  %v468 = vsel %vm396, %v432, %v126
  %v469 = vsel %vm397, %v433, %v133
  %v470 = vsel %vm398, %v434, %v140
  %v471 = vsel %vm399, %v435, %v147
  %v472 = vsel %vm400, %v436, %v154
  %v473 = vsel %vm401, %v437, %v161
  %v474 = vsel %vm402, %v438, %v168
  %v475 = vsel %vm403, %v439, %v175
  %v476 = vsel %vm404, %v440, %v182
  %v477 = vsel %vm405, %v441, %v189
  %v478 = vsel %vm406, %v442, %v196
  %v479 = vsel %vm407, %v443, %v203
  %v480 = vsel %vm408, %v444, %v210
  %v481 = vsel %vm409, %v445, %v217
  %v482 = vsel %vm410, %v446, %v224
  %v483 = vsel %vm411, %v447, %v231
  %v484 = vsel %vm412, %v448, %v238
  %v485 = vsel %vm413, %v449, %v245
  %v486 = vsel %vm414, %v450, %v252
  %v487 = vsel %vm415, %v451, %v259
  %v488 = vsel %vm416, %v452, %v266
  %v489 = vsel %vm417, %v453, %v273
  %v490 = vsel %vm418, %v454, %v280
  %v491 = vsel %vm419, %v455, %v287
  %v492 = vsel %vm420, %v456, %v294
  %v493 = vsel %vm421, %v457, %v301
  %v494 = vsel %vm422, %v458, %v308
  %v495 = vsel %vm423, %v459, %v315
  %vm496 = vcmp.gt.s32.totalorder %v460, 0
  %vm497 = vcmp.gt.s32.totalorder %v461, 0
  %vm498 = vcmp.gt.s32.totalorder %v462, 0
  %vm499 = vcmp.gt.s32.totalorder %v463, 0
  %vm500 = vcmp.gt.s32.totalorder %v464, 0
  %vm501 = vcmp.gt.s32.totalorder %v465, 0
  %vm502 = vcmp.gt.s32.totalorder %v466, 0
  %vm503 = vcmp.gt.s32.totalorder %v467, 0
  %vm504 = vcmp.gt.s32.totalorder %v468, 0
  %vm505 = vcmp.gt.s32.totalorder %v469, 0
  %vm506 = vcmp.gt.s32.totalorder %v470, 0
  %vm507 = vcmp.gt.s32.totalorder %v471, 0
  %vm508 = vcmp.gt.s32.totalorder %v472, 0
  %vm509 = vcmp.gt.s32.totalorder %v473, 0
  %vm510 = vcmp.gt.s32.totalorder %v474, 0
  %vm511 = vcmp.gt.s32.totalorder %v475, 0
  %vm512 = vcmp.gt.s32.totalorder %v476, 0
  %vm513 = vcmp.gt.s32.totalorder %v477, 0
  %vm514 = vcmp.gt.s32.totalorder %v478, 0
  %vm515 = vcmp.gt.s32.totalorder %v479, 0
  %vm516 = vcmp.gt.s32.totalorder %v480, 0
  %vm517 = vcmp.gt.s32.totalorder %v481, 0
  %vm518 = vcmp.gt.s32.totalorder %v482, 0
  %vm519 = vcmp.gt.s32.totalorder %v483, 0
  %vm520 = vcmp.gt.s32.totalorder %v484, 0
  %vm521 = vcmp.gt.s32.totalorder %v485, 0
  %vm522 = vcmp.gt.s32.totalorder %v486, 0
  %vm523 = vcmp.gt.s32.totalorder %v487, 0
  %vm524 = vcmp.gt.s32.totalorder %v488, 0
  %vm525 = vcmp.gt.s32.totalorder %v489, 0
  %vm526 = vcmp.gt.s32.totalorder %v490, 0
  %vm527 = vcmp.gt.s32.totalorder %v491, 0
  %vm528 = vcmp.gt.s32.totalorder %v492, 0
  %vm529 = vcmp.gt.s32.totalorder %v493, 0
  %vm530 = vcmp.gt.s32.totalorder %v494, 0
  %vm531 = vcmp.gt.s32.totalorder %v495, 0
  %v532 = vsel %vm496, 1, 0
  %v533 = vsel %vm497, 1, 0
  %v534 = vsel %vm498, 1, 0
  %v535 = vsel %vm499, 1, 0
  %v536 = vsel %vm500, 1, 0
  %v537 = vsel %vm501, 1, 0
  %v538 = vsel %vm502, 1, 0
  %v539 = vsel %vm503, 1, 0
  %v540 = vsel %vm504, 1, 0
  %v541 = vsel %vm505, 1, 0
  %v542 = vsel %vm506, 1, 0
  %v543 = vsel %vm507, 1, 0
  %v544 = vsel %vm508, 1, 0
  %v545 = vsel %vm509, 1, 0
  %v546 = vsel %vm510, 1, 0
  %v547 = vsel %vm511, 1, 0
  %v548 = vsel %vm512, 1, 0
  %v549 = vsel %vm513, 1, 0
  %v550 = vsel %vm514, 1, 0
  %v551 = vsel %vm515, 1, 0
  %v552 = vsel %vm516, 1, 0
  %v553 = vsel %vm517, 1, 0
  %v554 = vsel %vm518, 1, 0
  %v555 = vsel %vm519, 1, 0
  %v556 = vsel %vm520, 1, 0
  %v557 = vsel %vm521, 1, 0
  %v558 = vsel %vm522, 1, 0
  %v559 = vsel %vm523, 1, 0
  %v560 = vsel %vm524, 1, 0
  %v561 = vsel %vm525, 1, 0
  %v562 = vsel %vm526, 1, 0
  %v563 = vsel %vm527, 1, 0
  %v564 = vsel %vm528, 1, 0
  %v565 = vsel %vm529, 1, 0
  %v566 = vsel %vm530, 1, 0
  %v567 = vsel %vm531, 1, 0
  %v568 = vcvt.s32.f32 %v532
  %v569 = vcvt.s32.f32 %v533
  %v570 = vcvt.s32.f32 %v534
  %v571 = vcvt.s32.f32 %v535
  %v572 = vcvt.s32.f32 %v536
  %v573 = vcvt.s32.f32 %v537
  %v574 = vcvt.s32.f32 %v538
  %v575 = vcvt.s32.f32 %v539
  %v576 = vcvt.s32.f32 %v540
  %v577 = vcvt.s32.f32 %v541
  %v578 = vcvt.s32.f32 %v542
  %v579 = vcvt.s32.f32 %v543
  %v580 = vcvt.s32.f32 %v544
  %v581 = vcvt.s32.f32 %v545
  %v582 = vcvt.s32.f32 %v546
  %v583 = vcvt.s32.f32 %v547
  %v584 = vcvt.s32.f32 %v548
  %v585 = vcvt.s32.f32 %v549
  %v586 = vcvt.s32.f32 %v550
  %v587 = vcvt.s32.f32 %v551
  %v588 = vcvt.s32.f32 %v552
  %v589 = vcvt.s32.f32 %v553
  %v590 = vcvt.s32.f32 %v554
  %v591 = vcvt.s32.f32 %v555
  %v592 = vcvt.s32.f32 %v556
  %v593 = vcvt.s32.f32 %v557
  %v594 = vcvt.s32.f32 %v558
  %v595 = vcvt.s32.f32 %v559
  %v596 = vcvt.s32.f32 %v560
  %v597 = vcvt.s32.f32 %v561
  %v598 = vcvt.s32.f32 %v562
  %v599 = vcvt.s32.f32 %v563
  %v600 = vcvt.s32.f32 %v564
  %v601 = vcvt.s32.f32 %v565
  %v602 = vcvt.s32.f32 %v566
  %v603 = vcvt.s32.f32 %v567
  %vm604 = vcmp.lt.s32.totalorder %v460, 15
  %vm605 = vcmp.lt.s32.totalorder %v461, 15
  %vm606 = vcmp.lt.s32.totalorder %v462, 15
  %vm607 = vcmp.lt.s32.totalorder %v463, 15
  %vm608 = vcmp.lt.s32.totalorder %v464, 15
  %vm609 = vcmp.lt.s32.totalorder %v465, 15
  %vm610 = vcmp.lt.s32.totalorder %v466, 15
  %vm611 = vcmp.lt.s32.totalorder %v467, 15
  %vm612 = vcmp.lt.s32.totalorder %v468, 15
  %vm613 = vcmp.lt.s32.totalorder %v469, 15
  %vm614 = vcmp.lt.s32.totalorder %v470, 15
  %vm615 = vcmp.lt.s32.totalorder %v471, 15
  %vm616 = vcmp.lt.s32.totalorder %v472, 15
  %vm617 = vcmp.lt.s32.totalorder %v473, 15
  %vm618 = vcmp.lt.s32.totalorder %v474, 15
  %vm619 = vcmp.lt.s32.totalorder %v475, 15
  %vm620 = vcmp.lt.s32.totalorder %v476, 15
  %vm621 = vcmp.lt.s32.totalorder %v477, 15
  %vm622 = vcmp.lt.s32.totalorder %v478, 15
  %vm623 = vcmp.lt.s32.totalorder %v479, 15
  %vm624 = vcmp.lt.s32.totalorder %v480, 15
  %vm625 = vcmp.lt.s32.totalorder %v481, 15
  %vm626 = vcmp.lt.s32.totalorder %v482, 15
  %vm627 = vcmp.lt.s32.totalorder %v483, 15
  %vm628 = vcmp.lt.s32.totalorder %v484, 15
  %vm629 = vcmp.lt.s32.totalorder %v485, 15
  %vm630 = vcmp.lt.s32.totalorder %v486, 15
  %vm631 = vcmp.lt.s32.totalorder %v487, 15
  %vm632 = vcmp.lt.s32.totalorder %v488, 15
  %vm633 = vcmp.lt.s32.totalorder %v489, 15
  %vm634 = vcmp.lt.s32.totalorder %v490, 15
  %vm635 = vcmp.lt.s32.totalorder %v491, 15
  %vm636 = vcmp.lt.s32.totalorder %v492, 15
  %vm637 = vcmp.lt.s32.totalorder %v493, 15
  %vm638 = vcmp.lt.s32.totalorder %v494, 15
  %vm639 = vcmp.lt.s32.totalorder %v495, 15
  %v640 = vsel %vm604, 1, 0
  %v641 = vsel %vm605, 1, 0
  %v642 = vsel %vm606, 1, 0
  %v643 = vsel %vm607, 1, 0
  %v644 = vsel %vm608, 1, 0
  %v645 = vsel %vm609, 1, 0
  %v646 = vsel %vm610, 1, 0
  %v647 = vsel %vm611, 1, 0
  %v648 = vsel %vm612, 1, 0
  %v649 = vsel %vm613, 1, 0
  %v650 = vsel %vm614, 1, 0
  %v651 = vsel %vm615, 1, 0
  %v652 = vsel %vm616, 1, 0
  %v653 = vsel %vm617, 1, 0
  %v654 = vsel %vm618, 1, 0
  %v655 = vsel %vm619, 1, 0
  %v656 = vsel %vm620, 1, 0
  %v657 = vsel %vm621, 1, 0
  %v658 = vsel %vm622, 1, 0
  %v659 = vsel %vm623, 1, 0
  %v660 = vsel %vm624, 1, 0
  %v661 = vsel %vm625, 1, 0
  %v662 = vsel %vm626, 1, 0
  %v663 = vsel %vm627, 1, 0
  %v664 = vsel %vm628, 1, 0
  %v665 = vsel %vm629, 1, 0
  %v666 = vsel %vm630, 1, 0
  %v667 = vsel %vm631, 1, 0
  %v668 = vsel %vm632, 1, 0
  %v669 = vsel %vm633, 1, 0
  %v670 = vsel %vm634, 1, 0
  %v671 = vsel %vm635, 1, 0
  %v672 = vsel %vm636, 1, 0
  %v673 = vsel %vm637, 1, 0
  %v674 = vsel %vm638, 1, 0
  %v675 = vsel %vm639, 1, 0
  %v676 = vcvt.s32.f32 %v640
  %v677 = vcvt.s32.f32 %v641
  %v678 = vcvt.s32.f32 %v642
  %v679 = vcvt.s32.f32 %v643
  %v680 = vcvt.s32.f32 %v644
  %v681 = vcvt.s32.f32 %v645
  %v682 = vcvt.s32.f32 %v646
  %v683 = vcvt.s32.f32 %v647
  %v684 = vcvt.s32.f32 %v648
  %v685 = vcvt.s32.f32 %v649
  %v686 = vcvt.s32.f32 %v650
  %v687 = vcvt.s32.f32 %v651
  %v688 = vcvt.s32.f32 %v652
  %v689 = vcvt.s32.f32 %v653
  %v690 = vcvt.s32.f32 %v654
  %v691 = vcvt.s32.f32 %v655
  %v692 = vcvt.s32.f32 %v656
  %v693 = vcvt.s32.f32 %v657
  %v694 = vcvt.s32.f32 %v658
  %v695 = vcvt.s32.f32 %v659
  %v696 = vcvt.s32.f32 %v660
  %v697 = vcvt.s32.f32 %v661
  %v698 = vcvt.s32.f32 %v662
  %v699 = vcvt.s32.f32 %v663
  %v700 = vcvt.s32.f32 %v664
  %v701 = vcvt.s32.f32 %v665
  %v702 = vcvt.s32.f32 %v666
  %v703 = vcvt.s32.f32 %v667
  %v704 = vcvt.s32.f32 %v668
  %v705 = vcvt.s32.f32 %v669
  %v706 = vcvt.s32.f32 %v670
  %v707 = vcvt.s32.f32 %v671
  %v708 = vcvt.s32.f32 %v672
  %v709 = vcvt.s32.f32 %v673
  %v710 = vcvt.s32.f32 %v674
  %v711 = vcvt.s32.f32 %v675
  %v712 = vld [vmem:[%s0] sm:$0xf]
  %v713 = vld [vmem:[%s0 + $0x4] sm:$0xf]
  %v714 = vld [vmem:[%s0 + $0x8] sm:$0xf]
  %v715 = vld [vmem:[%s0 + $0xc] sm:$0xf]
  %v716 = vld [vmem:[%s0 + $0x10] sm:$0xf]
  %v717 = vld [vmem:[%s0 + $0x14] sm:$0xf]
  %v718 = vld [vmem:[%s0 + $0x18] sm:$0xf]
  %v719 = vld [vmem:[%s0 + $0x1c] sm:$0xf]
  %v720 = vld [vmem:[%s0 + $0x20] sm:$0xf]
  %v721 = vld [vmem:[%s0 + $0x24] sm:$0xf]
  %v722 = vld [vmem:[%s0 + $0x28] sm:$0xf]
  %v723 = vld [vmem:[%s0 + $0x2c] sm:$0xf]
  %v724 = vld [vmem:[%s0 + $0x30] sm:$0xf]
  %v725 = vld [vmem:[%s0 + $0x34] sm:$0xf]
  %v726 = vld [vmem:[%s0 + $0x38] sm:$0xf]
  %v727 = vld [vmem:[%s0 + $0x3c] sm:$0xf]
  %v728 = vld [vmem:[%s0 + $0x40] sm:$0xf]
  %v729 = vld [vmem:[%s0 + $0x44] sm:$0xf]
  %v730 = vld [vmem:[%s0 + $0x48] sm:$0xf]
  %v731 = vld [vmem:[%s0 + $0x4c] sm:$0xf]
  %v732 = vld [vmem:[%s0 + $0x50] sm:$0xf]
  %v733 = vld [vmem:[%s0 + $0x54] sm:$0xf]
  %v734 = vld [vmem:[%s0 + $0x58] sm:$0xf]
  %v735 = vld [vmem:[%s0 + $0x5c] sm:$0xf]
  %v736 = vld [vmem:[%s0 + $0x60] sm:$0xf]
  %v737 = vld [vmem:[%s0 + $0x64] sm:$0xf]
  %v738 = vld [vmem:[%s0 + $0x68] sm:$0xf]
  %v739 = vld [vmem:[%s0 + $0x6c] sm:$0xf]
  %v740 = vld [vmem:[%s0 + $0x70] sm:$0xf]
  %v741 = vld [vmem:[%s0 + $0x74] sm:$0xf]
  %v742 = vld [vmem:[%s0 + $0x78] sm:$0xf]
  %v743 = vld [vmem:[%s0 + $0x7c] sm:$0xf]
  %vm744 = vsmask.f32 256
  %vm745 = vsmask.f32 4368
  %vm746 = vmor %vm744, %vm745
  %v748 = vshrl.u32 %v712, 16
  %v750 = vrot.slane %v748, 7
  %v751 = vshll.u32 %v712, 16
  %v753 = vor.u32 %v750, %v751
  %v754 = vrot.slane %v750, 4
  %v756 = vshrl.u32 %v713, 16
  %v758 = vrot.slane %v756, 7
  %v759 = vshll.u32 %v713, 16
  %v761 = vor.u32 %v758, %v759
  %v762 = vsel %vm746, %v754, %v761
  %v763 = vrot.slane %v758, 4
  %v765 = vshrl.u32 %v714, 16
  %v767 = vrot.slane %v765, 7
  %v768 = vshll.u32 %v714, 16
  %v770 = vor.u32 %v767, %v768
  %v771 = vsel %vm746, %v763, %v770
  %v772 = vrot.slane %v767, 4
  %v774 = vshrl.u32 %v715, 16
  %v776 = vrot.slane %v774, 7
  %v777 = vshll.u32 %v715, 16
  %v779 = vor.u32 %v776, %v777
  %v780 = vsel %vm746, %v772, %v779
  %v781 = vrot.slane %v776, 4
  %v783 = vshrl.u32 %v716, 16
  %v785 = vrot.slane %v783, 7
  %v786 = vshll.u32 %v716, 16
  %v788 = vor.u32 %v785, %v786
  %v789 = vsel %vm746, %v781, %v788
  %v790 = vrot.slane %v785, 4
  %v792 = vshrl.u32 %v717, 16
  %v794 = vrot.slane %v792, 7
  %v795 = vshll.u32 %v717, 16
  %v797 = vor.u32 %v794, %v795
  %v798 = vsel %vm746, %v790, %v797
  %v799 = vrot.slane %v794, 4
  %v801 = vshrl.u32 %v718, 16
  %v803 = vrot.slane %v801, 7
  %v804 = vshll.u32 %v718, 16
  %v806 = vor.u32 %v803, %v804
  %v807 = vsel %vm746, %v799, %v806
  %v808 = vrot.slane %v803, 4
  %v810 = vshrl.u32 %v719, 16
  %v812 = vrot.slane %v810, 7
  %v813 = vshll.u32 %v719, 16
  %v815 = vor.u32 %v812, %v813
  %v816 = vsel %vm746, %v808, %v815
  %v817 = vrot.slane %v812, 4
  %v819 = vshrl.u32 %v720, 16
  %v821 = vrot.slane %v819, 7
  %v822 = vshll.u32 %v720, 16
  %v824 = vor.u32 %v821, %v822
  %v825 = vsel %vm746, %v817, %v824
  %v826 = vrot.slane %v821, 4
  %v828 = vshrl.u32 %v721, 16
  %v830 = vrot.slane %v828, 7
  %v831 = vshll.u32 %v721, 16
  %v833 = vor.u32 %v830, %v831
  %v834 = vsel %vm746, %v826, %v833
  %v835 = vrot.slane %v830, 4
  %v837 = vshrl.u32 %v722, 16
  %v839 = vrot.slane %v837, 7
  %v840 = vshll.u32 %v722, 16
  %v842 = vor.u32 %v839, %v840
  %v843 = vsel %vm746, %v835, %v842
  %v844 = vrot.slane %v839, 4
  %v846 = vshrl.u32 %v723, 16
  %v848 = vrot.slane %v846, 7
  %v849 = vshll.u32 %v723, 16
  %v851 = vor.u32 %v848, %v849
  %v852 = vsel %vm746, %v844, %v851
  %v853 = vrot.slane %v848, 4
  %v855 = vshrl.u32 %v724, 16
  %v857 = vrot.slane %v855, 7
  %v858 = vshll.u32 %v724, 16
  %v860 = vor.u32 %v857, %v858
  %v861 = vsel %vm746, %v853, %v860
  %v862 = vrot.slane %v857, 4
  %v864 = vshrl.u32 %v725, 16
  %v866 = vrot.slane %v864, 7
  %v867 = vshll.u32 %v725, 16
  %v869 = vor.u32 %v866, %v867
  %v870 = vsel %vm746, %v862, %v869
  %v871 = vrot.slane %v866, 4
  %v873 = vshrl.u32 %v726, 16
  %v875 = vrot.slane %v873, 7
  %v876 = vshll.u32 %v726, 16
  %v878 = vor.u32 %v875, %v876
  %v879 = vsel %vm746, %v871, %v878
  %v880 = vrot.slane %v875, 4
  %v882 = vshrl.u32 %v727, 16
  %v884 = vrot.slane %v882, 7
  %v885 = vshll.u32 %v727, 16
  %v887 = vor.u32 %v884, %v885
  %v888 = vsel %vm746, %v880, %v887
  %v889 = vrot.slane %v884, 4
  %v891 = vshrl.u32 %v728, 16
  %v893 = vrot.slane %v891, 7
  %v894 = vshll.u32 %v728, 16
  %v896 = vor.u32 %v893, %v894
  %v897 = vsel %vm746, %v889, %v896
  %v898 = vrot.slane %v893, 4
  %v900 = vshrl.u32 %v729, 16
  %v902 = vrot.slane %v900, 7
  %v903 = vshll.u32 %v729, 16
  %v905 = vor.u32 %v902, %v903
  %v906 = vsel %vm746, %v898, %v905
  %v907 = vrot.slane %v902, 4
  %v909 = vshrl.u32 %v730, 16
  %v911 = vrot.slane %v909, 7
  %v912 = vshll.u32 %v730, 16
  %v914 = vor.u32 %v911, %v912
  %v915 = vsel %vm746, %v907, %v914
  %v916 = vrot.slane %v911, 4
  %v918 = vshrl.u32 %v731, 16
  %v920 = vrot.slane %v918, 7
  %v921 = vshll.u32 %v731, 16
  %v923 = vor.u32 %v920, %v921
  %v924 = vsel %vm746, %v916, %v923
  %v925 = vrot.slane %v920, 4
  %v927 = vshrl.u32 %v732, 16
  %v929 = vrot.slane %v927, 7
  %v930 = vshll.u32 %v732, 16
  %v932 = vor.u32 %v929, %v930
  %v933 = vsel %vm746, %v925, %v932
  %v934 = vrot.slane %v929, 4
  %v936 = vshrl.u32 %v733, 16
  %v938 = vrot.slane %v936, 7
  %v939 = vshll.u32 %v733, 16
  %v941 = vor.u32 %v938, %v939
  %v942 = vsel %vm746, %v934, %v941
  %v943 = vrot.slane %v938, 4
  %v945 = vshrl.u32 %v734, 16
  %v947 = vrot.slane %v945, 7
  %v948 = vshll.u32 %v734, 16
  %v950 = vor.u32 %v947, %v948
  %v951 = vsel %vm746, %v943, %v950
  %v952 = vrot.slane %v947, 4
  %v954 = vshrl.u32 %v735, 16
  %v956 = vrot.slane %v954, 7
  %v957 = vshll.u32 %v735, 16
  %v959 = vor.u32 %v956, %v957
  %v960 = vsel %vm746, %v952, %v959
  %v961 = vrot.slane %v956, 4
  %v963 = vshrl.u32 %v736, 16
  %v965 = vrot.slane %v963, 7
  %v966 = vshll.u32 %v736, 16
  %v968 = vor.u32 %v965, %v966
  %v969 = vsel %vm746, %v961, %v968
  %v970 = vrot.slane %v965, 4
  %v972 = vshrl.u32 %v737, 16
  %v974 = vrot.slane %v972, 7
  %v975 = vshll.u32 %v737, 16
  %v977 = vor.u32 %v974, %v975
  %v978 = vsel %vm746, %v970, %v977
  %v979 = vrot.slane %v974, 4
  %v981 = vshrl.u32 %v738, 16
  %v983 = vrot.slane %v981, 7
  %v984 = vshll.u32 %v738, 16
  %v986 = vor.u32 %v983, %v984
  %v987 = vsel %vm746, %v979, %v986
  %v988 = vrot.slane %v983, 4
  %v990 = vshrl.u32 %v739, 16
  %v992 = vrot.slane %v990, 7
  %v993 = vshll.u32 %v739, 16
  %v995 = vor.u32 %v992, %v993
  %v996 = vsel %vm746, %v988, %v995
  %v997 = vrot.slane %v992, 4
  %v999 = vshrl.u32 %v740, 16
  %v1001 = vrot.slane %v999, 7
  %v1002 = vshll.u32 %v740, 16
  %v1004 = vor.u32 %v1001, %v1002
  %v1005 = vsel %vm746, %v997, %v1004
  %v1006 = vrot.slane %v1001, 4
  %v1008 = vshrl.u32 %v741, 16
  %v1010 = vrot.slane %v1008, 7
  %v1011 = vshll.u32 %v741, 16
  %v1013 = vor.u32 %v1010, %v1011
  %v1014 = vsel %vm746, %v1006, %v1013
  %v1015 = vrot.slane %v1010, 4
  %v1017 = vshrl.u32 %v742, 16
  %v1019 = vrot.slane %v1017, 7
  %v1020 = vshll.u32 %v742, 16
  %v1022 = vor.u32 %v1019, %v1020
  %v1023 = vsel %vm746, %v1015, %v1022
  %v1024 = vrot.slane %v1019, 4
  %v1026 = vshrl.u32 %v743, 16
  %v1028 = vrot.slane %v1026, 7
  %v1029 = vshll.u32 %v743, 16
  %v1031 = vor.u32 %v1028, %v1029
  %v1032 = vsel %vm746, %v1024, %v1031
  %v1033 = vrot.slane %v1028, 4
  %vm1067 = vcmask 125952
  %vm1068 = vsmask.f32 7938
  %vm1069 = vmand %vm1067, %vm1068
  %v1070 = vld [vmem:[#allocation2 + $0x10] sm:$0xf]
  %v1071 = vsel %vm1069, %v753, %v1070
  %1072 = vst [vmem:[#allocation2 + $0x10] sm:$0xf] %v1071
  %vm1073 = vcmask 125952
  %1074 = vst.msk [vmem:[#allocation2 + $0x14] sm:$0xf] %vm1073, %v762
  %1075 = vst.msk [vmem:[#allocation2 + $0x18] sm:$0xf] %vm1073, %v771
  %1076 = vst.msk [vmem:[#allocation2 + $0x1c] sm:$0xf] %vm1073, %v780
  %1077 = vst.msk [vmem:[#allocation2 + $0x20] sm:$0xf] %vm1073, %v789
  %1078 = vst.msk [vmem:[#allocation2 + $0x24] sm:$0xf] %vm1073, %v798
  %1079 = vst.msk [vmem:[#allocation2 + $0x28] sm:$0xf] %vm1073, %v807
  %1080 = vst.msk [vmem:[#allocation2 + $0x2c] sm:$0xf] %vm1073, %v816
  %1081 = vst.msk [vmem:[#allocation2 + $0x30] sm:$0xf] %vm1073, %v825
  %1082 = vst.msk [vmem:[#allocation2 + $0x34] sm:$0xf] %vm1073, %v834
  %1083 = vst.msk [vmem:[#allocation2 + $0x38] sm:$0xf] %vm1073, %v843
  %1084 = vst.msk [vmem:[#allocation2 + $0x3c] sm:$0xf] %vm1073, %v852
  %1085 = vst.msk [vmem:[#allocation2 + $0x40] sm:$0xf] %vm1073, %v861
  %1086 = vst.msk [vmem:[#allocation2 + $0x44] sm:$0xf] %vm1073, %v870
  %1087 = vst.msk [vmem:[#allocation2 + $0x48] sm:$0xf] %vm1073, %v879
  %1088 = vst.msk [vmem:[#allocation2 + $0x4c] sm:$0xf] %vm1073, %v888
  %1089 = vst.msk [vmem:[#allocation2 + $0x50] sm:$0xf] %vm1073, %v897
  %1090 = vst.msk [vmem:[#allocation2 + $0x54] sm:$0xf] %vm1073, %v906
  %1091 = vst.msk [vmem:[#allocation2 + $0x58] sm:$0xf] %vm1073, %v915
  %1092 = vst.msk [vmem:[#allocation2 + $0x5c] sm:$0xf] %vm1073, %v924
  %1093 = vst.msk [vmem:[#allocation2 + $0x60] sm:$0xf] %vm1073, %v933
  %1094 = vst.msk [vmem:[#allocation2 + $0x64] sm:$0xf] %vm1073, %v942
  %1095 = vst.msk [vmem:[#allocation2 + $0x68] sm:$0xf] %vm1073, %v951
  %1096 = vst.msk [vmem:[#allocation2 + $0x6c] sm:$0xf] %vm1073, %v960
  %1097 = vst.msk [vmem:[#allocation2 + $0x70] sm:$0xf] %vm1073, %v969
  %1098 = vst.msk [vmem:[#allocation2 + $0x74] sm:$0xf] %vm1073, %v978
  %1099 = vst.msk [vmem:[#allocation2 + $0x78] sm:$0xf] %vm1073, %v987
  %1100 = vst.msk [vmem:[#allocation2 + $0x7c] sm:$0xf] %vm1073, %v996
  %1101 = vst.msk [vmem:[#allocation2 + $0x80] sm:$0xf] %vm1073, %v1005
  %1102 = vst.msk [vmem:[#allocation2 + $0x84] sm:$0xf] %vm1073, %v1014
  %1103 = vst.msk [vmem:[#allocation2 + $0x88] sm:$0xf] %vm1073, %v1023
  %1104 = vst.msk [vmem:[#allocation2 + $0x8c] sm:$0xf] %vm1073, %v1032
  %vm1105 = vcmask 122880
  %vm1106 = vmand %vm1105, %vm744
  %v1107 = vld [vmem:[#allocation2 + $0x90] sm:$0x1]
  %v1108 = vsel %vm1106, %v1033, %v1107
  %1109 = vst [vmem:[#allocation2 + $0x90] sm:$0x1] %v1108
  %1110 = vst.msk [vmem:[#allocation2] sm:$0xf] %vm1073, 0
  %1111 = vst.msk [vmem:[#allocation2 + $0x4] sm:$0xf] %vm1073, 0
  %1112 = vst.msk [vmem:[#allocation2 + $0x8] sm:$0xf] %vm1073, 0
  %1113 = vst.msk [vmem:[#allocation2 + $0xc] sm:$0xf] %vm1073, 0
  %v1114 = vld [vmem:[#allocation2 + $0x10] sm:$0x1]
  %v1115 = vsel %vm1106, 0, %v1114
  %1116 = vst [vmem:[#allocation2 + $0x10] sm:$0x1] %v1115
  %v1117 = vld [vmem:[#allocation2 + $0x90] sm:$0xf]
  %v1118 = vsel %vm1069, 0, %v1117
  %1119 = vst [vmem:[#allocation2 + $0x90] sm:$0xf] %v1118
  %1120 = vst.msk [vmem:[#allocation2 + $0x94] sm:$0xf] %vm1073, 0
  %1121 = vst.msk [vmem:[#allocation2 + $0x98] sm:$0xf] %vm1073, 0
  %1122 = vst.msk [vmem:[#allocation2 + $0x9c] sm:$0xf] %vm1073, 0
  %vm1123 = vcmask 122880
  %1124 = vst.msk [vmem:[#allocation2 + $0xa0] sm:$0x1] %vm1123, 0
  %v1125 = vld [vmem:[%s1] sm:$0xf]
  %v1126 = vld [vmem:[%s1 + $0x4] sm:$0xf]
  %v1127 = vld [vmem:[%s1 + $0x8] sm:$0xf]
  %v1128 = vld [vmem:[%s1 + $0xc] sm:$0xf]
  %v1129 = vld [vmem:[%s1 + $0x10] sm:$0xf]
  %v1130 = vld [vmem:[%s1 + $0x14] sm:$0xf]
  %v1131 = vld [vmem:[%s1 + $0x18] sm:$0xf]
  %v1132 = vld [vmem:[%s1 + $0x1c] sm:$0xf]
  %v1133 = vld [vmem:[%s1 + $0x20] sm:$0xf]
  %v1134 = vld [vmem:[%s1 + $0x24] sm:$0xf]
  %v1135 = vld [vmem:[%s1 + $0x28] sm:$0xf]
  %v1136 = vld [vmem:[%s1 + $0x2c] sm:$0xf]
  %v1137 = vld [vmem:[%s1 + $0x30] sm:$0xf]
  %v1138 = vld [vmem:[%s1 + $0x34] sm:$0xf]
  %v1139 = vld [vmem:[%s1 + $0x38] sm:$0xf]
  %v1140 = vld [vmem:[%s1 + $0x3c] sm:$0xf]
  %v1141 = vld [vmem:[%s1 + $0x40] sm:$0xf]
  %v1142 = vld [vmem:[%s1 + $0x44] sm:$0xf]
  %v1143 = vld [vmem:[%s1 + $0x48] sm:$0xf]
  %v1144 = vld [vmem:[%s1 + $0x4c] sm:$0xf]
  %v1145 = vld [vmem:[%s1 + $0x50] sm:$0xf]
  %v1146 = vld [vmem:[%s1 + $0x54] sm:$0xf]
  %v1147 = vld [vmem:[%s1 + $0x58] sm:$0xf]
  %v1148 = vld [vmem:[%s1 + $0x5c] sm:$0xf]
  %v1149 = vld [vmem:[%s1 + $0x60] sm:$0xf]
  %v1150 = vld [vmem:[%s1 + $0x64] sm:$0xf]
  %v1151 = vld [vmem:[%s1 + $0x68] sm:$0xf]
  %v1152 = vld [vmem:[%s1 + $0x6c] sm:$0xf]
  %v1153 = vld [vmem:[%s1 + $0x70] sm:$0xf]
  %v1154 = vld [vmem:[%s1 + $0x74] sm:$0xf]
  %v1155 = vld [vmem:[%s1 + $0x78] sm:$0xf]
  %v1156 = vld [vmem:[%s1 + $0x7c] sm:$0xf]
  %v1158 = vshrl.u32 %v1125, 16
  %v1160 = vrot.slane %v1158, 7
  %v1161 = vshll.u32 %v1125, 16
  %v1163 = vor.u32 %v1160, %v1161
  %v1164 = vrot.slane %v1160, 4
  %v1166 = vshrl.u32 %v1126, 16
  %v1168 = vrot.slane %v1166, 7
  %v1169 = vshll.u32 %v1126, 16
  %v1171 = vor.u32 %v1168, %v1169
  %v1172 = vsel %vm746, %v1164, %v1171
  %v1173 = vrot.slane %v1168, 4
  %v1175 = vshrl.u32 %v1127, 16
  %v1177 = vrot.slane %v1175, 7
  %v1178 = vshll.u32 %v1127, 16
  %v1180 = vor.u32 %v1177, %v1178
  %v1181 = vsel %vm746, %v1173, %v1180
  %v1182 = vrot.slane %v1177, 4
  %v1184 = vshrl.u32 %v1128, 16
  %v1186 = vrot.slane %v1184, 7
  %v1187 = vshll.u32 %v1128, 16
  %v1189 = vor.u32 %v1186, %v1187
  %v1190 = vsel %vm746, %v1182, %v1189
  %v1191 = vrot.slane %v1186, 4
  %v1193 = vshrl.u32 %v1129, 16
  %v1195 = vrot.slane %v1193, 7
  %v1196 = vshll.u32 %v1129, 16
  %v1198 = vor.u32 %v1195, %v1196
  %v1199 = vsel %vm746, %v1191, %v1198
  %v1200 = vrot.slane %v1195, 4
  %v1202 = vshrl.u32 %v1130, 16
  %v1204 = vrot.slane %v1202, 7
  %v1205 = vshll.u32 %v1130, 16
  %v1207 = vor.u32 %v1204, %v1205
  %v1208 = vsel %vm746, %v1200, %v1207
  %v1209 = vrot.slane %v1204, 4
  %v1211 = vshrl.u32 %v1131, 16
  %v1213 = vrot.slane %v1211, 7
  %v1214 = vshll.u32 %v1131, 16
  %v1216 = vor.u32 %v1213, %v1214
  %v1217 = vsel %vm746, %v1209, %v1216
  %v1218 = vrot.slane %v1213, 4
  %v1220 = vshrl.u32 %v1132, 16
  %v1222 = vrot.slane %v1220, 7
  %v1223 = vshll.u32 %v1132, 16
  %v1225 = vor.u32 %v1222, %v1223
  %v1226 = vsel %vm746, %v1218, %v1225
  %v1227 = vrot.slane %v1222, 4
  %v1229 = vshrl.u32 %v1133, 16
  %v1231 = vrot.slane %v1229, 7
  %v1232 = vshll.u32 %v1133, 16
  %v1234 = vor.u32 %v1231, %v1232
  %v1235 = vsel %vm746, %v1227, %v1234
  %v1236 = vrot.slane %v1231, 4
  %v1238 = vshrl.u32 %v1134, 16
  %v1240 = vrot.slane %v1238, 7
  %v1241 = vshll.u32 %v1134, 16
  %v1243 = vor.u32 %v1240, %v1241
  %v1244 = vsel %vm746, %v1236, %v1243
  %v1245 = vrot.slane %v1240, 4
  %v1247 = vshrl.u32 %v1135, 16
  %v1249 = vrot.slane %v1247, 7
  %v1250 = vshll.u32 %v1135, 16
  %v1252 = vor.u32 %v1249, %v1250
  %v1253 = vsel %vm746, %v1245, %v1252
  %v1254 = vrot.slane %v1249, 4
  %v1256 = vshrl.u32 %v1136, 16
  %v1258 = vrot.slane %v1256, 7
  %v1259 = vshll.u32 %v1136, 16
  %v1261 = vor.u32 %v1258, %v1259
  %v1262 = vsel %vm746, %v1254, %v1261
  %v1263 = vrot.slane %v1258, 4
  %v1265 = vshrl.u32 %v1137, 16
  %v1267 = vrot.slane %v1265, 7
  %v1268 = vshll.u32 %v1137, 16
  %v1270 = vor.u32 %v1267, %v1268
  %v1271 = vsel %vm746, %v1263, %v1270
  %v1272 = vrot.slane %v1267, 4
  %v1274 = vshrl.u32 %v1138, 16
  %v1276 = vrot.slane %v1274, 7
  %v1277 = vshll.u32 %v1138, 16
  %v1279 = vor.u32 %v1276, %v1277
  %v1280 = vsel %vm746, %v1272, %v1279
  %v1281 = vrot.slane %v1276, 4
  %v1283 = vshrl.u32 %v1139, 16
  %v1285 = vrot.slane %v1283, 7
  %v1286 = vshll.u32 %v1139, 16
  %v1288 = vor.u32 %v1285, %v1286
  %v1289 = vsel %vm746, %v1281, %v1288
  %v1290 = vrot.slane %v1285, 4
  %v1292 = vshrl.u32 %v1140, 16
  %v1294 = vrot.slane %v1292, 7
  %v1295 = vshll.u32 %v1140, 16
  %v1297 = vor.u32 %v1294, %v1295
  %v1298 = vsel %vm746, %v1290, %v1297
  %v1299 = vrot.slane %v1294, 4
  %v1301 = vshrl.u32 %v1141, 16
  %v1303 = vrot.slane %v1301, 7
  %v1304 = vshll.u32 %v1141, 16
  %v1306 = vor.u32 %v1303, %v1304
  %v1307 = vsel %vm746, %v1299, %v1306
  %v1308 = vrot.slane %v1303, 4
  %v1310 = vshrl.u32 %v1142, 16
  %v1312 = vrot.slane %v1310, 7
  %v1313 = vshll.u32 %v1142, 16
  %v1315 = vor.u32 %v1312, %v1313
  %v1316 = vsel %vm746, %v1308, %v1315
  %v1317 = vrot.slane %v1312, 4
  %v1319 = vshrl.u32 %v1143, 16
  %v1321 = vrot.slane %v1319, 7
  %v1322 = vshll.u32 %v1143, 16
  %v1324 = vor.u32 %v1321, %v1322
  %v1325 = vsel %vm746, %v1317, %v1324
  %v1326 = vrot.slane %v1321, 4
  %v1328 = vshrl.u32 %v1144, 16
  %v1330 = vrot.slane %v1328, 7
  %v1331 = vshll.u32 %v1144, 16
  %v1333 = vor.u32 %v1330, %v1331
  %v1334 = vsel %vm746, %v1326, %v1333
  %v1335 = vrot.slane %v1330, 4
  %v1337 = vshrl.u32 %v1145, 16
  %v1339 = vrot.slane %v1337, 7
  %v1340 = vshll.u32 %v1145, 16
  %v1342 = vor.u32 %v1339, %v1340
  %v1343 = vsel %vm746, %v1335, %v1342
  %v1344 = vrot.slane %v1339, 4
  %v1346 = vshrl.u32 %v1146, 16
  %v1348 = vrot.slane %v1346, 7
  %v1349 = vshll.u32 %v1146, 16
  %v1351 = vor.u32 %v1348, %v1349
  %v1352 = vsel %vm746, %v1344, %v1351
  %v1353 = vrot.slane %v1348, 4
  %v1355 = vshrl.u32 %v1147, 16
  %v1357 = vrot.slane %v1355, 7
  %v1358 = vshll.u32 %v1147, 16
  %v1360 = vor.u32 %v1357, %v1358
  %v1361 = vsel %vm746, %v1353, %v1360
  %v1362 = vrot.slane %v1357, 4
  %v1364 = vshrl.u32 %v1148, 16
  %v1366 = vrot.slane %v1364, 7
  %v1367 = vshll.u32 %v1148, 16
  %v1369 = vor.u32 %v1366, %v1367
  %v1370 = vsel %vm746, %v1362, %v1369
  %v1371 = vrot.slane %v1366, 4
  %v1373 = vshrl.u32 %v1149, 16
  %v1375 = vrot.slane %v1373, 7
  %v1376 = vshll.u32 %v1149, 16
  %v1378 = vor.u32 %v1375, %v1376
  %v1379 = vsel %vm746, %v1371, %v1378
  %v1380 = vrot.slane %v1375, 4
  %v1382 = vshrl.u32 %v1150, 16
  %v1384 = vrot.slane %v1382, 7
  %v1385 = vshll.u32 %v1150, 16
  %v1387 = vor.u32 %v1384, %v1385
  %v1388 = vsel %vm746, %v1380, %v1387
  %v1389 = vrot.slane %v1384, 4
  %v1391 = vshrl.u32 %v1151, 16
  %v1393 = vrot.slane %v1391, 7
  %v1394 = vshll.u32 %v1151, 16
  %v1396 = vor.u32 %v1393, %v1394
  %v1397 = vsel %vm746, %v1389, %v1396
  %v1398 = vrot.slane %v1393, 4
  %v1400 = vshrl.u32 %v1152, 16
  %v1402 = vrot.slane %v1400, 7
  %v1403 = vshll.u32 %v1152, 16
  %v1405 = vor.u32 %v1402, %v1403
  %v1406 = vsel %vm746, %v1398, %v1405
  %v1407 = vrot.slane %v1402, 4
  %v1409 = vshrl.u32 %v1153, 16
  %v1411 = vrot.slane %v1409, 7
  %v1412 = vshll.u32 %v1153, 16
  %v1414 = vor.u32 %v1411, %v1412
  %v1415 = vsel %vm746, %v1407, %v1414
  %v1416 = vrot.slane %v1411, 4
  %v1418 = vshrl.u32 %v1154, 16
  %v1420 = vrot.slane %v1418, 7
  %v1421 = vshll.u32 %v1154, 16
  %v1423 = vor.u32 %v1420, %v1421
  %v1424 = vsel %vm746, %v1416, %v1423
  %v1425 = vrot.slane %v1420, 4
  %v1427 = vshrl.u32 %v1155, 16
  %v1429 = vrot.slane %v1427, 7
  %v1430 = vshll.u32 %v1155, 16
  %v1432 = vor.u32 %v1429, %v1430
  %v1433 = vsel %vm746, %v1425, %v1432
  %v1434 = vrot.slane %v1429, 4
  %v1436 = vshrl.u32 %v1156, 16
  %v1438 = vrot.slane %v1436, 7
  %v1439 = vshll.u32 %v1156, 16
  %v1441 = vor.u32 %v1438, %v1439
  %v1442 = vsel %vm746, %v1434, %v1441
  %v1443 = vrot.slane %v1438, 4
  %v1477 = vld [vmem:[#allocation3 + $0x10] sm:$0xf]
  %v1478 = vsel %vm1069, %v1163, %v1477
  %1479 = vst [vmem:[#allocation3 + $0x10] sm:$0xf] %v1478
  %1480 = vst.msk [vmem:[#allocation3 + $0x14] sm:$0xf] %vm1073, %v1172
  %1481 = vst.msk [vmem:[#allocation3 + $0x18] sm:$0xf] %vm1073, %v1181
  %1482 = vst.msk [vmem:[#allocation3 + $0x1c] sm:$0xf] %vm1073, %v1190
  %1483 = vst.msk [vmem:[#allocation3 + $0x20] sm:$0xf] %vm1073, %v1199
  %1484 = vst.msk [vmem:[#allocation3 + $0x24] sm:$0xf] %vm1073, %v1208
  %1485 = vst.msk [vmem:[#allocation3 + $0x28] sm:$0xf] %vm1073, %v1217
  %1486 = vst.msk [vmem:[#allocation3 + $0x2c] sm:$0xf] %vm1073, %v1226
  %1487 = vst.msk [vmem:[#allocation3 + $0x30] sm:$0xf] %vm1073, %v1235
  %1488 = vst.msk [vmem:[#allocation3 + $0x34] sm:$0xf] %vm1073, %v1244
  %1489 = vst.msk [vmem:[#allocation3 + $0x38] sm:$0xf] %vm1073, %v1253
  %1490 = vst.msk [vmem:[#allocation3 + $0x3c] sm:$0xf] %vm1073, %v1262
  %1491 = vst.msk [vmem:[#allocation3 + $0x40] sm:$0xf] %vm1073, %v1271
  %1492 = vst.msk [vmem:[#allocation3 + $0x44] sm:$0xf] %vm1073, %v1280
  %1493 = vst.msk [vmem:[#allocation3 + $0x48] sm:$0xf] %vm1073, %v1289
  %1494 = vst.msk [vmem:[#allocation3 + $0x4c] sm:$0xf] %vm1073, %v1298
  %1495 = vst.msk [vmem:[#allocation3 + $0x50] sm:$0xf] %vm1073, %v1307
  %1496 = vst.msk [vmem:[#allocation3 + $0x54] sm:$0xf] %vm1073, %v1316
  %1497 = vst.msk [vmem:[#allocation3 + $0x58] sm:$0xf] %vm1073, %v1325
  %1498 = vst.msk [vmem:[#allocation3 + $0x5c] sm:$0xf] %vm1073, %v1334
  %1499 = vst.msk [vmem:[#allocation3 + $0x60] sm:$0xf] %vm1073, %v1343
  %1500 = vst.msk [vmem:[#allocation3 + $0x64] sm:$0xf] %vm1073, %v1352
  %1501 = vst.msk [vmem:[#allocation3 + $0x68] sm:$0xf] %vm1073, %v1361
  %1502 = vst.msk [vmem:[#allocation3 + $0x6c] sm:$0xf] %vm1073, %v1370
  %1503 = vst.msk [vmem:[#allocation3 + $0x70] sm:$0xf] %vm1073, %v1379
  %1504 = vst.msk [vmem:[#allocation3 + $0x74] sm:$0xf] %vm1073, %v1388
  %1505 = vst.msk [vmem:[#allocation3 + $0x78] sm:$0xf] %vm1073, %v1397
  %1506 = vst.msk [vmem:[#allocation3 + $0x7c] sm:$0xf] %vm1073, %v1406
  %1507 = vst.msk [vmem:[#allocation3 + $0x80] sm:$0xf] %vm1073, %v1415
  %1508 = vst.msk [vmem:[#allocation3 + $0x84] sm:$0xf] %vm1073, %v1424
  %1509 = vst.msk [vmem:[#allocation3 + $0x88] sm:$0xf] %vm1073, %v1433
  %1510 = vst.msk [vmem:[#allocation3 + $0x8c] sm:$0xf] %vm1073, %v1442
  %v1511 = vld [vmem:[#allocation3 + $0x90] sm:$0x1]
  %v1512 = vsel %vm1106, %v1443, %v1511
  %1513 = vst [vmem:[#allocation3 + $0x90] sm:$0x1] %v1512
  %1514 = vst.msk [vmem:[#allocation3] sm:$0xf] %vm1073, 0
  %1515 = vst.msk [vmem:[#allocation3 + $0x4] sm:$0xf] %vm1073, 0
  %1516 = vst.msk [vmem:[#allocation3 + $0x8] sm:$0xf] %vm1073, 0
  %1517 = vst.msk [vmem:[#allocation3 + $0xc] sm:$0xf] %vm1073, 0
  %v1518 = vld [vmem:[#allocation3 + $0x10] sm:$0x1]
  %v1519 = vsel %vm1106, 0, %v1518
  %1520 = vst [vmem:[#allocation3 + $0x10] sm:$0x1] %v1519
  %v1521 = vld [vmem:[#allocation3 + $0x90] sm:$0xf]
  %v1522 = vsel %vm1069, 0, %v1521
  %1523 = vst [vmem:[#allocation3 + $0x90] sm:$0xf] %v1522
  %1524 = vst.msk [vmem:[#allocation3 + $0x94] sm:$0xf] %vm1073, 0
  %1525 = vst.msk [vmem:[#allocation3 + $0x98] sm:$0xf] %vm1073, 0
  %1526 = vst.msk [vmem:[#allocation3 + $0x9c] sm:$0xf] %vm1073, 0
  %1527 = vst.msk [vmem:[#allocation3 + $0xa0] sm:$0x1] %vm1123, 0
  %v1528 = vld [vmem:[#allocation2] sm:$0xf]
  %v1529 = vld [vmem:[#allocation2 + $0x4] sm:$0xf]
  %v1530 = vld [vmem:[#allocation2 + $0x8] sm:$0xf]
  %v1531 = vld [vmem:[#allocation2 + $0xc] sm:$0xf]
  %v1532 = vld [vmem:[#allocation2 + $0x10] sm:$0xf]
  %v1533 = vld [vmem:[#allocation2 + $0x14] sm:$0xf]
  %v1534 = vld [vmem:[#allocation2 + $0x18] sm:$0xf]
  %v1535 = vld [vmem:[#allocation2 + $0x1c] sm:$0xf]
  %v1536 = vld [vmem:[#allocation2 + $0x20] sm:$0xf]
  %v1537 = vld [vmem:[#allocation2 + $0x24] sm:$0xf]
  %v1538 = vld [vmem:[#allocation2 + $0x28] sm:$0xf]
  %v1539 = vld [vmem:[#allocation2 + $0x2c] sm:$0xf]
  %v1540 = vld [vmem:[#allocation2 + $0x30] sm:$0xf]
  %v1541 = vld [vmem:[#allocation2 + $0x34] sm:$0xf]
  %v1542 = vld [vmem:[#allocation2 + $0x38] sm:$0xf]
  %v1543 = vld [vmem:[#allocation2 + $0x3c] sm:$0xf]
  %v1544 = vld [vmem:[#allocation2 + $0x40] sm:$0xf]
  %v1545 = vld [vmem:[#allocation2 + $0x44] sm:$0xf]
  %v1546 = vld [vmem:[#allocation2 + $0x48] sm:$0xf]
  %v1547 = vld [vmem:[#allocation2 + $0x4c] sm:$0xf]
  %v1548 = vld [vmem:[#allocation2 + $0x50] sm:$0xf]
  %v1549 = vld [vmem:[#allocation2 + $0x54] sm:$0xf]
  %v1550 = vld [vmem:[#allocation2 + $0x58] sm:$0xf]
  %v1551 = vld [vmem:[#allocation2 + $0x5c] sm:$0xf]
  %v1552 = vld [vmem:[#allocation2 + $0x60] sm:$0xf]
  %v1553 = vld [vmem:[#allocation2 + $0x64] sm:$0xf]
  %v1554 = vld [vmem:[#allocation2 + $0x68] sm:$0xf]
  %v1555 = vld [vmem:[#allocation2 + $0x6c] sm:$0xf]
  %v1556 = vld [vmem:[#allocation2 + $0x70] sm:$0xf]
  %v1557 = vld [vmem:[#allocation2 + $0x74] sm:$0xf]
  %v1558 = vld [vmem:[#allocation2 + $0x78] sm:$0xf]
  %v1559 = vld [vmem:[#allocation2 + $0x7c] sm:$0xf]
  %v1560 = vld [vmem:[#allocation2 + $0x80] sm:$0xf]
  %v1561 = vld [vmem:[#allocation2 + $0x84] sm:$0xf]
  %v1562 = vld [vmem:[#allocation2 + $0x88] sm:$0xf]
  %v1563 = vld [vmem:[#allocation2 + $0x8c] sm:$0xf]
  %v1564 = vld [vmem:[%s2] sm:$0xf]
  %v1565 = vld [vmem:[%s2 + $0x4] sm:$0xf]
  %v1566 = vld [vmem:[#allocation2 + $0x90] sm:$0x1]
  %s1567 = scalar_lea.vmem %s2, 8
  %v1568 = vld [vmem:[%s1567] sm:$0xf]
  %v1569 = vld [vmem:[%s1567 + $0x4] sm:$0xf]
  %v1570 = vld [vmem:[#allocation2] sm:$0xe]
  %s1571 = scalar_lea.vmem %s2, 16
  %v1572 = vld [vmem:[%s1571] sm:$0xf]
  %v1573 = vld [vmem:[%s1571 + $0x4] sm:$0xf]
  %v1574 = vld [vmem:[#allocation2 + $0x90] sm:$0xf]
  %v1575 = vld [vmem:[#allocation2 + $0x94] sm:$0xf]
  %s1576 = scalar_lea.vmem %s2, 24
  %v1577 = vld [vmem:[%s1576] sm:$0xf]
  %v1578 = vld [vmem:[%s1576 + $0x4] sm:$0xf]
  %v1615 = vunpack.c.l.b16 %v1530
  %v1616 = vunpack.c.l.b16 %v1531
  %v1617 = vunpack.c.l.b16 %v1532
  %v1618 = vunpack.c.l.b16 %v1533
  %v1619 = vunpack.c.l.b16 %v1534
  %v1620 = vunpack.c.l.b16 %v1535
  %v1621 = vunpack.c.l.b16 %v1536
  %v1622 = vunpack.c.l.b16 %v1537
  %v1623 = vunpack.c.l.b16 %v1538
  %v1624 = vunpack.c.l.b16 %v1539
  %v1625 = vunpack.c.l.b16 %v1540
  %v1626 = vunpack.c.l.b16 %v1541
  %v1627 = vunpack.c.l.b16 %v1542
  %v1628 = vunpack.c.l.b16 %v1543
  %v1629 = vunpack.c.l.b16 %v1544
  %v1630 = vunpack.c.l.b16 %v1545
  %v1631 = vunpack.c.l.b16 %v1546
  %v1632 = vunpack.c.l.b16 %v1547
  %v1633 = vunpack.c.l.b16 %v1548
  %v1634 = vunpack.c.l.b16 %v1549
  %v1635 = vunpack.c.l.b16 %v1550
  %v1636 = vunpack.c.l.b16 %v1551
  %v1637 = vunpack.c.l.b16 %v1552
  %v1638 = vunpack.c.l.b16 %v1553
  %v1639 = vunpack.c.l.b16 %v1554
  %v1640 = vunpack.c.l.b16 %v1555
  %v1641 = vunpack.c.l.b16 %v1556
  %v1642 = vunpack.c.l.b16 %v1557
  %v1643 = vunpack.c.l.b16 %v1558
  %v1644 = vunpack.c.l.b16 %v1559
  %v1645 = vunpack.c.l.b16 %v1560
  %v1646 = vunpack.c.l.b16 %v1561
  %v1647 = vunpack.c.l.b16 %v1562
  %v1648 = vunpack.c.l.b16 %v1563
  %v1649 = vunpack.c.l.b16 %v1574
  %v1650 = vunpack.c.l.b16 %v1575
  %v1651 = vpack.c.b16 %v1616, %v1615
  %v1652 = vpack.c.b16 %v1618, %v1617
  %v1653 = vpack.c.b16 %v1620, %v1619
  %v1654 = vpack.c.b16 %v1622, %v1621
  %v1655 = vpack.c.b16 %v1624, %v1623
  %v1656 = vpack.c.b16 %v1626, %v1625
  %v1657 = vpack.c.b16 %v1628, %v1627
  %v1658 = vpack.c.b16 %v1630, %v1629
  %v1659 = vpack.c.b16 %v1632, %v1631
  %v1660 = vpack.c.b16 %v1634, %v1633
  %v1661 = vpack.c.b16 %v1636, %v1635
  %v1662 = vpack.c.b16 %v1638, %v1637
  %v1663 = vpack.c.b16 %v1640, %v1639
  %v1664 = vpack.c.b16 %v1642, %v1641
  %v1665 = vpack.c.b16 %v1644, %v1643
  %v1666 = vpack.c.b16 %v1646, %v1645
  %v1667 = vpack.c.b16 %v1648, %v1647
  %v1668 = vpack.c.b16 %v1650, %v1649
  %v1671 = vunpack.c.l.b16 %v1577
  %v1672 = vunpack.c.l.b16 %v1578
  %v1673 = vpack.c.b16 %v1672, %v1671
  %vm1675 = vcmask 130048
  %v1677 = vsel %vm1675, %v1651, 0
  %v1680 = vsel %vm1675, %v1652, 0
  %v1683 = vsel %vm1675, %v1653, 0
  %v1686 = vsel %vm1675, %v1654, 0
  %v1689 = vsel %vm1675, %v1655, 0
  %v1692 = vsel %vm1675, %v1656, 0
  %v1695 = vsel %vm1675, %v1657, 0
  %v1698 = vsel %vm1675, %v1658, 0
  %v1701 = vsel %vm1675, %v1659, 0
  %v1704 = vsel %vm1675, %v1660, 0
  %v1707 = vsel %vm1675, %v1661, 0
  %v1710 = vsel %vm1675, %v1662, 0
  %v1713 = vsel %vm1675, %v1663, 0
  %v1716 = vsel %vm1675, %v1664, 0
  %v1719 = vsel %vm1675, %v1665, 0
  %v1722 = vsel %vm1675, %v1666, 0
  %v1725 = vsel %vm1675, %v1667, 0
  %v1728 = vsel %vm1675, %v1668, 0
  %1730 = vmatprep.subr.bf16.mxu0 0
  %1731 = vmatpush1.bf16.msra.mxu0 0
  %1732 = vmatprep.subr.bf16.mxu0 0
  %1733 = vmatpush1.bf16.msra.mxu0 0
  %1734 = vmatprep.subr.bf16.mxu0 0
  %1735 = vmatpush1.bf16.msra.mxu0 0
  %1736 = vmatprep.subr.bf16.mxu0 0
  %1737 = vmatpush1.bf16.msra.mxu0 0
  %1738 = vmatprep.subr.bf16.mxu0 0
  %1739 = vmatpush1.bf16.msra.mxu0 0
  %1740 = vmatprep.subr.bf16.mxu0 0
  %1741 = vmatpush1.bf16.msra.mxu0 0
  %1742 = vmatprep.subr.bf16.mxu0 0
  %1743 = vmatpush1.bf16.msra.mxu0 0
  %1744 = vmatprep.subr.bf16.mxu0 0
  %1745 = vmatpush1.bf16.msra.mxu0 %v1673
  %1746 = vmatprep.subr.bf16.mxu0 0
  %1747 = vmatpush2.bf16.msra.mxu0 0
  %1748 = vmatprep.subr.bf16.mxu0 0
  %1749 = vmatpush2.bf16.msra.mxu0 0
  %1750 = vmatprep.subr.bf16.mxu0 0
  %1751 = vmatpush2.bf16.msra.mxu0 0
  %1752 = vmatprep.subr.bf16.mxu0 0
  %1753 = vmatpush2.bf16.msra.mxu0 0
  %1754 = vmatprep.subr.bf16.mxu0 0
  %1755 = vmatpush2.bf16.msra.mxu0 0
  %1756 = vmatprep.subr.bf16.mxu0 0
  %1757 = vmatpush2.bf16.msra.mxu0 0
  %1758 = vmatprep.subr.bf16.mxu0 0
  %1759 = vmatpush2.bf16.msra.mxu0 0
  %1760 = vmatprep.subr.bf16.mxu0 0
  %1761 = vmatpush2.bf16.msra.mxu0 0
  %1762 = vmatprep.mubr.bf16.mxu0 0
  %1763 = vmatmul.mubr.bf16.gmra.mxu0 %v1677
  %v1764 = vpop.f32.mrf.mxu0
  %v1765 = vadd.f32 0.0, %v1764
  %v1766 = vpop.f32.mrf.mxu0
  %v1767 = vpop.f32.mrf.mxu0
  %v1768 = vadd.f32 0.0, %v1767
  %v1769 = vpop.f32.mrf.mxu0
  %1770 = vmatprep.mubr.bf16.mxu0 0
  %1771 = vmatmul.mubr.bf16.gmra.mxu0 %v1680
  %v1772 = vpop.f32.mrf.mxu0
  %v1773 = vadd.f32 0.0, %v1772
  %v1774 = vpop.f32.mrf.mxu0
  %v1775 = vpop.f32.mrf.mxu0
  %v1776 = vadd.f32 0.0, %v1775
  %v1777 = vpop.f32.mrf.mxu0
  %1778 = vmatprep.mubr.bf16.mxu0 0
  %1779 = vmatmul.mubr.bf16.gmra.mxu0 %v1683
  %v1780 = vpop.f32.mrf.mxu0
  %v1781 = vadd.f32 0.0, %v1780
  %v1782 = vpop.f32.mrf.mxu0
  %v1783 = vpop.f32.mrf.mxu0
  %v1784 = vadd.f32 0.0, %v1783
  %v1785 = vpop.f32.mrf.mxu0
  %1786 = vmatprep.mubr.bf16.mxu0 0
  %1787 = vmatmul.mubr.bf16.gmra.mxu0 %v1686
  %v1788 = vpop.f32.mrf.mxu0
  %v1789 = vadd.f32 0.0, %v1788
  %v1790 = vpop.f32.mrf.mxu0
  %v1791 = vpop.f32.mrf.mxu0
  %v1792 = vadd.f32 0.0, %v1791
  %v1793 = vpop.f32.mrf.mxu0
  %1794 = vmatprep.mubr.bf16.mxu0 0
  %1795 = vmatmul.mubr.bf16.gmra.mxu0 %v1689
  %v1796 = vpop.f32.mrf.mxu0
  %v1797 = vadd.f32 0.0, %v1796
  %v1798 = vpop.f32.mrf.mxu0
  %v1799 = vpop.f32.mrf.mxu0
  %v1800 = vadd.f32 0.0, %v1799
  %v1801 = vpop.f32.mrf.mxu0
  %1802 = vmatprep.mubr.bf16.mxu0 0
  %1803 = vmatmul.mubr.bf16.gmra.mxu0 %v1692
  %v1804 = vpop.f32.mrf.mxu0
  %v1805 = vadd.f32 0.0, %v1804
  %v1806 = vpop.f32.mrf.mxu0
  %v1807 = vpop.f32.mrf.mxu0
  %v1808 = vadd.f32 0.0, %v1807
  %v1809 = vpop.f32.mrf.mxu0
  %1810 = vmatprep.mubr.bf16.mxu0 0
  %1811 = vmatmul.mubr.bf16.gmra.mxu0 %v1695
  %v1812 = vpop.f32.mrf.mxu0
  %v1813 = vadd.f32 0.0, %v1812
  %v1814 = vpop.f32.mrf.mxu0
  %v1815 = vpop.f32.mrf.mxu0
  %v1816 = vadd.f32 0.0, %v1815
  %v1817 = vpop.f32.mrf.mxu0
  %1818 = vmatprep.mubr.bf16.mxu0 0
  %1819 = vmatmul.mubr.bf16.gmra.mxu0 %v1698
  %v1820 = vpop.f32.mrf.mxu0
  %v1821 = vadd.f32 0.0, %v1820
  %v1822 = vpop.f32.mrf.mxu0
  %v1823 = vpop.f32.mrf.mxu0
  %v1824 = vadd.f32 0.0, %v1823
  %v1825 = vpop.f32.mrf.mxu0
  %1826 = vmatprep.mubr.bf16.mxu0 0
  %1827 = vmatmul.mubr.bf16.gmra.mxu0 %v1701
  %v1828 = vpop.f32.mrf.mxu0
  %v1829 = vadd.f32 0.0, %v1828
  %v1830 = vpop.f32.mrf.mxu0
  %v1831 = vpop.f32.mrf.mxu0
  %v1832 = vadd.f32 0.0, %v1831
  %v1833 = vpop.f32.mrf.mxu0
  %1834 = vmatprep.mubr.bf16.mxu0 0
  %1835 = vmatmul.mubr.bf16.gmra.mxu0 %v1704
  %v1836 = vpop.f32.mrf.mxu0
  %v1837 = vadd.f32 0.0, %v1836
  %v1838 = vpop.f32.mrf.mxu0
  %v1839 = vpop.f32.mrf.mxu0
  %v1840 = vadd.f32 0.0, %v1839
  %v1841 = vpop.f32.mrf.mxu0
  %1842 = vmatprep.mubr.bf16.mxu0 0
  %1843 = vmatmul.mubr.bf16.gmra.mxu0 %v1707
  %v1844 = vpop.f32.mrf.mxu0
  %v1845 = vadd.f32 0.0, %v1844
  %v1846 = vpop.f32.mrf.mxu0
  %v1847 = vpop.f32.mrf.mxu0
  %v1848 = vadd.f32 0.0, %v1847
  %v1849 = vpop.f32.mrf.mxu0
  %1850 = vmatprep.mubr.bf16.mxu0 0
  %1851 = vmatmul.mubr.bf16.gmra.mxu0 %v1710
  %v1852 = vpop.f32.mrf.mxu0
  %v1853 = vadd.f32 0.0, %v1852
  %v1854 = vpop.f32.mrf.mxu0
  %v1855 = vpop.f32.mrf.mxu0
  %v1856 = vadd.f32 0.0, %v1855
  %v1857 = vpop.f32.mrf.mxu0
  %1858 = vmatprep.mubr.bf16.mxu0 0
  %1859 = vmatmul.mubr.bf16.gmra.mxu0 %v1713
  %v1860 = vpop.f32.mrf.mxu0
  %v1861 = vadd.f32 0.0, %v1860
  %v1862 = vpop.f32.mrf.mxu0
  %v1863 = vpop.f32.mrf.mxu0
  %v1864 = vadd.f32 0.0, %v1863
  %v1865 = vpop.f32.mrf.mxu0
  %1866 = vmatprep.mubr.bf16.mxu0 0
  %1867 = vmatmul.mubr.bf16.gmra.mxu0 %v1716
  %v1868 = vpop.f32.mrf.mxu0
  %v1869 = vadd.f32 0.0, %v1868
  %v1870 = vpop.f32.mrf.mxu0
  %v1871 = vpop.f32.mrf.mxu0
  %v1872 = vadd.f32 0.0, %v1871
  %v1873 = vpop.f32.mrf.mxu0
  %1874 = vmatprep.mubr.bf16.mxu0 0
  %1875 = vmatmul.mubr.bf16.gmra.mxu0 %v1719
  %v1876 = vpop.f32.mrf.mxu0
  %v1877 = vadd.f32 0.0, %v1876
  %v1878 = vpop.f32.mrf.mxu0
  %v1879 = vpop.f32.mrf.mxu0
  %v1880 = vadd.f32 0.0, %v1879
  %v1881 = vpop.f32.mrf.mxu0
  %1882 = vmatprep.mubr.bf16.mxu0 0
  %1883 = vmatmul.mubr.bf16.gmra.mxu0 %v1722
  %v1884 = vpop.f32.mrf.mxu0
  %v1885 = vadd.f32 0.0, %v1884
  %v1886 = vpop.f32.mrf.mxu0
  %v1887 = vpop.f32.mrf.mxu0
  %v1888 = vadd.f32 0.0, %v1887
  %v1889 = vpop.f32.mrf.mxu0
  %1890 = vmatprep.mubr.bf16.mxu0 0
  %1891 = vmatmul.mubr.bf16.gmra.mxu0 %v1725
  %v1892 = vpop.f32.mrf.mxu0
  %v1893 = vadd.f32 0.0, %v1892
  %v1894 = vpop.f32.mrf.mxu0
  %v1895 = vpop.f32.mrf.mxu0
  %v1896 = vadd.f32 0.0, %v1895
  %v1897 = vpop.f32.mrf.mxu0
  %1898 = vmatprep.mubr.bf16.mxu0 0
  %1899 = vmatmul.mubr.bf16.gmra.mxu0 %v1728
  %v1900 = vpop.f32.mrf.mxu0
  %v1901 = vadd.f32 0.0, %v1900
  %v1902 = vpop.f32.mrf.mxu0
  %v1903 = vpop.f32.mrf.mxu0
  %v1904 = vadd.f32 0.0, %v1903
  %v1905 = vpop.f32.mrf.mxu0
  %1906 = vdwg.mxu0
  %v1909 = vunpack.c.l.b16 %v1528
  %v1910 = vunpack.c.l.b16 %v1529
  %v1911 = vpack.c.b16 %v1910, %v1909
  %v1914 = vunpack.c.l.b16 %v1564
  %v1915 = vunpack.c.l.b16 %v1565
  %v1916 = vpack.c.b16 %v1915, %v1914
  %v1919 = vsel %vm1675, %v1911, 0
  %1921 = vmatprep.subr.bf16.mxu0 0
  %1922 = vmatpush1.bf16.msra.mxu0 0
  %1923 = vmatprep.subr.bf16.mxu0 0
  %1924 = vmatpush1.bf16.msra.mxu0 0
  %1925 = vmatprep.subr.bf16.mxu0 0
  %1926 = vmatpush1.bf16.msra.mxu0 0
  %1927 = vmatprep.subr.bf16.mxu0 0
  %1928 = vmatpush1.bf16.msra.mxu0 0
  %1929 = vmatprep.subr.bf16.mxu0 0
  %1930 = vmatpush1.bf16.msra.mxu0 0
  %1931 = vmatprep.subr.bf16.mxu0 0
  %1932 = vmatpush1.bf16.msra.mxu0 0
  %1933 = vmatprep.subr.bf16.mxu0 0
  %1934 = vmatpush1.bf16.msra.mxu0 0
  %1935 = vmatprep.subr.bf16.mxu0 0
  %1936 = vmatpush1.bf16.msra.mxu0 %v1916
  %1937 = vmatprep.subr.bf16.mxu0 0
  %1938 = vmatpush2.bf16.msra.mxu0 0
  %1939 = vmatprep.subr.bf16.mxu0 0
  %1940 = vmatpush2.bf16.msra.mxu0 0
  %1941 = vmatprep.subr.bf16.mxu0 0
  %1942 = vmatpush2.bf16.msra.mxu0 0
  %1943 = vmatprep.subr.bf16.mxu0 0
  %1944 = vmatpush2.bf16.msra.mxu0 0
  %1945 = vmatprep.subr.bf16.mxu0 0
  %1946 = vmatpush2.bf16.msra.mxu0 0
  %1947 = vmatprep.subr.bf16.mxu0 0
  %1948 = vmatpush2.bf16.msra.mxu0 0
  %1949 = vmatprep.subr.bf16.mxu0 0
  %1950 = vmatpush2.bf16.msra.mxu0 0
  %1951 = vmatprep.subr.bf16.mxu0 0
  %1952 = vmatpush2.bf16.msra.mxu0 0
  %1953 = vmatprep.mubr.bf16.mxu0 0
  %1954 = vmatmul.mubr.bf16.gmra.mxu0 %v1919
  %v1955 = vpop.f32.mrf.mxu0
  %v1956 = vadd.f32 %v1765, %v1955
  %v1957 = vpop.f32.mrf.mxu0
  %v1958 = vpop.f32.mrf.mxu0
  %v1959 = vadd.f32 %v1768, %v1958
  %v1960 = vpop.f32.mrf.mxu0
  %1961 = vmatprep.mubr.bf16.mxu0 0
  %1962 = vmatmul.mubr.bf16.gmra.mxu0 %v1677
  %v1963 = vpop.f32.mrf.mxu0
  %v1964 = vadd.f32 %v1773, %v1963
  %v1965 = vpop.f32.mrf.mxu0
  %v1966 = vpop.f32.mrf.mxu0
  %v1967 = vadd.f32 %v1776, %v1966
  %v1968 = vpop.f32.mrf.mxu0
  %1969 = vmatprep.mubr.bf16.mxu0 0
  %1970 = vmatmul.mubr.bf16.gmra.mxu0 %v1680
  %v1971 = vpop.f32.mrf.mxu0
  %v1972 = vadd.f32 %v1781, %v1971
  %v1973 = vpop.f32.mrf.mxu0
  %v1974 = vpop.f32.mrf.mxu0
  %v1975 = vadd.f32 %v1784, %v1974
  %v1976 = vpop.f32.mrf.mxu0
  %1977 = vmatprep.mubr.bf16.mxu0 0
  %1978 = vmatmul.mubr.bf16.gmra.mxu0 %v1683
  %v1979 = vpop.f32.mrf.mxu0
  %v1980 = vadd.f32 %v1789, %v1979
  %v1981 = vpop.f32.mrf.mxu0
  %v1982 = vpop.f32.mrf.mxu0
  %v1983 = vadd.f32 %v1792, %v1982
  %v1984 = vpop.f32.mrf.mxu0
  %1985 = vmatprep.mubr.bf16.mxu0 0
  %1986 = vmatmul.mubr.bf16.gmra.mxu0 %v1686
  %v1987 = vpop.f32.mrf.mxu0
  %v1988 = vadd.f32 %v1797, %v1987
  %v1989 = vpop.f32.mrf.mxu0
  %v1990 = vpop.f32.mrf.mxu0
  %v1991 = vadd.f32 %v1800, %v1990
  %v1992 = vpop.f32.mrf.mxu0
  %1993 = vmatprep.mubr.bf16.mxu0 0
  %1994 = vmatmul.mubr.bf16.gmra.mxu0 %v1689
  %v1995 = vpop.f32.mrf.mxu0
  %v1996 = vadd.f32 %v1805, %v1995
  %v1997 = vpop.f32.mrf.mxu0
  %v1998 = vpop.f32.mrf.mxu0
  %v1999 = vadd.f32 %v1808, %v1998
  %v2000 = vpop.f32.mrf.mxu0
  %2001 = vmatprep.mubr.bf16.mxu0 0
  %2002 = vmatmul.mubr.bf16.gmra.mxu0 %v1692
  %v2003 = vpop.f32.mrf.mxu0
  %v2004 = vadd.f32 %v1813, %v2003
  %v2005 = vpop.f32.mrf.mxu0
  %v2006 = vpop.f32.mrf.mxu0
  %v2007 = vadd.f32 %v1816, %v2006
  %v2008 = vpop.f32.mrf.mxu0
  %2009 = vmatprep.mubr.bf16.mxu0 0
  %2010 = vmatmul.mubr.bf16.gmra.mxu0 %v1695
  %v2011 = vpop.f32.mrf.mxu0
  %v2012 = vadd.f32 %v1821, %v2011
  %v2013 = vpop.f32.mrf.mxu0
  %v2014 = vpop.f32.mrf.mxu0
  %v2015 = vadd.f32 %v1824, %v2014
  %v2016 = vpop.f32.mrf.mxu0
  %2017 = vmatprep.mubr.bf16.mxu0 0
  %2018 = vmatmul.mubr.bf16.gmra.mxu0 %v1698
  %v2019 = vpop.f32.mrf.mxu0
  %v2020 = vadd.f32 %v1829, %v2019
  %v2021 = vpop.f32.mrf.mxu0
  %v2022 = vpop.f32.mrf.mxu0
  %v2023 = vadd.f32 %v1832, %v2022
  %v2024 = vpop.f32.mrf.mxu0
  %2025 = vmatprep.mubr.bf16.mxu0 0
  %2026 = vmatmul.mubr.bf16.gmra.mxu0 %v1701
  %v2027 = vpop.f32.mrf.mxu0
  %v2028 = vadd.f32 %v1837, %v2027
  %v2029 = vpop.f32.mrf.mxu0
  %v2030 = vpop.f32.mrf.mxu0
  %v2031 = vadd.f32 %v1840, %v2030
  %v2032 = vpop.f32.mrf.mxu0
  %2033 = vmatprep.mubr.bf16.mxu0 0
  %2034 = vmatmul.mubr.bf16.gmra.mxu0 %v1704
  %v2035 = vpop.f32.mrf.mxu0
  %v2036 = vadd.f32 %v1845, %v2035
  %v2037 = vpop.f32.mrf.mxu0
  %v2038 = vpop.f32.mrf.mxu0
  %v2039 = vadd.f32 %v1848, %v2038
  %v2040 = vpop.f32.mrf.mxu0
  %2041 = vmatprep.mubr.bf16.mxu0 0
  %2042 = vmatmul.mubr.bf16.gmra.mxu0 %v1707
  %v2043 = vpop.f32.mrf.mxu0
  %v2044 = vadd.f32 %v1853, %v2043
  %v2045 = vpop.f32.mrf.mxu0
  %v2046 = vpop.f32.mrf.mxu0
  %v2047 = vadd.f32 %v1856, %v2046
  %v2048 = vpop.f32.mrf.mxu0
  %2049 = vmatprep.mubr.bf16.mxu0 0
  %2050 = vmatmul.mubr.bf16.gmra.mxu0 %v1710
  %v2051 = vpop.f32.mrf.mxu0
  %v2052 = vadd.f32 %v1861, %v2051
  %v2053 = vpop.f32.mrf.mxu0
  %v2054 = vpop.f32.mrf.mxu0
  %v2055 = vadd.f32 %v1864, %v2054
  %v2056 = vpop.f32.mrf.mxu0
  %2057 = vmatprep.mubr.bf16.mxu0 0
  %2058 = vmatmul.mubr.bf16.gmra.mxu0 %v1713
  %v2059 = vpop.f32.mrf.mxu0
  %v2060 = vadd.f32 %v1869, %v2059
  %v2061 = vpop.f32.mrf.mxu0
  %v2062 = vpop.f32.mrf.mxu0
  %v2063 = vadd.f32 %v1872, %v2062
  %v2064 = vpop.f32.mrf.mxu0
  %2065 = vmatprep.mubr.bf16.mxu0 0
  %2066 = vmatmul.mubr.bf16.gmra.mxu0 %v1716
  %v2067 = vpop.f32.mrf.mxu0
  %v2068 = vadd.f32 %v1877, %v2067
  %v2069 = vpop.f32.mrf.mxu0
  %v2070 = vpop.f32.mrf.mxu0
  %v2071 = vadd.f32 %v1880, %v2070
  %v2072 = vpop.f32.mrf.mxu0
  %2073 = vmatprep.mubr.bf16.mxu0 0
  %2074 = vmatmul.mubr.bf16.gmra.mxu0 %v1719
  %v2075 = vpop.f32.mrf.mxu0
  %v2076 = vadd.f32 %v1885, %v2075
  %v2077 = vpop.f32.mrf.mxu0
  %v2078 = vpop.f32.mrf.mxu0
  %v2079 = vadd.f32 %v1888, %v2078
  %v2080 = vpop.f32.mrf.mxu0
  %2081 = vmatprep.mubr.bf16.mxu0 0
  %2082 = vmatmul.mubr.bf16.gmra.mxu0 %v1722
  %v2083 = vpop.f32.mrf.mxu0
  %v2084 = vadd.f32 %v1893, %v2083
  %v2085 = vpop.f32.mrf.mxu0
  %v2086 = vpop.f32.mrf.mxu0
  %v2087 = vadd.f32 %v1896, %v2086
  %v2088 = vpop.f32.mrf.mxu0
  %2089 = vmatprep.mubr.bf16.mxu0 0
  %2090 = vmatmul.mubr.bf16.gmra.mxu0 %v1725
  %v2091 = vpop.f32.mrf.mxu0
  %v2092 = vadd.f32 %v1901, %v2091
  %v2093 = vpop.f32.mrf.mxu0
  %v2094 = vpop.f32.mrf.mxu0
  %v2095 = vadd.f32 %v1904, %v2094
  %v2096 = vpop.f32.mrf.mxu0
  %2097 = vdwg.mxu0
  %v2098 = vld [vmem:[#allocation2 + $0x8] sm:$0xf]
  %v2099 = vld [vmem:[#allocation2 + $0xc] sm:$0xf]
  %v2100 = vld [vmem:[#allocation2 + $0x10] sm:$0xf]
  %v2101 = vld [vmem:[#allocation2 + $0x14] sm:$0xf]
  %v2102 = vld [vmem:[#allocation2 + $0x18] sm:$0xf]
  %v2103 = vld [vmem:[#allocation2 + $0x1c] sm:$0xf]
  %v2104 = vld [vmem:[#allocation2 + $0x20] sm:$0xf]
  %v2105 = vld [vmem:[#allocation2 + $0x24] sm:$0xf]
  %v2106 = vld [vmem:[#allocation2 + $0x28] sm:$0xf]
  %v2107 = vld [vmem:[#allocation2 + $0x2c] sm:$0xf]
  %v2108 = vld [vmem:[#allocation2 + $0x30] sm:$0xf]
  %v2109 = vld [vmem:[#allocation2 + $0x34] sm:$0xf]
  %v2110 = vld [vmem:[#allocation2 + $0x38] sm:$0xf]
  %v2111 = vld [vmem:[#allocation2 + $0x3c] sm:$0xf]
  %v2112 = vld [vmem:[#allocation2 + $0x40] sm:$0xf]
  %v2113 = vld [vmem:[#allocation2 + $0x44] sm:$0xf]
  %v2114 = vld [vmem:[#allocation2 + $0x48] sm:$0xf]
  %v2115 = vld [vmem:[#allocation2 + $0x4c] sm:$0xf]
  %v2116 = vld [vmem:[#allocation2 + $0x50] sm:$0xf]
  %v2117 = vld [vmem:[#allocation2 + $0x54] sm:$0xf]
  %v2118 = vld [vmem:[#allocation2 + $0x58] sm:$0xf]
  %v2119 = vld [vmem:[#allocation2 + $0x5c] sm:$0xf]
  %v2120 = vld [vmem:[#allocation2 + $0x60] sm:$0xf]
  %v2121 = vld [vmem:[#allocation2 + $0x64] sm:$0xf]
  %v2122 = vld [vmem:[#allocation2 + $0x68] sm:$0xf]
  %v2123 = vld [vmem:[#allocation2 + $0x6c] sm:$0xf]
  %v2124 = vld [vmem:[#allocation2 + $0x70] sm:$0xf]
  %v2125 = vld [vmem:[#allocation2 + $0x74] sm:$0xf]
  %v2126 = vld [vmem:[#allocation2 + $0x78] sm:$0xf]
  %v2127 = vld [vmem:[#allocation2 + $0x7c] sm:$0xf]
  %v2128 = vld [vmem:[#allocation2 + $0x80] sm:$0xf]
  %v2129 = vld [vmem:[#allocation2 + $0x84] sm:$0xf]
  %v2130 = vld [vmem:[#allocation2 + $0x88] sm:$0xf]
  %v2131 = vld [vmem:[#allocation2 + $0x8c] sm:$0xf]
  %v2132 = vld [vmem:[#allocation2 + $0x90] sm:$0xf]
  %v2133 = vld [vmem:[#allocation2 + $0x94] sm:$0xf]
  %v2134 = vld [vmem:[#allocation2 + $0x98] sm:$0x1]
  %s2135 = scalar_lea.vmem %s2, 32
  %v2136 = vld [vmem:[%s2135] sm:$0xf]
  %v2137 = vld [vmem:[%s2135 + $0x4] sm:$0xf]
  %v2175 = vunpack.c.l.b16 %v2098
  %v2176 = vunpack.c.l.b16 %v2099
  %v2177 = vunpack.c.l.b16 %v2100
  %v2178 = vunpack.c.l.b16 %v2101
  %v2179 = vunpack.c.l.b16 %v2102
  %v2180 = vunpack.c.l.b16 %v2103
  %v2181 = vunpack.c.l.b16 %v2104
  %v2182 = vunpack.c.l.b16 %v2105
  %v2183 = vunpack.c.l.b16 %v2106
  %v2184 = vunpack.c.l.b16 %v2107
  %v2185 = vunpack.c.l.b16 %v2108
  %v2186 = vunpack.c.l.b16 %v2109
  %v2187 = vunpack.c.l.b16 %v2110
  %v2188 = vunpack.c.l.b16 %v2111
  %v2189 = vunpack.c.l.b16 %v2112
  %v2190 = vunpack.c.l.b16 %v2113
  %v2191 = vunpack.c.l.b16 %v2114
  %v2192 = vunpack.c.l.b16 %v2115
  %v2193 = vunpack.c.l.b16 %v2116
  %v2194 = vunpack.c.l.b16 %v2117
  %v2195 = vunpack.c.l.b16 %v2118
  %v2196 = vunpack.c.l.b16 %v2119
  %v2197 = vunpack.c.l.b16 %v2120
  %v2198 = vunpack.c.l.b16 %v2121
  %v2199 = vunpack.c.l.b16 %v2122
  %v2200 = vunpack.c.l.b16 %v2123
  %v2201 = vunpack.c.l.b16 %v2124
  %v2202 = vunpack.c.l.b16 %v2125
  %v2203 = vunpack.c.l.b16 %v2126
  %v2204 = vunpack.c.l.b16 %v2127
  %v2205 = vunpack.c.l.b16 %v2128
  %v2206 = vunpack.c.l.b16 %v2129
  %v2207 = vunpack.c.l.b16 %v2130
  %v2208 = vunpack.c.l.b16 %v2131
  %v2209 = vunpack.c.l.b16 %v2132
  %v2210 = vunpack.c.l.b16 %v2133
  %v2211 = vunpack.c.l.b16 %v2134
  %v2212 = vpack.c.b16 %v2176, %v2175
  %v2213 = vpack.c.b16 %v2178, %v2177
  %v2214 = vpack.c.b16 %v2180, %v2179
  %v2215 = vpack.c.b16 %v2182, %v2181
  %v2216 = vpack.c.b16 %v2184, %v2183
  %v2217 = vpack.c.b16 %v2186, %v2185
  %v2218 = vpack.c.b16 %v2188, %v2187
  %v2219 = vpack.c.b16 %v2190, %v2189
  %v2220 = vpack.c.b16 %v2192, %v2191
  %v2221 = vpack.c.b16 %v2194, %v2193
  %v2222 = vpack.c.b16 %v2196, %v2195
  %v2223 = vpack.c.b16 %v2198, %v2197
  %v2224 = vpack.c.b16 %v2200, %v2199
  %v2225 = vpack.c.b16 %v2202, %v2201
  %v2226 = vpack.c.b16 %v2204, %v2203
  %v2227 = vpack.c.b16 %v2206, %v2205
  %v2228 = vpack.c.b16 %v2208, %v2207
  %v2229 = vpack.c.b16 %v2210, %v2209
  %v2230 = vpack.c.b16 %v2211, %v2211
  %vm2231 = vsmask.f32 7424
  %v2233 = vshrl.u32 %v2212, 16
  %v2235 = vshll.u32 %v2212, 16
  %v2237 = vrot.slane %v2235, 1
  %v2238 = vor.u32 %v2233, %v2237
  %v2240 = vshll.u32 %v2213, 16
  %v2242 = vrot.slane %v2240, 1
  %v2243 = vsel %vm2231, %v2238, %v2242
  %v2244 = vshrl.u32 %v2213, 16
  %v2246 = vor.u32 %v2244, %v2242
  %v2248 = vshll.u32 %v2214, 16
  %v2250 = vrot.slane %v2248, 1
  %v2251 = vsel %vm2231, %v2246, %v2250
  %v2252 = vshrl.u32 %v2214, 16
  %v2254 = vor.u32 %v2252, %v2250
  %v2256 = vshll.u32 %v2215, 16
  %v2258 = vrot.slane %v2256, 1
  %v2259 = vsel %vm2231, %v2254, %v2258
  %v2260 = vshrl.u32 %v2215, 16
  %v2262 = vor.u32 %v2260, %v2258
  %v2264 = vshll.u32 %v2216, 16
  %v2266 = vrot.slane %v2264, 1
  %v2267 = vsel %vm2231, %v2262, %v2266
  %v2268 = vshrl.u32 %v2216, 16
  %v2270 = vor.u32 %v2268, %v2266
  %v2272 = vshll.u32 %v2217, 16
  %v2274 = vrot.slane %v2272, 1
  %v2275 = vsel %vm2231, %v2270, %v2274
  %v2276 = vshrl.u32 %v2217, 16
  %v2278 = vor.u32 %v2276, %v2274
  %v2280 = vshll.u32 %v2218, 16
  %v2282 = vrot.slane %v2280, 1
  %v2283 = vsel %vm2231, %v2278, %v2282
  %v2284 = vshrl.u32 %v2218, 16
  %v2286 = vor.u32 %v2284, %v2282
  %v2288 = vshll.u32 %v2219, 16
  %v2290 = vrot.slane %v2288, 1
  %v2291 = vsel %vm2231, %v2286, %v2290
  %v2292 = vshrl.u32 %v2219, 16
  %v2294 = vor.u32 %v2292, %v2290
  %v2296 = vshll.u32 %v2220, 16
  %v2298 = vrot.slane %v2296, 1
  %v2299 = vsel %vm2231, %v2294, %v2298
  %v2300 = vshrl.u32 %v2220, 16
  %v2302 = vor.u32 %v2300, %v2298
  %v2304 = vshll.u32 %v2221, 16
  %v2306 = vrot.slane %v2304, 1
  %v2307 = vsel %vm2231, %v2302, %v2306
  %v2308 = vshrl.u32 %v2221, 16
  %v2310 = vor.u32 %v2308, %v2306
  %v2312 = vshll.u32 %v2222, 16
  %v2314 = vrot.slane %v2312, 1
  %v2315 = vsel %vm2231, %v2310, %v2314
  %v2316 = vshrl.u32 %v2222, 16
  %v2318 = vor.u32 %v2316, %v2314
  %v2320 = vshll.u32 %v2223, 16
  %v2322 = vrot.slane %v2320, 1
  %v2323 = vsel %vm2231, %v2318, %v2322
  %v2324 = vshrl.u32 %v2223, 16
  %v2326 = vor.u32 %v2324, %v2322
  %v2328 = vshll.u32 %v2224, 16
  %v2330 = vrot.slane %v2328, 1
  %v2331 = vsel %vm2231, %v2326, %v2330
  %v2332 = vshrl.u32 %v2224, 16
  %v2334 = vor.u32 %v2332, %v2330
  %v2336 = vshll.u32 %v2225, 16
  %v2338 = vrot.slane %v2336, 1
  %v2339 = vsel %vm2231, %v2334, %v2338
  %v2340 = vshrl.u32 %v2225, 16
  %v2342 = vor.u32 %v2340, %v2338
  %v2344 = vshll.u32 %v2226, 16
  %v2346 = vrot.slane %v2344, 1
  %v2347 = vsel %vm2231, %v2342, %v2346
  %v2348 = vshrl.u32 %v2226, 16
  %v2350 = vor.u32 %v2348, %v2346
  %v2352 = vshll.u32 %v2227, 16
  %v2354 = vrot.slane %v2352, 1
  %v2355 = vsel %vm2231, %v2350, %v2354
  %v2356 = vshrl.u32 %v2227, 16
  %v2358 = vor.u32 %v2356, %v2354
  %v2360 = vshll.u32 %v2228, 16
  %v2362 = vrot.slane %v2360, 1
  %v2363 = vsel %vm2231, %v2358, %v2362
  %v2364 = vshrl.u32 %v2228, 16
  %v2366 = vor.u32 %v2364, %v2362
  %v2368 = vshll.u32 %v2229, 16
  %v2370 = vrot.slane %v2368, 1
  %v2371 = vsel %vm2231, %v2366, %v2370
  %v2372 = vshrl.u32 %v2229, 16
  %v2374 = vor.u32 %v2372, %v2370
  %v2376 = vshll.u32 %v2230, 16
  %v2378 = vrot.slane %v2376, 1
  %v2379 = vsel %vm2231, %v2374, %v2378
  %v2382 = vunpack.c.l.b16 %v2136
  %v2383 = vunpack.c.l.b16 %v2137
  %v2384 = vpack.c.b16 %v2383, %v2382
  %v2387 = vsel %vm1675, %v2243, 0
  %v2390 = vsel %vm1675, %v2251, 0
  %v2393 = vsel %vm1675, %v2259, 0
  %v2396 = vsel %vm1675, %v2267, 0
  %v2399 = vsel %vm1675, %v2275, 0
  %v2402 = vsel %vm1675, %v2283, 0
  %v2405 = vsel %vm1675, %v2291, 0
  %v2408 = vsel %vm1675, %v2299, 0
  %v2411 = vsel %vm1675, %v2307, 0
  %v2414 = vsel %vm1675, %v2315, 0
  %v2417 = vsel %vm1675, %v2323, 0
  %v2420 = vsel %vm1675, %v2331, 0
  %v2423 = vsel %vm1675, %v2339, 0
  %v2426 = vsel %vm1675, %v2347, 0
  %v2429 = vsel %vm1675, %v2355, 0
  %v2432 = vsel %vm1675, %v2363, 0
  %v2435 = vsel %vm1675, %v2371, 0
  %v2438 = vsel %vm1675, %v2379, 0
  %2440 = vmatprep.subr.bf16.mxu0 0
  %2441 = vmatpush1.bf16.msra.mxu0 0
  %2442 = vmatprep.subr.bf16.mxu0 0
  %2443 = vmatpush1.bf16.msra.mxu0 0
  %2444 = vmatprep.subr.bf16.mxu0 0
  %2445 = vmatpush1.bf16.msra.mxu0 0
  %2446 = vmatprep.subr.bf16.mxu0 0
  %2447 = vmatpush1.bf16.msra.mxu0 0
  %2448 = vmatprep.subr.bf16.mxu0 0
  %2449 = vmatpush1.bf16.msra.mxu0 0
  %2450 = vmatprep.subr.bf16.mxu0 0
  %2451 = vmatpush1.bf16.msra.mxu0 0
  %2452 = vmatprep.subr.bf16.mxu0 0
  %2453 = vmatpush1.bf16.msra.mxu0 0
  %2454 = vmatprep.subr.bf16.mxu0 0
  %2455 = vmatpush1.bf16.msra.mxu0 %v2384
  %2456 = vmatprep.subr.bf16.mxu0 0
  %2457 = vmatpush2.bf16.msra.mxu0 0
  %2458 = vmatprep.subr.bf16.mxu0 0
  %2459 = vmatpush2.bf16.msra.mxu0 0
  %2460 = vmatprep.subr.bf16.mxu0 0
  %2461 = vmatpush2.bf16.msra.mxu0 0
  %2462 = vmatprep.subr.bf16.mxu0 0
  %2463 = vmatpush2.bf16.msra.mxu0 0
  %2464 = vmatprep.subr.bf16.mxu0 0
  %2465 = vmatpush2.bf16.msra.mxu0 0
  %2466 = vmatprep.subr.bf16.mxu0 0
  %2467 = vmatpush2.bf16.msra.mxu0 0
  %2468 = vmatprep.subr.bf16.mxu0 0
  %2469 = vmatpush2.bf16.msra.mxu0 0
  %2470 = vmatprep.subr.bf16.mxu0 0
  %2471 = vmatpush2.bf16.msra.mxu0 0
  %2472 = vmatprep.mubr.bf16.mxu0 0
  %2473 = vmatmul.mubr.bf16.gmra.mxu0 %v2387
  %v2474 = vpop.f32.mrf.mxu0
  %v2475 = vadd.f32 0.0, %v2474
  %v2476 = vpop.f32.mrf.mxu0
  %v2477 = vpop.f32.mrf.mxu0
  %v2478 = vadd.f32 0.0, %v2477
  %v2479 = vpop.f32.mrf.mxu0
  %2480 = vmatprep.mubr.bf16.mxu0 0
  %2481 = vmatmul.mubr.bf16.gmra.mxu0 %v2390
  %v2482 = vpop.f32.mrf.mxu0
  %v2483 = vadd.f32 0.0, %v2482
  %v2484 = vpop.f32.mrf.mxu0
  %v2485 = vpop.f32.mrf.mxu0
  %v2486 = vadd.f32 0.0, %v2485
  %v2487 = vpop.f32.mrf.mxu0
  %2488 = vmatprep.mubr.bf16.mxu0 0
  %2489 = vmatmul.mubr.bf16.gmra.mxu0 %v2393
  %v2490 = vpop.f32.mrf.mxu0
  %v2491 = vadd.f32 0.0, %v2490
  %v2492 = vpop.f32.mrf.mxu0
  %v2493 = vpop.f32.mrf.mxu0
  %v2494 = vadd.f32 0.0, %v2493
  %v2495 = vpop.f32.mrf.mxu0
  %2496 = vmatprep.mubr.bf16.mxu0 0
  %2497 = vmatmul.mubr.bf16.gmra.mxu0 %v2396
  %v2498 = vpop.f32.mrf.mxu0
  %v2499 = vadd.f32 0.0, %v2498
  %v2500 = vpop.f32.mrf.mxu0
  %v2501 = vpop.f32.mrf.mxu0
  %v2502 = vadd.f32 0.0, %v2501
  %v2503 = vpop.f32.mrf.mxu0
  %2504 = vmatprep.mubr.bf16.mxu0 0
  %2505 = vmatmul.mubr.bf16.gmra.mxu0 %v2399
  %v2506 = vpop.f32.mrf.mxu0
  %v2507 = vadd.f32 0.0, %v2506
  %v2508 = vpop.f32.mrf.mxu0
  %v2509 = vpop.f32.mrf.mxu0
  %v2510 = vadd.f32 0.0, %v2509
  %v2511 = vpop.f32.mrf.mxu0
  %2512 = vmatprep.mubr.bf16.mxu0 0
  %2513 = vmatmul.mubr.bf16.gmra.mxu0 %v2402
  %v2514 = vpop.f32.mrf.mxu0
  %v2515 = vadd.f32 0.0, %v2514
  %v2516 = vpop.f32.mrf.mxu0
  %v2517 = vpop.f32.mrf.mxu0
  %v2518 = vadd.f32 0.0, %v2517
  %v2519 = vpop.f32.mrf.mxu0
  %2520 = vmatprep.mubr.bf16.mxu0 0
  %2521 = vmatmul.mubr.bf16.gmra.mxu0 %v2405
  %v2522 = vpop.f32.mrf.mxu0
  %v2523 = vadd.f32 0.0, %v2522
  %v2524 = vpop.f32.mrf.mxu0
  %v2525 = vpop.f32.mrf.mxu0
  %v2526 = vadd.f32 0.0, %v2525
  %v2527 = vpop.f32.mrf.mxu0
  %2528 = vmatprep.mubr.bf16.mxu0 0
  %2529 = vmatmul.mubr.bf16.gmra.mxu0 %v2408
  %v2530 = vpop.f32.mrf.mxu0
  %v2531 = vadd.f32 0.0, %v2530
  %v2532 = vpop.f32.mrf.mxu0
  %v2533 = vpop.f32.mrf.mxu0
  %v2534 = vadd.f32 0.0, %v2533
  %v2535 = vpop.f32.mrf.mxu0
  %2536 = vmatprep.mubr.bf16.mxu0 0
  %2537 = vmatmul.mubr.bf16.gmra.mxu0 %v2411
  %v2538 = vpop.f32.mrf.mxu0
  %v2539 = vadd.f32 0.0, %v2538
  %v2540 = vpop.f32.mrf.mxu0
  %v2541 = vpop.f32.mrf.mxu0
  %v2542 = vadd.f32 0.0, %v2541
  %v2543 = vpop.f32.mrf.mxu0
  %2544 = vmatprep.mubr.bf16.mxu0 0
  %2545 = vmatmul.mubr.bf16.gmra.mxu0 %v2414
  %v2546 = vpop.f32.mrf.mxu0
  %v2547 = vadd.f32 0.0, %v2546
  %v2548 = vpop.f32.mrf.mxu0
  %v2549 = vpop.f32.mrf.mxu0
  %v2550 = vadd.f32 0.0, %v2549
  %v2551 = vpop.f32.mrf.mxu0
  %2552 = vmatprep.mubr.bf16.mxu0 0
  %2553 = vmatmul.mubr.bf16.gmra.mxu0 %v2417
  %v2554 = vpop.f32.mrf.mxu0
  %v2555 = vadd.f32 0.0, %v2554
  %v2556 = vpop.f32.mrf.mxu0
  %v2557 = vpop.f32.mrf.mxu0
  %v2558 = vadd.f32 0.0, %v2557
  %v2559 = vpop.f32.mrf.mxu0
  %2560 = vmatprep.mubr.bf16.mxu0 0
  %2561 = vmatmul.mubr.bf16.gmra.mxu0 %v2420
  %v2562 = vpop.f32.mrf.mxu0
  %v2563 = vadd.f32 0.0, %v2562
  %v2564 = vpop.f32.mrf.mxu0
  %v2565 = vpop.f32.mrf.mxu0
  %v2566 = vadd.f32 0.0, %v2565
  %v2567 = vpop.f32.mrf.mxu0
  %2568 = vmatprep.mubr.bf16.mxu0 0
  %2569 = vmatmul.mubr.bf16.gmra.mxu0 %v2423
  %v2570 = vpop.f32.mrf.mxu0
  %v2571 = vadd.f32 0.0, %v2570
  %v2572 = vpop.f32.mrf.mxu0
  %v2573 = vpop.f32.mrf.mxu0
  %v2574 = vadd.f32 0.0, %v2573
  %v2575 = vpop.f32.mrf.mxu0
  %2576 = vmatprep.mubr.bf16.mxu0 0
  %2577 = vmatmul.mubr.bf16.gmra.mxu0 %v2426
  %v2578 = vpop.f32.mrf.mxu0
  %v2579 = vadd.f32 0.0, %v2578
  %v2580 = vpop.f32.mrf.mxu0
  %v2581 = vpop.f32.mrf.mxu0
  %v2582 = vadd.f32 0.0, %v2581
  %v2583 = vpop.f32.mrf.mxu0
  %2584 = vmatprep.mubr.bf16.mxu0 0
  %2585 = vmatmul.mubr.bf16.gmra.mxu0 %v2429
  %v2586 = vpop.f32.mrf.mxu0
  %v2587 = vadd.f32 0.0, %v2586
  %v2588 = vpop.f32.mrf.mxu0
  %v2589 = vpop.f32.mrf.mxu0
  %v2590 = vadd.f32 0.0, %v2589
  %v2591 = vpop.f32.mrf.mxu0
  %2592 = vmatprep.mubr.bf16.mxu0 0
  %2593 = vmatmul.mubr.bf16.gmra.mxu0 %v2432
  %v2594 = vpop.f32.mrf.mxu0
  %v2595 = vadd.f32 0.0, %v2594
  %v2596 = vpop.f32.mrf.mxu0
  %v2597 = vpop.f32.mrf.mxu0
  %v2598 = vadd.f32 0.0, %v2597
  %v2599 = vpop.f32.mrf.mxu0
  %2600 = vmatprep.mubr.bf16.mxu0 0
  %2601 = vmatmul.mubr.bf16.gmra.mxu0 %v2435
  %v2602 = vpop.f32.mrf.mxu0
  %v2603 = vadd.f32 0.0, %v2602
  %v2604 = vpop.f32.mrf.mxu0
  %v2605 = vpop.f32.mrf.mxu0
  %v2606 = vadd.f32 0.0, %v2605
  %v2607 = vpop.f32.mrf.mxu0
  %2608 = vmatprep.mubr.bf16.mxu0 0
  %2609 = vmatmul.mubr.bf16.gmra.mxu0 %v2438
  %v2610 = vpop.f32.mrf.mxu0
  %v2611 = vadd.f32 0.0, %v2610
  %v2612 = vpop.f32.mrf.mxu0
  %v2613 = vpop.f32.mrf.mxu0
  %v2614 = vadd.f32 0.0, %v2613
  %v2615 = vpop.f32.mrf.mxu0
  %2616 = vdwg.mxu0
  %v2618 = vunpack.c.l.b16 %v1566
  %v2619 = vpack.c.b16 %v2618, %v2618
  %v2620 = vshrl.u32 %v1911, 16
  %v2622 = vshll.u32 %v1911, 16
  %v2624 = vrot.slane %v2622, 1
  %v2625 = vor.u32 %v2620, %v2624
  %v2626 = vshll.u32 %v1651, 16
  %v2628 = vrot.slane %v2626, 1
  %v2629 = vsel %vm2231, %v2625, %v2628
  %v2630 = vshrl.u32 %v1651, 16
  %v2632 = vor.u32 %v2630, %v2628
  %v2633 = vshll.u32 %v1652, 16
  %v2635 = vrot.slane %v2633, 1
  %v2636 = vsel %vm2231, %v2632, %v2635
  %v2637 = vshrl.u32 %v1652, 16
  %v2639 = vor.u32 %v2637, %v2635
  %v2640 = vshll.u32 %v1653, 16
  %v2642 = vrot.slane %v2640, 1
  %v2643 = vsel %vm2231, %v2639, %v2642
  %v2644 = vshrl.u32 %v1653, 16
  %v2646 = vor.u32 %v2644, %v2642
  %v2647 = vshll.u32 %v1654, 16
  %v2649 = vrot.slane %v2647, 1
  %v2650 = vsel %vm2231, %v2646, %v2649
  %v2651 = vshrl.u32 %v1654, 16
  %v2653 = vor.u32 %v2651, %v2649
  %v2654 = vshll.u32 %v1655, 16
  %v2656 = vrot.slane %v2654, 1
  %v2657 = vsel %vm2231, %v2653, %v2656
  %v2658 = vshrl.u32 %v1655, 16
  %v2660 = vor.u32 %v2658, %v2656
  %v2661 = vshll.u32 %v1656, 16
  %v2663 = vrot.slane %v2661, 1
  %v2664 = vsel %vm2231, %v2660, %v2663
  %v2665 = vshrl.u32 %v1656, 16
  %v2667 = vor.u32 %v2665, %v2663
  %v2668 = vshll.u32 %v1657, 16
  %v2670 = vrot.slane %v2668, 1
  %v2671 = vsel %vm2231, %v2667, %v2670
  %v2672 = vshrl.u32 %v1657, 16
  %v2674 = vor.u32 %v2672, %v2670
  %v2675 = vshll.u32 %v1658, 16
  %v2677 = vrot.slane %v2675, 1
  %v2678 = vsel %vm2231, %v2674, %v2677
  %v2679 = vshrl.u32 %v1658, 16
  %v2681 = vor.u32 %v2679, %v2677
  %v2682 = vshll.u32 %v1659, 16
  %v2684 = vrot.slane %v2682, 1
  %v2685 = vsel %vm2231, %v2681, %v2684
  %v2686 = vshrl.u32 %v1659, 16
  %v2688 = vor.u32 %v2686, %v2684
  %v2689 = vshll.u32 %v1660, 16
  %v2691 = vrot.slane %v2689, 1
  %v2692 = vsel %vm2231, %v2688, %v2691
  %v2693 = vshrl.u32 %v1660, 16
  %v2695 = vor.u32 %v2693, %v2691
  %v2696 = vshll.u32 %v1661, 16
  %v2698 = vrot.slane %v2696, 1
  %v2699 = vsel %vm2231, %v2695, %v2698
  %v2700 = vshrl.u32 %v1661, 16
  %v2702 = vor.u32 %v2700, %v2698
  %v2703 = vshll.u32 %v1662, 16
  %v2705 = vrot.slane %v2703, 1
  %v2706 = vsel %vm2231, %v2702, %v2705
  %v2707 = vshrl.u32 %v1662, 16
  %v2709 = vor.u32 %v2707, %v2705
  %v2710 = vshll.u32 %v1663, 16
  %v2712 = vrot.slane %v2710, 1
  %v2713 = vsel %vm2231, %v2709, %v2712
  %v2714 = vshrl.u32 %v1663, 16
  %v2716 = vor.u32 %v2714, %v2712
  %v2717 = vshll.u32 %v1664, 16
  %v2719 = vrot.slane %v2717, 1
  %v2720 = vsel %vm2231, %v2716, %v2719
  %v2721 = vshrl.u32 %v1664, 16
  %v2723 = vor.u32 %v2721, %v2719
  %v2724 = vshll.u32 %v1665, 16
  %v2726 = vrot.slane %v2724, 1
  %v2727 = vsel %vm2231, %v2723, %v2726
  %v2728 = vshrl.u32 %v1665, 16
  %v2730 = vor.u32 %v2728, %v2726
  %v2731 = vshll.u32 %v1666, 16
  %v2733 = vrot.slane %v2731, 1
  %v2734 = vsel %vm2231, %v2730, %v2733
  %v2735 = vshrl.u32 %v1666, 16
  %v2737 = vor.u32 %v2735, %v2733
  %v2738 = vshll.u32 %v1667, 16
  %v2740 = vrot.slane %v2738, 1
  %v2741 = vsel %vm2231, %v2737, %v2740
  %v2742 = vshrl.u32 %v1667, 16
  %v2744 = vor.u32 %v2742, %v2740
  %v2746 = vshll.u32 %v2619, 16
  %v2748 = vrot.slane %v2746, 1
  %v2749 = vsel %vm2231, %v2744, %v2748
  %v2752 = vunpack.c.l.b16 %v1568
  %v2753 = vunpack.c.l.b16 %v1569
  %v2754 = vpack.c.b16 %v2753, %v2752
  %v2757 = vsel %vm1675, %v2629, 0
  %v2760 = vsel %vm1675, %v2636, 0
  %v2763 = vsel %vm1675, %v2643, 0
  %v2766 = vsel %vm1675, %v2650, 0
  %v2769 = vsel %vm1675, %v2657, 0
  %v2772 = vsel %vm1675, %v2664, 0
  %v2775 = vsel %vm1675, %v2671, 0
  %v2778 = vsel %vm1675, %v2678, 0
  %v2781 = vsel %vm1675, %v2685, 0
  %v2784 = vsel %vm1675, %v2692, 0
  %v2787 = vsel %vm1675, %v2699, 0
  %v2790 = vsel %vm1675, %v2706, 0
  %v2793 = vsel %vm1675, %v2713, 0
  %v2796 = vsel %vm1675, %v2720, 0
  %v2799 = vsel %vm1675, %v2727, 0
  %v2802 = vsel %vm1675, %v2734, 0
  %v2805 = vsel %vm1675, %v2741, 0
  %v2808 = vsel %vm1675, %v2749, 0
  %2810 = vmatprep.subr.bf16.mxu0 0
  %2811 = vmatpush1.bf16.msra.mxu0 0
  %2812 = vmatprep.subr.bf16.mxu0 0
  %2813 = vmatpush1.bf16.msra.mxu0 0
  %2814 = vmatprep.subr.bf16.mxu0 0
  %2815 = vmatpush1.bf16.msra.mxu0 0
  %2816 = vmatprep.subr.bf16.mxu0 0
  %2817 = vmatpush1.bf16.msra.mxu0 0
  %2818 = vmatprep.subr.bf16.mxu0 0
  %2819 = vmatpush1.bf16.msra.mxu0 0
  %2820 = vmatprep.subr.bf16.mxu0 0
  %2821 = vmatpush1.bf16.msra.mxu0 0
  %2822 = vmatprep.subr.bf16.mxu0 0
  %2823 = vmatpush1.bf16.msra.mxu0 0
  %2824 = vmatprep.subr.bf16.mxu0 0
  %2825 = vmatpush1.bf16.msra.mxu0 %v2754
  %2826 = vmatprep.subr.bf16.mxu0 0
  %2827 = vmatpush2.bf16.msra.mxu0 0
  %2828 = vmatprep.subr.bf16.mxu0 0
  %2829 = vmatpush2.bf16.msra.mxu0 0
  %2830 = vmatprep.subr.bf16.mxu0 0
  %2831 = vmatpush2.bf16.msra.mxu0 0
  %2832 = vmatprep.subr.bf16.mxu0 0
  %2833 = vmatpush2.bf16.msra.mxu0 0
  %2834 = vmatprep.subr.bf16.mxu0 0
  %2835 = vmatpush2.bf16.msra.mxu0 0
  %2836 = vmatprep.subr.bf16.mxu0 0
  %2837 = vmatpush2.bf16.msra.mxu0 0
  %2838 = vmatprep.subr.bf16.mxu0 0
  %2839 = vmatpush2.bf16.msra.mxu0 0
  %2840 = vmatprep.subr.bf16.mxu0 0
  %2841 = vmatpush2.bf16.msra.mxu0 0
  %2842 = vmatprep.mubr.bf16.mxu0 0
  %2843 = vmatmul.mubr.bf16.gmra.mxu0 %v2757
  %v2844 = vpop.f32.mrf.mxu0
  %v2845 = vadd.f32 %v2475, %v2844
  %v2846 = vpop.f32.mrf.mxu0
  %v2847 = vpop.f32.mrf.mxu0
  %v2848 = vadd.f32 %v2478, %v2847
  %v2849 = vpop.f32.mrf.mxu0
  %2850 = vmatprep.mubr.bf16.mxu0 0
  %2851 = vmatmul.mubr.bf16.gmra.mxu0 %v2760
  %v2852 = vpop.f32.mrf.mxu0
  %v2853 = vadd.f32 %v2483, %v2852
  %v2854 = vpop.f32.mrf.mxu0
  %v2855 = vpop.f32.mrf.mxu0
  %v2856 = vadd.f32 %v2486, %v2855
  %v2857 = vpop.f32.mrf.mxu0
  %2858 = vmatprep.mubr.bf16.mxu0 0
  %2859 = vmatmul.mubr.bf16.gmra.mxu0 %v2763
  %v2860 = vpop.f32.mrf.mxu0
  %v2861 = vadd.f32 %v2491, %v2860
  %v2862 = vpop.f32.mrf.mxu0
  %v2863 = vpop.f32.mrf.mxu0
  %v2864 = vadd.f32 %v2494, %v2863
  %v2865 = vpop.f32.mrf.mxu0
  %2866 = vmatprep.mubr.bf16.mxu0 0
  %2867 = vmatmul.mubr.bf16.gmra.mxu0 %v2766
  %v2868 = vpop.f32.mrf.mxu0
  %v2869 = vadd.f32 %v2499, %v2868
  %v2870 = vpop.f32.mrf.mxu0
  %v2871 = vpop.f32.mrf.mxu0
  %v2872 = vadd.f32 %v2502, %v2871
  %v2873 = vpop.f32.mrf.mxu0
  %2874 = vmatprep.mubr.bf16.mxu0 0
  %2875 = vmatmul.mubr.bf16.gmra.mxu0 %v2769
  %v2876 = vpop.f32.mrf.mxu0
  %v2877 = vadd.f32 %v2507, %v2876
  %v2878 = vpop.f32.mrf.mxu0
  %v2879 = vpop.f32.mrf.mxu0
  %v2880 = vadd.f32 %v2510, %v2879
  %v2881 = vpop.f32.mrf.mxu0
  %2882 = vmatprep.mubr.bf16.mxu0 0
  %2883 = vmatmul.mubr.bf16.gmra.mxu0 %v2772
  %v2884 = vpop.f32.mrf.mxu0
  %v2885 = vadd.f32 %v2515, %v2884
  %v2886 = vpop.f32.mrf.mxu0
  %v2887 = vpop.f32.mrf.mxu0
  %v2888 = vadd.f32 %v2518, %v2887
  %v2889 = vpop.f32.mrf.mxu0
  %2890 = vmatprep.mubr.bf16.mxu0 0
  %2891 = vmatmul.mubr.bf16.gmra.mxu0 %v2775
  %v2892 = vpop.f32.mrf.mxu0
  %v2893 = vadd.f32 %v2523, %v2892
  %v2894 = vpop.f32.mrf.mxu0
  %v2895 = vpop.f32.mrf.mxu0
  %v2896 = vadd.f32 %v2526, %v2895
  %v2897 = vpop.f32.mrf.mxu0
  %2898 = vmatprep.mubr.bf16.mxu0 0
  %2899 = vmatmul.mubr.bf16.gmra.mxu0 %v2778
  %v2900 = vpop.f32.mrf.mxu0
  %v2901 = vadd.f32 %v2531, %v2900
  %v2902 = vpop.f32.mrf.mxu0
  %v2903 = vpop.f32.mrf.mxu0
  %v2904 = vadd.f32 %v2534, %v2903
  %v2905 = vpop.f32.mrf.mxu0
  %2906 = vmatprep.mubr.bf16.mxu0 0
  %2907 = vmatmul.mubr.bf16.gmra.mxu0 %v2781
  %v2908 = vpop.f32.mrf.mxu0
  %v2909 = vadd.f32 %v2539, %v2908
  %v2910 = vpop.f32.mrf.mxu0
  %v2911 = vpop.f32.mrf.mxu0
  %v2912 = vadd.f32 %v2542, %v2911
  %v2913 = vpop.f32.mrf.mxu0
  %2914 = vmatprep.mubr.bf16.mxu0 0
  %2915 = vmatmul.mubr.bf16.gmra.mxu0 %v2784
  %v2916 = vpop.f32.mrf.mxu0
  %v2917 = vadd.f32 %v2547, %v2916
  %v2918 = vpop.f32.mrf.mxu0
  %v2919 = vpop.f32.mrf.mxu0
  %v2920 = vadd.f32 %v2550, %v2919
  %v2921 = vpop.f32.mrf.mxu0
  %2922 = vmatprep.mubr.bf16.mxu0 0
  %2923 = vmatmul.mubr.bf16.gmra.mxu0 %v2787
  %v2924 = vpop.f32.mrf.mxu0
  %v2925 = vadd.f32 %v2555, %v2924
  %v2926 = vpop.f32.mrf.mxu0
  %v2927 = vpop.f32.mrf.mxu0
  %v2928 = vadd.f32 %v2558, %v2927
  %v2929 = vpop.f32.mrf.mxu0
  %2930 = vmatprep.mubr.bf16.mxu0 0
  %2931 = vmatmul.mubr.bf16.gmra.mxu0 %v2790
  %v2932 = vpop.f32.mrf.mxu0
  %v2933 = vadd.f32 %v2563, %v2932
  %v2934 = vpop.f32.mrf.mxu0
  %v2935 = vpop.f32.mrf.mxu0
  %v2936 = vadd.f32 %v2566, %v2935
  %v2937 = vpop.f32.mrf.mxu0
  %2938 = vmatprep.mubr.bf16.mxu0 0
  %2939 = vmatmul.mubr.bf16.gmra.mxu0 %v2793
  %v2940 = vpop.f32.mrf.mxu0
  %v2941 = vadd.f32 %v2571, %v2940
  %v2942 = vpop.f32.mrf.mxu0
  %v2943 = vpop.f32.mrf.mxu0
  %v2944 = vadd.f32 %v2574, %v2943
  %v2945 = vpop.f32.mrf.mxu0
  %2946 = vmatprep.mubr.bf16.mxu0 0
  %2947 = vmatmul.mubr.bf16.gmra.mxu0 %v2796
  %v2948 = vpop.f32.mrf.mxu0
  %v2949 = vadd.f32 %v2579, %v2948
  %v2950 = vpop.f32.mrf.mxu0
  %v2951 = vpop.f32.mrf.mxu0
  %v2952 = vadd.f32 %v2582, %v2951
  %v2953 = vpop.f32.mrf.mxu0
  %2954 = vmatprep.mubr.bf16.mxu0 0
  %2955 = vmatmul.mubr.bf16.gmra.mxu0 %v2799
  %v2956 = vpop.f32.mrf.mxu0
  %v2957 = vadd.f32 %v2587, %v2956
  %v2958 = vpop.f32.mrf.mxu0
  %v2959 = vpop.f32.mrf.mxu0
  %v2960 = vadd.f32 %v2590, %v2959
  %v2961 = vpop.f32.mrf.mxu0
  %2962 = vmatprep.mubr.bf16.mxu0 0
  %2963 = vmatmul.mubr.bf16.gmra.mxu0 %v2802
  %v2964 = vpop.f32.mrf.mxu0
  %v2965 = vadd.f32 %v2595, %v2964
  %v2966 = vpop.f32.mrf.mxu0
  %v2967 = vpop.f32.mrf.mxu0
  %v2968 = vadd.f32 %v2598, %v2967
  %v2969 = vpop.f32.mrf.mxu0
  %2970 = vmatprep.mubr.bf16.mxu0 0
  %2971 = vmatmul.mubr.bf16.gmra.mxu0 %v2805
  %v2972 = vpop.f32.mrf.mxu0
  %v2973 = vadd.f32 %v2603, %v2972
  %v2974 = vpop.f32.mrf.mxu0
  %v2975 = vpop.f32.mrf.mxu0
  %v2976 = vadd.f32 %v2606, %v2975
  %v2977 = vpop.f32.mrf.mxu0
  %2978 = vmatprep.mubr.bf16.mxu0 0
  %2979 = vmatmul.mubr.bf16.gmra.mxu0 %v2808
  %v2980 = vpop.f32.mrf.mxu0
  %v2981 = vadd.f32 %v2611, %v2980
  %v2982 = vpop.f32.mrf.mxu0
  %v2983 = vpop.f32.mrf.mxu0
  %v2984 = vadd.f32 %v2614, %v2983
  %v2985 = vpop.f32.mrf.mxu0
  %2986 = vdwg.mxu0
  %v2987 = vld [vmem:[#allocation2 + $0x8] sm:$0xe]
  %s2988 = scalar_lea.vmem %s2, 40
  %v2989 = vld [vmem:[%s2988] sm:$0xf]
  %v2990 = vld [vmem:[%s2988 + $0x4] sm:$0xf]
  %v2992 = vunpack.c.l.b16 %v2987
  %v2993 = vpack.c.b16 %v2176, %v2992
  %vm2994 = vcmask 1046528
  %v2995 = vrot.slane %v2993, 1
  %v2996 = vrot.slane %v2213, 1
  %v2997 = vsel %vm2994, %v2995, %v2996
  %v2998 = vrot.slane %v2214, 1
  %v2999 = vsel %vm2994, %v2996, %v2998
  %v3000 = vrot.slane %v2215, 1
  %v3001 = vsel %vm2994, %v2998, %v3000
  %v3002 = vrot.slane %v2216, 1
  %v3003 = vsel %vm2994, %v3000, %v3002
  %v3004 = vrot.slane %v2217, 1
  %v3005 = vsel %vm2994, %v3002, %v3004
  %v3006 = vrot.slane %v2218, 1
  %v3007 = vsel %vm2994, %v3004, %v3006
  %v3008 = vrot.slane %v2219, 1
  %v3009 = vsel %vm2994, %v3006, %v3008
  %v3010 = vrot.slane %v2220, 1
  %v3011 = vsel %vm2994, %v3008, %v3010
  %v3012 = vrot.slane %v2221, 1
  %v3013 = vsel %vm2994, %v3010, %v3012
  %v3014 = vrot.slane %v2222, 1
  %v3015 = vsel %vm2994, %v3012, %v3014
  %v3016 = vrot.slane %v2223, 1
  %v3017 = vsel %vm2994, %v3014, %v3016
  %v3018 = vrot.slane %v2224, 1
  %v3019 = vsel %vm2994, %v3016, %v3018
  %v3020 = vrot.slane %v2225, 1
  %v3021 = vsel %vm2994, %v3018, %v3020
  %v3022 = vrot.slane %v2226, 1
  %v3023 = vsel %vm2994, %v3020, %v3022
  %v3024 = vrot.slane %v2227, 1
  %v3025 = vsel %vm2994, %v3022, %v3024
  %v3026 = vrot.slane %v2228, 1
  %v3027 = vsel %vm2994, %v3024, %v3026
  %v3028 = vrot.slane %v2229, 1
  %v3029 = vsel %vm2994, %v3026, %v3028
  %v3030 = vrot.slane %v2230, 1
  %v3031 = vsel %vm2994, %v3028, %v3030
  %v3034 = vunpack.c.l.b16 %v2989
  %v3035 = vunpack.c.l.b16 %v2990
  %v3036 = vpack.c.b16 %v3035, %v3034
  %v3039 = vsel %vm1675, %v2997, 0
  %v3042 = vsel %vm1675, %v2999, 0
  %v3045 = vsel %vm1675, %v3001, 0
  %v3048 = vsel %vm1675, %v3003, 0
  %v3051 = vsel %vm1675, %v3005, 0
  %v3054 = vsel %vm1675, %v3007, 0
  %v3057 = vsel %vm1675, %v3009, 0
  %v3060 = vsel %vm1675, %v3011, 0
  %v3063 = vsel %vm1675, %v3013, 0
  %v3066 = vsel %vm1675, %v3015, 0
  %v3069 = vsel %vm1675, %v3017, 0
  %v3072 = vsel %vm1675, %v3019, 0
  %v3075 = vsel %vm1675, %v3021, 0
  %v3078 = vsel %vm1675, %v3023, 0
  %v3081 = vsel %vm1675, %v3025, 0
  %v3084 = vsel %vm1675, %v3027, 0
  %v3087 = vsel %vm1675, %v3029, 0
  %v3090 = vsel %vm1675, %v3031, 0
  %3092 = vmatprep.subr.bf16.mxu0 0
  %3093 = vmatpush1.bf16.msra.mxu0 0
  %3094 = vmatprep.subr.bf16.mxu0 0
  %3095 = vmatpush1.bf16.msra.mxu0 0
  %3096 = vmatprep.subr.bf16.mxu0 0
  %3097 = vmatpush1.bf16.msra.mxu0 0
  %3098 = vmatprep.subr.bf16.mxu0 0
  %3099 = vmatpush1.bf16.msra.mxu0 0
  %3100 = vmatprep.subr.bf16.mxu0 0
  %3101 = vmatpush1.bf16.msra.mxu0 0
  %3102 = vmatprep.subr.bf16.mxu0 0
  %3103 = vmatpush1.bf16.msra.mxu0 0
  %3104 = vmatprep.subr.bf16.mxu0 0
  %3105 = vmatpush1.bf16.msra.mxu0 0
  %3106 = vmatprep.subr.bf16.mxu0 0
  %3107 = vmatpush1.bf16.msra.mxu0 %v3036
  %3108 = vmatprep.subr.bf16.mxu0 0
  %3109 = vmatpush2.bf16.msra.mxu0 0
  %3110 = vmatprep.subr.bf16.mxu0 0
  %3111 = vmatpush2.bf16.msra.mxu0 0
  %3112 = vmatprep.subr.bf16.mxu0 0
  %3113 = vmatpush2.bf16.msra.mxu0 0
  %3114 = vmatprep.subr.bf16.mxu0 0
  %3115 = vmatpush2.bf16.msra.mxu0 0
  %3116 = vmatprep.subr.bf16.mxu0 0
  %3117 = vmatpush2.bf16.msra.mxu0 0
  %3118 = vmatprep.subr.bf16.mxu0 0
  %3119 = vmatpush2.bf16.msra.mxu0 0
  %3120 = vmatprep.subr.bf16.mxu0 0
  %3121 = vmatpush2.bf16.msra.mxu0 0
  %3122 = vmatprep.subr.bf16.mxu0 0
  %3123 = vmatpush2.bf16.msra.mxu0 0
  %3124 = vmatprep.mubr.bf16.mxu0 0
  %3125 = vmatmul.mubr.bf16.gmra.mxu0 %v3039
  %v3126 = vpop.f32.mrf.mxu0
  %v3127 = vadd.f32 0.0, %v3126
  %v3128 = vpop.f32.mrf.mxu0
  %v3129 = vpop.f32.mrf.mxu0
  %v3130 = vadd.f32 0.0, %v3129
  %v3131 = vpop.f32.mrf.mxu0
  %3132 = vmatprep.mubr.bf16.mxu0 0
  %3133 = vmatmul.mubr.bf16.gmra.mxu0 %v3042
  %v3134 = vpop.f32.mrf.mxu0
  %v3135 = vadd.f32 0.0, %v3134
  %v3136 = vpop.f32.mrf.mxu0
  %v3137 = vpop.f32.mrf.mxu0
  %v3138 = vadd.f32 0.0, %v3137
  %v3139 = vpop.f32.mrf.mxu0
  %3140 = vmatprep.mubr.bf16.mxu0 0
  %3141 = vmatmul.mubr.bf16.gmra.mxu0 %v3045
  %v3142 = vpop.f32.mrf.mxu0
  %v3143 = vadd.f32 0.0, %v3142
  %v3144 = vpop.f32.mrf.mxu0
  %v3145 = vpop.f32.mrf.mxu0
  %v3146 = vadd.f32 0.0, %v3145
  %v3147 = vpop.f32.mrf.mxu0
  %3148 = vmatprep.mubr.bf16.mxu0 0
  %3149 = vmatmul.mubr.bf16.gmra.mxu0 %v3048
  %v3150 = vpop.f32.mrf.mxu0
  %v3151 = vadd.f32 0.0, %v3150
  %v3152 = vpop.f32.mrf.mxu0
  %v3153 = vpop.f32.mrf.mxu0
  %v3154 = vadd.f32 0.0, %v3153
  %v3155 = vpop.f32.mrf.mxu0
  %3156 = vmatprep.mubr.bf16.mxu0 0
  %3157 = vmatmul.mubr.bf16.gmra.mxu0 %v3051
  %v3158 = vpop.f32.mrf.mxu0
  %v3159 = vadd.f32 0.0, %v3158
  %v3160 = vpop.f32.mrf.mxu0
  %v3161 = vpop.f32.mrf.mxu0
  %v3162 = vadd.f32 0.0, %v3161
  %v3163 = vpop.f32.mrf.mxu0
  %3164 = vmatprep.mubr.bf16.mxu0 0
  %3165 = vmatmul.mubr.bf16.gmra.mxu0 %v3054
  %v3166 = vpop.f32.mrf.mxu0
  %v3167 = vadd.f32 0.0, %v3166
  %v3168 = vpop.f32.mrf.mxu0
  %v3169 = vpop.f32.mrf.mxu0
  %v3170 = vadd.f32 0.0, %v3169
  %v3171 = vpop.f32.mrf.mxu0
  %3172 = vmatprep.mubr.bf16.mxu0 0
  %3173 = vmatmul.mubr.bf16.gmra.mxu0 %v3057
  %v3174 = vpop.f32.mrf.mxu0
  %v3175 = vadd.f32 0.0, %v3174
  %v3176 = vpop.f32.mrf.mxu0
  %v3177 = vpop.f32.mrf.mxu0
  %v3178 = vadd.f32 0.0, %v3177
  %v3179 = vpop.f32.mrf.mxu0
  %3180 = vmatprep.mubr.bf16.mxu0 0
  %3181 = vmatmul.mubr.bf16.gmra.mxu0 %v3060
  %v3182 = vpop.f32.mrf.mxu0
  %v3183 = vadd.f32 0.0, %v3182
  %v3184 = vpop.f32.mrf.mxu0
  %v3185 = vpop.f32.mrf.mxu0
  %v3186 = vadd.f32 0.0, %v3185
  %v3187 = vpop.f32.mrf.mxu0
  %3188 = vmatprep.mubr.bf16.mxu0 0
  %3189 = vmatmul.mubr.bf16.gmra.mxu0 %v3063
  %v3190 = vpop.f32.mrf.mxu0
  %v3191 = vadd.f32 0.0, %v3190
  %v3192 = vpop.f32.mrf.mxu0
  %v3193 = vpop.f32.mrf.mxu0
  %v3194 = vadd.f32 0.0, %v3193
  %v3195 = vpop.f32.mrf.mxu0
  %3196 = vmatprep.mubr.bf16.mxu0 0
  %3197 = vmatmul.mubr.bf16.gmra.mxu0 %v3066
  %v3198 = vpop.f32.mrf.mxu0
  %v3199 = vadd.f32 0.0, %v3198
  %v3200 = vpop.f32.mrf.mxu0
  %v3201 = vpop.f32.mrf.mxu0
  %v3202 = vadd.f32 0.0, %v3201
  %v3203 = vpop.f32.mrf.mxu0
  %3204 = vmatprep.mubr.bf16.mxu0 0
  %3205 = vmatmul.mubr.bf16.gmra.mxu0 %v3069
  %v3206 = vpop.f32.mrf.mxu0
  %v3207 = vadd.f32 0.0, %v3206
  %v3208 = vpop.f32.mrf.mxu0
  %v3209 = vpop.f32.mrf.mxu0
  %v3210 = vadd.f32 0.0, %v3209
  %v3211 = vpop.f32.mrf.mxu0
  %3212 = vmatprep.mubr.bf16.mxu0 0
  %3213 = vmatmul.mubr.bf16.gmra.mxu0 %v3072
  %v3214 = vpop.f32.mrf.mxu0
  %v3215 = vadd.f32 0.0, %v3214
  %v3216 = vpop.f32.mrf.mxu0
  %v3217 = vpop.f32.mrf.mxu0
  %v3218 = vadd.f32 0.0, %v3217
  %v3219 = vpop.f32.mrf.mxu0
  %3220 = vmatprep.mubr.bf16.mxu0 0
  %3221 = vmatmul.mubr.bf16.gmra.mxu0 %v3075
  %v3222 = vpop.f32.mrf.mxu0
  %v3223 = vadd.f32 0.0, %v3222
  %v3224 = vpop.f32.mrf.mxu0
  %v3225 = vpop.f32.mrf.mxu0
  %v3226 = vadd.f32 0.0, %v3225
  %v3227 = vpop.f32.mrf.mxu0
  %3228 = vmatprep.mubr.bf16.mxu0 0
  %3229 = vmatmul.mubr.bf16.gmra.mxu0 %v3078
  %v3230 = vpop.f32.mrf.mxu0
  %v3231 = vadd.f32 0.0, %v3230
  %v3232 = vpop.f32.mrf.mxu0
  %v3233 = vpop.f32.mrf.mxu0
  %v3234 = vadd.f32 0.0, %v3233
  %v3235 = vpop.f32.mrf.mxu0
  %3236 = vmatprep.mubr.bf16.mxu0 0
  %3237 = vmatmul.mubr.bf16.gmra.mxu0 %v3081
  %v3238 = vpop.f32.mrf.mxu0
  %v3239 = vadd.f32 0.0, %v3238
  %v3240 = vpop.f32.mrf.mxu0
  %v3241 = vpop.f32.mrf.mxu0
  %v3242 = vadd.f32 0.0, %v3241
  %v3243 = vpop.f32.mrf.mxu0
  %3244 = vmatprep.mubr.bf16.mxu0 0
  %3245 = vmatmul.mubr.bf16.gmra.mxu0 %v3084
  %v3246 = vpop.f32.mrf.mxu0
  %v3247 = vadd.f32 0.0, %v3246
  %v3248 = vpop.f32.mrf.mxu0
  %v3249 = vpop.f32.mrf.mxu0
  %v3250 = vadd.f32 0.0, %v3249
  %v3251 = vpop.f32.mrf.mxu0
  %3252 = vmatprep.mubr.bf16.mxu0 0
  %3253 = vmatmul.mubr.bf16.gmra.mxu0 %v3087
  %v3254 = vpop.f32.mrf.mxu0
  %v3255 = vadd.f32 0.0, %v3254
  %v3256 = vpop.f32.mrf.mxu0
  %v3257 = vpop.f32.mrf.mxu0
  %v3258 = vadd.f32 0.0, %v3257
  %v3259 = vpop.f32.mrf.mxu0
  %3260 = vmatprep.mubr.bf16.mxu0 0
  %3261 = vmatmul.mubr.bf16.gmra.mxu0 %v3090
  %v3262 = vpop.f32.mrf.mxu0
  %v3263 = vadd.f32 0.0, %v3262
  %v3264 = vpop.f32.mrf.mxu0
  %v3265 = vpop.f32.mrf.mxu0
  %v3266 = vadd.f32 0.0, %v3265
  %v3267 = vpop.f32.mrf.mxu0
  %3268 = vdwg.mxu0
  %v3270 = vunpack.c.l.b16 %v1570
  %v3271 = vpack.c.b16 %v1910, %v3270
  %v3272 = vrot.slane %v3271, 1
  %v3273 = vrot.slane %v1651, 1
  %v3274 = vsel %vm2994, %v3272, %v3273
  %v3275 = vrot.slane %v1652, 1
  %v3276 = vsel %vm2994, %v3273, %v3275
  %v3277 = vrot.slane %v1653, 1
  %v3278 = vsel %vm2994, %v3275, %v3277
  %v3279 = vrot.slane %v1654, 1
  %v3280 = vsel %vm2994, %v3277, %v3279
  %v3281 = vrot.slane %v1655, 1
  %v3282 = vsel %vm2994, %v3279, %v3281
  %v3283 = vrot.slane %v1656, 1
  %v3284 = vsel %vm2994, %v3281, %v3283
  %v3285 = vrot.slane %v1657, 1
  %v3286 = vsel %vm2994, %v3283, %v3285
  %v3287 = vrot.slane %v1658, 1
  %v3288 = vsel %vm2994, %v3285, %v3287
  %v3289 = vrot.slane %v1659, 1
  %v3290 = vsel %vm2994, %v3287, %v3289
  %v3291 = vrot.slane %v1660, 1
  %v3292 = vsel %vm2994, %v3289, %v3291
  %v3293 = vrot.slane %v1661, 1
  %v3294 = vsel %vm2994, %v3291, %v3293
  %v3295 = vrot.slane %v1662, 1
  %v3296 = vsel %vm2994, %v3293, %v3295
  %v3297 = vrot.slane %v1663, 1
  %v3298 = vsel %vm2994, %v3295, %v3297
  %v3299 = vrot.slane %v1664, 1
  %v3300 = vsel %vm2994, %v3297, %v3299
  %v3301 = vrot.slane %v1665, 1
  %v3302 = vsel %vm2994, %v3299, %v3301
  %v3303 = vrot.slane %v1666, 1
  %v3304 = vsel %vm2994, %v3301, %v3303
  %v3305 = vrot.slane %v1667, 1
  %v3306 = vsel %vm2994, %v3303, %v3305
  %v3307 = vrot.slane %v2619, 1
  %v3308 = vsel %vm2994, %v3305, %v3307
  %v3311 = vunpack.c.l.b16 %v1572
  %v3312 = vunpack.c.l.b16 %v1573
  %v3313 = vpack.c.b16 %v3312, %v3311
  %v3316 = vsel %vm1675, %v3274, 0
  %v3319 = vsel %vm1675, %v3276, 0
  %v3322 = vsel %vm1675, %v3278, 0
  %v3325 = vsel %vm1675, %v3280, 0
  %v3328 = vsel %vm1675, %v3282, 0
  %v3331 = vsel %vm1675, %v3284, 0
  %v3334 = vsel %vm1675, %v3286, 0
  %v3337 = vsel %vm1675, %v3288, 0
  %v3340 = vsel %vm1675, %v3290, 0
  %v3343 = vsel %vm1675, %v3292, 0
  %v3346 = vsel %vm1675, %v3294, 0
  %v3349 = vsel %vm1675, %v3296, 0
  %v3352 = vsel %vm1675, %v3298, 0
  %v3355 = vsel %vm1675, %v3300, 0
  %v3358 = vsel %vm1675, %v3302, 0
  %v3361 = vsel %vm1675, %v3304, 0
  %v3364 = vsel %vm1675, %v3306, 0
  %v3367 = vsel %vm1675, %v3308, 0
  %3369 = vmatprep.subr.bf16.mxu0 0
  %3370 = vmatpush1.bf16.msra.mxu0 0
  %3371 = vmatprep.subr.bf16.mxu0 0
  %3372 = vmatpush1.bf16.msra.mxu0 0
  %3373 = vmatprep.subr.bf16.mxu0 0
  %3374 = vmatpush1.bf16.msra.mxu0 0
  %3375 = vmatprep.subr.bf16.mxu0 0
  %3376 = vmatpush1.bf16.msra.mxu0 0
  %3377 = vmatprep.subr.bf16.mxu0 0
  %3378 = vmatpush1.bf16.msra.mxu0 0
  %3379 = vmatprep.subr.bf16.mxu0 0
  %3380 = vmatpush1.bf16.msra.mxu0 0
  %3381 = vmatprep.subr.bf16.mxu0 0
  %3382 = vmatpush1.bf16.msra.mxu0 0
  %3383 = vmatprep.subr.bf16.mxu0 0
  %3384 = vmatpush1.bf16.msra.mxu0 %v3313
  %3385 = vmatprep.subr.bf16.mxu0 0
  %3386 = vmatpush2.bf16.msra.mxu0 0
  %3387 = vmatprep.subr.bf16.mxu0 0
  %3388 = vmatpush2.bf16.msra.mxu0 0
  %3389 = vmatprep.subr.bf16.mxu0 0
  %3390 = vmatpush2.bf16.msra.mxu0 0
  %3391 = vmatprep.subr.bf16.mxu0 0
  %3392 = vmatpush2.bf16.msra.mxu0 0
  %3393 = vmatprep.subr.bf16.mxu0 0
  %3394 = vmatpush2.bf16.msra.mxu0 0
  %3395 = vmatprep.subr.bf16.mxu0 0
  %3396 = vmatpush2.bf16.msra.mxu0 0
  %3397 = vmatprep.subr.bf16.mxu0 0
  %3398 = vmatpush2.bf16.msra.mxu0 0
  %3399 = vmatprep.subr.bf16.mxu0 0
  %3400 = vmatpush2.bf16.msra.mxu0 0
  %3401 = vmatprep.mubr.bf16.mxu0 0
  %3402 = vmatmul.mubr.bf16.gmra.mxu0 %v3316
  %v3403 = vpop.f32.mrf.mxu0
  %v3404 = vadd.f32 %v3127, %v3403
  %v3405 = vpop.f32.mrf.mxu0
  %v3406 = vpop.f32.mrf.mxu0
  %v3407 = vadd.f32 %v3130, %v3406
  %v3408 = vpop.f32.mrf.mxu0
  %3409 = vmatprep.mubr.bf16.mxu0 0
  %3410 = vmatmul.mubr.bf16.gmra.mxu0 %v3319
  %v3411 = vpop.f32.mrf.mxu0
  %v3412 = vadd.f32 %v3135, %v3411
  %v3413 = vpop.f32.mrf.mxu0
  %v3414 = vpop.f32.mrf.mxu0
  %v3415 = vadd.f32 %v3138, %v3414
  %v3416 = vpop.f32.mrf.mxu0
  %3417 = vmatprep.mubr.bf16.mxu0 0
  %3418 = vmatmul.mubr.bf16.gmra.mxu0 %v3322
  %v3419 = vpop.f32.mrf.mxu0
  %v3420 = vadd.f32 %v3143, %v3419
  %v3421 = vpop.f32.mrf.mxu0
  %v3422 = vpop.f32.mrf.mxu0
  %v3423 = vadd.f32 %v3146, %v3422
  %v3424 = vpop.f32.mrf.mxu0
  %3425 = vmatprep.mubr.bf16.mxu0 0
  %3426 = vmatmul.mubr.bf16.gmra.mxu0 %v3325
  %v3427 = vpop.f32.mrf.mxu0
  %v3428 = vadd.f32 %v3151, %v3427
  %v3429 = vpop.f32.mrf.mxu0
  %v3430 = vpop.f32.mrf.mxu0
  %v3431 = vadd.f32 %v3154, %v3430
  %v3432 = vpop.f32.mrf.mxu0
  %3433 = vmatprep.mubr.bf16.mxu0 0
  %3434 = vmatmul.mubr.bf16.gmra.mxu0 %v3328
  %v3435 = vpop.f32.mrf.mxu0
  %v3436 = vadd.f32 %v3159, %v3435
  %v3437 = vpop.f32.mrf.mxu0
  %v3438 = vpop.f32.mrf.mxu0
  %v3439 = vadd.f32 %v3162, %v3438
  %v3440 = vpop.f32.mrf.mxu0
  %3441 = vmatprep.mubr.bf16.mxu0 0
  %3442 = vmatmul.mubr.bf16.gmra.mxu0 %v3331
  %v3443 = vpop.f32.mrf.mxu0
  %v3444 = vadd.f32 %v3167, %v3443
  %v3445 = vpop.f32.mrf.mxu0
  %v3446 = vpop.f32.mrf.mxu0
  %v3447 = vadd.f32 %v3170, %v3446
  %v3448 = vpop.f32.mrf.mxu0
  %3449 = vmatprep.mubr.bf16.mxu0 0
  %3450 = vmatmul.mubr.bf16.gmra.mxu0 %v3334
  %v3451 = vpop.f32.mrf.mxu0
  %v3452 = vadd.f32 %v3175, %v3451
  %v3453 = vpop.f32.mrf.mxu0
  %v3454 = vpop.f32.mrf.mxu0
  %v3455 = vadd.f32 %v3178, %v3454
  %v3456 = vpop.f32.mrf.mxu0
  %3457 = vmatprep.mubr.bf16.mxu0 0
  %3458 = vmatmul.mubr.bf16.gmra.mxu0 %v3337
  %v3459 = vpop.f32.mrf.mxu0
  %v3460 = vadd.f32 %v3183, %v3459
  %v3461 = vpop.f32.mrf.mxu0
  %v3462 = vpop.f32.mrf.mxu0
  %v3463 = vadd.f32 %v3186, %v3462
  %v3464 = vpop.f32.mrf.mxu0
  %3465 = vmatprep.mubr.bf16.mxu0 0
  %3466 = vmatmul.mubr.bf16.gmra.mxu0 %v3340
  %v3467 = vpop.f32.mrf.mxu0
  %v3468 = vadd.f32 %v3191, %v3467
  %v3469 = vpop.f32.mrf.mxu0
  %v3470 = vpop.f32.mrf.mxu0
  %v3471 = vadd.f32 %v3194, %v3470
  %v3472 = vpop.f32.mrf.mxu0
  %3473 = vmatprep.mubr.bf16.mxu0 0
  %3474 = vmatmul.mubr.bf16.gmra.mxu0 %v3343
  %v3475 = vpop.f32.mrf.mxu0
  %v3476 = vadd.f32 %v3199, %v3475
  %v3477 = vpop.f32.mrf.mxu0
  %v3478 = vpop.f32.mrf.mxu0
  %v3479 = vadd.f32 %v3202, %v3478
  %v3480 = vpop.f32.mrf.mxu0
  %3481 = vmatprep.mubr.bf16.mxu0 0
  %3482 = vmatmul.mubr.bf16.gmra.mxu0 %v3346
  %v3483 = vpop.f32.mrf.mxu0
  %v3484 = vadd.f32 %v3207, %v3483
  %v3485 = vpop.f32.mrf.mxu0
  %v3486 = vpop.f32.mrf.mxu0
  %v3487 = vadd.f32 %v3210, %v3486
  %v3488 = vpop.f32.mrf.mxu0
  %3489 = vmatprep.mubr.bf16.mxu0 0
  %3490 = vmatmul.mubr.bf16.gmra.mxu0 %v3349
  %v3491 = vpop.f32.mrf.mxu0
  %v3492 = vadd.f32 %v3215, %v3491
  %v3493 = vpop.f32.mrf.mxu0
  %v3494 = vpop.f32.mrf.mxu0
  %v3495 = vadd.f32 %v3218, %v3494
  %v3496 = vpop.f32.mrf.mxu0
  %3497 = vmatprep.mubr.bf16.mxu0 0
  %3498 = vmatmul.mubr.bf16.gmra.mxu0 %v3352
  %v3499 = vpop.f32.mrf.mxu0
  %v3500 = vadd.f32 %v3223, %v3499
  %v3501 = vpop.f32.mrf.mxu0
  %v3502 = vpop.f32.mrf.mxu0
  %v3503 = vadd.f32 %v3226, %v3502
  %v3504 = vpop.f32.mrf.mxu0
  %3505 = vmatprep.mubr.bf16.mxu0 0
  %3506 = vmatmul.mubr.bf16.gmra.mxu0 %v3355
  %v3507 = vpop.f32.mrf.mxu0
  %v3508 = vadd.f32 %v3231, %v3507
  %v3509 = vpop.f32.mrf.mxu0
  %v3510 = vpop.f32.mrf.mxu0
  %v3511 = vadd.f32 %v3234, %v3510
  %v3512 = vpop.f32.mrf.mxu0
  %3513 = vmatprep.mubr.bf16.mxu0 0
  %3514 = vmatmul.mubr.bf16.gmra.mxu0 %v3358
  %v3515 = vpop.f32.mrf.mxu0
  %v3516 = vadd.f32 %v3239, %v3515
  %v3517 = vpop.f32.mrf.mxu0
  %v3518 = vpop.f32.mrf.mxu0
  %v3519 = vadd.f32 %v3242, %v3518
  %v3520 = vpop.f32.mrf.mxu0
  %3521 = vmatprep.mubr.bf16.mxu0 0
  %3522 = vmatmul.mubr.bf16.gmra.mxu0 %v3361
  %v3523 = vpop.f32.mrf.mxu0
  %v3524 = vadd.f32 %v3247, %v3523
  %v3525 = vpop.f32.mrf.mxu0
  %v3526 = vpop.f32.mrf.mxu0
  %v3527 = vadd.f32 %v3250, %v3526
  %v3528 = vpop.f32.mrf.mxu0
  %3529 = vmatprep.mubr.bf16.mxu0 0
  %3530 = vmatmul.mubr.bf16.gmra.mxu0 %v3364
  %v3531 = vpop.f32.mrf.mxu0
  %v3532 = vadd.f32 %v3255, %v3531
  %v3533 = vpop.f32.mrf.mxu0
  %v3534 = vpop.f32.mrf.mxu0
  %v3535 = vadd.f32 %v3258, %v3534
  %v3536 = vpop.f32.mrf.mxu0
  %3537 = vmatprep.mubr.bf16.mxu0 0
  %3538 = vmatmul.mubr.bf16.gmra.mxu0 %v3367
  %v3539 = vpop.f32.mrf.mxu0
  %v3540 = vadd.f32 %v3263, %v3539
  %v3541 = vpop.f32.mrf.mxu0
  %v3542 = vpop.f32.mrf.mxu0
  %v3543 = vadd.f32 %v3266, %v3542
  %v3544 = vpop.f32.mrf.mxu0
  %3545 = vdwg.mxu0
  %v3546 = vld [vmem:[#allocation2 + $0x10] sm:$0xf]
  %v3547 = vld [vmem:[#allocation2 + $0x14] sm:$0xf]
  %v3548 = vld [vmem:[#allocation2 + $0x18] sm:$0xf]
  %v3549 = vld [vmem:[#allocation2 + $0x1c] sm:$0xf]
  %v3550 = vld [vmem:[#allocation2 + $0x20] sm:$0xf]
  %v3551 = vld [vmem:[#allocation2 + $0x24] sm:$0xf]
  %v3552 = vld [vmem:[#allocation2 + $0x28] sm:$0xf]
  %v3553 = vld [vmem:[#allocation2 + $0x2c] sm:$0xf]
  %v3554 = vld [vmem:[#allocation2 + $0x30] sm:$0xf]
  %v3555 = vld [vmem:[#allocation2 + $0x34] sm:$0xf]
  %v3556 = vld [vmem:[#allocation2 + $0x38] sm:$0xf]
  %v3557 = vld [vmem:[#allocation2 + $0x3c] sm:$0xf]
  %v3558 = vld [vmem:[#allocation2 + $0x40] sm:$0xf]
  %v3559 = vld [vmem:[#allocation2 + $0x44] sm:$0xf]
  %v3560 = vld [vmem:[#allocation2 + $0x48] sm:$0xf]
  %v3561 = vld [vmem:[#allocation2 + $0x4c] sm:$0xf]
  %v3562 = vld [vmem:[#allocation2 + $0x50] sm:$0xf]
  %v3563 = vld [vmem:[#allocation2 + $0x54] sm:$0xf]
  %v3564 = vld [vmem:[#allocation2 + $0x58] sm:$0xf]
  %v3565 = vld [vmem:[#allocation2 + $0x5c] sm:$0xf]
  %v3566 = vld [vmem:[#allocation2 + $0x60] sm:$0xf]
  %v3567 = vld [vmem:[#allocation2 + $0x64] sm:$0xf]
  %v3568 = vld [vmem:[#allocation2 + $0x68] sm:$0xf]
  %v3569 = vld [vmem:[#allocation2 + $0x6c] sm:$0xf]
  %v3570 = vld [vmem:[#allocation2 + $0x70] sm:$0xf]
  %v3571 = vld [vmem:[#allocation2 + $0x74] sm:$0xf]
  %v3572 = vld [vmem:[#allocation2 + $0x78] sm:$0xf]
  %v3573 = vld [vmem:[#allocation2 + $0x7c] sm:$0xf]
  %v3574 = vld [vmem:[#allocation2 + $0x80] sm:$0xf]
  %v3575 = vld [vmem:[#allocation2 + $0x84] sm:$0xf]
  %v3576 = vld [vmem:[#allocation2 + $0x88] sm:$0xf]
  %v3577 = vld [vmem:[#allocation2 + $0x8c] sm:$0xf]
  %v3578 = vld [vmem:[#allocation2 + $0x90] sm:$0xf]
  %v3579 = vld [vmem:[#allocation2 + $0x94] sm:$0xf]
  %v3580 = vld [vmem:[#allocation2 + $0x98] sm:$0xf]
  %v3581 = vld [vmem:[#allocation2 + $0x9c] sm:$0xf]
  %s3582 = scalar_lea.vmem %s2, 48
  %v3583 = vld [vmem:[%s3582] sm:$0xf]
  %v3584 = vld [vmem:[%s3582 + $0x4] sm:$0xf]
  %v3621 = vunpack.c.l.b16 %v3546
  %v3622 = vunpack.c.l.b16 %v3547
  %v3623 = vunpack.c.l.b16 %v3548
  %v3624 = vunpack.c.l.b16 %v3549
  %v3625 = vunpack.c.l.b16 %v3550
  %v3626 = vunpack.c.l.b16 %v3551
  %v3627 = vunpack.c.l.b16 %v3552
  %v3628 = vunpack.c.l.b16 %v3553
  %v3629 = vunpack.c.l.b16 %v3554
  %v3630 = vunpack.c.l.b16 %v3555
  %v3631 = vunpack.c.l.b16 %v3556
  %v3632 = vunpack.c.l.b16 %v3557
  %v3633 = vunpack.c.l.b16 %v3558
  %v3634 = vunpack.c.l.b16 %v3559
  %v3635 = vunpack.c.l.b16 %v3560
  %v3636 = vunpack.c.l.b16 %v3561
  %v3637 = vunpack.c.l.b16 %v3562
  %v3638 = vunpack.c.l.b16 %v3563
  %v3639 = vunpack.c.l.b16 %v3564
  %v3640 = vunpack.c.l.b16 %v3565
  %v3641 = vunpack.c.l.b16 %v3566
  %v3642 = vunpack.c.l.b16 %v3567
  %v3643 = vunpack.c.l.b16 %v3568
  %v3644 = vunpack.c.l.b16 %v3569
  %v3645 = vunpack.c.l.b16 %v3570
  %v3646 = vunpack.c.l.b16 %v3571
  %v3647 = vunpack.c.l.b16 %v3572
  %v3648 = vunpack.c.l.b16 %v3573
  %v3649 = vunpack.c.l.b16 %v3574
  %v3650 = vunpack.c.l.b16 %v3575
  %v3651 = vunpack.c.l.b16 %v3576
  %v3652 = vunpack.c.l.b16 %v3577
  %v3653 = vunpack.c.l.b16 %v3578
  %v3654 = vunpack.c.l.b16 %v3579
  %v3655 = vunpack.c.l.b16 %v3580
  %v3656 = vunpack.c.l.b16 %v3581
  %v3657 = vpack.c.b16 %v3622, %v3621
  %v3658 = vpack.c.b16 %v3624, %v3623
  %v3659 = vpack.c.b16 %v3626, %v3625
  %v3660 = vpack.c.b16 %v3628, %v3627
  %v3661 = vpack.c.b16 %v3630, %v3629
  %v3662 = vpack.c.b16 %v3632, %v3631
  %v3663 = vpack.c.b16 %v3634, %v3633
  %v3664 = vpack.c.b16 %v3636, %v3635
  %v3665 = vpack.c.b16 %v3638, %v3637
  %v3666 = vpack.c.b16 %v3640, %v3639
  %v3667 = vpack.c.b16 %v3642, %v3641
  %v3668 = vpack.c.b16 %v3644, %v3643
  %v3669 = vpack.c.b16 %v3646, %v3645
  %v3670 = vpack.c.b16 %v3648, %v3647
  %v3671 = vpack.c.b16 %v3650, %v3649
  %v3672 = vpack.c.b16 %v3652, %v3651
  %v3673 = vpack.c.b16 %v3654, %v3653
  %v3674 = vpack.c.b16 %v3656, %v3655
  %v3677 = vunpack.c.l.b16 %v3583
  %v3678 = vunpack.c.l.b16 %v3584
  %v3679 = vpack.c.b16 %v3678, %v3677
  %v3682 = vsel %vm1675, %v3657, 0
  %v3685 = vsel %vm1675, %v3658, 0
  %v3688 = vsel %vm1675, %v3659, 0
  %v3691 = vsel %vm1675, %v3660, 0
  %v3694 = vsel %vm1675, %v3661, 0
  %v3697 = vsel %vm1675, %v3662, 0
  %v3700 = vsel %vm1675, %v3663, 0
  %v3703 = vsel %vm1675, %v3664, 0
  %v3706 = vsel %vm1675, %v3665, 0
  %v3709 = vsel %vm1675, %v3666, 0
  %v3712 = vsel %vm1675, %v3667, 0
  %v3715 = vsel %vm1675, %v3668, 0
  %v3718 = vsel %vm1675, %v3669, 0
  %v3721 = vsel %vm1675, %v3670, 0
  %v3724 = vsel %vm1675, %v3671, 0
  %v3727 = vsel %vm1675, %v3672, 0
  %v3730 = vsel %vm1675, %v3673, 0
  %v3733 = vsel %vm1675, %v3674, 0
  %3735 = vmatprep.subr.bf16.mxu0 0
  %3736 = vmatpush1.bf16.msra.mxu0 0
  %3737 = vmatprep.subr.bf16.mxu0 0
  %3738 = vmatpush1.bf16.msra.mxu0 0
  %3739 = vmatprep.subr.bf16.mxu0 0
  %3740 = vmatpush1.bf16.msra.mxu0 0
  %3741 = vmatprep.subr.bf16.mxu0 0
  %3742 = vmatpush1.bf16.msra.mxu0 0
  %3743 = vmatprep.subr.bf16.mxu0 0
  %3744 = vmatpush1.bf16.msra.mxu0 0
  %3745 = vmatprep.subr.bf16.mxu0 0
  %3746 = vmatpush1.bf16.msra.mxu0 0
  %3747 = vmatprep.subr.bf16.mxu0 0
  %3748 = vmatpush1.bf16.msra.mxu0 0
  %3749 = vmatprep.subr.bf16.mxu0 0
  %3750 = vmatpush1.bf16.msra.mxu0 %v3679
  %3751 = vmatprep.subr.bf16.mxu0 0
  %3752 = vmatpush2.bf16.msra.mxu0 0
  %3753 = vmatprep.subr.bf16.mxu0 0
  %3754 = vmatpush2.bf16.msra.mxu0 0
  %3755 = vmatprep.subr.bf16.mxu0 0
  %3756 = vmatpush2.bf16.msra.mxu0 0
  %3757 = vmatprep.subr.bf16.mxu0 0
  %3758 = vmatpush2.bf16.msra.mxu0 0
  %3759 = vmatprep.subr.bf16.mxu0 0
  %3760 = vmatpush2.bf16.msra.mxu0 0
  %3761 = vmatprep.subr.bf16.mxu0 0
  %3762 = vmatpush2.bf16.msra.mxu0 0
  %3763 = vmatprep.subr.bf16.mxu0 0
  %3764 = vmatpush2.bf16.msra.mxu0 0
  %3765 = vmatprep.subr.bf16.mxu0 0
  %3766 = vmatpush2.bf16.msra.mxu0 0
  %3767 = vmatprep.mubr.bf16.mxu0 0
  %3768 = vmatmul.mubr.bf16.gmra.mxu0 %v3682
  %v3769 = vpop.f32.mrf.mxu0
  %v3770 = vadd.f32 0.0, %v3769
  %v3771 = vpop.f32.mrf.mxu0
  %v3772 = vpop.f32.mrf.mxu0
  %v3773 = vadd.f32 0.0, %v3772
  %v3774 = vpop.f32.mrf.mxu0
  %3775 = vmatprep.mubr.bf16.mxu0 0
  %3776 = vmatmul.mubr.bf16.gmra.mxu0 %v3685
  %v3777 = vpop.f32.mrf.mxu0
  %v3778 = vadd.f32 0.0, %v3777
  %v3779 = vpop.f32.mrf.mxu0
  %v3780 = vpop.f32.mrf.mxu0
  %v3781 = vadd.f32 0.0, %v3780
  %v3782 = vpop.f32.mrf.mxu0
  %3783 = vmatprep.mubr.bf16.mxu0 0
  %3784 = vmatmul.mubr.bf16.gmra.mxu0 %v3688
  %v3785 = vpop.f32.mrf.mxu0
  %v3786 = vadd.f32 0.0, %v3785
  %v3787 = vpop.f32.mrf.mxu0
  %v3788 = vpop.f32.mrf.mxu0
  %v3789 = vadd.f32 0.0, %v3788
  %v3790 = vpop.f32.mrf.mxu0
  %3791 = vmatprep.mubr.bf16.mxu0 0
  %3792 = vmatmul.mubr.bf16.gmra.mxu0 %v3691
  %v3793 = vpop.f32.mrf.mxu0
  %v3794 = vadd.f32 0.0, %v3793
  %v3795 = vpop.f32.mrf.mxu0
  %v3796 = vpop.f32.mrf.mxu0
  %v3797 = vadd.f32 0.0, %v3796
  %v3798 = vpop.f32.mrf.mxu0
  %3799 = vmatprep.mubr.bf16.mxu0 0
  %3800 = vmatmul.mubr.bf16.gmra.mxu0 %v3694
  %v3801 = vpop.f32.mrf.mxu0
  %v3802 = vadd.f32 0.0, %v3801
  %v3803 = vpop.f32.mrf.mxu0
  %v3804 = vpop.f32.mrf.mxu0
  %v3805 = vadd.f32 0.0, %v3804
  %v3806 = vpop.f32.mrf.mxu0
  %3807 = vmatprep.mubr.bf16.mxu0 0
  %3808 = vmatmul.mubr.bf16.gmra.mxu0 %v3697
  %v3809 = vpop.f32.mrf.mxu0
  %v3810 = vadd.f32 0.0, %v3809
  %v3811 = vpop.f32.mrf.mxu0
  %v3812 = vpop.f32.mrf.mxu0
  %v3813 = vadd.f32 0.0, %v3812
  %v3814 = vpop.f32.mrf.mxu0
  %3815 = vmatprep.mubr.bf16.mxu0 0
  %3816 = vmatmul.mubr.bf16.gmra.mxu0 %v3700
  %v3817 = vpop.f32.mrf.mxu0
  %v3818 = vadd.f32 0.0, %v3817
  %v3819 = vpop.f32.mrf.mxu0
  %v3820 = vpop.f32.mrf.mxu0
  %v3821 = vadd.f32 0.0, %v3820
  %v3822 = vpop.f32.mrf.mxu0
  %3823 = vmatprep.mubr.bf16.mxu0 0
  %3824 = vmatmul.mubr.bf16.gmra.mxu0 %v3703
  %v3825 = vpop.f32.mrf.mxu0
  %v3826 = vadd.f32 0.0, %v3825
  %v3827 = vpop.f32.mrf.mxu0
  %v3828 = vpop.f32.mrf.mxu0
  %v3829 = vadd.f32 0.0, %v3828
  %v3830 = vpop.f32.mrf.mxu0
  %3831 = vmatprep.mubr.bf16.mxu0 0
  %3832 = vmatmul.mubr.bf16.gmra.mxu0 %v3706
  %v3833 = vpop.f32.mrf.mxu0
  %v3834 = vadd.f32 0.0, %v3833
  %v3835 = vpop.f32.mrf.mxu0
  %v3836 = vpop.f32.mrf.mxu0
  %v3837 = vadd.f32 0.0, %v3836
  %v3838 = vpop.f32.mrf.mxu0
  %3839 = vmatprep.mubr.bf16.mxu0 0
  %3840 = vmatmul.mubr.bf16.gmra.mxu0 %v3709
  %v3841 = vpop.f32.mrf.mxu0
  %v3842 = vadd.f32 0.0, %v3841
  %v3843 = vpop.f32.mrf.mxu0
  %v3844 = vpop.f32.mrf.mxu0
  %v3845 = vadd.f32 0.0, %v3844
  %v3846 = vpop.f32.mrf.mxu0
  %3847 = vmatprep.mubr.bf16.mxu0 0
  %3848 = vmatmul.mubr.bf16.gmra.mxu0 %v3712
  %v3849 = vpop.f32.mrf.mxu0
  %v3850 = vadd.f32 0.0, %v3849
  %v3851 = vpop.f32.mrf.mxu0
  %v3852 = vpop.f32.mrf.mxu0
  %v3853 = vadd.f32 0.0, %v3852
  %v3854 = vpop.f32.mrf.mxu0
  %3855 = vmatprep.mubr.bf16.mxu0 0
  %3856 = vmatmul.mubr.bf16.gmra.mxu0 %v3715
  %v3857 = vpop.f32.mrf.mxu0
  %v3858 = vadd.f32 0.0, %v3857
  %v3859 = vpop.f32.mrf.mxu0
  %v3860 = vpop.f32.mrf.mxu0
  %v3861 = vadd.f32 0.0, %v3860
  %v3862 = vpop.f32.mrf.mxu0
  %3863 = vmatprep.mubr.bf16.mxu0 0
  %3864 = vmatmul.mubr.bf16.gmra.mxu0 %v3718
  %v3865 = vpop.f32.mrf.mxu0
  %v3866 = vadd.f32 0.0, %v3865
  %v3867 = vpop.f32.mrf.mxu0
  %v3868 = vpop.f32.mrf.mxu0
  %v3869 = vadd.f32 0.0, %v3868
  %v3870 = vpop.f32.mrf.mxu0
  %3871 = vmatprep.mubr.bf16.mxu0 0
  %3872 = vmatmul.mubr.bf16.gmra.mxu0 %v3721
  %v3873 = vpop.f32.mrf.mxu0
  %v3874 = vadd.f32 0.0, %v3873
  %v3875 = vpop.f32.mrf.mxu0
  %v3876 = vpop.f32.mrf.mxu0
  %v3877 = vadd.f32 0.0, %v3876
  %v3878 = vpop.f32.mrf.mxu0
  %3879 = vmatprep.mubr.bf16.mxu0 0
  %3880 = vmatmul.mubr.bf16.gmra.mxu0 %v3724
  %v3881 = vpop.f32.mrf.mxu0
  %v3882 = vadd.f32 0.0, %v3881
  %v3883 = vpop.f32.mrf.mxu0
  %v3884 = vpop.f32.mrf.mxu0
  %v3885 = vadd.f32 0.0, %v3884
  %v3886 = vpop.f32.mrf.mxu0
  %3887 = vmatprep.mubr.bf16.mxu0 0
  %3888 = vmatmul.mubr.bf16.gmra.mxu0 %v3727
  %v3889 = vpop.f32.mrf.mxu0
  %v3890 = vadd.f32 0.0, %v3889
  %v3891 = vpop.f32.mrf.mxu0
  %v3892 = vpop.f32.mrf.mxu0
  %v3893 = vadd.f32 0.0, %v3892
  %v3894 = vpop.f32.mrf.mxu0
  %3895 = vmatprep.mubr.bf16.mxu0 0
  %3896 = vmatmul.mubr.bf16.gmra.mxu0 %v3730
  %v3897 = vpop.f32.mrf.mxu0
  %v3898 = vadd.f32 0.0, %v3897
  %v3899 = vpop.f32.mrf.mxu0
  %v3900 = vpop.f32.mrf.mxu0
  %v3901 = vadd.f32 0.0, %v3900
  %v3902 = vpop.f32.mrf.mxu0
  %3903 = vmatprep.mubr.bf16.mxu0 0
  %3904 = vmatmul.mubr.bf16.gmra.mxu0 %v3733
  %v3905 = vpop.f32.mrf.mxu0
  %v3906 = vadd.f32 0.0, %v3905
  %v3907 = vpop.f32.mrf.mxu0
  %v3908 = vpop.f32.mrf.mxu0
  %v3909 = vadd.f32 0.0, %v3908
  %v3910 = vpop.f32.mrf.mxu0
  %3911 = vdwg.mxu0
  %v3912 = vadd.f32 %v1956, %v3770
  %v3913 = vadd.f32 %v1959, %v3773
  %v3914 = vadd.f32 %v1964, %v3778
  %v3915 = vadd.f32 %v1967, %v3781
  %v3916 = vadd.f32 %v1972, %v3786
  %v3917 = vadd.f32 %v1975, %v3789
  %v3918 = vadd.f32 %v1980, %v3794
  %v3919 = vadd.f32 %v1983, %v3797
  %v3920 = vadd.f32 %v1988, %v3802
  %v3921 = vadd.f32 %v1991, %v3805
  %v3922 = vadd.f32 %v1996, %v3810
  %v3923 = vadd.f32 %v1999, %v3813
  %v3924 = vadd.f32 %v2004, %v3818
  %v3925 = vadd.f32 %v2007, %v3821
  %v3926 = vadd.f32 %v2012, %v3826
  %v3927 = vadd.f32 %v2015, %v3829
  %v3928 = vadd.f32 %v2020, %v3834
  %v3929 = vadd.f32 %v2023, %v3837
  %v3930 = vadd.f32 %v2028, %v3842
  %v3931 = vadd.f32 %v2031, %v3845
  %v3932 = vadd.f32 %v2036, %v3850
  %v3933 = vadd.f32 %v2039, %v3853
  %v3934 = vadd.f32 %v2044, %v3858
  %v3935 = vadd.f32 %v2047, %v3861
  %v3936 = vadd.f32 %v2052, %v3866
  %v3937 = vadd.f32 %v2055, %v3869
  %v3938 = vadd.f32 %v2060, %v3874
  %v3939 = vadd.f32 %v2063, %v3877
  %v3940 = vadd.f32 %v2068, %v3882
  %v3941 = vadd.f32 %v2071, %v3885
  %v3942 = vadd.f32 %v2076, %v3890
  %v3943 = vadd.f32 %v2079, %v3893
  %v3944 = vadd.f32 %v2084, %v3898
  %v3945 = vadd.f32 %v2087, %v3901
  %v3946 = vadd.f32 %v2092, %v3906
  %v3947 = vadd.f32 %v2095, %v3909
  %v3948 = vld [vmem:[#allocation2 + $0x10] sm:$0xf]
  %v3949 = vld [vmem:[#allocation2 + $0x14] sm:$0xf]
  %v3950 = vld [vmem:[#allocation2 + $0x18] sm:$0xf]
  %v3951 = vld [vmem:[#allocation2 + $0x1c] sm:$0xf]
  %v3952 = vld [vmem:[#allocation2 + $0x20] sm:$0xf]
  %v3953 = vld [vmem:[#allocation2 + $0x24] sm:$0xf]
  %v3954 = vld [vmem:[#allocation2 + $0x28] sm:$0xf]
  %v3955 = vld [vmem:[#allocation2 + $0x2c] sm:$0xf]
  %v3956 = vld [vmem:[#allocation2 + $0x30] sm:$0xf]
  %v3957 = vld [vmem:[#allocation2 + $0x34] sm:$0xf]
  %v3958 = vld [vmem:[#allocation2 + $0x38] sm:$0xf]
  %v3959 = vld [vmem:[#allocation2 + $0x3c] sm:$0xf]
  %v3960 = vld [vmem:[#allocation2 + $0x40] sm:$0xf]
  %v3961 = vld [vmem:[#allocation2 + $0x44] sm:$0xf]
  %v3962 = vld [vmem:[#allocation2 + $0x48] sm:$0xf]
  %v3963 = vld [vmem:[#allocation2 + $0x4c] sm:$0xf]
  %v3964 = vld [vmem:[#allocation2 + $0x50] sm:$0xf]
  %v3965 = vld [vmem:[#allocation2 + $0x54] sm:$0xf]
  %v3966 = vld [vmem:[#allocation2 + $0x58] sm:$0xf]
  %v3967 = vld [vmem:[#allocation2 + $0x5c] sm:$0xf]
  %v3968 = vld [vmem:[#allocation2 + $0x60] sm:$0xf]
  %v3969 = vld [vmem:[#allocation2 + $0x64] sm:$0xf]
  %v3970 = vld [vmem:[#allocation2 + $0x68] sm:$0xf]
  %v3971 = vld [vmem:[#allocation2 + $0x6c] sm:$0xf]
  %v3972 = vld [vmem:[#allocation2 + $0x70] sm:$0xf]
  %v3973 = vld [vmem:[#allocation2 + $0x74] sm:$0xf]
  %v3974 = vld [vmem:[#allocation2 + $0x78] sm:$0xf]
  %v3975 = vld [vmem:[#allocation2 + $0x7c] sm:$0xf]
  %v3976 = vld [vmem:[#allocation2 + $0x80] sm:$0xf]
  %v3977 = vld [vmem:[#allocation2 + $0x84] sm:$0xf]
  %v3978 = vld [vmem:[#allocation2 + $0x88] sm:$0xf]
  %v3979 = vld [vmem:[#allocation2 + $0x8c] sm:$0xf]
  %v3980 = vld [vmem:[#allocation2 + $0x90] sm:$0xf]
  %v3981 = vld [vmem:[#allocation2 + $0x94] sm:$0xf]
  %v3982 = vld [vmem:[#allocation2 + $0x98] sm:$0xf]
  %v3983 = vld [vmem:[#allocation2 + $0x9c] sm:$0xf]
  %v3984 = vld [vmem:[#allocation2 + $0xa0] sm:$0x1]
  %s3985 = scalar_lea.vmem %s2, 56
  %v3986 = vld [vmem:[%s3985] sm:$0xf]
  %v3987 = vld [vmem:[%s3985 + $0x4] sm:$0xf]
  %v4025 = vunpack.c.l.b16 %v3948
  %v4026 = vunpack.c.l.b16 %v3949
  %v4027 = vunpack.c.l.b16 %v3950
  %v4028 = vunpack.c.l.b16 %v3951
  %v4029 = vunpack.c.l.b16 %v3952
  %v4030 = vunpack.c.l.b16 %v3953
  %v4031 = vunpack.c.l.b16 %v3954
  %v4032 = vunpack.c.l.b16 %v3955
  %v4033 = vunpack.c.l.b16 %v3956
  %v4034 = vunpack.c.l.b16 %v3957
  %v4035 = vunpack.c.l.b16 %v3958
  %v4036 = vunpack.c.l.b16 %v3959
  %v4037 = vunpack.c.l.b16 %v3960
  %v4038 = vunpack.c.l.b16 %v3961
  %v4039 = vunpack.c.l.b16 %v3962
  %v4040 = vunpack.c.l.b16 %v3963
  %v4041 = vunpack.c.l.b16 %v3964
  %v4042 = vunpack.c.l.b16 %v3965
  %v4043 = vunpack.c.l.b16 %v3966
  %v4044 = vunpack.c.l.b16 %v3967
  %v4045 = vunpack.c.l.b16 %v3968
  %v4046 = vunpack.c.l.b16 %v3969
  %v4047 = vunpack.c.l.b16 %v3970
  %v4048 = vunpack.c.l.b16 %v3971
  %v4049 = vunpack.c.l.b16 %v3972
  %v4050 = vunpack.c.l.b16 %v3973
  %v4051 = vunpack.c.l.b16 %v3974
  %v4052 = vunpack.c.l.b16 %v3975
  %v4053 = vunpack.c.l.b16 %v3976
  %v4054 = vunpack.c.l.b16 %v3977
  %v4055 = vunpack.c.l.b16 %v3978
  %v4056 = vunpack.c.l.b16 %v3979
  %v4057 = vunpack.c.l.b16 %v3980
  %v4058 = vunpack.c.l.b16 %v3981
  %v4059 = vunpack.c.l.b16 %v3982
  %v4060 = vunpack.c.l.b16 %v3983
  %v4061 = vunpack.c.l.b16 %v3984
  %v4062 = vpack.c.b16 %v4026, %v4025
  %v4063 = vpack.c.b16 %v4028, %v4027
  %v4064 = vpack.c.b16 %v4030, %v4029
  %v4065 = vpack.c.b16 %v4032, %v4031
  %v4066 = vpack.c.b16 %v4034, %v4033
  %v4067 = vpack.c.b16 %v4036, %v4035
  %v4068 = vpack.c.b16 %v4038, %v4037
  %v4069 = vpack.c.b16 %v4040, %v4039
  %v4070 = vpack.c.b16 %v4042, %v4041
  %v4071 = vpack.c.b16 %v4044, %v4043
  %v4072 = vpack.c.b16 %v4046, %v4045
  %v4073 = vpack.c.b16 %v4048, %v4047
  %v4074 = vpack.c.b16 %v4050, %v4049
  %v4075 = vpack.c.b16 %v4052, %v4051
  %v4076 = vpack.c.b16 %v4054, %v4053
  %v4077 = vpack.c.b16 %v4056, %v4055
  %v4078 = vpack.c.b16 %v4058, %v4057
  %v4079 = vpack.c.b16 %v4060, %v4059
  %v4080 = vpack.c.b16 %v4061, %v4061
  %v4082 = vshrl.u32 %v4062, 16
  %v4084 = vshll.u32 %v4062, 16
  %v4086 = vrot.slane %v4084, 1
  %v4087 = vor.u32 %v4082, %v4086
  %v4089 = vshll.u32 %v4063, 16
  %v4091 = vrot.slane %v4089, 1
  %v4092 = vsel %vm2231, %v4087, %v4091
  %v4093 = vshrl.u32 %v4063, 16
  %v4095 = vor.u32 %v4093, %v4091
  %v4097 = vshll.u32 %v4064, 16
  %v4099 = vrot.slane %v4097, 1
  %v4100 = vsel %vm2231, %v4095, %v4099
  %v4101 = vshrl.u32 %v4064, 16
  %v4103 = vor.u32 %v4101, %v4099
  %v4105 = vshll.u32 %v4065, 16
  %v4107 = vrot.slane %v4105, 1
  %v4108 = vsel %vm2231, %v4103, %v4107
  %v4109 = vshrl.u32 %v4065, 16
  %v4111 = vor.u32 %v4109, %v4107
  %v4113 = vshll.u32 %v4066, 16
  %v4115 = vrot.slane %v4113, 1
  %v4116 = vsel %vm2231, %v4111, %v4115
  %v4117 = vshrl.u32 %v4066, 16
  %v4119 = vor.u32 %v4117, %v4115
  %v4121 = vshll.u32 %v4067, 16
  %v4123 = vrot.slane %v4121, 1
  %v4124 = vsel %vm2231, %v4119, %v4123
  %v4125 = vshrl.u32 %v4067, 16
  %v4127 = vor.u32 %v4125, %v4123
  %v4129 = vshll.u32 %v4068, 16
  %v4131 = vrot.slane %v4129, 1
  %v4132 = vsel %vm2231, %v4127, %v4131
  %v4133 = vshrl.u32 %v4068, 16
  %v4135 = vor.u32 %v4133, %v4131
  %v4137 = vshll.u32 %v4069, 16
  %v4139 = vrot.slane %v4137, 1
  %v4140 = vsel %vm2231, %v4135, %v4139
  %v4141 = vshrl.u32 %v4069, 16
  %v4143 = vor.u32 %v4141, %v4139
  %v4145 = vshll.u32 %v4070, 16
  %v4147 = vrot.slane %v4145, 1
  %v4148 = vsel %vm2231, %v4143, %v4147
  %v4149 = vshrl.u32 %v4070, 16
  %v4151 = vor.u32 %v4149, %v4147
  %v4153 = vshll.u32 %v4071, 16
  %v4155 = vrot.slane %v4153, 1
  %v4156 = vsel %vm2231, %v4151, %v4155
  %v4157 = vshrl.u32 %v4071, 16
  %v4159 = vor.u32 %v4157, %v4155
  %v4161 = vshll.u32 %v4072, 16
  %v4163 = vrot.slane %v4161, 1
  %v4164 = vsel %vm2231, %v4159, %v4163
  %v4165 = vshrl.u32 %v4072, 16
  %v4167 = vor.u32 %v4165, %v4163
  %v4169 = vshll.u32 %v4073, 16
  %v4171 = vrot.slane %v4169, 1
  %v4172 = vsel %vm2231, %v4167, %v4171
  %v4173 = vshrl.u32 %v4073, 16
  %v4175 = vor.u32 %v4173, %v4171
  %v4177 = vshll.u32 %v4074, 16
  %v4179 = vrot.slane %v4177, 1
  %v4180 = vsel %vm2231, %v4175, %v4179
  %v4181 = vshrl.u32 %v4074, 16
  %v4183 = vor.u32 %v4181, %v4179
  %v4185 = vshll.u32 %v4075, 16
  %v4187 = vrot.slane %v4185, 1
  %v4188 = vsel %vm2231, %v4183, %v4187
  %v4189 = vshrl.u32 %v4075, 16
  %v4191 = vor.u32 %v4189, %v4187
  %v4193 = vshll.u32 %v4076, 16
  %v4195 = vrot.slane %v4193, 1
  %v4196 = vsel %vm2231, %v4191, %v4195
  %v4197 = vshrl.u32 %v4076, 16
  %v4199 = vor.u32 %v4197, %v4195
  %v4201 = vshll.u32 %v4077, 16
  %v4203 = vrot.slane %v4201, 1
  %v4204 = vsel %vm2231, %v4199, %v4203
  %v4205 = vshrl.u32 %v4077, 16
  %v4207 = vor.u32 %v4205, %v4203
  %v4209 = vshll.u32 %v4078, 16
  %v4211 = vrot.slane %v4209, 1
  %v4212 = vsel %vm2231, %v4207, %v4211
  %v4213 = vshrl.u32 %v4078, 16
  %v4215 = vor.u32 %v4213, %v4211
  %v4217 = vshll.u32 %v4079, 16
  %v4219 = vrot.slane %v4217, 1
  %v4220 = vsel %vm2231, %v4215, %v4219
  %v4221 = vshrl.u32 %v4079, 16
  %v4223 = vor.u32 %v4221, %v4219
  %v4225 = vshll.u32 %v4080, 16
  %v4227 = vrot.slane %v4225, 1
  %v4228 = vsel %vm2231, %v4223, %v4227
  %v4231 = vunpack.c.l.b16 %v3986
  %v4232 = vunpack.c.l.b16 %v3987
  %v4233 = vpack.c.b16 %v4232, %v4231
  %v4236 = vsel %vm1675, %v4092, 0
  %v4239 = vsel %vm1675, %v4100, 0
  %v4242 = vsel %vm1675, %v4108, 0
  %v4245 = vsel %vm1675, %v4116, 0
  %v4248 = vsel %vm1675, %v4124, 0
  %v4251 = vsel %vm1675, %v4132, 0
  %v4254 = vsel %vm1675, %v4140, 0
  %v4257 = vsel %vm1675, %v4148, 0
  %v4260 = vsel %vm1675, %v4156, 0
  %v4263 = vsel %vm1675, %v4164, 0
  %v4266 = vsel %vm1675, %v4172, 0
  %v4269 = vsel %vm1675, %v4180, 0
  %v4272 = vsel %vm1675, %v4188, 0
  %v4275 = vsel %vm1675, %v4196, 0
  %v4278 = vsel %vm1675, %v4204, 0
  %v4281 = vsel %vm1675, %v4212, 0
  %v4284 = vsel %vm1675, %v4220, 0
  %v4287 = vsel %vm1675, %v4228, 0
  %4289 = vmatprep.subr.bf16.mxu0 0
  %4290 = vmatpush1.bf16.msra.mxu0 0
  %4291 = vmatprep.subr.bf16.mxu0 0
  %4292 = vmatpush1.bf16.msra.mxu0 0
  %4293 = vmatprep.subr.bf16.mxu0 0
  %4294 = vmatpush1.bf16.msra.mxu0 0
  %4295 = vmatprep.subr.bf16.mxu0 0
  %4296 = vmatpush1.bf16.msra.mxu0 0
  %4297 = vmatprep.subr.bf16.mxu0 0
  %4298 = vmatpush1.bf16.msra.mxu0 0
  %4299 = vmatprep.subr.bf16.mxu0 0
  %4300 = vmatpush1.bf16.msra.mxu0 0
  %4301 = vmatprep.subr.bf16.mxu0 0
  %4302 = vmatpush1.bf16.msra.mxu0 0
  %4303 = vmatprep.subr.bf16.mxu0 0
  %4304 = vmatpush1.bf16.msra.mxu0 %v4233
  %4305 = vmatprep.subr.bf16.mxu0 0
  %4306 = vmatpush2.bf16.msra.mxu0 0
  %4307 = vmatprep.subr.bf16.mxu0 0
  %4308 = vmatpush2.bf16.msra.mxu0 0
  %4309 = vmatprep.subr.bf16.mxu0 0
  %4310 = vmatpush2.bf16.msra.mxu0 0
  %4311 = vmatprep.subr.bf16.mxu0 0
  %4312 = vmatpush2.bf16.msra.mxu0 0
  %4313 = vmatprep.subr.bf16.mxu0 0
  %4314 = vmatpush2.bf16.msra.mxu0 0
  %4315 = vmatprep.subr.bf16.mxu0 0
  %4316 = vmatpush2.bf16.msra.mxu0 0
  %4317 = vmatprep.subr.bf16.mxu0 0
  %4318 = vmatpush2.bf16.msra.mxu0 0
  %4319 = vmatprep.subr.bf16.mxu0 0
  %4320 = vmatpush2.bf16.msra.mxu0 0
  %4321 = vmatprep.mubr.bf16.mxu0 0
  %4322 = vmatmul.mubr.bf16.gmra.mxu0 %v4236
  %v4323 = vpop.f32.mrf.mxu0
  %v4324 = vadd.f32 0.0, %v4323
  %v4325 = vpop.f32.mrf.mxu0
  %v4326 = vpop.f32.mrf.mxu0
  %v4327 = vadd.f32 0.0, %v4326
  %v4328 = vpop.f32.mrf.mxu0
  %4329 = vmatprep.mubr.bf16.mxu0 0
  %4330 = vmatmul.mubr.bf16.gmra.mxu0 %v4239
  %v4331 = vpop.f32.mrf.mxu0
  %v4332 = vadd.f32 0.0, %v4331
  %v4333 = vpop.f32.mrf.mxu0
  %v4334 = vpop.f32.mrf.mxu0
  %v4335 = vadd.f32 0.0, %v4334
  %v4336 = vpop.f32.mrf.mxu0
  %4337 = vmatprep.mubr.bf16.mxu0 0
  %4338 = vmatmul.mubr.bf16.gmra.mxu0 %v4242
  %v4339 = vpop.f32.mrf.mxu0
  %v4340 = vadd.f32 0.0, %v4339
  %v4341 = vpop.f32.mrf.mxu0
  %v4342 = vpop.f32.mrf.mxu0
  %v4343 = vadd.f32 0.0, %v4342
  %v4344 = vpop.f32.mrf.mxu0
  %4345 = vmatprep.mubr.bf16.mxu0 0
  %4346 = vmatmul.mubr.bf16.gmra.mxu0 %v4245
  %v4347 = vpop.f32.mrf.mxu0
  %v4348 = vadd.f32 0.0, %v4347
  %v4349 = vpop.f32.mrf.mxu0
  %v4350 = vpop.f32.mrf.mxu0
  %v4351 = vadd.f32 0.0, %v4350
  %v4352 = vpop.f32.mrf.mxu0
  %4353 = vmatprep.mubr.bf16.mxu0 0
  %4354 = vmatmul.mubr.bf16.gmra.mxu0 %v4248
  %v4355 = vpop.f32.mrf.mxu0
  %v4356 = vadd.f32 0.0, %v4355
  %v4357 = vpop.f32.mrf.mxu0
  %v4358 = vpop.f32.mrf.mxu0
  %v4359 = vadd.f32 0.0, %v4358
  %v4360 = vpop.f32.mrf.mxu0
  %4361 = vmatprep.mubr.bf16.mxu0 0
  %4362 = vmatmul.mubr.bf16.gmra.mxu0 %v4251
  %v4363 = vpop.f32.mrf.mxu0
  %v4364 = vadd.f32 0.0, %v4363
  %v4365 = vpop.f32.mrf.mxu0
  %v4366 = vpop.f32.mrf.mxu0
  %v4367 = vadd.f32 0.0, %v4366
  %v4368 = vpop.f32.mrf.mxu0
  %4369 = vmatprep.mubr.bf16.mxu0 0
  %4370 = vmatmul.mubr.bf16.gmra.mxu0 %v4254
  %v4371 = vpop.f32.mrf.mxu0
  %v4372 = vadd.f32 0.0, %v4371
  %v4373 = vpop.f32.mrf.mxu0
  %v4374 = vpop.f32.mrf.mxu0
  %v4375 = vadd.f32 0.0, %v4374
  %v4376 = vpop.f32.mrf.mxu0
  %4377 = vmatprep.mubr.bf16.mxu0 0
  %4378 = vmatmul.mubr.bf16.gmra.mxu0 %v4257
  %v4379 = vpop.f32.mrf.mxu0
  %v4380 = vadd.f32 0.0, %v4379
  %v4381 = vpop.f32.mrf.mxu0
  %v4382 = vpop.f32.mrf.mxu0
  %v4383 = vadd.f32 0.0, %v4382
  %v4384 = vpop.f32.mrf.mxu0
  %4385 = vmatprep.mubr.bf16.mxu0 0
  %4386 = vmatmul.mubr.bf16.gmra.mxu0 %v4260
  %v4387 = vpop.f32.mrf.mxu0
  %v4388 = vadd.f32 0.0, %v4387
  %v4389 = vpop.f32.mrf.mxu0
  %v4390 = vpop.f32.mrf.mxu0
  %v4391 = vadd.f32 0.0, %v4390
  %v4392 = vpop.f32.mrf.mxu0
  %4393 = vmatprep.mubr.bf16.mxu0 0
  %4394 = vmatmul.mubr.bf16.gmra.mxu0 %v4263
  %v4395 = vpop.f32.mrf.mxu0
  %v4396 = vadd.f32 0.0, %v4395
  %v4397 = vpop.f32.mrf.mxu0
  %v4398 = vpop.f32.mrf.mxu0
  %v4399 = vadd.f32 0.0, %v4398
  %v4400 = vpop.f32.mrf.mxu0
  %4401 = vmatprep.mubr.bf16.mxu0 0
  %4402 = vmatmul.mubr.bf16.gmra.mxu0 %v4266
  %v4403 = vpop.f32.mrf.mxu0
  %v4404 = vadd.f32 0.0, %v4403
  %v4405 = vpop.f32.mrf.mxu0
  %v4406 = vpop.f32.mrf.mxu0
  %v4407 = vadd.f32 0.0, %v4406
  %v4408 = vpop.f32.mrf.mxu0
  %4409 = vmatprep.mubr.bf16.mxu0 0
  %4410 = vmatmul.mubr.bf16.gmra.mxu0 %v4269
  %v4411 = vpop.f32.mrf.mxu0
  %v4412 = vadd.f32 0.0, %v4411
  %v4413 = vpop.f32.mrf.mxu0
  %v4414 = vpop.f32.mrf.mxu0
  %v4415 = vadd.f32 0.0, %v4414
  %v4416 = vpop.f32.mrf.mxu0
  %4417 = vmatprep.mubr.bf16.mxu0 0
  %4418 = vmatmul.mubr.bf16.gmra.mxu0 %v4272
  %v4419 = vpop.f32.mrf.mxu0
  %v4420 = vadd.f32 0.0, %v4419
  %v4421 = vpop.f32.mrf.mxu0
  %v4422 = vpop.f32.mrf.mxu0
  %v4423 = vadd.f32 0.0, %v4422
  %v4424 = vpop.f32.mrf.mxu0
  %4425 = vmatprep.mubr.bf16.mxu0 0
  %4426 = vmatmul.mubr.bf16.gmra.mxu0 %v4275
  %v4427 = vpop.f32.mrf.mxu0
  %v4428 = vadd.f32 0.0, %v4427
  %v4429 = vpop.f32.mrf.mxu0
  %v4430 = vpop.f32.mrf.mxu0
  %v4431 = vadd.f32 0.0, %v4430
  %v4432 = vpop.f32.mrf.mxu0
  %4433 = vmatprep.mubr.bf16.mxu0 0
  %4434 = vmatmul.mubr.bf16.gmra.mxu0 %v4278
  %v4435 = vpop.f32.mrf.mxu0
  %v4436 = vadd.f32 0.0, %v4435
  %v4437 = vpop.f32.mrf.mxu0
  %v4438 = vpop.f32.mrf.mxu0
  %v4439 = vadd.f32 0.0, %v4438
  %v4440 = vpop.f32.mrf.mxu0
  %4441 = vmatprep.mubr.bf16.mxu0 0
  %4442 = vmatmul.mubr.bf16.gmra.mxu0 %v4281
  %v4443 = vpop.f32.mrf.mxu0
  %v4444 = vadd.f32 0.0, %v4443
  %v4445 = vpop.f32.mrf.mxu0
  %v4446 = vpop.f32.mrf.mxu0
  %v4447 = vadd.f32 0.0, %v4446
  %v4448 = vpop.f32.mrf.mxu0
  %4449 = vmatprep.mubr.bf16.mxu0 0
  %4450 = vmatmul.mubr.bf16.gmra.mxu0 %v4284
  %v4451 = vpop.f32.mrf.mxu0
  %v4452 = vadd.f32 0.0, %v4451
  %v4453 = vpop.f32.mrf.mxu0
  %v4454 = vpop.f32.mrf.mxu0
  %v4455 = vadd.f32 0.0, %v4454
  %v4456 = vpop.f32.mrf.mxu0
  %4457 = vmatprep.mubr.bf16.mxu0 0
  %4458 = vmatmul.mubr.bf16.gmra.mxu0 %v4287
  %v4459 = vpop.f32.mrf.mxu0
  %v4460 = vadd.f32 0.0, %v4459
  %v4461 = vpop.f32.mrf.mxu0
  %v4462 = vpop.f32.mrf.mxu0
  %v4463 = vadd.f32 0.0, %v4462
  %v4464 = vpop.f32.mrf.mxu0
  %4465 = vdwg.mxu0
  %v4466 = vadd.f32 %v2845, %v4324
  %v4467 = vadd.f32 %v2848, %v4327
  %v4468 = vadd.f32 %v2853, %v4332
  %v4469 = vadd.f32 %v2856, %v4335
  %v4470 = vadd.f32 %v2861, %v4340
  %v4471 = vadd.f32 %v2864, %v4343
  %v4472 = vadd.f32 %v2869, %v4348
  %v4473 = vadd.f32 %v2872, %v4351
  %v4474 = vadd.f32 %v2877, %v4356
  %v4475 = vadd.f32 %v2880, %v4359
  %v4476 = vadd.f32 %v2885, %v4364
  %v4477 = vadd.f32 %v2888, %v4367
  %v4478 = vadd.f32 %v2893, %v4372
  %v4479 = vadd.f32 %v2896, %v4375
  %v4480 = vadd.f32 %v2901, %v4380
  %v4481 = vadd.f32 %v2904, %v4383
  %v4482 = vadd.f32 %v2909, %v4388
  %v4483 = vadd.f32 %v2912, %v4391
  %v4484 = vadd.f32 %v2917, %v4396
  %v4485 = vadd.f32 %v2920, %v4399
  %v4486 = vadd.f32 %v2925, %v4404
  %v4487 = vadd.f32 %v2928, %v4407
  %v4488 = vadd.f32 %v2933, %v4412
  %v4489 = vadd.f32 %v2936, %v4415
  %v4490 = vadd.f32 %v2941, %v4420
  %v4491 = vadd.f32 %v2944, %v4423
  %v4492 = vadd.f32 %v2949, %v4428
  %v4493 = vadd.f32 %v2952, %v4431
  %v4494 = vadd.f32 %v2957, %v4436
  %v4495 = vadd.f32 %v2960, %v4439
  %v4496 = vadd.f32 %v2965, %v4444
  %v4497 = vadd.f32 %v2968, %v4447
  %v4498 = vadd.f32 %v2973, %v4452
  %v4499 = vadd.f32 %v2976, %v4455
  %v4500 = vadd.f32 %v2981, %v4460
  %v4501 = vadd.f32 %v2984, %v4463
  %v4502 = vld [vmem:[#allocation2 + $0x10] sm:$0xe]
  %s4503 = scalar_lea.vmem %s2, 64
  %v4504 = vld [vmem:[%s4503] sm:$0xf]
  %v4505 = vld [vmem:[%s4503 + $0x4] sm:$0xf]
  %v4507 = vunpack.c.l.b16 %v4502
  %v4508 = vpack.c.b16 %v4026, %v4507
  %v4509 = vrot.slane %v4508, 1
  %v4510 = vrot.slane %v4063, 1
  %v4511 = vsel %vm2994, %v4509, %v4510
  %v4512 = vrot.slane %v4064, 1
  %v4513 = vsel %vm2994, %v4510, %v4512
  %v4514 = vrot.slane %v4065, 1
  %v4515 = vsel %vm2994, %v4512, %v4514
  %v4516 = vrot.slane %v4066, 1
  %v4517 = vsel %vm2994, %v4514, %v4516
  %v4518 = vrot.slane %v4067, 1
  %v4519 = vsel %vm2994, %v4516, %v4518
  %v4520 = vrot.slane %v4068, 1
  %v4521 = vsel %vm2994, %v4518, %v4520
  %v4522 = vrot.slane %v4069, 1
  %v4523 = vsel %vm2994, %v4520, %v4522
  %v4524 = vrot.slane %v4070, 1
  %v4525 = vsel %vm2994, %v4522, %v4524
  %v4526 = vrot.slane %v4071, 1
  %v4527 = vsel %vm2994, %v4524, %v4526
  %v4528 = vrot.slane %v4072, 1
  %v4529 = vsel %vm2994, %v4526, %v4528
  %v4530 = vrot.slane %v4073, 1
  %v4531 = vsel %vm2994, %v4528, %v4530
  %v4532 = vrot.slane %v4074, 1
  %v4533 = vsel %vm2994, %v4530, %v4532
  %v4534 = vrot.slane %v4075, 1
  %v4535 = vsel %vm2994, %v4532, %v4534
  %v4536 = vrot.slane %v4076, 1
  %v4537 = vsel %vm2994, %v4534, %v4536
  %v4538 = vrot.slane %v4077, 1
  %v4539 = vsel %vm2994, %v4536, %v4538
  %v4540 = vrot.slane %v4078, 1
  %v4541 = vsel %vm2994, %v4538, %v4540
  %v4542 = vrot.slane %v4079, 1
  %v4543 = vsel %vm2994, %v4540, %v4542
  %v4544 = vrot.slane %v4080, 1
  %v4545 = vsel %vm2994, %v4542, %v4544
  %v4548 = vunpack.c.l.b16 %v4504
  %v4549 = vunpack.c.l.b16 %v4505
  %v4550 = vpack.c.b16 %v4549, %v4548
  %v4553 = vsel %vm1675, %v4511, 0
  %v4556 = vsel %vm1675, %v4513, 0
  %v4559 = vsel %vm1675, %v4515, 0
  %v4562 = vsel %vm1675, %v4517, 0
  %v4565 = vsel %vm1675, %v4519, 0
  %v4568 = vsel %vm1675, %v4521, 0
  %v4571 = vsel %vm1675, %v4523, 0
  %v4574 = vsel %vm1675, %v4525, 0
  %v4577 = vsel %vm1675, %v4527, 0
  %v4580 = vsel %vm1675, %v4529, 0
  %v4583 = vsel %vm1675, %v4531, 0
  %v4586 = vsel %vm1675, %v4533, 0
  %v4589 = vsel %vm1675, %v4535, 0
  %v4592 = vsel %vm1675, %v4537, 0
  %v4595 = vsel %vm1675, %v4539, 0
  %v4598 = vsel %vm1675, %v4541, 0
  %v4601 = vsel %vm1675, %v4543, 0
  %v4604 = vsel %vm1675, %v4545, 0
  %4606 = vmatprep.subr.bf16.mxu0 0
  %4607 = vmatpush1.bf16.msra.mxu0 0
  %4608 = vmatprep.subr.bf16.mxu0 0
  %4609 = vmatpush1.bf16.msra.mxu0 0
  %4610 = vmatprep.subr.bf16.mxu0 0
  %4611 = vmatpush1.bf16.msra.mxu0 0
  %4612 = vmatprep.subr.bf16.mxu0 0
  %4613 = vmatpush1.bf16.msra.mxu0 0
  %4614 = vmatprep.subr.bf16.mxu0 0
  %4615 = vmatpush1.bf16.msra.mxu0 0
  %4616 = vmatprep.subr.bf16.mxu0 0
  %4617 = vmatpush1.bf16.msra.mxu0 0
  %4618 = vmatprep.subr.bf16.mxu0 0
  %4619 = vmatpush1.bf16.msra.mxu0 0
  %4620 = vmatprep.subr.bf16.mxu0 0
  %4621 = vmatpush1.bf16.msra.mxu0 %v4550
  %4622 = vmatprep.subr.bf16.mxu0 0
  %4623 = vmatpush2.bf16.msra.mxu0 0
  %4624 = vmatprep.subr.bf16.mxu0 0
  %4625 = vmatpush2.bf16.msra.mxu0 0
  %4626 = vmatprep.subr.bf16.mxu0 0
  %4627 = vmatpush2.bf16.msra.mxu0 0
  %4628 = vmatprep.subr.bf16.mxu0 0
  %4629 = vmatpush2.bf16.msra.mxu0 0
  %4630 = vmatprep.subr.bf16.mxu0 0
  %4631 = vmatpush2.bf16.msra.mxu0 0
  %4632 = vmatprep.subr.bf16.mxu0 0
  %4633 = vmatpush2.bf16.msra.mxu0 0
  %4634 = vmatprep.subr.bf16.mxu0 0
  %4635 = vmatpush2.bf16.msra.mxu0 0
  %4636 = vmatprep.subr.bf16.mxu0 0
  %4637 = vmatpush2.bf16.msra.mxu0 0
  %4638 = vmatprep.mubr.bf16.mxu0 0
  %4639 = vmatmul.mubr.bf16.gmra.mxu0 %v4553
  %v4640 = vpop.f32.mrf.mxu0
  %v4641 = vadd.f32 0.0, %v4640
  %v4642 = vpop.f32.mrf.mxu0
  %v4643 = vpop.f32.mrf.mxu0
  %v4644 = vadd.f32 0.0, %v4643
  %v4645 = vpop.f32.mrf.mxu0
  %4646 = vmatprep.mubr.bf16.mxu0 0
  %4647 = vmatmul.mubr.bf16.gmra.mxu0 %v4556
  %v4648 = vpop.f32.mrf.mxu0
  %v4649 = vadd.f32 0.0, %v4648
  %v4650 = vpop.f32.mrf.mxu0
  %v4651 = vpop.f32.mrf.mxu0
  %v4652 = vadd.f32 0.0, %v4651
  %v4653 = vpop.f32.mrf.mxu0
  %4654 = vmatprep.mubr.bf16.mxu0 0
  %4655 = vmatmul.mubr.bf16.gmra.mxu0 %v4559
  %v4656 = vpop.f32.mrf.mxu0
  %v4657 = vadd.f32 0.0, %v4656
  %v4658 = vpop.f32.mrf.mxu0
  %v4659 = vpop.f32.mrf.mxu0
  %v4660 = vadd.f32 0.0, %v4659
  %v4661 = vpop.f32.mrf.mxu0
  %4662 = vmatprep.mubr.bf16.mxu0 0
  %4663 = vmatmul.mubr.bf16.gmra.mxu0 %v4562
  %v4664 = vpop.f32.mrf.mxu0
  %v4665 = vadd.f32 0.0, %v4664
  %v4666 = vpop.f32.mrf.mxu0
  %v4667 = vpop.f32.mrf.mxu0
  %v4668 = vadd.f32 0.0, %v4667
  %v4669 = vpop.f32.mrf.mxu0
  %4670 = vmatprep.mubr.bf16.mxu0 0
  %4671 = vmatmul.mubr.bf16.gmra.mxu0 %v4565
  %v4672 = vpop.f32.mrf.mxu0
  %v4673 = vadd.f32 0.0, %v4672
  %v4674 = vpop.f32.mrf.mxu0
  %v4675 = vpop.f32.mrf.mxu0
  %v4676 = vadd.f32 0.0, %v4675
  %v4677 = vpop.f32.mrf.mxu0
  %4678 = vmatprep.mubr.bf16.mxu0 0
  %4679 = vmatmul.mubr.bf16.gmra.mxu0 %v4568
  %v4680 = vpop.f32.mrf.mxu0
  %v4681 = vadd.f32 0.0, %v4680
  %v4682 = vpop.f32.mrf.mxu0
  %v4683 = vpop.f32.mrf.mxu0
  %v4684 = vadd.f32 0.0, %v4683
  %v4685 = vpop.f32.mrf.mxu0
  %4686 = vmatprep.mubr.bf16.mxu0 0
  %4687 = vmatmul.mubr.bf16.gmra.mxu0 %v4571
  %v4688 = vpop.f32.mrf.mxu0
  %v4689 = vadd.f32 0.0, %v4688
  %v4690 = vpop.f32.mrf.mxu0
  %v4691 = vpop.f32.mrf.mxu0
  %v4692 = vadd.f32 0.0, %v4691
  %v4693 = vpop.f32.mrf.mxu0
  %4694 = vmatprep.mubr.bf16.mxu0 0
  %4695 = vmatmul.mubr.bf16.gmra.mxu0 %v4574
  %v4696 = vpop.f32.mrf.mxu0
  %v4697 = vadd.f32 0.0, %v4696
  %v4698 = vpop.f32.mrf.mxu0
  %v4699 = vpop.f32.mrf.mxu0
  %v4700 = vadd.f32 0.0, %v4699
  %v4701 = vpop.f32.mrf.mxu0
  %4702 = vmatprep.mubr.bf16.mxu0 0
  %4703 = vmatmul.mubr.bf16.gmra.mxu0 %v4577
  %v4704 = vpop.f32.mrf.mxu0
  %v4705 = vadd.f32 0.0, %v4704
  %v4706 = vpop.f32.mrf.mxu0
  %v4707 = vpop.f32.mrf.mxu0
  %v4708 = vadd.f32 0.0, %v4707
  %v4709 = vpop.f32.mrf.mxu0
  %4710 = vmatprep.mubr.bf16.mxu0 0
  %4711 = vmatmul.mubr.bf16.gmra.mxu0 %v4580
  %v4712 = vpop.f32.mrf.mxu0
  %v4713 = vadd.f32 0.0, %v4712
  %v4714 = vpop.f32.mrf.mxu0
  %v4715 = vpop.f32.mrf.mxu0
  %v4716 = vadd.f32 0.0, %v4715
  %v4717 = vpop.f32.mrf.mxu0
  %4718 = vmatprep.mubr.bf16.mxu0 0
  %4719 = vmatmul.mubr.bf16.gmra.mxu0 %v4583
  %v4720 = vpop.f32.mrf.mxu0
  %v4721 = vadd.f32 0.0, %v4720
  %v4722 = vpop.f32.mrf.mxu0
  %v4723 = vpop.f32.mrf.mxu0
  %v4724 = vadd.f32 0.0, %v4723
  %v4725 = vpop.f32.mrf.mxu0
  %4726 = vmatprep.mubr.bf16.mxu0 0
  %4727 = vmatmul.mubr.bf16.gmra.mxu0 %v4586
  %v4728 = vpop.f32.mrf.mxu0
  %v4729 = vadd.f32 0.0, %v4728
  %v4730 = vpop.f32.mrf.mxu0
  %v4731 = vpop.f32.mrf.mxu0
  %v4732 = vadd.f32 0.0, %v4731
  %v4733 = vpop.f32.mrf.mxu0
  %4734 = vmatprep.mubr.bf16.mxu0 0
  %4735 = vmatmul.mubr.bf16.gmra.mxu0 %v4589
  %v4736 = vpop.f32.mrf.mxu0
  %v4737 = vadd.f32 0.0, %v4736
  %v4738 = vpop.f32.mrf.mxu0
  %v4739 = vpop.f32.mrf.mxu0
  %v4740 = vadd.f32 0.0, %v4739
  %v4741 = vpop.f32.mrf.mxu0
  %4742 = vmatprep.mubr.bf16.mxu0 0
  %4743 = vmatmul.mubr.bf16.gmra.mxu0 %v4592
  %v4744 = vpop.f32.mrf.mxu0
  %v4745 = vadd.f32 0.0, %v4744
  %v4746 = vpop.f32.mrf.mxu0
  %v4747 = vpop.f32.mrf.mxu0
  %v4748 = vadd.f32 0.0, %v4747
  %v4749 = vpop.f32.mrf.mxu0
  %4750 = vmatprep.mubr.bf16.mxu0 0
  %4751 = vmatmul.mubr.bf16.gmra.mxu0 %v4595
  %v4752 = vpop.f32.mrf.mxu0
  %v4753 = vadd.f32 0.0, %v4752
  %v4754 = vpop.f32.mrf.mxu0
  %v4755 = vpop.f32.mrf.mxu0
  %v4756 = vadd.f32 0.0, %v4755
  %v4757 = vpop.f32.mrf.mxu0
  %4758 = vmatprep.mubr.bf16.mxu0 0
  %4759 = vmatmul.mubr.bf16.gmra.mxu0 %v4598
  %v4760 = vpop.f32.mrf.mxu0
  %v4761 = vadd.f32 0.0, %v4760
  %v4762 = vpop.f32.mrf.mxu0
  %v4763 = vpop.f32.mrf.mxu0
  %v4764 = vadd.f32 0.0, %v4763
  %v4765 = vpop.f32.mrf.mxu0
  %4766 = vmatprep.mubr.bf16.mxu0 0
  %4767 = vmatmul.mubr.bf16.gmra.mxu0 %v4601
  %v4768 = vpop.f32.mrf.mxu0
  %v4769 = vadd.f32 0.0, %v4768
  %v4770 = vpop.f32.mrf.mxu0
  %v4771 = vpop.f32.mrf.mxu0
  %v4772 = vadd.f32 0.0, %v4771
  %v4773 = vpop.f32.mrf.mxu0
  %4774 = vmatprep.mubr.bf16.mxu0 0
  %4775 = vmatmul.mubr.bf16.gmra.mxu0 %v4604
  %v4776 = vpop.f32.mrf.mxu0
  %v4777 = vadd.f32 0.0, %v4776
  %v4778 = vpop.f32.mrf.mxu0
  %v4779 = vpop.f32.mrf.mxu0
  %v4780 = vadd.f32 0.0, %v4779
  %v4781 = vpop.f32.mrf.mxu0
  %4782 = vdwg.mxu0
  %v4783 = vadd.f32 %v3404, %v4641
  %v4784 = vadd.f32 %v3407, %v4644
  %v4785 = vadd.f32 %v3412, %v4649
  %v4786 = vadd.f32 %v3415, %v4652
  %v4787 = vadd.f32 %v3420, %v4657
  %v4788 = vadd.f32 %v3423, %v4660
  %v4789 = vadd.f32 %v3428, %v4665
  %v4790 = vadd.f32 %v3431, %v4668
  %v4791 = vadd.f32 %v3436, %v4673
  %v4792 = vadd.f32 %v3439, %v4676
  %v4793 = vadd.f32 %v3444, %v4681
  %v4794 = vadd.f32 %v3447, %v4684
  %v4795 = vadd.f32 %v3452, %v4689
  %v4796 = vadd.f32 %v3455, %v4692
  %v4797 = vadd.f32 %v3460, %v4697
  %v4798 = vadd.f32 %v3463, %v4700
  %v4799 = vadd.f32 %v3468, %v4705
  %v4800 = vadd.f32 %v3471, %v4708
  %v4801 = vadd.f32 %v3476, %v4713
  %v4802 = vadd.f32 %v3479, %v4716
  %v4803 = vadd.f32 %v3484, %v4721
  %v4804 = vadd.f32 %v3487, %v4724
  %v4805 = vadd.f32 %v3492, %v4729
  %v4806 = vadd.f32 %v3495, %v4732
  %v4807 = vadd.f32 %v3500, %v4737
  %v4808 = vadd.f32 %v3503, %v4740
  %v4809 = vadd.f32 %v3508, %v4745
  %v4810 = vadd.f32 %v3511, %v4748
  %v4811 = vadd.f32 %v3516, %v4753
  %v4812 = vadd.f32 %v3519, %v4756
  %v4813 = vadd.f32 %v3524, %v4761
  %v4814 = vadd.f32 %v3527, %v4764
  %v4815 = vadd.f32 %v3532, %v4769
  %v4816 = vadd.f32 %v3535, %v4772
  %v4817 = vadd.f32 %v3540, %v4777
  %v4818 = vadd.f32 %v3543, %v4780
  %v4819 = vld [vmem:[#allocation3] sm:$0xf]
  %v4820 = vld [vmem:[#allocation3 + $0x4] sm:$0xf]
  %v4821 = vld [vmem:[#allocation3 + $0x8] sm:$0xf]
  %v4822 = vld [vmem:[#allocation3 + $0xc] sm:$0xf]
  %v4823 = vld [vmem:[#allocation3 + $0x10] sm:$0xf]
  %v4824 = vld [vmem:[#allocation3 + $0x14] sm:$0xf]
  %v4825 = vld [vmem:[#allocation3 + $0x18] sm:$0xf]
  %v4826 = vld [vmem:[#allocation3 + $0x1c] sm:$0xf]
  %v4827 = vld [vmem:[#allocation3 + $0x20] sm:$0xf]
  %v4828 = vld [vmem:[#allocation3 + $0x24] sm:$0xf]
  %v4829 = vld [vmem:[#allocation3 + $0x28] sm:$0xf]
  %v4830 = vld [vmem:[#allocation3 + $0x2c] sm:$0xf]
  %v4831 = vld [vmem:[#allocation3 + $0x30] sm:$0xf]
  %v4832 = vld [vmem:[#allocation3 + $0x34] sm:$0xf]
  %v4833 = vld [vmem:[#allocation3 + $0x38] sm:$0xf]
  %v4834 = vld [vmem:[#allocation3 + $0x3c] sm:$0xf]
  %v4835 = vld [vmem:[#allocation3 + $0x40] sm:$0xf]
  %v4836 = vld [vmem:[#allocation3 + $0x44] sm:$0xf]
  %v4837 = vld [vmem:[#allocation3 + $0x48] sm:$0xf]
  %v4838 = vld [vmem:[#allocation3 + $0x4c] sm:$0xf]
  %v4839 = vld [vmem:[#allocation3 + $0x50] sm:$0xf]
  %v4840 = vld [vmem:[#allocation3 + $0x54] sm:$0xf]
  %v4841 = vld [vmem:[#allocation3 + $0x58] sm:$0xf]
  %v4842 = vld [vmem:[#allocation3 + $0x5c] sm:$0xf]
  %v4843 = vld [vmem:[#allocation3 + $0x60] sm:$0xf]
  %v4844 = vld [vmem:[#allocation3 + $0x64] sm:$0xf]
  %v4845 = vld [vmem:[#allocation3 + $0x68] sm:$0xf]
  %v4846 = vld [vmem:[#allocation3 + $0x6c] sm:$0xf]
  %v4847 = vld [vmem:[#allocation3 + $0x70] sm:$0xf]
  %v4848 = vld [vmem:[#allocation3 + $0x74] sm:$0xf]
  %v4849 = vld [vmem:[#allocation3 + $0x78] sm:$0xf]
  %v4850 = vld [vmem:[#allocation3 + $0x7c] sm:$0xf]
  %v4851 = vld [vmem:[#allocation3 + $0x80] sm:$0xf]
  %v4852 = vld [vmem:[#allocation3 + $0x84] sm:$0xf]
  %v4853 = vld [vmem:[#allocation3 + $0x88] sm:$0xf]
  %v4854 = vld [vmem:[#allocation3 + $0x8c] sm:$0xf]
  %v4855 = vld [vmem:[%s3] sm:$0xf]
  %v4856 = vld [vmem:[%s3 + $0x4] sm:$0xf]
  %v4893 = vunpack.c.l.b16 %v4819
  %v4894 = vunpack.c.l.b16 %v4820
  %v4895 = vunpack.c.l.b16 %v4821
  %v4896 = vunpack.c.l.b16 %v4822
  %v4897 = vunpack.c.l.b16 %v4823
  %v4898 = vunpack.c.l.b16 %v4824
  %v4899 = vunpack.c.l.b16 %v4825
  %v4900 = vunpack.c.l.b16 %v4826
  %v4901 = vunpack.c.l.b16 %v4827
  %v4902 = vunpack.c.l.b16 %v4828
  %v4903 = vunpack.c.l.b16 %v4829
  %v4904 = vunpack.c.l.b16 %v4830
  %v4905 = vunpack.c.l.b16 %v4831
  %v4906 = vunpack.c.l.b16 %v4832
  %v4907 = vunpack.c.l.b16 %v4833
  %v4908 = vunpack.c.l.b16 %v4834
  %v4909 = vunpack.c.l.b16 %v4835
  %v4910 = vunpack.c.l.b16 %v4836
  %v4911 = vunpack.c.l.b16 %v4837
  %v4912 = vunpack.c.l.b16 %v4838
  %v4913 = vunpack.c.l.b16 %v4839
  %v4914 = vunpack.c.l.b16 %v4840
  %v4915 = vunpack.c.l.b16 %v4841
  %v4916 = vunpack.c.l.b16 %v4842
  %v4917 = vunpack.c.l.b16 %v4843
  %v4918 = vunpack.c.l.b16 %v4844
  %v4919 = vunpack.c.l.b16 %v4845
  %v4920 = vunpack.c.l.b16 %v4846
  %v4921 = vunpack.c.l.b16 %v4847
  %v4922 = vunpack.c.l.b16 %v4848
  %v4923 = vunpack.c.l.b16 %v4849
  %v4924 = vunpack.c.l.b16 %v4850
  %v4925 = vunpack.c.l.b16 %v4851
  %v4926 = vunpack.c.l.b16 %v4852
  %v4927 = vunpack.c.l.b16 %v4853
  %v4928 = vunpack.c.l.b16 %v4854
  %v4929 = vpack.c.b16 %v4894, %v4893
  %v4930 = vpack.c.b16 %v4896, %v4895
  %v4931 = vpack.c.b16 %v4898, %v4897
  %v4932 = vpack.c.b16 %v4900, %v4899
  %v4933 = vpack.c.b16 %v4902, %v4901
  %v4934 = vpack.c.b16 %v4904, %v4903
  %v4935 = vpack.c.b16 %v4906, %v4905
  %v4936 = vpack.c.b16 %v4908, %v4907
  %v4937 = vpack.c.b16 %v4910, %v4909
  %v4938 = vpack.c.b16 %v4912, %v4911
  %v4939 = vpack.c.b16 %v4914, %v4913
  %v4940 = vpack.c.b16 %v4916, %v4915
  %v4941 = vpack.c.b16 %v4918, %v4917
  %v4942 = vpack.c.b16 %v4920, %v4919
  %v4943 = vpack.c.b16 %v4922, %v4921
  %v4944 = vpack.c.b16 %v4924, %v4923
  %v4945 = vpack.c.b16 %v4926, %v4925
  %v4946 = vpack.c.b16 %v4928, %v4927
  %v4949 = vunpack.c.l.b16 %v4855
  %v4950 = vunpack.c.l.b16 %v4856
  %v4951 = vpack.c.b16 %v4950, %v4949
  %v4954 = vsel %vm1675, %v4929, 0
  %v4957 = vsel %vm1675, %v4930, 0
  %v4960 = vsel %vm1675, %v4931, 0
  %v4963 = vsel %vm1675, %v4932, 0
  %v4966 = vsel %vm1675, %v4933, 0
  %v4969 = vsel %vm1675, %v4934, 0
  %v4972 = vsel %vm1675, %v4935, 0
  %v4975 = vsel %vm1675, %v4936, 0
  %v4978 = vsel %vm1675, %v4937, 0
  %v4981 = vsel %vm1675, %v4938, 0
  %v4984 = vsel %vm1675, %v4939, 0
  %v4987 = vsel %vm1675, %v4940, 0
  %v4990 = vsel %vm1675, %v4941, 0
  %v4993 = vsel %vm1675, %v4942, 0
  %v4996 = vsel %vm1675, %v4943, 0
  %v4999 = vsel %vm1675, %v4944, 0
  %v5002 = vsel %vm1675, %v4945, 0
  %v5005 = vsel %vm1675, %v4946, 0
  %5007 = vmatprep.subr.bf16.mxu0 0
  %5008 = vmatpush1.bf16.msra.mxu0 0
  %5009 = vmatprep.subr.bf16.mxu0 0
  %5010 = vmatpush1.bf16.msra.mxu0 0
  %5011 = vmatprep.subr.bf16.mxu0 0
  %5012 = vmatpush1.bf16.msra.mxu0 0
  %5013 = vmatprep.subr.bf16.mxu0 0
  %5014 = vmatpush1.bf16.msra.mxu0 0
  %5015 = vmatprep.subr.bf16.mxu0 0
  %5016 = vmatpush1.bf16.msra.mxu0 0
  %5017 = vmatprep.subr.bf16.mxu0 0
  %5018 = vmatpush1.bf16.msra.mxu0 0
  %5019 = vmatprep.subr.bf16.mxu0 0
  %5020 = vmatpush1.bf16.msra.mxu0 0
  %5021 = vmatprep.subr.bf16.mxu0 0
  %5022 = vmatpush1.bf16.msra.mxu0 %v4951
  %5023 = vmatprep.subr.bf16.mxu0 0
  %5024 = vmatpush2.bf16.msra.mxu0 0
  %5025 = vmatprep.subr.bf16.mxu0 0
  %5026 = vmatpush2.bf16.msra.mxu0 0
  %5027 = vmatprep.subr.bf16.mxu0 0
  %5028 = vmatpush2.bf16.msra.mxu0 0
  %5029 = vmatprep.subr.bf16.mxu0 0
  %5030 = vmatpush2.bf16.msra.mxu0 0
  %5031 = vmatprep.subr.bf16.mxu0 0
  %5032 = vmatpush2.bf16.msra.mxu0 0
  %5033 = vmatprep.subr.bf16.mxu0 0
  %5034 = vmatpush2.bf16.msra.mxu0 0
  %5035 = vmatprep.subr.bf16.mxu0 0
  %5036 = vmatpush2.bf16.msra.mxu0 0
  %5037 = vmatprep.subr.bf16.mxu0 0
  %5038 = vmatpush2.bf16.msra.mxu0 0
  %5039 = vmatprep.mubr.bf16.mxu0 0
  %5040 = vmatmul.mubr.bf16.gmra.mxu0 %v4954
  %v5041 = vpop.f32.mrf.mxu0
  %v5042 = vadd.f32 0.0, %v5041
  %v5043 = vpop.f32.mrf.mxu0
  %v5044 = vpop.f32.mrf.mxu0
  %v5045 = vadd.f32 0.0, %v5044
  %v5046 = vpop.f32.mrf.mxu0
  %5047 = vmatprep.mubr.bf16.mxu0 0
  %5048 = vmatmul.mubr.bf16.gmra.mxu0 %v4957
  %v5049 = vpop.f32.mrf.mxu0
  %v5050 = vadd.f32 0.0, %v5049
  %v5051 = vpop.f32.mrf.mxu0
  %v5052 = vpop.f32.mrf.mxu0
  %v5053 = vadd.f32 0.0, %v5052
  %v5054 = vpop.f32.mrf.mxu0
  %5055 = vmatprep.mubr.bf16.mxu0 0
  %5056 = vmatmul.mubr.bf16.gmra.mxu0 %v4960
  %v5057 = vpop.f32.mrf.mxu0
  %v5058 = vadd.f32 0.0, %v5057
  %v5059 = vpop.f32.mrf.mxu0
  %v5060 = vpop.f32.mrf.mxu0
  %v5061 = vadd.f32 0.0, %v5060
  %v5062 = vpop.f32.mrf.mxu0
  %5063 = vmatprep.mubr.bf16.mxu0 0
  %5064 = vmatmul.mubr.bf16.gmra.mxu0 %v4963
  %v5065 = vpop.f32.mrf.mxu0
  %v5066 = vadd.f32 0.0, %v5065
  %v5067 = vpop.f32.mrf.mxu0
  %v5068 = vpop.f32.mrf.mxu0
  %v5069 = vadd.f32 0.0, %v5068
  %v5070 = vpop.f32.mrf.mxu0
  %5071 = vmatprep.mubr.bf16.mxu0 0
  %5072 = vmatmul.mubr.bf16.gmra.mxu0 %v4966
  %v5073 = vpop.f32.mrf.mxu0
  %v5074 = vadd.f32 0.0, %v5073
  %v5075 = vpop.f32.mrf.mxu0
  %v5076 = vpop.f32.mrf.mxu0
  %v5077 = vadd.f32 0.0, %v5076
  %v5078 = vpop.f32.mrf.mxu0
  %5079 = vmatprep.mubr.bf16.mxu0 0
  %5080 = vmatmul.mubr.bf16.gmra.mxu0 %v4969
  %v5081 = vpop.f32.mrf.mxu0
  %v5082 = vadd.f32 0.0, %v5081
  %v5083 = vpop.f32.mrf.mxu0
  %v5084 = vpop.f32.mrf.mxu0
  %v5085 = vadd.f32 0.0, %v5084
  %v5086 = vpop.f32.mrf.mxu0
  %5087 = vmatprep.mubr.bf16.mxu0 0
  %5088 = vmatmul.mubr.bf16.gmra.mxu0 %v4972
  %v5089 = vpop.f32.mrf.mxu0
  %v5090 = vadd.f32 0.0, %v5089
  %v5091 = vpop.f32.mrf.mxu0
  %v5092 = vpop.f32.mrf.mxu0
  %v5093 = vadd.f32 0.0, %v5092
  %v5094 = vpop.f32.mrf.mxu0
  %5095 = vmatprep.mubr.bf16.mxu0 0
  %5096 = vmatmul.mubr.bf16.gmra.mxu0 %v4975
  %v5097 = vpop.f32.mrf.mxu0
  %v5098 = vadd.f32 0.0, %v5097
  %v5099 = vpop.f32.mrf.mxu0
  %v5100 = vpop.f32.mrf.mxu0
  %v5101 = vadd.f32 0.0, %v5100
  %v5102 = vpop.f32.mrf.mxu0
  %5103 = vmatprep.mubr.bf16.mxu0 0
  %5104 = vmatmul.mubr.bf16.gmra.mxu0 %v4978
  %v5105 = vpop.f32.mrf.mxu0
  %v5106 = vadd.f32 0.0, %v5105
  %v5107 = vpop.f32.mrf.mxu0
  %v5108 = vpop.f32.mrf.mxu0
  %v5109 = vadd.f32 0.0, %v5108
  %v5110 = vpop.f32.mrf.mxu0
  %5111 = vmatprep.mubr.bf16.mxu0 0
  %5112 = vmatmul.mubr.bf16.gmra.mxu0 %v4981
  %v5113 = vpop.f32.mrf.mxu0
  %v5114 = vadd.f32 0.0, %v5113
  %v5115 = vpop.f32.mrf.mxu0
  %v5116 = vpop.f32.mrf.mxu0
  %v5117 = vadd.f32 0.0, %v5116
  %v5118 = vpop.f32.mrf.mxu0
  %5119 = vmatprep.mubr.bf16.mxu0 0
  %5120 = vmatmul.mubr.bf16.gmra.mxu0 %v4984
  %v5121 = vpop.f32.mrf.mxu0
  %v5122 = vadd.f32 0.0, %v5121
  %v5123 = vpop.f32.mrf.mxu0
  %v5124 = vpop.f32.mrf.mxu0
  %v5125 = vadd.f32 0.0, %v5124
  %v5126 = vpop.f32.mrf.mxu0
  %5127 = vmatprep.mubr.bf16.mxu0 0
  %5128 = vmatmul.mubr.bf16.gmra.mxu0 %v4987
  %v5129 = vpop.f32.mrf.mxu0
  %v5130 = vadd.f32 0.0, %v5129
  %v5131 = vpop.f32.mrf.mxu0
  %v5132 = vpop.f32.mrf.mxu0
  %v5133 = vadd.f32 0.0, %v5132
  %v5134 = vpop.f32.mrf.mxu0
  %5135 = vmatprep.mubr.bf16.mxu0 0
  %5136 = vmatmul.mubr.bf16.gmra.mxu0 %v4990
  %v5137 = vpop.f32.mrf.mxu0
  %v5138 = vadd.f32 0.0, %v5137
  %v5139 = vpop.f32.mrf.mxu0
  %v5140 = vpop.f32.mrf.mxu0
  %v5141 = vadd.f32 0.0, %v5140
  %v5142 = vpop.f32.mrf.mxu0
  %5143 = vmatprep.mubr.bf16.mxu0 0
  %5144 = vmatmul.mubr.bf16.gmra.mxu0 %v4993
  %v5145 = vpop.f32.mrf.mxu0
  %v5146 = vadd.f32 0.0, %v5145
  %v5147 = vpop.f32.mrf.mxu0
  %v5148 = vpop.f32.mrf.mxu0
  %v5149 = vadd.f32 0.0, %v5148
  %v5150 = vpop.f32.mrf.mxu0
  %5151 = vmatprep.mubr.bf16.mxu0 0
  %5152 = vmatmul.mubr.bf16.gmra.mxu0 %v4996
  %v5153 = vpop.f32.mrf.mxu0
  %v5154 = vadd.f32 0.0, %v5153
  %v5155 = vpop.f32.mrf.mxu0
  %v5156 = vpop.f32.mrf.mxu0
  %v5157 = vadd.f32 0.0, %v5156
  %v5158 = vpop.f32.mrf.mxu0
  %5159 = vmatprep.mubr.bf16.mxu0 0
  %5160 = vmatmul.mubr.bf16.gmra.mxu0 %v4999
  %v5161 = vpop.f32.mrf.mxu0
  %v5162 = vadd.f32 0.0, %v5161
  %v5163 = vpop.f32.mrf.mxu0
  %v5164 = vpop.f32.mrf.mxu0
  %v5165 = vadd.f32 0.0, %v5164
  %v5166 = vpop.f32.mrf.mxu0
  %5167 = vmatprep.mubr.bf16.mxu0 0
  %5168 = vmatmul.mubr.bf16.gmra.mxu0 %v5002
  %v5169 = vpop.f32.mrf.mxu0
  %v5170 = vadd.f32 0.0, %v5169
  %v5171 = vpop.f32.mrf.mxu0
  %v5172 = vpop.f32.mrf.mxu0
  %v5173 = vadd.f32 0.0, %v5172
  %v5174 = vpop.f32.mrf.mxu0
  %5175 = vmatprep.mubr.bf16.mxu0 0
  %5176 = vmatmul.mubr.bf16.gmra.mxu0 %v5005
  %v5177 = vpop.f32.mrf.mxu0
  %v5178 = vadd.f32 0.0, %v5177
  %v5179 = vpop.f32.mrf.mxu0
  %v5180 = vpop.f32.mrf.mxu0
  %v5181 = vadd.f32 0.0, %v5180
  %v5182 = vpop.f32.mrf.mxu0
  %5183 = vdwg.mxu0
  %v5184 = vadd.f32 %v3912, %v5042
  %v5185 = vadd.f32 %v3913, %v5045
  %v5186 = vadd.f32 %v3914, %v5050
  %v5187 = vadd.f32 %v3915, %v5053
  %v5188 = vadd.f32 %v3916, %v5058
  %v5189 = vadd.f32 %v3917, %v5061
  %v5190 = vadd.f32 %v3918, %v5066
  %v5191 = vadd.f32 %v3919, %v5069
  %v5192 = vadd.f32 %v3920, %v5074
  %v5193 = vadd.f32 %v3921, %v5077
  %v5194 = vadd.f32 %v3922, %v5082
  %v5195 = vadd.f32 %v3923, %v5085
  %v5196 = vadd.f32 %v3924, %v5090
  %v5197 = vadd.f32 %v3925, %v5093
  %v5198 = vadd.f32 %v3926, %v5098
  %v5199 = vadd.f32 %v3927, %v5101
  %v5200 = vadd.f32 %v3928, %v5106
  %v5201 = vadd.f32 %v3929, %v5109
  %v5202 = vadd.f32 %v3930, %v5114
  %v5203 = vadd.f32 %v3931, %v5117
  %v5204 = vadd.f32 %v3932, %v5122
  %v5205 = vadd.f32 %v3933, %v5125
  %v5206 = vadd.f32 %v3934, %v5130
  %v5207 = vadd.f32 %v3935, %v5133
  %v5208 = vadd.f32 %v3936, %v5138
  %v5209 = vadd.f32 %v3937, %v5141
  %v5210 = vadd.f32 %v3938, %v5146
  %v5211 = vadd.f32 %v3939, %v5149
  %v5212 = vadd.f32 %v3940, %v5154
  %v5213 = vadd.f32 %v3941, %v5157
  %v5214 = vadd.f32 %v3942, %v5162
  %v5215 = vadd.f32 %v3943, %v5165
  %v5216 = vadd.f32 %v3944, %v5170
  %v5217 = vadd.f32 %v3945, %v5173
  %v5218 = vadd.f32 %v3946, %v5178
  %v5219 = vadd.f32 %v3947, %v5181
  %v5220 = vld [vmem:[#allocation3] sm:$0xf]
  %v5221 = vld [vmem:[#allocation3 + $0x4] sm:$0xf]
  %v5222 = vld [vmem:[#allocation3 + $0x8] sm:$0xf]
  %v5223 = vld [vmem:[#allocation3 + $0xc] sm:$0xf]
  %v5224 = vld [vmem:[#allocation3 + $0x10] sm:$0xf]
  %v5225 = vld [vmem:[#allocation3 + $0x14] sm:$0xf]
  %v5226 = vld [vmem:[#allocation3 + $0x18] sm:$0xf]
  %v5227 = vld [vmem:[#allocation3 + $0x1c] sm:$0xf]
  %v5228 = vld [vmem:[#allocation3 + $0x20] sm:$0xf]
  %v5229 = vld [vmem:[#allocation3 + $0x24] sm:$0xf]
  %v5230 = vld [vmem:[#allocation3 + $0x28] sm:$0xf]
  %v5231 = vld [vmem:[#allocation3 + $0x2c] sm:$0xf]
  %v5232 = vld [vmem:[#allocation3 + $0x30] sm:$0xf]
  %v5233 = vld [vmem:[#allocation3 + $0x34] sm:$0xf]
  %v5234 = vld [vmem:[#allocation3 + $0x38] sm:$0xf]
  %v5235 = vld [vmem:[#allocation3 + $0x3c] sm:$0xf]
  %v5236 = vld [vmem:[#allocation3 + $0x40] sm:$0xf]
  %v5237 = vld [vmem:[#allocation3 + $0x44] sm:$0xf]
  %v5238 = vld [vmem:[#allocation3 + $0x48] sm:$0xf]
  %v5239 = vld [vmem:[#allocation3 + $0x4c] sm:$0xf]
  %v5240 = vld [vmem:[#allocation3 + $0x50] sm:$0xf]
  %v5241 = vld [vmem:[#allocation3 + $0x54] sm:$0xf]
  %v5242 = vld [vmem:[#allocation3 + $0x58] sm:$0xf]
  %v5243 = vld [vmem:[#allocation3 + $0x5c] sm:$0xf]
  %v5244 = vld [vmem:[#allocation3 + $0x60] sm:$0xf]
  %v5245 = vld [vmem:[#allocation3 + $0x64] sm:$0xf]
  %v5246 = vld [vmem:[#allocation3 + $0x68] sm:$0xf]
  %v5247 = vld [vmem:[#allocation3 + $0x6c] sm:$0xf]
  %v5248 = vld [vmem:[#allocation3 + $0x70] sm:$0xf]
  %v5249 = vld [vmem:[#allocation3 + $0x74] sm:$0xf]
  %v5250 = vld [vmem:[#allocation3 + $0x78] sm:$0xf]
  %v5251 = vld [vmem:[#allocation3 + $0x7c] sm:$0xf]
  %v5252 = vld [vmem:[#allocation3 + $0x80] sm:$0xf]
  %v5253 = vld [vmem:[#allocation3 + $0x84] sm:$0xf]
  %v5254 = vld [vmem:[#allocation3 + $0x88] sm:$0xf]
  %v5255 = vld [vmem:[#allocation3 + $0x8c] sm:$0xf]
  %v5256 = vld [vmem:[#allocation3 + $0x90] sm:$0x1]
  %s5257 = scalar_lea.vmem %s3, 8
  %v5258 = vld [vmem:[%s5257] sm:$0xf]
  %v5259 = vld [vmem:[%s5257 + $0x4] sm:$0xf]
  %v5297 = vunpack.c.l.b16 %v5220
  %v5298 = vunpack.c.l.b16 %v5221
  %v5299 = vunpack.c.l.b16 %v5222
  %v5300 = vunpack.c.l.b16 %v5223
  %v5301 = vunpack.c.l.b16 %v5224
  %v5302 = vunpack.c.l.b16 %v5225
  %v5303 = vunpack.c.l.b16 %v5226
  %v5304 = vunpack.c.l.b16 %v5227
  %v5305 = vunpack.c.l.b16 %v5228
  %v5306 = vunpack.c.l.b16 %v5229
  %v5307 = vunpack.c.l.b16 %v5230
  %v5308 = vunpack.c.l.b16 %v5231
  %v5309 = vunpack.c.l.b16 %v5232
  %v5310 = vunpack.c.l.b16 %v5233
  %v5311 = vunpack.c.l.b16 %v5234
  %v5312 = vunpack.c.l.b16 %v5235
  %v5313 = vunpack.c.l.b16 %v5236
  %v5314 = vunpack.c.l.b16 %v5237
  %v5315 = vunpack.c.l.b16 %v5238
  %v5316 = vunpack.c.l.b16 %v5239
  %v5317 = vunpack.c.l.b16 %v5240
  %v5318 = vunpack.c.l.b16 %v5241
  %v5319 = vunpack.c.l.b16 %v5242
  %v5320 = vunpack.c.l.b16 %v5243
  %v5321 = vunpack.c.l.b16 %v5244
  %v5322 = vunpack.c.l.b16 %v5245
  %v5323 = vunpack.c.l.b16 %v5246
  %v5324 = vunpack.c.l.b16 %v5247
  %v5325 = vunpack.c.l.b16 %v5248
  %v5326 = vunpack.c.l.b16 %v5249
  %v5327 = vunpack.c.l.b16 %v5250
  %v5328 = vunpack.c.l.b16 %v5251
  %v5329 = vunpack.c.l.b16 %v5252
  %v5330 = vunpack.c.l.b16 %v5253
  %v5331 = vunpack.c.l.b16 %v5254
  %v5332 = vunpack.c.l.b16 %v5255
  %v5333 = vunpack.c.l.b16 %v5256
  %v5334 = vpack.c.b16 %v5298, %v5297
  %v5335 = vpack.c.b16 %v5300, %v5299
  %v5336 = vpack.c.b16 %v5302, %v5301
  %v5337 = vpack.c.b16 %v5304, %v5303
  %v5338 = vpack.c.b16 %v5306, %v5305
  %v5339 = vpack.c.b16 %v5308, %v5307
  %v5340 = vpack.c.b16 %v5310, %v5309
  %v5341 = vpack.c.b16 %v5312, %v5311
  %v5342 = vpack.c.b16 %v5314, %v5313
  %v5343 = vpack.c.b16 %v5316, %v5315
  %v5344 = vpack.c.b16 %v5318, %v5317
  %v5345 = vpack.c.b16 %v5320, %v5319
  %v5346 = vpack.c.b16 %v5322, %v5321
  %v5347 = vpack.c.b16 %v5324, %v5323
  %v5348 = vpack.c.b16 %v5326, %v5325
  %v5349 = vpack.c.b16 %v5328, %v5327
  %v5350 = vpack.c.b16 %v5330, %v5329
  %v5351 = vpack.c.b16 %v5332, %v5331
  %v5352 = vpack.c.b16 %v5333, %v5333
  %v5354 = vshrl.u32 %v5334, 16
  %v5356 = vshll.u32 %v5334, 16
  %v5358 = vrot.slane %v5356, 1
  %v5359 = vor.u32 %v5354, %v5358
  %v5361 = vshll.u32 %v5335, 16
  %v5363 = vrot.slane %v5361, 1
  %v5364 = vsel %vm2231, %v5359, %v5363
  %v5365 = vshrl.u32 %v5335, 16
  %v5367 = vor.u32 %v5365, %v5363
  %v5369 = vshll.u32 %v5336, 16
  %v5371 = vrot.slane %v5369, 1
  %v5372 = vsel %vm2231, %v5367, %v5371
  %v5373 = vshrl.u32 %v5336, 16
  %v5375 = vor.u32 %v5373, %v5371
  %v5377 = vshll.u32 %v5337, 16
  %v5379 = vrot.slane %v5377, 1
  %v5380 = vsel %vm2231, %v5375, %v5379
  %v5381 = vshrl.u32 %v5337, 16
  %v5383 = vor.u32 %v5381, %v5379
  %v5385 = vshll.u32 %v5338, 16
  %v5387 = vrot.slane %v5385, 1
  %v5388 = vsel %vm2231, %v5383, %v5387
  %v5389 = vshrl.u32 %v5338, 16
  %v5391 = vor.u32 %v5389, %v5387
  %v5393 = vshll.u32 %v5339, 16
  %v5395 = vrot.slane %v5393, 1
  %v5396 = vsel %vm2231, %v5391, %v5395
  %v5397 = vshrl.u32 %v5339, 16
  %v5399 = vor.u32 %v5397, %v5395
  %v5401 = vshll.u32 %v5340, 16
  %v5403 = vrot.slane %v5401, 1
  %v5404 = vsel %vm2231, %v5399, %v5403
  %v5405 = vshrl.u32 %v5340, 16
  %v5407 = vor.u32 %v5405, %v5403
  %v5409 = vshll.u32 %v5341, 16
  %v5411 = vrot.slane %v5409, 1
  %v5412 = vsel %vm2231, %v5407, %v5411
  %v5413 = vshrl.u32 %v5341, 16
  %v5415 = vor.u32 %v5413, %v5411
  %v5417 = vshll.u32 %v5342, 16
  %v5419 = vrot.slane %v5417, 1
  %v5420 = vsel %vm2231, %v5415, %v5419
  %v5421 = vshrl.u32 %v5342, 16
  %v5423 = vor.u32 %v5421, %v5419
  %v5425 = vshll.u32 %v5343, 16
  %v5427 = vrot.slane %v5425, 1
  %v5428 = vsel %vm2231, %v5423, %v5427
  %v5429 = vshrl.u32 %v5343, 16
  %v5431 = vor.u32 %v5429, %v5427
  %v5433 = vshll.u32 %v5344, 16
  %v5435 = vrot.slane %v5433, 1
  %v5436 = vsel %vm2231, %v5431, %v5435
  %v5437 = vshrl.u32 %v5344, 16
  %v5439 = vor.u32 %v5437, %v5435
  %v5441 = vshll.u32 %v5345, 16
  %v5443 = vrot.slane %v5441, 1
  %v5444 = vsel %vm2231, %v5439, %v5443
  %v5445 = vshrl.u32 %v5345, 16
  %v5447 = vor.u32 %v5445, %v5443
  %v5449 = vshll.u32 %v5346, 16
  %v5451 = vrot.slane %v5449, 1
  %v5452 = vsel %vm2231, %v5447, %v5451
  %v5453 = vshrl.u32 %v5346, 16
  %v5455 = vor.u32 %v5453, %v5451
  %v5457 = vshll.u32 %v5347, 16
  %v5459 = vrot.slane %v5457, 1
  %v5460 = vsel %vm2231, %v5455, %v5459
  %v5461 = vshrl.u32 %v5347, 16
  %v5463 = vor.u32 %v5461, %v5459
  %v5465 = vshll.u32 %v5348, 16
  %v5467 = vrot.slane %v5465, 1
  %v5468 = vsel %vm2231, %v5463, %v5467
  %v5469 = vshrl.u32 %v5348, 16
  %v5471 = vor.u32 %v5469, %v5467
  %v5473 = vshll.u32 %v5349, 16
  %v5475 = vrot.slane %v5473, 1
  %v5476 = vsel %vm2231, %v5471, %v5475
  %v5477 = vshrl.u32 %v5349, 16
  %v5479 = vor.u32 %v5477, %v5475
  %v5481 = vshll.u32 %v5350, 16
  %v5483 = vrot.slane %v5481, 1
  %v5484 = vsel %vm2231, %v5479, %v5483
  %v5485 = vshrl.u32 %v5350, 16
  %v5487 = vor.u32 %v5485, %v5483
  %v5489 = vshll.u32 %v5351, 16
  %v5491 = vrot.slane %v5489, 1
  %v5492 = vsel %vm2231, %v5487, %v5491
  %v5493 = vshrl.u32 %v5351, 16
  %v5495 = vor.u32 %v5493, %v5491
  %v5497 = vshll.u32 %v5352, 16
  %v5499 = vrot.slane %v5497, 1
  %v5500 = vsel %vm2231, %v5495, %v5499
  %v5503 = vunpack.c.l.b16 %v5258
  %v5504 = vunpack.c.l.b16 %v5259
  %v5505 = vpack.c.b16 %v5504, %v5503
  %v5508 = vsel %vm1675, %v5364, 0
  %v5511 = vsel %vm1675, %v5372, 0
  %v5514 = vsel %vm1675, %v5380, 0
  %v5517 = vsel %vm1675, %v5388, 0
  %v5520 = vsel %vm1675, %v5396, 0
  %v5523 = vsel %vm1675, %v5404, 0
  %v5526 = vsel %vm1675, %v5412, 0
  %v5529 = vsel %vm1675, %v5420, 0
  %v5532 = vsel %vm1675, %v5428, 0
  %v5535 = vsel %vm1675, %v5436, 0
  %v5538 = vsel %vm1675, %v5444, 0
  %v5541 = vsel %vm1675, %v5452, 0
  %v5544 = vsel %vm1675, %v5460, 0
  %v5547 = vsel %vm1675, %v5468, 0
  %v5550 = vsel %vm1675, %v5476, 0
  %v5553 = vsel %vm1675, %v5484, 0
  %v5556 = vsel %vm1675, %v5492, 0
  %v5559 = vsel %vm1675, %v5500, 0
  %5561 = vmatprep.subr.bf16.mxu0 0
  %5562 = vmatpush1.bf16.msra.mxu0 0
  %5563 = vmatprep.subr.bf16.mxu0 0
  %5564 = vmatpush1.bf16.msra.mxu0 0
  %5565 = vmatprep.subr.bf16.mxu0 0
  %5566 = vmatpush1.bf16.msra.mxu0 0
  %5567 = vmatprep.subr.bf16.mxu0 0
  %5568 = vmatpush1.bf16.msra.mxu0 0
  %5569 = vmatprep.subr.bf16.mxu0 0
  %5570 = vmatpush1.bf16.msra.mxu0 0
  %5571 = vmatprep.subr.bf16.mxu0 0
  %5572 = vmatpush1.bf16.msra.mxu0 0
  %5573 = vmatprep.subr.bf16.mxu0 0
  %5574 = vmatpush1.bf16.msra.mxu0 0
  %5575 = vmatprep.subr.bf16.mxu0 0
  %5576 = vmatpush1.bf16.msra.mxu0 %v5505
  %5577 = vmatprep.subr.bf16.mxu0 0
  %5578 = vmatpush2.bf16.msra.mxu0 0
  %5579 = vmatprep.subr.bf16.mxu0 0
  %5580 = vmatpush2.bf16.msra.mxu0 0
  %5581 = vmatprep.subr.bf16.mxu0 0
  %5582 = vmatpush2.bf16.msra.mxu0 0
  %5583 = vmatprep.subr.bf16.mxu0 0
  %5584 = vmatpush2.bf16.msra.mxu0 0
  %5585 = vmatprep.subr.bf16.mxu0 0
  %5586 = vmatpush2.bf16.msra.mxu0 0
  %5587 = vmatprep.subr.bf16.mxu0 0
  %5588 = vmatpush2.bf16.msra.mxu0 0
  %5589 = vmatprep.subr.bf16.mxu0 0
  %5590 = vmatpush2.bf16.msra.mxu0 0
  %5591 = vmatprep.subr.bf16.mxu0 0
  %5592 = vmatpush2.bf16.msra.mxu0 0
  %5593 = vmatprep.mubr.bf16.mxu0 0
  %5594 = vmatmul.mubr.bf16.gmra.mxu0 %v5508
  %v5595 = vpop.f32.mrf.mxu0
  %v5596 = vadd.f32 0.0, %v5595
  %v5597 = vpop.f32.mrf.mxu0
  %v5598 = vpop.f32.mrf.mxu0
  %v5599 = vadd.f32 0.0, %v5598
  %v5600 = vpop.f32.mrf.mxu0
  %5601 = vmatprep.mubr.bf16.mxu0 0
  %5602 = vmatmul.mubr.bf16.gmra.mxu0 %v5511
  %v5603 = vpop.f32.mrf.mxu0
  %v5604 = vadd.f32 0.0, %v5603
  %v5605 = vpop.f32.mrf.mxu0
  %v5606 = vpop.f32.mrf.mxu0
  %v5607 = vadd.f32 0.0, %v5606
  %v5608 = vpop.f32.mrf.mxu0
  %5609 = vmatprep.mubr.bf16.mxu0 0
  %5610 = vmatmul.mubr.bf16.gmra.mxu0 %v5514
  %v5611 = vpop.f32.mrf.mxu0
  %v5612 = vadd.f32 0.0, %v5611
  %v5613 = vpop.f32.mrf.mxu0
  %v5614 = vpop.f32.mrf.mxu0
  %v5615 = vadd.f32 0.0, %v5614
  %v5616 = vpop.f32.mrf.mxu0
  %5617 = vmatprep.mubr.bf16.mxu0 0
  %5618 = vmatmul.mubr.bf16.gmra.mxu0 %v5517
  %v5619 = vpop.f32.mrf.mxu0
  %v5620 = vadd.f32 0.0, %v5619
  %v5621 = vpop.f32.mrf.mxu0
  %v5622 = vpop.f32.mrf.mxu0
  %v5623 = vadd.f32 0.0, %v5622
  %v5624 = vpop.f32.mrf.mxu0
  %5625 = vmatprep.mubr.bf16.mxu0 0
  %5626 = vmatmul.mubr.bf16.gmra.mxu0 %v5520
  %v5627 = vpop.f32.mrf.mxu0
  %v5628 = vadd.f32 0.0, %v5627
  %v5629 = vpop.f32.mrf.mxu0
  %v5630 = vpop.f32.mrf.mxu0
  %v5631 = vadd.f32 0.0, %v5630
  %v5632 = vpop.f32.mrf.mxu0
  %5633 = vmatprep.mubr.bf16.mxu0 0
  %5634 = vmatmul.mubr.bf16.gmra.mxu0 %v5523
  %v5635 = vpop.f32.mrf.mxu0
  %v5636 = vadd.f32 0.0, %v5635
  %v5637 = vpop.f32.mrf.mxu0
  %v5638 = vpop.f32.mrf.mxu0
  %v5639 = vadd.f32 0.0, %v5638
  %v5640 = vpop.f32.mrf.mxu0
  %5641 = vmatprep.mubr.bf16.mxu0 0
  %5642 = vmatmul.mubr.bf16.gmra.mxu0 %v5526
  %v5643 = vpop.f32.mrf.mxu0
  %v5644 = vadd.f32 0.0, %v5643
  %v5645 = vpop.f32.mrf.mxu0
  %v5646 = vpop.f32.mrf.mxu0
  %v5647 = vadd.f32 0.0, %v5646
  %v5648 = vpop.f32.mrf.mxu0
  %5649 = vmatprep.mubr.bf16.mxu0 0
  %5650 = vmatmul.mubr.bf16.gmra.mxu0 %v5529
  %v5651 = vpop.f32.mrf.mxu0
  %v5652 = vadd.f32 0.0, %v5651
  %v5653 = vpop.f32.mrf.mxu0
  %v5654 = vpop.f32.mrf.mxu0
  %v5655 = vadd.f32 0.0, %v5654
  %v5656 = vpop.f32.mrf.mxu0
  %5657 = vmatprep.mubr.bf16.mxu0 0
  %5658 = vmatmul.mubr.bf16.gmra.mxu0 %v5532
  %v5659 = vpop.f32.mrf.mxu0
  %v5660 = vadd.f32 0.0, %v5659
  %v5661 = vpop.f32.mrf.mxu0
  %v5662 = vpop.f32.mrf.mxu0
  %v5663 = vadd.f32 0.0, %v5662
  %v5664 = vpop.f32.mrf.mxu0
  %5665 = vmatprep.mubr.bf16.mxu0 0
  %5666 = vmatmul.mubr.bf16.gmra.mxu0 %v5535
  %v5667 = vpop.f32.mrf.mxu0
  %v5668 = vadd.f32 0.0, %v5667
  %v5669 = vpop.f32.mrf.mxu0
  %v5670 = vpop.f32.mrf.mxu0
  %v5671 = vadd.f32 0.0, %v5670
  %v5672 = vpop.f32.mrf.mxu0
  %5673 = vmatprep.mubr.bf16.mxu0 0
  %5674 = vmatmul.mubr.bf16.gmra.mxu0 %v5538
  %v5675 = vpop.f32.mrf.mxu0
  %v5676 = vadd.f32 0.0, %v5675
  %v5677 = vpop.f32.mrf.mxu0
  %v5678 = vpop.f32.mrf.mxu0
  %v5679 = vadd.f32 0.0, %v5678
  %v5680 = vpop.f32.mrf.mxu0
  %5681 = vmatprep.mubr.bf16.mxu0 0
  %5682 = vmatmul.mubr.bf16.gmra.mxu0 %v5541
  %v5683 = vpop.f32.mrf.mxu0
  %v5684 = vadd.f32 0.0, %v5683
  %v5685 = vpop.f32.mrf.mxu0
  %v5686 = vpop.f32.mrf.mxu0
  %v5687 = vadd.f32 0.0, %v5686
  %v5688 = vpop.f32.mrf.mxu0
  %5689 = vmatprep.mubr.bf16.mxu0 0
  %5690 = vmatmul.mubr.bf16.gmra.mxu0 %v5544
  %v5691 = vpop.f32.mrf.mxu0
  %v5692 = vadd.f32 0.0, %v5691
  %v5693 = vpop.f32.mrf.mxu0
  %v5694 = vpop.f32.mrf.mxu0
  %v5695 = vadd.f32 0.0, %v5694
  %v5696 = vpop.f32.mrf.mxu0
  %5697 = vmatprep.mubr.bf16.mxu0 0
  %5698 = vmatmul.mubr.bf16.gmra.mxu0 %v5547
  %v5699 = vpop.f32.mrf.mxu0
  %v5700 = vadd.f32 0.0, %v5699
  %v5701 = vpop.f32.mrf.mxu0
  %v5702 = vpop.f32.mrf.mxu0
  %v5703 = vadd.f32 0.0, %v5702
  %v5704 = vpop.f32.mrf.mxu0
  %5705 = vmatprep.mubr.bf16.mxu0 0
  %5706 = vmatmul.mubr.bf16.gmra.mxu0 %v5550
  %v5707 = vpop.f32.mrf.mxu0
  %v5708 = vadd.f32 0.0, %v5707
  %v5709 = vpop.f32.mrf.mxu0
  %v5710 = vpop.f32.mrf.mxu0
  %v5711 = vadd.f32 0.0, %v5710
  %v5712 = vpop.f32.mrf.mxu0
  %5713 = vmatprep.mubr.bf16.mxu0 0
  %5714 = vmatmul.mubr.bf16.gmra.mxu0 %v5553
  %v5715 = vpop.f32.mrf.mxu0
  %v5716 = vadd.f32 0.0, %v5715
  %v5717 = vpop.f32.mrf.mxu0
  %v5718 = vpop.f32.mrf.mxu0
  %v5719 = vadd.f32 0.0, %v5718
  %v5720 = vpop.f32.mrf.mxu0
  %5721 = vmatprep.mubr.bf16.mxu0 0
  %5722 = vmatmul.mubr.bf16.gmra.mxu0 %v5556
  %v5723 = vpop.f32.mrf.mxu0
  %v5724 = vadd.f32 0.0, %v5723
  %v5725 = vpop.f32.mrf.mxu0
  %v5726 = vpop.f32.mrf.mxu0
  %v5727 = vadd.f32 0.0, %v5726
  %v5728 = vpop.f32.mrf.mxu0
  %5729 = vmatprep.mubr.bf16.mxu0 0
  %5730 = vmatmul.mubr.bf16.gmra.mxu0 %v5559
  %v5731 = vpop.f32.mrf.mxu0
  %v5732 = vadd.f32 0.0, %v5731
  %v5733 = vpop.f32.mrf.mxu0
  %v5734 = vpop.f32.mrf.mxu0
  %v5735 = vadd.f32 0.0, %v5734
  %v5736 = vpop.f32.mrf.mxu0
  %5737 = vdwg.mxu0
  %v5738 = vadd.f32 %v4466, %v5596
  %v5739 = vadd.f32 %v4467, %v5599
  %v5740 = vadd.f32 %v4468, %v5604
  %v5741 = vadd.f32 %v4469, %v5607
  %v5742 = vadd.f32 %v4470, %v5612
  %v5743 = vadd.f32 %v4471, %v5615
  %v5744 = vadd.f32 %v4472, %v5620
  %v5745 = vadd.f32 %v4473, %v5623
  %v5746 = vadd.f32 %v4474, %v5628
  %v5747 = vadd.f32 %v4475, %v5631
  %v5748 = vadd.f32 %v4476, %v5636
  %v5749 = vadd.f32 %v4477, %v5639
  %v5750 = vadd.f32 %v4478, %v5644
  %v5751 = vadd.f32 %v4479, %v5647
  %v5752 = vadd.f32 %v4480, %v5652
  %v5753 = vadd.f32 %v4481, %v5655
  %v5754 = vadd.f32 %v4482, %v5660
  %v5755 = vadd.f32 %v4483, %v5663
  %v5756 = vadd.f32 %v4484, %v5668
  %v5757 = vadd.f32 %v4485, %v5671
  %v5758 = vadd.f32 %v4486, %v5676
  %v5759 = vadd.f32 %v4487, %v5679
  %v5760 = vadd.f32 %v4488, %v5684
  %v5761 = vadd.f32 %v4489, %v5687
  %v5762 = vadd.f32 %v4490, %v5692
  %v5763 = vadd.f32 %v4491, %v5695
  %v5764 = vadd.f32 %v4492, %v5700
  %v5765 = vadd.f32 %v4493, %v5703
  %v5766 = vadd.f32 %v4494, %v5708
  %v5767 = vadd.f32 %v4495, %v5711
  %v5768 = vadd.f32 %v4496, %v5716
  %v5769 = vadd.f32 %v4497, %v5719
  %v5770 = vadd.f32 %v4498, %v5724
  %v5771 = vadd.f32 %v4499, %v5727
  %v5772 = vadd.f32 %v4500, %v5732
  %v5773 = vadd.f32 %v4501, %v5735
  %v5774 = vld [vmem:[#allocation3] sm:$0xe]
  %s5775 = scalar_lea.vmem %s3, 16
  %v5776 = vld [vmem:[%s5775] sm:$0xf]
  %v5777 = vld [vmem:[%s5775 + $0x4] sm:$0xf]
  %v5779 = vunpack.c.l.b16 %v5774
  %v5780 = vpack.c.b16 %v5298, %v5779
  %v5781 = vrot.slane %v5780, 1
  %v5782 = vrot.slane %v5335, 1
  %v5783 = vsel %vm2994, %v5781, %v5782
  %v5784 = vrot.slane %v5336, 1
  %v5785 = vsel %vm2994, %v5782, %v5784
  %v5786 = vrot.slane %v5337, 1
  %v5787 = vsel %vm2994, %v5784, %v5786
  %v5788 = vrot.slane %v5338, 1
  %v5789 = vsel %vm2994, %v5786, %v5788
  %v5790 = vrot.slane %v5339, 1
  %v5791 = vsel %vm2994, %v5788, %v5790
  %v5792 = vrot.slane %v5340, 1
  %v5793 = vsel %vm2994, %v5790, %v5792
  %v5794 = vrot.slane %v5341, 1
  %v5795 = vsel %vm2994, %v5792, %v5794
  %v5796 = vrot.slane %v5342, 1
  %v5797 = vsel %vm2994, %v5794, %v5796
  %v5798 = vrot.slane %v5343, 1
  %v5799 = vsel %vm2994, %v5796, %v5798
  %v5800 = vrot.slane %v5344, 1
  %v5801 = vsel %vm2994, %v5798, %v5800
  %v5802 = vrot.slane %v5345, 1
  %v5803 = vsel %vm2994, %v5800, %v5802
  %v5804 = vrot.slane %v5346, 1
  %v5805 = vsel %vm2994, %v5802, %v5804
  %v5806 = vrot.slane %v5347, 1
  %v5807 = vsel %vm2994, %v5804, %v5806
  %v5808 = vrot.slane %v5348, 1
  %v5809 = vsel %vm2994, %v5806, %v5808
  %v5810 = vrot.slane %v5349, 1
  %v5811 = vsel %vm2994, %v5808, %v5810
  %v5812 = vrot.slane %v5350, 1
  %v5813 = vsel %vm2994, %v5810, %v5812
  %v5814 = vrot.slane %v5351, 1
  %v5815 = vsel %vm2994, %v5812, %v5814
  %v5816 = vrot.slane %v5352, 1
  %v5817 = vsel %vm2994, %v5814, %v5816
  %v5820 = vunpack.c.l.b16 %v5776
  %v5821 = vunpack.c.l.b16 %v5777
  %v5822 = vpack.c.b16 %v5821, %v5820
  %v5825 = vsel %vm1675, %v5783, 0
  %v5828 = vsel %vm1675, %v5785, 0
  %v5831 = vsel %vm1675, %v5787, 0
  %v5834 = vsel %vm1675, %v5789, 0
  %v5837 = vsel %vm1675, %v5791, 0
  %v5840 = vsel %vm1675, %v5793, 0
  %v5843 = vsel %vm1675, %v5795, 0
  %v5846 = vsel %vm1675, %v5797, 0
  %v5849 = vsel %vm1675, %v5799, 0
  %v5852 = vsel %vm1675, %v5801, 0
  %v5855 = vsel %vm1675, %v5803, 0
  %v5858 = vsel %vm1675, %v5805, 0
  %v5861 = vsel %vm1675, %v5807, 0
  %v5864 = vsel %vm1675, %v5809, 0
  %v5867 = vsel %vm1675, %v5811, 0
  %v5870 = vsel %vm1675, %v5813, 0
  %v5873 = vsel %vm1675, %v5815, 0
  %v5876 = vsel %vm1675, %v5817, 0
  %5878 = vmatprep.subr.bf16.mxu0 0
  %5879 = vmatpush1.bf16.msra.mxu0 0
  %5880 = vmatprep.subr.bf16.mxu0 0
  %5881 = vmatpush1.bf16.msra.mxu0 0
  %5882 = vmatprep.subr.bf16.mxu0 0
  %5883 = vmatpush1.bf16.msra.mxu0 0
  %5884 = vmatprep.subr.bf16.mxu0 0
  %5885 = vmatpush1.bf16.msra.mxu0 0
  %5886 = vmatprep.subr.bf16.mxu0 0
  %5887 = vmatpush1.bf16.msra.mxu0 0
  %5888 = vmatprep.subr.bf16.mxu0 0
  %5889 = vmatpush1.bf16.msra.mxu0 0
  %5890 = vmatprep.subr.bf16.mxu0 0
  %5891 = vmatpush1.bf16.msra.mxu0 0
  %5892 = vmatprep.subr.bf16.mxu0 0
  %5893 = vmatpush1.bf16.msra.mxu0 %v5822
  %5894 = vmatprep.subr.bf16.mxu0 0
  %5895 = vmatpush2.bf16.msra.mxu0 0
  %5896 = vmatprep.subr.bf16.mxu0 0
  %5897 = vmatpush2.bf16.msra.mxu0 0
  %5898 = vmatprep.subr.bf16.mxu0 0
  %5899 = vmatpush2.bf16.msra.mxu0 0
  %5900 = vmatprep.subr.bf16.mxu0 0
  %5901 = vmatpush2.bf16.msra.mxu0 0
  %5902 = vmatprep.subr.bf16.mxu0 0
  %5903 = vmatpush2.bf16.msra.mxu0 0
  %5904 = vmatprep.subr.bf16.mxu0 0
  %5905 = vmatpush2.bf16.msra.mxu0 0
  %5906 = vmatprep.subr.bf16.mxu0 0
  %5907 = vmatpush2.bf16.msra.mxu0 0
  %5908 = vmatprep.subr.bf16.mxu0 0
  %5909 = vmatpush2.bf16.msra.mxu0 0
  %5910 = vmatprep.mubr.bf16.mxu0 0
  %5911 = vmatmul.mubr.bf16.gmra.mxu0 %v5825
  %v5912 = vpop.f32.mrf.mxu0
  %v5913 = vadd.f32 0.0, %v5912
  %v5914 = vpop.f32.mrf.mxu0
  %v5915 = vpop.f32.mrf.mxu0
  %v5916 = vadd.f32 0.0, %v5915
  %v5917 = vpop.f32.mrf.mxu0
  %5918 = vmatprep.mubr.bf16.mxu0 0
  %5919 = vmatmul.mubr.bf16.gmra.mxu0 %v5828
  %v5920 = vpop.f32.mrf.mxu0
  %v5921 = vadd.f32 0.0, %v5920
  %v5922 = vpop.f32.mrf.mxu0
  %v5923 = vpop.f32.mrf.mxu0
  %v5924 = vadd.f32 0.0, %v5923
  %v5925 = vpop.f32.mrf.mxu0
  %5926 = vmatprep.mubr.bf16.mxu0 0
  %5927 = vmatmul.mubr.bf16.gmra.mxu0 %v5831
  %v5928 = vpop.f32.mrf.mxu0
  %v5929 = vadd.f32 0.0, %v5928
  %v5930 = vpop.f32.mrf.mxu0
  %v5931 = vpop.f32.mrf.mxu0
  %v5932 = vadd.f32 0.0, %v5931
  %v5933 = vpop.f32.mrf.mxu0
  %5934 = vmatprep.mubr.bf16.mxu0 0
  %5935 = vmatmul.mubr.bf16.gmra.mxu0 %v5834
  %v5936 = vpop.f32.mrf.mxu0
  %v5937 = vadd.f32 0.0, %v5936
  %v5938 = vpop.f32.mrf.mxu0
  %v5939 = vpop.f32.mrf.mxu0
  %v5940 = vadd.f32 0.0, %v5939
  %v5941 = vpop.f32.mrf.mxu0
  %5942 = vmatprep.mubr.bf16.mxu0 0
  %5943 = vmatmul.mubr.bf16.gmra.mxu0 %v5837
  %v5944 = vpop.f32.mrf.mxu0
  %v5945 = vadd.f32 0.0, %v5944
  %v5946 = vpop.f32.mrf.mxu0
  %v5947 = vpop.f32.mrf.mxu0
  %v5948 = vadd.f32 0.0, %v5947
  %v5949 = vpop.f32.mrf.mxu0
  %5950 = vmatprep.mubr.bf16.mxu0 0
  %5951 = vmatmul.mubr.bf16.gmra.mxu0 %v5840
  %v5952 = vpop.f32.mrf.mxu0
  %v5953 = vadd.f32 0.0, %v5952
  %v5954 = vpop.f32.mrf.mxu0
  %v5955 = vpop.f32.mrf.mxu0
  %v5956 = vadd.f32 0.0, %v5955
  %v5957 = vpop.f32.mrf.mxu0
  %5958 = vmatprep.mubr.bf16.mxu0 0
  %5959 = vmatmul.mubr.bf16.gmra.mxu0 %v5843
  %v5960 = vpop.f32.mrf.mxu0
  %v5961 = vadd.f32 0.0, %v5960
  %v5962 = vpop.f32.mrf.mxu0
  %v5963 = vpop.f32.mrf.mxu0
  %v5964 = vadd.f32 0.0, %v5963
  %v5965 = vpop.f32.mrf.mxu0
  %5966 = vmatprep.mubr.bf16.mxu0 0
  %5967 = vmatmul.mubr.bf16.gmra.mxu0 %v5846
  %v5968 = vpop.f32.mrf.mxu0
  %v5969 = vadd.f32 0.0, %v5968
  %v5970 = vpop.f32.mrf.mxu0
  %v5971 = vpop.f32.mrf.mxu0
  %v5972 = vadd.f32 0.0, %v5971
  %v5973 = vpop.f32.mrf.mxu0
  %5974 = vmatprep.mubr.bf16.mxu0 0
  %5975 = vmatmul.mubr.bf16.gmra.mxu0 %v5849
  %v5976 = vpop.f32.mrf.mxu0
  %v5977 = vadd.f32 0.0, %v5976
  %v5978 = vpop.f32.mrf.mxu0
  %v5979 = vpop.f32.mrf.mxu0
  %v5980 = vadd.f32 0.0, %v5979
  %v5981 = vpop.f32.mrf.mxu0
  %5982 = vmatprep.mubr.bf16.mxu0 0
  %5983 = vmatmul.mubr.bf16.gmra.mxu0 %v5852
  %v5984 = vpop.f32.mrf.mxu0
  %v5985 = vadd.f32 0.0, %v5984
  %v5986 = vpop.f32.mrf.mxu0
  %v5987 = vpop.f32.mrf.mxu0
  %v5988 = vadd.f32 0.0, %v5987
  %v5989 = vpop.f32.mrf.mxu0
  %5990 = vmatprep.mubr.bf16.mxu0 0
  %5991 = vmatmul.mubr.bf16.gmra.mxu0 %v5855
  %v5992 = vpop.f32.mrf.mxu0
  %v5993 = vadd.f32 0.0, %v5992
  %v5994 = vpop.f32.mrf.mxu0
  %v5995 = vpop.f32.mrf.mxu0
  %v5996 = vadd.f32 0.0, %v5995
  %v5997 = vpop.f32.mrf.mxu0
  %5998 = vmatprep.mubr.bf16.mxu0 0
  %5999 = vmatmul.mubr.bf16.gmra.mxu0 %v5858
  %v6000 = vpop.f32.mrf.mxu0
  %v6001 = vadd.f32 0.0, %v6000
  %v6002 = vpop.f32.mrf.mxu0
  %v6003 = vpop.f32.mrf.mxu0
  %v6004 = vadd.f32 0.0, %v6003
  %v6005 = vpop.f32.mrf.mxu0
  %6006 = vmatprep.mubr.bf16.mxu0 0
  %6007 = vmatmul.mubr.bf16.gmra.mxu0 %v5861
  %v6008 = vpop.f32.mrf.mxu0
  %v6009 = vadd.f32 0.0, %v6008
  %v6010 = vpop.f32.mrf.mxu0
  %v6011 = vpop.f32.mrf.mxu0
  %v6012 = vadd.f32 0.0, %v6011
  %v6013 = vpop.f32.mrf.mxu0
  %6014 = vmatprep.mubr.bf16.mxu0 0
  %6015 = vmatmul.mubr.bf16.gmra.mxu0 %v5864
  %v6016 = vpop.f32.mrf.mxu0
  %v6017 = vadd.f32 0.0, %v6016
  %v6018 = vpop.f32.mrf.mxu0
  %v6019 = vpop.f32.mrf.mxu0
  %v6020 = vadd.f32 0.0, %v6019
  %v6021 = vpop.f32.mrf.mxu0
  %6022 = vmatprep.mubr.bf16.mxu0 0
  %6023 = vmatmul.mubr.bf16.gmra.mxu0 %v5867
  %v6024 = vpop.f32.mrf.mxu0
  %v6025 = vadd.f32 0.0, %v6024
  %v6026 = vpop.f32.mrf.mxu0
  %v6027 = vpop.f32.mrf.mxu0
  %v6028 = vadd.f32 0.0, %v6027
  %v6029 = vpop.f32.mrf.mxu0
  %6030 = vmatprep.mubr.bf16.mxu0 0
  %6031 = vmatmul.mubr.bf16.gmra.mxu0 %v5870
  %v6032 = vpop.f32.mrf.mxu0
  %v6033 = vadd.f32 0.0, %v6032
  %v6034 = vpop.f32.mrf.mxu0
  %v6035 = vpop.f32.mrf.mxu0
  %v6036 = vadd.f32 0.0, %v6035
  %v6037 = vpop.f32.mrf.mxu0
  %6038 = vmatprep.mubr.bf16.mxu0 0
  %6039 = vmatmul.mubr.bf16.gmra.mxu0 %v5873
  %v6040 = vpop.f32.mrf.mxu0
  %v6041 = vadd.f32 0.0, %v6040
  %v6042 = vpop.f32.mrf.mxu0
  %v6043 = vpop.f32.mrf.mxu0
  %v6044 = vadd.f32 0.0, %v6043
  %v6045 = vpop.f32.mrf.mxu0
  %6046 = vmatprep.mubr.bf16.mxu0 0
  %6047 = vmatmul.mubr.bf16.gmra.mxu0 %v5876
  %v6048 = vpop.f32.mrf.mxu0
  %v6049 = vadd.f32 0.0, %v6048
  %v6050 = vpop.f32.mrf.mxu0
  %v6051 = vpop.f32.mrf.mxu0
  %v6052 = vadd.f32 0.0, %v6051
  %v6053 = vpop.f32.mrf.mxu0
  %6054 = vdwg.mxu0
  %v6055 = vadd.f32 %v4783, %v5913
  %v6056 = vadd.f32 %v4784, %v5916
  %v6057 = vadd.f32 %v4785, %v5921
  %v6058 = vadd.f32 %v4786, %v5924
  %v6059 = vadd.f32 %v4787, %v5929
  %v6060 = vadd.f32 %v4788, %v5932
  %v6061 = vadd.f32 %v4789, %v5937
  %v6062 = vadd.f32 %v4790, %v5940
  %v6063 = vadd.f32 %v4791, %v5945
  %v6064 = vadd.f32 %v4792, %v5948
  %v6065 = vadd.f32 %v4793, %v5953
  %v6066 = vadd.f32 %v4794, %v5956
  %v6067 = vadd.f32 %v4795, %v5961
  %v6068 = vadd.f32 %v4796, %v5964
  %v6069 = vadd.f32 %v4797, %v5969
  %v6070 = vadd.f32 %v4798, %v5972
  %v6071 = vadd.f32 %v4799, %v5977
  %v6072 = vadd.f32 %v4800, %v5980
  %v6073 = vadd.f32 %v4801, %v5985
  %v6074 = vadd.f32 %v4802, %v5988
  %v6075 = vadd.f32 %v4803, %v5993
  %v6076 = vadd.f32 %v4804, %v5996
  %v6077 = vadd.f32 %v4805, %v6001
  %v6078 = vadd.f32 %v4806, %v6004
  %v6079 = vadd.f32 %v4807, %v6009
  %v6080 = vadd.f32 %v4808, %v6012
  %v6081 = vadd.f32 %v4809, %v6017
  %v6082 = vadd.f32 %v4810, %v6020
  %v6083 = vadd.f32 %v4811, %v6025
  %v6084 = vadd.f32 %v4812, %v6028
  %v6085 = vadd.f32 %v4813, %v6033
  %v6086 = vadd.f32 %v4814, %v6036
  %v6087 = vadd.f32 %v4815, %v6041
  %v6088 = vadd.f32 %v4816, %v6044
  %v6089 = vadd.f32 %v4817, %v6049
  %v6090 = vadd.f32 %v4818, %v6052
  %v6091 = vld [vmem:[#allocation3 + $0x8] sm:$0xf]
  %v6092 = vld [vmem:[#allocation3 + $0xc] sm:$0xf]
  %v6093 = vld [vmem:[#allocation3 + $0x10] sm:$0xf]
  %v6094 = vld [vmem:[#allocation3 + $0x14] sm:$0xf]
  %v6095 = vld [vmem:[#allocation3 + $0x18] sm:$0xf]
  %v6096 = vld [vmem:[#allocation3 + $0x1c] sm:$0xf]
  %v6097 = vld [vmem:[#allocation3 + $0x20] sm:$0xf]
  %v6098 = vld [vmem:[#allocation3 + $0x24] sm:$0xf]
  %v6099 = vld [vmem:[#allocation3 + $0x28] sm:$0xf]
  %v6100 = vld [vmem:[#allocation3 + $0x2c] sm:$0xf]
  %v6101 = vld [vmem:[#allocation3 + $0x30] sm:$0xf]
  %v6102 = vld [vmem:[#allocation3 + $0x34] sm:$0xf]
  %v6103 = vld [vmem:[#allocation3 + $0x38] sm:$0xf]
  %v6104 = vld [vmem:[#allocation3 + $0x3c] sm:$0xf]
  %v6105 = vld [vmem:[#allocation3 + $0x40] sm:$0xf]
  %v6106 = vld [vmem:[#allocation3 + $0x44] sm:$0xf]
  %v6107 = vld [vmem:[#allocation3 + $0x48] sm:$0xf]
  %v6108 = vld [vmem:[#allocation3 + $0x4c] sm:$0xf]
  %v6109 = vld [vmem:[#allocation3 + $0x50] sm:$0xf]
  %v6110 = vld [vmem:[#allocation3 + $0x54] sm:$0xf]
  %v6111 = vld [vmem:[#allocation3 + $0x58] sm:$0xf]
  %v6112 = vld [vmem:[#allocation3 + $0x5c] sm:$0xf]
  %v6113 = vld [vmem:[#allocation3 + $0x60] sm:$0xf]
  %v6114 = vld [vmem:[#allocation3 + $0x64] sm:$0xf]
  %v6115 = vld [vmem:[#allocation3 + $0x68] sm:$0xf]
  %v6116 = vld [vmem:[#allocation3 + $0x6c] sm:$0xf]
  %v6117 = vld [vmem:[#allocation3 + $0x70] sm:$0xf]
  %v6118 = vld [vmem:[#allocation3 + $0x74] sm:$0xf]
  %v6119 = vld [vmem:[#allocation3 + $0x78] sm:$0xf]
  %v6120 = vld [vmem:[#allocation3 + $0x7c] sm:$0xf]
  %v6121 = vld [vmem:[#allocation3 + $0x80] sm:$0xf]
  %v6122 = vld [vmem:[#allocation3 + $0x84] sm:$0xf]
  %v6123 = vld [vmem:[#allocation3 + $0x88] sm:$0xf]
  %v6124 = vld [vmem:[#allocation3 + $0x8c] sm:$0xf]
  %v6125 = vld [vmem:[#allocation3 + $0x90] sm:$0xf]
  %v6126 = vld [vmem:[#allocation3 + $0x94] sm:$0xf]
  %s6127 = scalar_lea.vmem %s3, 24
  %v6128 = vld [vmem:[%s6127] sm:$0xf]
  %v6129 = vld [vmem:[%s6127 + $0x4] sm:$0xf]
  %v6166 = vunpack.c.l.b16 %v6091
  %v6167 = vunpack.c.l.b16 %v6092
  %v6168 = vunpack.c.l.b16 %v6093
  %v6169 = vunpack.c.l.b16 %v6094
  %v6170 = vunpack.c.l.b16 %v6095
  %v6171 = vunpack.c.l.b16 %v6096
  %v6172 = vunpack.c.l.b16 %v6097
  %v6173 = vunpack.c.l.b16 %v6098
  %v6174 = vunpack.c.l.b16 %v6099
  %v6175 = vunpack.c.l.b16 %v6100
  %v6176 = vunpack.c.l.b16 %v6101
  %v6177 = vunpack.c.l.b16 %v6102
  %v6178 = vunpack.c.l.b16 %v6103
  %v6179 = vunpack.c.l.b16 %v6104
  %v6180 = vunpack.c.l.b16 %v6105
  %v6181 = vunpack.c.l.b16 %v6106
  %v6182 = vunpack.c.l.b16 %v6107
  %v6183 = vunpack.c.l.b16 %v6108
  %v6184 = vunpack.c.l.b16 %v6109
  %v6185 = vunpack.c.l.b16 %v6110
  %v6186 = vunpack.c.l.b16 %v6111
  %v6187 = vunpack.c.l.b16 %v6112
  %v6188 = vunpack.c.l.b16 %v6113
  %v6189 = vunpack.c.l.b16 %v6114
  %v6190 = vunpack.c.l.b16 %v6115
  %v6191 = vunpack.c.l.b16 %v6116
  %v6192 = vunpack.c.l.b16 %v6117
  %v6193 = vunpack.c.l.b16 %v6118
  %v6194 = vunpack.c.l.b16 %v6119
  %v6195 = vunpack.c.l.b16 %v6120
  %v6196 = vunpack.c.l.b16 %v6121
  %v6197 = vunpack.c.l.b16 %v6122
  %v6198 = vunpack.c.l.b16 %v6123
  %v6199 = vunpack.c.l.b16 %v6124
  %v6200 = vunpack.c.l.b16 %v6125
  %v6201 = vunpack.c.l.b16 %v6126
  %v6202 = vpack.c.b16 %v6167, %v6166
  %v6203 = vpack.c.b16 %v6169, %v6168
  %v6204 = vpack.c.b16 %v6171, %v6170
  %v6205 = vpack.c.b16 %v6173, %v6172
  %v6206 = vpack.c.b16 %v6175, %v6174
  %v6207 = vpack.c.b16 %v6177, %v6176
  %v6208 = vpack.c.b16 %v6179, %v6178
  %v6209 = vpack.c.b16 %v6181, %v6180
  %v6210 = vpack.c.b16 %v6183, %v6182
  %v6211 = vpack.c.b16 %v6185, %v6184
  %v6212 = vpack.c.b16 %v6187, %v6186
  %v6213 = vpack.c.b16 %v6189, %v6188
  %v6214 = vpack.c.b16 %v6191, %v6190
  %v6215 = vpack.c.b16 %v6193, %v6192
  %v6216 = vpack.c.b16 %v6195, %v6194
  %v6217 = vpack.c.b16 %v6197, %v6196
  %v6218 = vpack.c.b16 %v6199, %v6198
  %v6219 = vpack.c.b16 %v6201, %v6200
  %v6222 = vunpack.c.l.b16 %v6128
  %v6223 = vunpack.c.l.b16 %v6129
  %v6224 = vpack.c.b16 %v6223, %v6222
  %v6227 = vsel %vm1675, %v6202, 0
  %v6230 = vsel %vm1675, %v6203, 0
  %v6233 = vsel %vm1675, %v6204, 0
  %v6236 = vsel %vm1675, %v6205, 0
  %v6239 = vsel %vm1675, %v6206, 0
  %v6242 = vsel %vm1675, %v6207, 0
  %v6245 = vsel %vm1675, %v6208, 0
  %v6248 = vsel %vm1675, %v6209, 0
  %v6251 = vsel %vm1675, %v6210, 0
  %v6254 = vsel %vm1675, %v6211, 0
  %v6257 = vsel %vm1675, %v6212, 0
  %v6260 = vsel %vm1675, %v6213, 0
  %v6263 = vsel %vm1675, %v6214, 0
  %v6266 = vsel %vm1675, %v6215, 0
  %v6269 = vsel %vm1675, %v6216, 0
  %v6272 = vsel %vm1675, %v6217, 0
  %v6275 = vsel %vm1675, %v6218, 0
  %v6278 = vsel %vm1675, %v6219, 0
  %6280 = vmatprep.subr.bf16.mxu0 0
  %6281 = vmatpush1.bf16.msra.mxu0 0
  %6282 = vmatprep.subr.bf16.mxu0 0
  %6283 = vmatpush1.bf16.msra.mxu0 0
  %6284 = vmatprep.subr.bf16.mxu0 0
  %6285 = vmatpush1.bf16.msra.mxu0 0
  %6286 = vmatprep.subr.bf16.mxu0 0
  %6287 = vmatpush1.bf16.msra.mxu0 0
  %6288 = vmatprep.subr.bf16.mxu0 0
  %6289 = vmatpush1.bf16.msra.mxu0 0
  %6290 = vmatprep.subr.bf16.mxu0 0
  %6291 = vmatpush1.bf16.msra.mxu0 0
  %6292 = vmatprep.subr.bf16.mxu0 0
  %6293 = vmatpush1.bf16.msra.mxu0 0
  %6294 = vmatprep.subr.bf16.mxu0 0
  %6295 = vmatpush1.bf16.msra.mxu0 %v6224
  %6296 = vmatprep.subr.bf16.mxu0 0
  %6297 = vmatpush2.bf16.msra.mxu0 0
  %6298 = vmatprep.subr.bf16.mxu0 0
  %6299 = vmatpush2.bf16.msra.mxu0 0
  %6300 = vmatprep.subr.bf16.mxu0 0
  %6301 = vmatpush2.bf16.msra.mxu0 0
  %6302 = vmatprep.subr.bf16.mxu0 0
  %6303 = vmatpush2.bf16.msra.mxu0 0
  %6304 = vmatprep.subr.bf16.mxu0 0
  %6305 = vmatpush2.bf16.msra.mxu0 0
  %6306 = vmatprep.subr.bf16.mxu0 0
  %6307 = vmatpush2.bf16.msra.mxu0 0
  %6308 = vmatprep.subr.bf16.mxu0 0
  %6309 = vmatpush2.bf16.msra.mxu0 0
  %6310 = vmatprep.subr.bf16.mxu0 0
  %6311 = vmatpush2.bf16.msra.mxu0 0
  %6312 = vmatprep.mubr.bf16.mxu0 0
  %6313 = vmatmul.mubr.bf16.gmra.mxu0 %v6227
  %v6314 = vpop.f32.mrf.mxu0
  %v6315 = vadd.f32 0.0, %v6314
  %v6316 = vpop.f32.mrf.mxu0
  %v6317 = vpop.f32.mrf.mxu0
  %v6318 = vadd.f32 0.0, %v6317
  %v6319 = vpop.f32.mrf.mxu0
  %6320 = vmatprep.mubr.bf16.mxu0 0
  %6321 = vmatmul.mubr.bf16.gmra.mxu0 %v6230
  %v6322 = vpop.f32.mrf.mxu0
  %v6323 = vadd.f32 0.0, %v6322
  %v6324 = vpop.f32.mrf.mxu0
  %v6325 = vpop.f32.mrf.mxu0
  %v6326 = vadd.f32 0.0, %v6325
  %v6327 = vpop.f32.mrf.mxu0
  %6328 = vmatprep.mubr.bf16.mxu0 0
  %6329 = vmatmul.mubr.bf16.gmra.mxu0 %v6233
  %v6330 = vpop.f32.mrf.mxu0
  %v6331 = vadd.f32 0.0, %v6330
  %v6332 = vpop.f32.mrf.mxu0
  %v6333 = vpop.f32.mrf.mxu0
  %v6334 = vadd.f32 0.0, %v6333
  %v6335 = vpop.f32.mrf.mxu0
  %6336 = vmatprep.mubr.bf16.mxu0 0
  %6337 = vmatmul.mubr.bf16.gmra.mxu0 %v6236
  %v6338 = vpop.f32.mrf.mxu0
  %v6339 = vadd.f32 0.0, %v6338
  %v6340 = vpop.f32.mrf.mxu0
  %v6341 = vpop.f32.mrf.mxu0
  %v6342 = vadd.f32 0.0, %v6341
  %v6343 = vpop.f32.mrf.mxu0
  %6344 = vmatprep.mubr.bf16.mxu0 0
  %6345 = vmatmul.mubr.bf16.gmra.mxu0 %v6239
  %v6346 = vpop.f32.mrf.mxu0
  %v6347 = vadd.f32 0.0, %v6346
  %v6348 = vpop.f32.mrf.mxu0
  %v6349 = vpop.f32.mrf.mxu0
  %v6350 = vadd.f32 0.0, %v6349
  %v6351 = vpop.f32.mrf.mxu0
  %6352 = vmatprep.mubr.bf16.mxu0 0
  %6353 = vmatmul.mubr.bf16.gmra.mxu0 %v6242
  %v6354 = vpop.f32.mrf.mxu0
  %v6355 = vadd.f32 0.0, %v6354
  %v6356 = vpop.f32.mrf.mxu0
  %v6357 = vpop.f32.mrf.mxu0
  %v6358 = vadd.f32 0.0, %v6357
  %v6359 = vpop.f32.mrf.mxu0
  %6360 = vmatprep.mubr.bf16.mxu0 0
  %6361 = vmatmul.mubr.bf16.gmra.mxu0 %v6245
  %v6362 = vpop.f32.mrf.mxu0
  %v6363 = vadd.f32 0.0, %v6362
  %v6364 = vpop.f32.mrf.mxu0
  %v6365 = vpop.f32.mrf.mxu0
  %v6366 = vadd.f32 0.0, %v6365
  %v6367 = vpop.f32.mrf.mxu0
  %6368 = vmatprep.mubr.bf16.mxu0 0
  %6369 = vmatmul.mubr.bf16.gmra.mxu0 %v6248
  %v6370 = vpop.f32.mrf.mxu0
  %v6371 = vadd.f32 0.0, %v6370
  %v6372 = vpop.f32.mrf.mxu0
  %v6373 = vpop.f32.mrf.mxu0
  %v6374 = vadd.f32 0.0, %v6373
  %v6375 = vpop.f32.mrf.mxu0
  %6376 = vmatprep.mubr.bf16.mxu0 0
  %6377 = vmatmul.mubr.bf16.gmra.mxu0 %v6251
  %v6378 = vpop.f32.mrf.mxu0
  %v6379 = vadd.f32 0.0, %v6378
  %v6380 = vpop.f32.mrf.mxu0
  %v6381 = vpop.f32.mrf.mxu0
  %v6382 = vadd.f32 0.0, %v6381
  %v6383 = vpop.f32.mrf.mxu0
  %6384 = vmatprep.mubr.bf16.mxu0 0
  %6385 = vmatmul.mubr.bf16.gmra.mxu0 %v6254
  %v6386 = vpop.f32.mrf.mxu0
  %v6387 = vadd.f32 0.0, %v6386
  %v6388 = vpop.f32.mrf.mxu0
  %v6389 = vpop.f32.mrf.mxu0
  %v6390 = vadd.f32 0.0, %v6389
  %v6391 = vpop.f32.mrf.mxu0
  %6392 = vmatprep.mubr.bf16.mxu0 0
  %6393 = vmatmul.mubr.bf16.gmra.mxu0 %v6257
  %v6394 = vpop.f32.mrf.mxu0
  %v6395 = vadd.f32 0.0, %v6394
  %v6396 = vpop.f32.mrf.mxu0
  %v6397 = vpop.f32.mrf.mxu0
  %v6398 = vadd.f32 0.0, %v6397
  %v6399 = vpop.f32.mrf.mxu0
  %6400 = vmatprep.mubr.bf16.mxu0 0
  %6401 = vmatmul.mubr.bf16.gmra.mxu0 %v6260
  %v6402 = vpop.f32.mrf.mxu0
  %v6403 = vadd.f32 0.0, %v6402
  %v6404 = vpop.f32.mrf.mxu0
  %v6405 = vpop.f32.mrf.mxu0
  %v6406 = vadd.f32 0.0, %v6405
  %v6407 = vpop.f32.mrf.mxu0
  %6408 = vmatprep.mubr.bf16.mxu0 0
  %6409 = vmatmul.mubr.bf16.gmra.mxu0 %v6263
  %v6410 = vpop.f32.mrf.mxu0
  %v6411 = vadd.f32 0.0, %v6410
  %v6412 = vpop.f32.mrf.mxu0
  %v6413 = vpop.f32.mrf.mxu0
  %v6414 = vadd.f32 0.0, %v6413
  %v6415 = vpop.f32.mrf.mxu0
  %6416 = vmatprep.mubr.bf16.mxu0 0
  %6417 = vmatmul.mubr.bf16.gmra.mxu0 %v6266
  %v6418 = vpop.f32.mrf.mxu0
  %v6419 = vadd.f32 0.0, %v6418
  %v6420 = vpop.f32.mrf.mxu0
  %v6421 = vpop.f32.mrf.mxu0
  %v6422 = vadd.f32 0.0, %v6421
  %v6423 = vpop.f32.mrf.mxu0
  %6424 = vmatprep.mubr.bf16.mxu0 0
  %6425 = vmatmul.mubr.bf16.gmra.mxu0 %v6269
  %v6426 = vpop.f32.mrf.mxu0
  %v6427 = vadd.f32 0.0, %v6426
  %v6428 = vpop.f32.mrf.mxu0
  %v6429 = vpop.f32.mrf.mxu0
  %v6430 = vadd.f32 0.0, %v6429
  %v6431 = vpop.f32.mrf.mxu0
  %6432 = vmatprep.mubr.bf16.mxu0 0
  %6433 = vmatmul.mubr.bf16.gmra.mxu0 %v6272
  %v6434 = vpop.f32.mrf.mxu0
  %v6435 = vadd.f32 0.0, %v6434
  %v6436 = vpop.f32.mrf.mxu0
  %v6437 = vpop.f32.mrf.mxu0
  %v6438 = vadd.f32 0.0, %v6437
  %v6439 = vpop.f32.mrf.mxu0
  %6440 = vmatprep.mubr.bf16.mxu0 0
  %6441 = vmatmul.mubr.bf16.gmra.mxu0 %v6275
  %v6442 = vpop.f32.mrf.mxu0
  %v6443 = vadd.f32 0.0, %v6442
  %v6444 = vpop.f32.mrf.mxu0
  %v6445 = vpop.f32.mrf.mxu0
  %v6446 = vadd.f32 0.0, %v6445
  %v6447 = vpop.f32.mrf.mxu0
  %6448 = vmatprep.mubr.bf16.mxu0 0
  %6449 = vmatmul.mubr.bf16.gmra.mxu0 %v6278
  %v6450 = vpop.f32.mrf.mxu0
  %v6451 = vadd.f32 0.0, %v6450
  %v6452 = vpop.f32.mrf.mxu0
  %v6453 = vpop.f32.mrf.mxu0
  %v6454 = vadd.f32 0.0, %v6453
  %v6455 = vpop.f32.mrf.mxu0
  %6456 = vdwg.mxu0
  %v6457 = vadd.f32 %v5184, %v6315
  %v6458 = vadd.f32 %v5185, %v6318
  %v6459 = vadd.f32 %v5186, %v6323
  %v6460 = vadd.f32 %v5187, %v6326
  %v6461 = vadd.f32 %v5188, %v6331
  %v6462 = vadd.f32 %v5189, %v6334
  %v6463 = vadd.f32 %v5190, %v6339
  %v6464 = vadd.f32 %v5191, %v6342
  %v6465 = vadd.f32 %v5192, %v6347
  %v6466 = vadd.f32 %v5193, %v6350
  %v6467 = vadd.f32 %v5194, %v6355
  %v6468 = vadd.f32 %v5195, %v6358
  %v6469 = vadd.f32 %v5196, %v6363
  %v6470 = vadd.f32 %v5197, %v6366
  %v6471 = vadd.f32 %v5198, %v6371
  %v6472 = vadd.f32 %v5199, %v6374
  %v6473 = vadd.f32 %v5200, %v6379
  %v6474 = vadd.f32 %v5201, %v6382
  %v6475 = vadd.f32 %v5202, %v6387
  %v6476 = vadd.f32 %v5203, %v6390
  %v6477 = vadd.f32 %v5204, %v6395
  %v6478 = vadd.f32 %v5205, %v6398
  %v6479 = vadd.f32 %v5206, %v6403
  %v6480 = vadd.f32 %v5207, %v6406
  %v6481 = vadd.f32 %v5208, %v6411
  %v6482 = vadd.f32 %v5209, %v6414
  %v6483 = vadd.f32 %v5210, %v6419
  %v6484 = vadd.f32 %v5211, %v6422
  %v6485 = vadd.f32 %v5212, %v6427
  %v6486 = vadd.f32 %v5213, %v6430
  %v6487 = vadd.f32 %v5214, %v6435
  %v6488 = vadd.f32 %v5215, %v6438
  %v6489 = vadd.f32 %v5216, %v6443
  %v6490 = vadd.f32 %v5217, %v6446
  %v6491 = vadd.f32 %v5218, %v6451
  %v6492 = vadd.f32 %v5219, %v6454
  %v6493 = vld [vmem:[#allocation3 + $0x8] sm:$0xf]
  %v6494 = vld [vmem:[#allocation3 + $0xc] sm:$0xf]
  %v6495 = vld [vmem:[#allocation3 + $0x10] sm:$0xf]
  %v6496 = vld [vmem:[#allocation3 + $0x14] sm:$0xf]
  %v6497 = vld [vmem:[#allocation3 + $0x18] sm:$0xf]
  %v6498 = vld [vmem:[#allocation3 + $0x1c] sm:$0xf]
  %v6499 = vld [vmem:[#allocation3 + $0x20] sm:$0xf]
  %v6500 = vld [vmem:[#allocation3 + $0x24] sm:$0xf]
  %v6501 = vld [vmem:[#allocation3 + $0x28] sm:$0xf]
  %v6502 = vld [vmem:[#allocation3 + $0x2c] sm:$0xf]
  %v6503 = vld [vmem:[#allocation3 + $0x30] sm:$0xf]
  %v6504 = vld [vmem:[#allocation3 + $0x34] sm:$0xf]
  %v6505 = vld [vmem:[#allocation3 + $0x38] sm:$0xf]
  %v6506 = vld [vmem:[#allocation3 + $0x3c] sm:$0xf]
  %v6507 = vld [vmem:[#allocation3 + $0x40] sm:$0xf]
  %v6508 = vld [vmem:[#allocation3 + $0x44] sm:$0xf]
  %v6509 = vld [vmem:[#allocation3 + $0x48] sm:$0xf]
  %v6510 = vld [vmem:[#allocation3 + $0x4c] sm:$0xf]
  %v6511 = vld [vmem:[#allocation3 + $0x50] sm:$0xf]
  %v6512 = vld [vmem:[#allocation3 + $0x54] sm:$0xf]
  %v6513 = vld [vmem:[#allocation3 + $0x58] sm:$0xf]
  %v6514 = vld [vmem:[#allocation3 + $0x5c] sm:$0xf]
  %v6515 = vld [vmem:[#allocation3 + $0x60] sm:$0xf]
  %v6516 = vld [vmem:[#allocation3 + $0x64] sm:$0xf]
  %v6517 = vld [vmem:[#allocation3 + $0x68] sm:$0xf]
  %v6518 = vld [vmem:[#allocation3 + $0x6c] sm:$0xf]
  %v6519 = vld [vmem:[#allocation3 + $0x70] sm:$0xf]
  %v6520 = vld [vmem:[#allocation3 + $0x74] sm:$0xf]
  %v6521 = vld [vmem:[#allocation3 + $0x78] sm:$0xf]
  %v6522 = vld [vmem:[#allocation3 + $0x7c] sm:$0xf]
  %v6523 = vld [vmem:[#allocation3 + $0x80] sm:$0xf]
  %v6524 = vld [vmem:[#allocation3 + $0x84] sm:$0xf]
  %v6525 = vld [vmem:[#allocation3 + $0x88] sm:$0xf]
  %v6526 = vld [vmem:[#allocation3 + $0x8c] sm:$0xf]
  %v6527 = vld [vmem:[#allocation3 + $0x90] sm:$0xf]
  %v6528 = vld [vmem:[#allocation3 + $0x94] sm:$0xf]
  %v6529 = vld [vmem:[#allocation3 + $0x98] sm:$0x1]
  %s6530 = scalar_lea.vmem %s3, 32
  %v6531 = vld [vmem:[%s6530] sm:$0xf]
  %v6532 = vld [vmem:[%s6530 + $0x4] sm:$0xf]
  %v6570 = vunpack.c.l.b16 %v6493
  %v6571 = vunpack.c.l.b16 %v6494
  %v6572 = vunpack.c.l.b16 %v6495
  %v6573 = vunpack.c.l.b16 %v6496
  %v6574 = vunpack.c.l.b16 %v6497
  %v6575 = vunpack.c.l.b16 %v6498
  %v6576 = vunpack.c.l.b16 %v6499
  %v6577 = vunpack.c.l.b16 %v6500
  %v6578 = vunpack.c.l.b16 %v6501
  %v6579 = vunpack.c.l.b16 %v6502
  %v6580 = vunpack.c.l.b16 %v6503
  %v6581 = vunpack.c.l.b16 %v6504
  %v6582 = vunpack.c.l.b16 %v6505
  %v6583 = vunpack.c.l.b16 %v6506
  %v6584 = vunpack.c.l.b16 %v6507
  %v6585 = vunpack.c.l.b16 %v6508
  %v6586 = vunpack.c.l.b16 %v6509
  %v6587 = vunpack.c.l.b16 %v6510
  %v6588 = vunpack.c.l.b16 %v6511
  %v6589 = vunpack.c.l.b16 %v6512
  %v6590 = vunpack.c.l.b16 %v6513
  %v6591 = vunpack.c.l.b16 %v6514
  %v6592 = vunpack.c.l.b16 %v6515
  %v6593 = vunpack.c.l.b16 %v6516
  %v6594 = vunpack.c.l.b16 %v6517
  %v6595 = vunpack.c.l.b16 %v6518
  %v6596 = vunpack.c.l.b16 %v6519
  %v6597 = vunpack.c.l.b16 %v6520
  %v6598 = vunpack.c.l.b16 %v6521
  %v6599 = vunpack.c.l.b16 %v6522
  %v6600 = vunpack.c.l.b16 %v6523
  %v6601 = vunpack.c.l.b16 %v6524
  %v6602 = vunpack.c.l.b16 %v6525
  %v6603 = vunpack.c.l.b16 %v6526
  %v6604 = vunpack.c.l.b16 %v6527
  %v6605 = vunpack.c.l.b16 %v6528
  %v6606 = vunpack.c.l.b16 %v6529
  %v6607 = vpack.c.b16 %v6571, %v6570
  %v6608 = vpack.c.b16 %v6573, %v6572
  %v6609 = vpack.c.b16 %v6575, %v6574
  %v6610 = vpack.c.b16 %v6577, %v6576
  %v6611 = vpack.c.b16 %v6579, %v6578
  %v6612 = vpack.c.b16 %v6581, %v6580
  %v6613 = vpack.c.b16 %v6583, %v6582
  %v6614 = vpack.c.b16 %v6585, %v6584
  %v6615 = vpack.c.b16 %v6587, %v6586
  %v6616 = vpack.c.b16 %v6589, %v6588
  %v6617 = vpack.c.b16 %v6591, %v6590
  %v6618 = vpack.c.b16 %v6593, %v6592
  %v6619 = vpack.c.b16 %v6595, %v6594
  %v6620 = vpack.c.b16 %v6597, %v6596
  %v6621 = vpack.c.b16 %v6599, %v6598
  %v6622 = vpack.c.b16 %v6601, %v6600
  %v6623 = vpack.c.b16 %v6603, %v6602
  %v6624 = vpack.c.b16 %v6605, %v6604
  %v6625 = vpack.c.b16 %v6606, %v6606
  %v6627 = vshrl.u32 %v6607, 16
  %v6629 = vshll.u32 %v6607, 16
  %v6631 = vrot.slane %v6629, 1
  %v6632 = vor.u32 %v6627, %v6631
  %v6634 = vshll.u32 %v6608, 16
  %v6636 = vrot.slane %v6634, 1
  %v6637 = vsel %vm2231, %v6632, %v6636
  %v6638 = vshrl.u32 %v6608, 16
  %v6640 = vor.u32 %v6638, %v6636
  %v6642 = vshll.u32 %v6609, 16
  %v6644 = vrot.slane %v6642, 1
  %v6645 = vsel %vm2231, %v6640, %v6644
  %v6646 = vshrl.u32 %v6609, 16
  %v6648 = vor.u32 %v6646, %v6644
  %v6650 = vshll.u32 %v6610, 16
  %v6652 = vrot.slane %v6650, 1
  %v6653 = vsel %vm2231, %v6648, %v6652
  %v6654 = vshrl.u32 %v6610, 16
  %v6656 = vor.u32 %v6654, %v6652
  %v6658 = vshll.u32 %v6611, 16
  %v6660 = vrot.slane %v6658, 1
  %v6661 = vsel %vm2231, %v6656, %v6660
  %v6662 = vshrl.u32 %v6611, 16
  %v6664 = vor.u32 %v6662, %v6660
  %v6666 = vshll.u32 %v6612, 16
  %v6668 = vrot.slane %v6666, 1
  %v6669 = vsel %vm2231, %v6664, %v6668
  %v6670 = vshrl.u32 %v6612, 16
  %v6672 = vor.u32 %v6670, %v6668
  %v6674 = vshll.u32 %v6613, 16
  %v6676 = vrot.slane %v6674, 1
  %v6677 = vsel %vm2231, %v6672, %v6676
  %v6678 = vshrl.u32 %v6613, 16
  %v6680 = vor.u32 %v6678, %v6676
  %v6682 = vshll.u32 %v6614, 16
  %v6684 = vrot.slane %v6682, 1
  %v6685 = vsel %vm2231, %v6680, %v6684
  %v6686 = vshrl.u32 %v6614, 16
  %v6688 = vor.u32 %v6686, %v6684
  %v6690 = vshll.u32 %v6615, 16
  %v6692 = vrot.slane %v6690, 1
  %v6693 = vsel %vm2231, %v6688, %v6692
  %v6694 = vshrl.u32 %v6615, 16
  %v6696 = vor.u32 %v6694, %v6692
  %v6698 = vshll.u32 %v6616, 16
  %v6700 = vrot.slane %v6698, 1
  %v6701 = vsel %vm2231, %v6696, %v6700
  %v6702 = vshrl.u32 %v6616, 16
  %v6704 = vor.u32 %v6702, %v6700
  %v6706 = vshll.u32 %v6617, 16
  %v6708 = vrot.slane %v6706, 1
  %v6709 = vsel %vm2231, %v6704, %v6708
  %v6710 = vshrl.u32 %v6617, 16
  %v6712 = vor.u32 %v6710, %v6708
  %v6714 = vshll.u32 %v6618, 16
  %v6716 = vrot.slane %v6714, 1
  %v6717 = vsel %vm2231, %v6712, %v6716
  %v6718 = vshrl.u32 %v6618, 16
  %v6720 = vor.u32 %v6718, %v6716
  %v6722 = vshll.u32 %v6619, 16
  %v6724 = vrot.slane %v6722, 1
  %v6725 = vsel %vm2231, %v6720, %v6724
  %v6726 = vshrl.u32 %v6619, 16
  %v6728 = vor.u32 %v6726, %v6724
  %v6730 = vshll.u32 %v6620, 16
  %v6732 = vrot.slane %v6730, 1
  %v6733 = vsel %vm2231, %v6728, %v6732
  %v6734 = vshrl.u32 %v6620, 16
  %v6736 = vor.u32 %v6734, %v6732
  %v6738 = vshll.u32 %v6621, 16
  %v6740 = vrot.slane %v6738, 1
  %v6741 = vsel %vm2231, %v6736, %v6740
  %v6742 = vshrl.u32 %v6621, 16
  %v6744 = vor.u32 %v6742, %v6740
  %v6746 = vshll.u32 %v6622, 16
  %v6748 = vrot.slane %v6746, 1
  %v6749 = vsel %vm2231, %v6744, %v6748
  %v6750 = vshrl.u32 %v6622, 16
  %v6752 = vor.u32 %v6750, %v6748
  %v6754 = vshll.u32 %v6623, 16
  %v6756 = vrot.slane %v6754, 1
  %v6757 = vsel %vm2231, %v6752, %v6756
  %v6758 = vshrl.u32 %v6623, 16
  %v6760 = vor.u32 %v6758, %v6756
  %v6762 = vshll.u32 %v6624, 16
  %v6764 = vrot.slane %v6762, 1
  %v6765 = vsel %vm2231, %v6760, %v6764
  %v6766 = vshrl.u32 %v6624, 16
  %v6768 = vor.u32 %v6766, %v6764
  %v6770 = vshll.u32 %v6625, 16
  %v6772 = vrot.slane %v6770, 1
  %v6773 = vsel %vm2231, %v6768, %v6772
  %v6776 = vunpack.c.l.b16 %v6531
  %v6777 = vunpack.c.l.b16 %v6532
  %v6778 = vpack.c.b16 %v6777, %v6776
  %v6781 = vsel %vm1675, %v6637, 0
  %v6784 = vsel %vm1675, %v6645, 0
  %v6787 = vsel %vm1675, %v6653, 0
  %v6790 = vsel %vm1675, %v6661, 0
  %v6793 = vsel %vm1675, %v6669, 0
  %v6796 = vsel %vm1675, %v6677, 0
  %v6799 = vsel %vm1675, %v6685, 0
  %v6802 = vsel %vm1675, %v6693, 0
  %v6805 = vsel %vm1675, %v6701, 0
  %v6808 = vsel %vm1675, %v6709, 0
  %v6811 = vsel %vm1675, %v6717, 0
  %v6814 = vsel %vm1675, %v6725, 0
  %v6817 = vsel %vm1675, %v6733, 0
  %v6820 = vsel %vm1675, %v6741, 0
  %v6823 = vsel %vm1675, %v6749, 0
  %v6826 = vsel %vm1675, %v6757, 0
  %v6829 = vsel %vm1675, %v6765, 0
  %v6832 = vsel %vm1675, %v6773, 0
  %6834 = vmatprep.subr.bf16.mxu0 0
  %6835 = vmatpush1.bf16.msra.mxu0 0
  %6836 = vmatprep.subr.bf16.mxu0 0
  %6837 = vmatpush1.bf16.msra.mxu0 0
  %6838 = vmatprep.subr.bf16.mxu0 0
  %6839 = vmatpush1.bf16.msra.mxu0 0
  %6840 = vmatprep.subr.bf16.mxu0 0
  %6841 = vmatpush1.bf16.msra.mxu0 0
  %6842 = vmatprep.subr.bf16.mxu0 0
  %6843 = vmatpush1.bf16.msra.mxu0 0
  %6844 = vmatprep.subr.bf16.mxu0 0
  %6845 = vmatpush1.bf16.msra.mxu0 0
  %6846 = vmatprep.subr.bf16.mxu0 0
  %6847 = vmatpush1.bf16.msra.mxu0 0
  %6848 = vmatprep.subr.bf16.mxu0 0
  %6849 = vmatpush1.bf16.msra.mxu0 %v6778
  %6850 = vmatprep.subr.bf16.mxu0 0
  %6851 = vmatpush2.bf16.msra.mxu0 0
  %6852 = vmatprep.subr.bf16.mxu0 0
  %6853 = vmatpush2.bf16.msra.mxu0 0
  %6854 = vmatprep.subr.bf16.mxu0 0
  %6855 = vmatpush2.bf16.msra.mxu0 0
  %6856 = vmatprep.subr.bf16.mxu0 0
  %6857 = vmatpush2.bf16.msra.mxu0 0
  %6858 = vmatprep.subr.bf16.mxu0 0
  %6859 = vmatpush2.bf16.msra.mxu0 0
  %6860 = vmatprep.subr.bf16.mxu0 0
  %6861 = vmatpush2.bf16.msra.mxu0 0
  %6862 = vmatprep.subr.bf16.mxu0 0
  %6863 = vmatpush2.bf16.msra.mxu0 0
  %6864 = vmatprep.subr.bf16.mxu0 0
  %6865 = vmatpush2.bf16.msra.mxu0 0
  %6866 = vmatprep.mubr.bf16.mxu0 0
  %6867 = vmatmul.mubr.bf16.gmra.mxu0 %v6781
  %v6868 = vpop.f32.mrf.mxu0
  %v6869 = vadd.f32 0.0, %v6868
  %v6870 = vpop.f32.mrf.mxu0
  %v6871 = vpop.f32.mrf.mxu0
  %v6872 = vadd.f32 0.0, %v6871
  %v6873 = vpop.f32.mrf.mxu0
  %6874 = vmatprep.mubr.bf16.mxu0 0
  %6875 = vmatmul.mubr.bf16.gmra.mxu0 %v6784
  %v6876 = vpop.f32.mrf.mxu0
  %v6877 = vadd.f32 0.0, %v6876
  %v6878 = vpop.f32.mrf.mxu0
  %v6879 = vpop.f32.mrf.mxu0
  %v6880 = vadd.f32 0.0, %v6879
  %v6881 = vpop.f32.mrf.mxu0
  %6882 = vmatprep.mubr.bf16.mxu0 0
  %6883 = vmatmul.mubr.bf16.gmra.mxu0 %v6787
  %v6884 = vpop.f32.mrf.mxu0
  %v6885 = vadd.f32 0.0, %v6884
  %v6886 = vpop.f32.mrf.mxu0
  %v6887 = vpop.f32.mrf.mxu0
  %v6888 = vadd.f32 0.0, %v6887
  %v6889 = vpop.f32.mrf.mxu0
  %6890 = vmatprep.mubr.bf16.mxu0 0
  %6891 = vmatmul.mubr.bf16.gmra.mxu0 %v6790
  %v6892 = vpop.f32.mrf.mxu0
  %v6893 = vadd.f32 0.0, %v6892
  %v6894 = vpop.f32.mrf.mxu0
  %v6895 = vpop.f32.mrf.mxu0
  %v6896 = vadd.f32 0.0, %v6895
  %v6897 = vpop.f32.mrf.mxu0
  %6898 = vmatprep.mubr.bf16.mxu0 0
  %6899 = vmatmul.mubr.bf16.gmra.mxu0 %v6793
  %v6900 = vpop.f32.mrf.mxu0
  %v6901 = vadd.f32 0.0, %v6900
  %v6902 = vpop.f32.mrf.mxu0
  %v6903 = vpop.f32.mrf.mxu0
  %v6904 = vadd.f32 0.0, %v6903
  %v6905 = vpop.f32.mrf.mxu0
  %6906 = vmatprep.mubr.bf16.mxu0 0
  %6907 = vmatmul.mubr.bf16.gmra.mxu0 %v6796
  %v6908 = vpop.f32.mrf.mxu0
  %v6909 = vadd.f32 0.0, %v6908
  %v6910 = vpop.f32.mrf.mxu0
  %v6911 = vpop.f32.mrf.mxu0
  %v6912 = vadd.f32 0.0, %v6911
  %v6913 = vpop.f32.mrf.mxu0
  %6914 = vmatprep.mubr.bf16.mxu0 0
  %6915 = vmatmul.mubr.bf16.gmra.mxu0 %v6799
  %v6916 = vpop.f32.mrf.mxu0
  %v6917 = vadd.f32 0.0, %v6916
  %v6918 = vpop.f32.mrf.mxu0
  %v6919 = vpop.f32.mrf.mxu0
  %v6920 = vadd.f32 0.0, %v6919
  %v6921 = vpop.f32.mrf.mxu0
  %6922 = vmatprep.mubr.bf16.mxu0 0
  %6923 = vmatmul.mubr.bf16.gmra.mxu0 %v6802
  %v6924 = vpop.f32.mrf.mxu0
  %v6925 = vadd.f32 0.0, %v6924
  %v6926 = vpop.f32.mrf.mxu0
  %v6927 = vpop.f32.mrf.mxu0
  %v6928 = vadd.f32 0.0, %v6927
  %v6929 = vpop.f32.mrf.mxu0
  %6930 = vmatprep.mubr.bf16.mxu0 0
  %6931 = vmatmul.mubr.bf16.gmra.mxu0 %v6805
  %v6932 = vpop.f32.mrf.mxu0
  %v6933 = vadd.f32 0.0, %v6932
  %v6934 = vpop.f32.mrf.mxu0
  %v6935 = vpop.f32.mrf.mxu0
  %v6936 = vadd.f32 0.0, %v6935
  %v6937 = vpop.f32.mrf.mxu0
  %6938 = vmatprep.mubr.bf16.mxu0 0
  %6939 = vmatmul.mubr.bf16.gmra.mxu0 %v6808
  %v6940 = vpop.f32.mrf.mxu0
  %v6941 = vadd.f32 0.0, %v6940
  %v6942 = vpop.f32.mrf.mxu0
  %v6943 = vpop.f32.mrf.mxu0
  %v6944 = vadd.f32 0.0, %v6943
  %v6945 = vpop.f32.mrf.mxu0
  %6946 = vmatprep.mubr.bf16.mxu0 0
  %6947 = vmatmul.mubr.bf16.gmra.mxu0 %v6811
  %v6948 = vpop.f32.mrf.mxu0
  %v6949 = vadd.f32 0.0, %v6948
  %v6950 = vpop.f32.mrf.mxu0
  %v6951 = vpop.f32.mrf.mxu0
  %v6952 = vadd.f32 0.0, %v6951
  %v6953 = vpop.f32.mrf.mxu0
  %6954 = vmatprep.mubr.bf16.mxu0 0
  %6955 = vmatmul.mubr.bf16.gmra.mxu0 %v6814
  %v6956 = vpop.f32.mrf.mxu0
  %v6957 = vadd.f32 0.0, %v6956
  %v6958 = vpop.f32.mrf.mxu0
  %v6959 = vpop.f32.mrf.mxu0
  %v6960 = vadd.f32 0.0, %v6959
  %v6961 = vpop.f32.mrf.mxu0
  %6962 = vmatprep.mubr.bf16.mxu0 0
  %6963 = vmatmul.mubr.bf16.gmra.mxu0 %v6817
  %v6964 = vpop.f32.mrf.mxu0
  %v6965 = vadd.f32 0.0, %v6964
  %v6966 = vpop.f32.mrf.mxu0
  %v6967 = vpop.f32.mrf.mxu0
  %v6968 = vadd.f32 0.0, %v6967
  %v6969 = vpop.f32.mrf.mxu0
  %6970 = vmatprep.mubr.bf16.mxu0 0
  %6971 = vmatmul.mubr.bf16.gmra.mxu0 %v6820
  %v6972 = vpop.f32.mrf.mxu0
  %v6973 = vadd.f32 0.0, %v6972
  %v6974 = vpop.f32.mrf.mxu0
  %v6975 = vpop.f32.mrf.mxu0
  %v6976 = vadd.f32 0.0, %v6975
  %v6977 = vpop.f32.mrf.mxu0
  %6978 = vmatprep.mubr.bf16.mxu0 0
  %6979 = vmatmul.mubr.bf16.gmra.mxu0 %v6823
  %v6980 = vpop.f32.mrf.mxu0
  %v6981 = vadd.f32 0.0, %v6980
  %v6982 = vpop.f32.mrf.mxu0
  %v6983 = vpop.f32.mrf.mxu0
  %v6984 = vadd.f32 0.0, %v6983
  %v6985 = vpop.f32.mrf.mxu0
  %6986 = vmatprep.mubr.bf16.mxu0 0
  %6987 = vmatmul.mubr.bf16.gmra.mxu0 %v6826
  %v6988 = vpop.f32.mrf.mxu0
  %v6989 = vadd.f32 0.0, %v6988
  %v6990 = vpop.f32.mrf.mxu0
  %v6991 = vpop.f32.mrf.mxu0
  %v6992 = vadd.f32 0.0, %v6991
  %v6993 = vpop.f32.mrf.mxu0
  %6994 = vmatprep.mubr.bf16.mxu0 0
  %6995 = vmatmul.mubr.bf16.gmra.mxu0 %v6829
  %v6996 = vpop.f32.mrf.mxu0
  %v6997 = vadd.f32 0.0, %v6996
  %v6998 = vpop.f32.mrf.mxu0
  %v6999 = vpop.f32.mrf.mxu0
  %v7000 = vadd.f32 0.0, %v6999
  %v7001 = vpop.f32.mrf.mxu0
  %7002 = vmatprep.mubr.bf16.mxu0 0
  %7003 = vmatmul.mubr.bf16.gmra.mxu0 %v6832
  %v7004 = vpop.f32.mrf.mxu0
  %v7005 = vadd.f32 0.0, %v7004
  %v7006 = vpop.f32.mrf.mxu0
  %v7007 = vpop.f32.mrf.mxu0
  %v7008 = vadd.f32 0.0, %v7007
  %v7009 = vpop.f32.mrf.mxu0
  %7010 = vdwg.mxu0
  %v7011 = vadd.f32 %v5738, %v6869
  %v7012 = vadd.f32 %v5739, %v6872
  %v7013 = vadd.f32 %v5740, %v6877
  %v7014 = vadd.f32 %v5741, %v6880
  %v7015 = vadd.f32 %v5742, %v6885
  %v7016 = vadd.f32 %v5743, %v6888
  %v7017 = vadd.f32 %v5744, %v6893
  %v7018 = vadd.f32 %v5745, %v6896
  %v7019 = vadd.f32 %v5746, %v6901
  %v7020 = vadd.f32 %v5747, %v6904
  %v7021 = vadd.f32 %v5748, %v6909
  %v7022 = vadd.f32 %v5749, %v6912
  %v7023 = vadd.f32 %v5750, %v6917
  %v7024 = vadd.f32 %v5751, %v6920
  %v7025 = vadd.f32 %v5752, %v6925
  %v7026 = vadd.f32 %v5753, %v6928
  %v7027 = vadd.f32 %v5754, %v6933
  %v7028 = vadd.f32 %v5755, %v6936
  %v7029 = vadd.f32 %v5756, %v6941
  %v7030 = vadd.f32 %v5757, %v6944
  %v7031 = vadd.f32 %v5758, %v6949
  %v7032 = vadd.f32 %v5759, %v6952
  %v7033 = vadd.f32 %v5760, %v6957
  %v7034 = vadd.f32 %v5761, %v6960
  %v7035 = vadd.f32 %v5762, %v6965
  %v7036 = vadd.f32 %v5763, %v6968
  %v7037 = vadd.f32 %v5764, %v6973
  %v7038 = vadd.f32 %v5765, %v6976
  %v7039 = vadd.f32 %v5766, %v6981
  %v7040 = vadd.f32 %v5767, %v6984
  %v7041 = vadd.f32 %v5768, %v6989
  %v7042 = vadd.f32 %v5769, %v6992
  %v7043 = vadd.f32 %v5770, %v6997
  %v7044 = vadd.f32 %v5771, %v7000
  %v7045 = vadd.f32 %v5772, %v7005
  %v7046 = vadd.f32 %v5773, %v7008
  %v7047 = vld [vmem:[#allocation3 + $0x8] sm:$0xe]
  %s7048 = scalar_lea.vmem %s3, 40
  %v7049 = vld [vmem:[%s7048] sm:$0xf]
  %v7050 = vld [vmem:[%s7048 + $0x4] sm:$0xf]
  %v7052 = vunpack.c.l.b16 %v7047
  %v7053 = vpack.c.b16 %v6571, %v7052
  %v7054 = vrot.slane %v7053, 1
  %v7055 = vrot.slane %v6608, 1
  %v7056 = vsel %vm2994, %v7054, %v7055
  %v7057 = vrot.slane %v6609, 1
  %v7058 = vsel %vm2994, %v7055, %v7057
  %v7059 = vrot.slane %v6610, 1
  %v7060 = vsel %vm2994, %v7057, %v7059
  %v7061 = vrot.slane %v6611, 1
  %v7062 = vsel %vm2994, %v7059, %v7061
  %v7063 = vrot.slane %v6612, 1
  %v7064 = vsel %vm2994, %v7061, %v7063
  %v7065 = vrot.slane %v6613, 1
  %v7066 = vsel %vm2994, %v7063, %v7065
  %v7067 = vrot.slane %v6614, 1
  %v7068 = vsel %vm2994, %v7065, %v7067
  %v7069 = vrot.slane %v6615, 1
  %v7070 = vsel %vm2994, %v7067, %v7069
  %v7071 = vrot.slane %v6616, 1
  %v7072 = vsel %vm2994, %v7069, %v7071
  %v7073 = vrot.slane %v6617, 1
  %v7074 = vsel %vm2994, %v7071, %v7073
  %v7075 = vrot.slane %v6618, 1
  %v7076 = vsel %vm2994, %v7073, %v7075
  %v7077 = vrot.slane %v6619, 1
  %v7078 = vsel %vm2994, %v7075, %v7077
  %v7079 = vrot.slane %v6620, 1
  %v7080 = vsel %vm2994, %v7077, %v7079
  %v7081 = vrot.slane %v6621, 1
  %v7082 = vsel %vm2994, %v7079, %v7081
  %v7083 = vrot.slane %v6622, 1
  %v7084 = vsel %vm2994, %v7081, %v7083
  %v7085 = vrot.slane %v6623, 1
  %v7086 = vsel %vm2994, %v7083, %v7085
  %v7087 = vrot.slane %v6624, 1
  %v7088 = vsel %vm2994, %v7085, %v7087
  %v7089 = vrot.slane %v6625, 1
  %v7090 = vsel %vm2994, %v7087, %v7089
  %v7093 = vunpack.c.l.b16 %v7049
  %v7094 = vunpack.c.l.b16 %v7050
  %v7095 = vpack.c.b16 %v7094, %v7093
  %v7098 = vsel %vm1675, %v7056, 0
  %v7101 = vsel %vm1675, %v7058, 0
  %v7104 = vsel %vm1675, %v7060, 0
  %v7107 = vsel %vm1675, %v7062, 0
  %v7110 = vsel %vm1675, %v7064, 0
  %v7113 = vsel %vm1675, %v7066, 0
  %v7116 = vsel %vm1675, %v7068, 0
  %v7119 = vsel %vm1675, %v7070, 0
  %v7122 = vsel %vm1675, %v7072, 0
  %v7125 = vsel %vm1675, %v7074, 0
  %v7128 = vsel %vm1675, %v7076, 0
  %v7131 = vsel %vm1675, %v7078, 0
  %v7134 = vsel %vm1675, %v7080, 0
  %v7137 = vsel %vm1675, %v7082, 0
  %v7140 = vsel %vm1675, %v7084, 0
  %v7143 = vsel %vm1675, %v7086, 0
  %v7146 = vsel %vm1675, %v7088, 0
  %v7149 = vsel %vm1675, %v7090, 0
  %7151 = vmatprep.subr.bf16.mxu0 0
  %7152 = vmatpush1.bf16.msra.mxu0 0
  %7153 = vmatprep.subr.bf16.mxu0 0
  %7154 = vmatpush1.bf16.msra.mxu0 0
  %7155 = vmatprep.subr.bf16.mxu0 0
  %7156 = vmatpush1.bf16.msra.mxu0 0
  %7157 = vmatprep.subr.bf16.mxu0 0
  %7158 = vmatpush1.bf16.msra.mxu0 0
  %7159 = vmatprep.subr.bf16.mxu0 0
  %7160 = vmatpush1.bf16.msra.mxu0 0
  %7161 = vmatprep.subr.bf16.mxu0 0
  %7162 = vmatpush1.bf16.msra.mxu0 0
  %7163 = vmatprep.subr.bf16.mxu0 0
  %7164 = vmatpush1.bf16.msra.mxu0 0
  %7165 = vmatprep.subr.bf16.mxu0 0
  %7166 = vmatpush1.bf16.msra.mxu0 %v7095
  %7167 = vmatprep.subr.bf16.mxu0 0
  %7168 = vmatpush2.bf16.msra.mxu0 0
  %7169 = vmatprep.subr.bf16.mxu0 0
  %7170 = vmatpush2.bf16.msra.mxu0 0
  %7171 = vmatprep.subr.bf16.mxu0 0
  %7172 = vmatpush2.bf16.msra.mxu0 0
  %7173 = vmatprep.subr.bf16.mxu0 0
  %7174 = vmatpush2.bf16.msra.mxu0 0
  %7175 = vmatprep.subr.bf16.mxu0 0
  %7176 = vmatpush2.bf16.msra.mxu0 0
  %7177 = vmatprep.subr.bf16.mxu0 0
  %7178 = vmatpush2.bf16.msra.mxu0 0
  %7179 = vmatprep.subr.bf16.mxu0 0
  %7180 = vmatpush2.bf16.msra.mxu0 0
  %7181 = vmatprep.subr.bf16.mxu0 0
  %7182 = vmatpush2.bf16.msra.mxu0 0
  %7183 = vmatprep.mubr.bf16.mxu0 0
  %7184 = vmatmul.mubr.bf16.gmra.mxu0 %v7098
  %v7185 = vpop.f32.mrf.mxu0
  %v7186 = vadd.f32 0.0, %v7185
  %v7187 = vpop.f32.mrf.mxu0
  %v7188 = vpop.f32.mrf.mxu0
  %v7189 = vadd.f32 0.0, %v7188
  %v7190 = vpop.f32.mrf.mxu0
  %7191 = vmatprep.mubr.bf16.mxu0 0
  %7192 = vmatmul.mubr.bf16.gmra.mxu0 %v7101
  %v7193 = vpop.f32.mrf.mxu0
  %v7194 = vadd.f32 0.0, %v7193
  %v7195 = vpop.f32.mrf.mxu0
  %v7196 = vpop.f32.mrf.mxu0
  %v7197 = vadd.f32 0.0, %v7196
  %v7198 = vpop.f32.mrf.mxu0
  %7199 = vmatprep.mubr.bf16.mxu0 0
  %7200 = vmatmul.mubr.bf16.gmra.mxu0 %v7104
  %v7201 = vpop.f32.mrf.mxu0
  %v7202 = vadd.f32 0.0, %v7201
  %v7203 = vpop.f32.mrf.mxu0
  %v7204 = vpop.f32.mrf.mxu0
  %v7205 = vadd.f32 0.0, %v7204
  %v7206 = vpop.f32.mrf.mxu0
  %7207 = vmatprep.mubr.bf16.mxu0 0
  %7208 = vmatmul.mubr.bf16.gmra.mxu0 %v7107
  %v7209 = vpop.f32.mrf.mxu0
  %v7210 = vadd.f32 0.0, %v7209
  %v7211 = vpop.f32.mrf.mxu0
  %v7212 = vpop.f32.mrf.mxu0
  %v7213 = vadd.f32 0.0, %v7212
  %v7214 = vpop.f32.mrf.mxu0
  %7215 = vmatprep.mubr.bf16.mxu0 0
  %7216 = vmatmul.mubr.bf16.gmra.mxu0 %v7110
  %v7217 = vpop.f32.mrf.mxu0
  %v7218 = vadd.f32 0.0, %v7217
  %v7219 = vpop.f32.mrf.mxu0
  %v7220 = vpop.f32.mrf.mxu0
  %v7221 = vadd.f32 0.0, %v7220
  %v7222 = vpop.f32.mrf.mxu0
  %7223 = vmatprep.mubr.bf16.mxu0 0
  %7224 = vmatmul.mubr.bf16.gmra.mxu0 %v7113
  %v7225 = vpop.f32.mrf.mxu0
  %v7226 = vadd.f32 0.0, %v7225
  %v7227 = vpop.f32.mrf.mxu0
  %v7228 = vpop.f32.mrf.mxu0
  %v7229 = vadd.f32 0.0, %v7228
  %v7230 = vpop.f32.mrf.mxu0
  %7231 = vmatprep.mubr.bf16.mxu0 0
  %7232 = vmatmul.mubr.bf16.gmra.mxu0 %v7116
  %v7233 = vpop.f32.mrf.mxu0
  %v7234 = vadd.f32 0.0, %v7233
  %v7235 = vpop.f32.mrf.mxu0
  %v7236 = vpop.f32.mrf.mxu0
  %v7237 = vadd.f32 0.0, %v7236
  %v7238 = vpop.f32.mrf.mxu0
  %7239 = vmatprep.mubr.bf16.mxu0 0
  %7240 = vmatmul.mubr.bf16.gmra.mxu0 %v7119
  %v7241 = vpop.f32.mrf.mxu0
  %v7242 = vadd.f32 0.0, %v7241
  %v7243 = vpop.f32.mrf.mxu0
  %v7244 = vpop.f32.mrf.mxu0
  %v7245 = vadd.f32 0.0, %v7244
  %v7246 = vpop.f32.mrf.mxu0
  %7247 = vmatprep.mubr.bf16.mxu0 0
  %7248 = vmatmul.mubr.bf16.gmra.mxu0 %v7122
  %v7249 = vpop.f32.mrf.mxu0
  %v7250 = vadd.f32 0.0, %v7249
  %v7251 = vpop.f32.mrf.mxu0
  %v7252 = vpop.f32.mrf.mxu0
  %v7253 = vadd.f32 0.0, %v7252
  %v7254 = vpop.f32.mrf.mxu0
  %7255 = vmatprep.mubr.bf16.mxu0 0
  %7256 = vmatmul.mubr.bf16.gmra.mxu0 %v7125
  %v7257 = vpop.f32.mrf.mxu0
  %v7258 = vadd.f32 0.0, %v7257
  %v7259 = vpop.f32.mrf.mxu0
  %v7260 = vpop.f32.mrf.mxu0
  %v7261 = vadd.f32 0.0, %v7260
  %v7262 = vpop.f32.mrf.mxu0
  %7263 = vmatprep.mubr.bf16.mxu0 0
  %7264 = vmatmul.mubr.bf16.gmra.mxu0 %v7128
  %v7265 = vpop.f32.mrf.mxu0
  %v7266 = vadd.f32 0.0, %v7265
  %v7267 = vpop.f32.mrf.mxu0
  %v7268 = vpop.f32.mrf.mxu0
  %v7269 = vadd.f32 0.0, %v7268
  %v7270 = vpop.f32.mrf.mxu0
  %7271 = vmatprep.mubr.bf16.mxu0 0
  %7272 = vmatmul.mubr.bf16.gmra.mxu0 %v7131
  %v7273 = vpop.f32.mrf.mxu0
  %v7274 = vadd.f32 0.0, %v7273
  %v7275 = vpop.f32.mrf.mxu0
  %v7276 = vpop.f32.mrf.mxu0
  %v7277 = vadd.f32 0.0, %v7276
  %v7278 = vpop.f32.mrf.mxu0
  %7279 = vmatprep.mubr.bf16.mxu0 0
  %7280 = vmatmul.mubr.bf16.gmra.mxu0 %v7134
  %v7281 = vpop.f32.mrf.mxu0
  %v7282 = vadd.f32 0.0, %v7281
  %v7283 = vpop.f32.mrf.mxu0
  %v7284 = vpop.f32.mrf.mxu0
  %v7285 = vadd.f32 0.0, %v7284
  %v7286 = vpop.f32.mrf.mxu0
  %7287 = vmatprep.mubr.bf16.mxu0 0
  %7288 = vmatmul.mubr.bf16.gmra.mxu0 %v7137
  %v7289 = vpop.f32.mrf.mxu0
  %v7290 = vadd.f32 0.0, %v7289
  %v7291 = vpop.f32.mrf.mxu0
  %v7292 = vpop.f32.mrf.mxu0
  %v7293 = vadd.f32 0.0, %v7292
  %v7294 = vpop.f32.mrf.mxu0
  %7295 = vmatprep.mubr.bf16.mxu0 0
  %7296 = vmatmul.mubr.bf16.gmra.mxu0 %v7140
  %v7297 = vpop.f32.mrf.mxu0
  %v7298 = vadd.f32 0.0, %v7297
  %v7299 = vpop.f32.mrf.mxu0
  %v7300 = vpop.f32.mrf.mxu0
  %v7301 = vadd.f32 0.0, %v7300
  %v7302 = vpop.f32.mrf.mxu0
  %7303 = vmatprep.mubr.bf16.mxu0 0
  %7304 = vmatmul.mubr.bf16.gmra.mxu0 %v7143
  %v7305 = vpop.f32.mrf.mxu0
  %v7306 = vadd.f32 0.0, %v7305
  %v7307 = vpop.f32.mrf.mxu0
  %v7308 = vpop.f32.mrf.mxu0
  %v7309 = vadd.f32 0.0, %v7308
  %v7310 = vpop.f32.mrf.mxu0
  %7311 = vmatprep.mubr.bf16.mxu0 0
  %7312 = vmatmul.mubr.bf16.gmra.mxu0 %v7146
  %v7313 = vpop.f32.mrf.mxu0
  %v7314 = vadd.f32 0.0, %v7313
  %v7315 = vpop.f32.mrf.mxu0
  %v7316 = vpop.f32.mrf.mxu0
  %v7317 = vadd.f32 0.0, %v7316
  %v7318 = vpop.f32.mrf.mxu0
  %7319 = vmatprep.mubr.bf16.mxu0 0
  %7320 = vmatmul.mubr.bf16.gmra.mxu0 %v7149
  %v7321 = vpop.f32.mrf.mxu0
  %v7322 = vadd.f32 0.0, %v7321
  %v7323 = vpop.f32.mrf.mxu0
  %v7324 = vpop.f32.mrf.mxu0
  %v7325 = vadd.f32 0.0, %v7324
  %v7326 = vpop.f32.mrf.mxu0
  %7327 = vdwg.mxu0
  %v7328 = vadd.f32 %v6055, %v7186
  %v7329 = vadd.f32 %v6056, %v7189
  %v7330 = vadd.f32 %v6057, %v7194
  %v7331 = vadd.f32 %v6058, %v7197
  %v7332 = vadd.f32 %v6059, %v7202
  %v7333 = vadd.f32 %v6060, %v7205
  %v7334 = vadd.f32 %v6061, %v7210
  %v7335 = vadd.f32 %v6062, %v7213
  %v7336 = vadd.f32 %v6063, %v7218
  %v7337 = vadd.f32 %v6064, %v7221
  %v7338 = vadd.f32 %v6065, %v7226
  %v7339 = vadd.f32 %v6066, %v7229
  %v7340 = vadd.f32 %v6067, %v7234
  %v7341 = vadd.f32 %v6068, %v7237
  %v7342 = vadd.f32 %v6069, %v7242
  %v7343 = vadd.f32 %v6070, %v7245
  %v7344 = vadd.f32 %v6071, %v7250
  %v7345 = vadd.f32 %v6072, %v7253
  %v7346 = vadd.f32 %v6073, %v7258
  %v7347 = vadd.f32 %v6074, %v7261
  %v7348 = vadd.f32 %v6075, %v7266
  %v7349 = vadd.f32 %v6076, %v7269
  %v7350 = vadd.f32 %v6077, %v7274
  %v7351 = vadd.f32 %v6078, %v7277
  %v7352 = vadd.f32 %v6079, %v7282
  %v7353 = vadd.f32 %v6080, %v7285
  %v7354 = vadd.f32 %v6081, %v7290
  %v7355 = vadd.f32 %v6082, %v7293
  %v7356 = vadd.f32 %v6083, %v7298
  %v7357 = vadd.f32 %v6084, %v7301
  %v7358 = vadd.f32 %v6085, %v7306
  %v7359 = vadd.f32 %v6086, %v7309
  %v7360 = vadd.f32 %v6087, %v7314
  %v7361 = vadd.f32 %v6088, %v7317
  %v7362 = vadd.f32 %v6089, %v7322
  %v7363 = vadd.f32 %v6090, %v7325
  %v7364 = vld [vmem:[#allocation3 + $0x10] sm:$0xf]
  %v7365 = vld [vmem:[#allocation3 + $0x14] sm:$0xf]
  %v7366 = vld [vmem:[#allocation3 + $0x18] sm:$0xf]
  %v7367 = vld [vmem:[#allocation3 + $0x1c] sm:$0xf]
  %v7368 = vld [vmem:[#allocation3 + $0x20] sm:$0xf]
  %v7369 = vld [vmem:[#allocation3 + $0x24] sm:$0xf]
  %v7370 = vld [vmem:[#allocation3 + $0x28] sm:$0xf]
  %v7371 = vld [vmem:[#allocation3 + $0x2c] sm:$0xf]
  %v7372 = vld [vmem:[#allocation3 + $0x30] sm:$0xf]
  %v7373 = vld [vmem:[#allocation3 + $0x34] sm:$0xf]
  %v7374 = vld [vmem:[#allocation3 + $0x38] sm:$0xf]
  %v7375 = vld [vmem:[#allocation3 + $0x3c] sm:$0xf]
  %v7376 = vld [vmem:[#allocation3 + $0x40] sm:$0xf]
  %v7377 = vld [vmem:[#allocation3 + $0x44] sm:$0xf]
  %v7378 = vld [vmem:[#allocation3 + $0x48] sm:$0xf]
  %v7379 = vld [vmem:[#allocation3 + $0x4c] sm:$0xf]
  %v7380 = vld [vmem:[#allocation3 + $0x50] sm:$0xf]
  %v7381 = vld [vmem:[#allocation3 + $0x54] sm:$0xf]
  %v7382 = vld [vmem:[#allocation3 + $0x58] sm:$0xf]
  %v7383 = vld [vmem:[#allocation3 + $0x5c] sm:$0xf]
  %v7384 = vld [vmem:[#allocation3 + $0x60] sm:$0xf]
  %v7385 = vld [vmem:[#allocation3 + $0x64] sm:$0xf]
  %v7386 = vld [vmem:[#allocation3 + $0x68] sm:$0xf]
  %v7387 = vld [vmem:[#allocation3 + $0x6c] sm:$0xf]
  %v7388 = vld [vmem:[#allocation3 + $0x70] sm:$0xf]
  %v7389 = vld [vmem:[#allocation3 + $0x74] sm:$0xf]
  %v7390 = vld [vmem:[#allocation3 + $0x78] sm:$0xf]
  %v7391 = vld [vmem:[#allocation3 + $0x7c] sm:$0xf]
  %v7392 = vld [vmem:[#allocation3 + $0x80] sm:$0xf]
  %v7393 = vld [vmem:[#allocation3 + $0x84] sm:$0xf]
  %v7394 = vld [vmem:[#allocation3 + $0x88] sm:$0xf]
  %v7395 = vld [vmem:[#allocation3 + $0x8c] sm:$0xf]
  %v7396 = vld [vmem:[#allocation3 + $0x90] sm:$0xf]
  %v7397 = vld [vmem:[#allocation3 + $0x94] sm:$0xf]
  %v7398 = vld [vmem:[#allocation3 + $0x98] sm:$0xf]
  %v7399 = vld [vmem:[#allocation3 + $0x9c] sm:$0xf]
  %s7400 = scalar_lea.vmem %s3, 48
  %v7401 = vld [vmem:[%s7400] sm:$0xf]
  %v7402 = vld [vmem:[%s7400 + $0x4] sm:$0xf]
  %v7439 = vunpack.c.l.b16 %v7364
  %v7440 = vunpack.c.l.b16 %v7365
  %v7441 = vunpack.c.l.b16 %v7366
  %v7442 = vunpack.c.l.b16 %v7367
  %v7443 = vunpack.c.l.b16 %v7368
  %v7444 = vunpack.c.l.b16 %v7369
  %v7445 = vunpack.c.l.b16 %v7370
  %v7446 = vunpack.c.l.b16 %v7371
  %v7447 = vunpack.c.l.b16 %v7372
  %v7448 = vunpack.c.l.b16 %v7373
  %v7449 = vunpack.c.l.b16 %v7374
  %v7450 = vunpack.c.l.b16 %v7375
  %v7451 = vunpack.c.l.b16 %v7376
  %v7452 = vunpack.c.l.b16 %v7377
  %v7453 = vunpack.c.l.b16 %v7378
  %v7454 = vunpack.c.l.b16 %v7379
  %v7455 = vunpack.c.l.b16 %v7380
  %v7456 = vunpack.c.l.b16 %v7381
  %v7457 = vunpack.c.l.b16 %v7382
  %v7458 = vunpack.c.l.b16 %v7383
  %v7459 = vunpack.c.l.b16 %v7384
  %v7460 = vunpack.c.l.b16 %v7385
  %v7461 = vunpack.c.l.b16 %v7386
  %v7462 = vunpack.c.l.b16 %v7387
  %v7463 = vunpack.c.l.b16 %v7388
  %v7464 = vunpack.c.l.b16 %v7389
  %v7465 = vunpack.c.l.b16 %v7390
  %v7466 = vunpack.c.l.b16 %v7391
  %v7467 = vunpack.c.l.b16 %v7392
  %v7468 = vunpack.c.l.b16 %v7393
  %v7469 = vunpack.c.l.b16 %v7394
  %v7470 = vunpack.c.l.b16 %v7395
  %v7471 = vunpack.c.l.b16 %v7396
  %v7472 = vunpack.c.l.b16 %v7397
  %v7473 = vunpack.c.l.b16 %v7398
  %v7474 = vunpack.c.l.b16 %v7399
  %v7475 = vpack.c.b16 %v7440, %v7439
  %v7476 = vpack.c.b16 %v7442, %v7441
  %v7477 = vpack.c.b16 %v7444, %v7443
  %v7478 = vpack.c.b16 %v7446, %v7445
  %v7479 = vpack.c.b16 %v7448, %v7447
  %v7480 = vpack.c.b16 %v7450, %v7449
  %v7481 = vpack.c.b16 %v7452, %v7451
  %v7482 = vpack.c.b16 %v7454, %v7453
  %v7483 = vpack.c.b16 %v7456, %v7455
  %v7484 = vpack.c.b16 %v7458, %v7457
  %v7485 = vpack.c.b16 %v7460, %v7459
  %v7486 = vpack.c.b16 %v7462, %v7461
  %v7487 = vpack.c.b16 %v7464, %v7463
  %v7488 = vpack.c.b16 %v7466, %v7465
  %v7489 = vpack.c.b16 %v7468, %v7467
  %v7490 = vpack.c.b16 %v7470, %v7469
  %v7491 = vpack.c.b16 %v7472, %v7471
  %v7492 = vpack.c.b16 %v7474, %v7473
  %v7495 = vunpack.c.l.b16 %v7401
  %v7496 = vunpack.c.l.b16 %v7402
  %v7497 = vpack.c.b16 %v7496, %v7495
  %v7500 = vsel %vm1675, %v7475, 0
  %v7503 = vsel %vm1675, %v7476, 0
  %v7506 = vsel %vm1675, %v7477, 0
  %v7509 = vsel %vm1675, %v7478, 0
  %v7512 = vsel %vm1675, %v7479, 0
  %v7515 = vsel %vm1675, %v7480, 0
  %v7518 = vsel %vm1675, %v7481, 0
  %v7521 = vsel %vm1675, %v7482, 0
  %v7524 = vsel %vm1675, %v7483, 0
  %v7527 = vsel %vm1675, %v7484, 0
  %v7530 = vsel %vm1675, %v7485, 0
  %v7533 = vsel %vm1675, %v7486, 0
  %v7536 = vsel %vm1675, %v7487, 0
  %v7539 = vsel %vm1675, %v7488, 0
  %v7542 = vsel %vm1675, %v7489, 0
  %v7545 = vsel %vm1675, %v7490, 0
  %v7548 = vsel %vm1675, %v7491, 0
  %v7551 = vsel %vm1675, %v7492, 0
  %7553 = vmatprep.subr.bf16.mxu0 0
  %7554 = vmatpush1.bf16.msra.mxu0 0
  %7555 = vmatprep.subr.bf16.mxu0 0
  %7556 = vmatpush1.bf16.msra.mxu0 0
  %7557 = vmatprep.subr.bf16.mxu0 0
  %7558 = vmatpush1.bf16.msra.mxu0 0
  %7559 = vmatprep.subr.bf16.mxu0 0
  %7560 = vmatpush1.bf16.msra.mxu0 0
  %7561 = vmatprep.subr.bf16.mxu0 0
  %7562 = vmatpush1.bf16.msra.mxu0 0
  %7563 = vmatprep.subr.bf16.mxu0 0
  %7564 = vmatpush1.bf16.msra.mxu0 0
  %7565 = vmatprep.subr.bf16.mxu0 0
  %7566 = vmatpush1.bf16.msra.mxu0 0
  %7567 = vmatprep.subr.bf16.mxu0 0
  %7568 = vmatpush1.bf16.msra.mxu0 %v7497
  %7569 = vmatprep.subr.bf16.mxu0 0
  %7570 = vmatpush2.bf16.msra.mxu0 0
  %7571 = vmatprep.subr.bf16.mxu0 0
  %7572 = vmatpush2.bf16.msra.mxu0 0
  %7573 = vmatprep.subr.bf16.mxu0 0
  %7574 = vmatpush2.bf16.msra.mxu0 0
  %7575 = vmatprep.subr.bf16.mxu0 0
  %7576 = vmatpush2.bf16.msra.mxu0 0
  %7577 = vmatprep.subr.bf16.mxu0 0
  %7578 = vmatpush2.bf16.msra.mxu0 0
  %7579 = vmatprep.subr.bf16.mxu0 0
  %7580 = vmatpush2.bf16.msra.mxu0 0
  %7581 = vmatprep.subr.bf16.mxu0 0
  %7582 = vmatpush2.bf16.msra.mxu0 0
  %7583 = vmatprep.subr.bf16.mxu0 0
  %7584 = vmatpush2.bf16.msra.mxu0 0
  %7585 = vmatprep.mubr.bf16.mxu0 0
  %7586 = vmatmul.mubr.bf16.gmra.mxu0 %v7500
  %v7587 = vpop.f32.mrf.mxu0
  %v7588 = vadd.f32 0.0, %v7587
  %v7589 = vpop.f32.mrf.mxu0
  %v7590 = vpop.f32.mrf.mxu0
  %v7591 = vadd.f32 0.0, %v7590
  %v7592 = vpop.f32.mrf.mxu0
  %7593 = vmatprep.mubr.bf16.mxu0 0
  %7594 = vmatmul.mubr.bf16.gmra.mxu0 %v7503
  %v7595 = vpop.f32.mrf.mxu0
  %v7596 = vadd.f32 0.0, %v7595
  %v7597 = vpop.f32.mrf.mxu0
  %v7598 = vpop.f32.mrf.mxu0
  %v7599 = vadd.f32 0.0, %v7598
  %v7600 = vpop.f32.mrf.mxu0
  %7601 = vmatprep.mubr.bf16.mxu0 0
  %7602 = vmatmul.mubr.bf16.gmra.mxu0 %v7506
  %v7603 = vpop.f32.mrf.mxu0
  %v7604 = vadd.f32 0.0, %v7603
  %v7605 = vpop.f32.mrf.mxu0
  %v7606 = vpop.f32.mrf.mxu0
  %v7607 = vadd.f32 0.0, %v7606
  %v7608 = vpop.f32.mrf.mxu0
  %7609 = vmatprep.mubr.bf16.mxu0 0
  %7610 = vmatmul.mubr.bf16.gmra.mxu0 %v7509
  %v7611 = vpop.f32.mrf.mxu0
  %v7612 = vadd.f32 0.0, %v7611
  %v7613 = vpop.f32.mrf.mxu0
  %v7614 = vpop.f32.mrf.mxu0
  %v7615 = vadd.f32 0.0, %v7614
  %v7616 = vpop.f32.mrf.mxu0
  %7617 = vmatprep.mubr.bf16.mxu0 0
  %7618 = vmatmul.mubr.bf16.gmra.mxu0 %v7512
  %v7619 = vpop.f32.mrf.mxu0
  %v7620 = vadd.f32 0.0, %v7619
  %v7621 = vpop.f32.mrf.mxu0
  %v7622 = vpop.f32.mrf.mxu0
  %v7623 = vadd.f32 0.0, %v7622
  %v7624 = vpop.f32.mrf.mxu0
  %7625 = vmatprep.mubr.bf16.mxu0 0
  %7626 = vmatmul.mubr.bf16.gmra.mxu0 %v7515
  %v7627 = vpop.f32.mrf.mxu0
  %v7628 = vadd.f32 0.0, %v7627
  %v7629 = vpop.f32.mrf.mxu0
  %v7630 = vpop.f32.mrf.mxu0
  %v7631 = vadd.f32 0.0, %v7630
  %v7632 = vpop.f32.mrf.mxu0
  %7633 = vmatprep.mubr.bf16.mxu0 0
  %7634 = vmatmul.mubr.bf16.gmra.mxu0 %v7518
  %v7635 = vpop.f32.mrf.mxu0
  %v7636 = vadd.f32 0.0, %v7635
  %v7637 = vpop.f32.mrf.mxu0
  %v7638 = vpop.f32.mrf.mxu0
  %v7639 = vadd.f32 0.0, %v7638
  %v7640 = vpop.f32.mrf.mxu0
  %7641 = vmatprep.mubr.bf16.mxu0 0
  %7642 = vmatmul.mubr.bf16.gmra.mxu0 %v7521
  %v7643 = vpop.f32.mrf.mxu0
  %v7644 = vadd.f32 0.0, %v7643
  %v7645 = vpop.f32.mrf.mxu0
  %v7646 = vpop.f32.mrf.mxu0
  %v7647 = vadd.f32 0.0, %v7646
  %v7648 = vpop.f32.mrf.mxu0
  %7649 = vmatprep.mubr.bf16.mxu0 0
  %7650 = vmatmul.mubr.bf16.gmra.mxu0 %v7524
  %v7651 = vpop.f32.mrf.mxu0
  %v7652 = vadd.f32 0.0, %v7651
  %v7653 = vpop.f32.mrf.mxu0
  %v7654 = vpop.f32.mrf.mxu0
  %v7655 = vadd.f32 0.0, %v7654
  %v7656 = vpop.f32.mrf.mxu0
  %7657 = vmatprep.mubr.bf16.mxu0 0
  %7658 = vmatmul.mubr.bf16.gmra.mxu0 %v7527
  %v7659 = vpop.f32.mrf.mxu0
  %v7660 = vadd.f32 0.0, %v7659
  %v7661 = vpop.f32.mrf.mxu0
  %v7662 = vpop.f32.mrf.mxu0
  %v7663 = vadd.f32 0.0, %v7662
  %v7664 = vpop.f32.mrf.mxu0
  %7665 = vmatprep.mubr.bf16.mxu0 0
  %7666 = vmatmul.mubr.bf16.gmra.mxu0 %v7530
  %v7667 = vpop.f32.mrf.mxu0
  %v7668 = vadd.f32 0.0, %v7667
  %v7669 = vpop.f32.mrf.mxu0
  %v7670 = vpop.f32.mrf.mxu0
  %v7671 = vadd.f32 0.0, %v7670
  %v7672 = vpop.f32.mrf.mxu0
  %7673 = vmatprep.mubr.bf16.mxu0 0
  %7674 = vmatmul.mubr.bf16.gmra.mxu0 %v7533
  %v7675 = vpop.f32.mrf.mxu0
  %v7676 = vadd.f32 0.0, %v7675
  %v7677 = vpop.f32.mrf.mxu0
  %v7678 = vpop.f32.mrf.mxu0
  %v7679 = vadd.f32 0.0, %v7678
  %v7680 = vpop.f32.mrf.mxu0
  %7681 = vmatprep.mubr.bf16.mxu0 0
  %7682 = vmatmul.mubr.bf16.gmra.mxu0 %v7536
  %v7683 = vpop.f32.mrf.mxu0
  %v7684 = vadd.f32 0.0, %v7683
  %v7685 = vpop.f32.mrf.mxu0
  %v7686 = vpop.f32.mrf.mxu0
  %v7687 = vadd.f32 0.0, %v7686
  %v7688 = vpop.f32.mrf.mxu0
  %7689 = vmatprep.mubr.bf16.mxu0 0
  %7690 = vmatmul.mubr.bf16.gmra.mxu0 %v7539
  %v7691 = vpop.f32.mrf.mxu0
  %v7692 = vadd.f32 0.0, %v7691
  %v7693 = vpop.f32.mrf.mxu0
  %v7694 = vpop.f32.mrf.mxu0
  %v7695 = vadd.f32 0.0, %v7694
  %v7696 = vpop.f32.mrf.mxu0
  %7697 = vmatprep.mubr.bf16.mxu0 0
  %7698 = vmatmul.mubr.bf16.gmra.mxu0 %v7542
  %v7699 = vpop.f32.mrf.mxu0
  %v7700 = vadd.f32 0.0, %v7699
  %v7701 = vpop.f32.mrf.mxu0
  %v7702 = vpop.f32.mrf.mxu0
  %v7703 = vadd.f32 0.0, %v7702
  %v7704 = vpop.f32.mrf.mxu0
  %7705 = vmatprep.mubr.bf16.mxu0 0
  %7706 = vmatmul.mubr.bf16.gmra.mxu0 %v7545
  %v7707 = vpop.f32.mrf.mxu0
  %v7708 = vadd.f32 0.0, %v7707
  %v7709 = vpop.f32.mrf.mxu0
  %v7710 = vpop.f32.mrf.mxu0
  %v7711 = vadd.f32 0.0, %v7710
  %v7712 = vpop.f32.mrf.mxu0
  %7713 = vmatprep.mubr.bf16.mxu0 0
  %7714 = vmatmul.mubr.bf16.gmra.mxu0 %v7548
  %v7715 = vpop.f32.mrf.mxu0
  %v7716 = vadd.f32 0.0, %v7715
  %v7717 = vpop.f32.mrf.mxu0
  %v7718 = vpop.f32.mrf.mxu0
  %v7719 = vadd.f32 0.0, %v7718
  %v7720 = vpop.f32.mrf.mxu0
  %7721 = vmatprep.mubr.bf16.mxu0 0
  %7722 = vmatmul.mubr.bf16.gmra.mxu0 %v7551
  %v7723 = vpop.f32.mrf.mxu0
  %v7724 = vadd.f32 0.0, %v7723
  %v7725 = vpop.f32.mrf.mxu0
  %v7726 = vpop.f32.mrf.mxu0
  %v7727 = vadd.f32 0.0, %v7726
  %v7728 = vpop.f32.mrf.mxu0
  %7729 = vdwg.mxu0
  %v7730 = vadd.f32 %v6457, %v7588
  %v7731 = vadd.f32 %v6458, %v7591
  %v7732 = vadd.f32 %v6459, %v7596
  %v7733 = vadd.f32 %v6460, %v7599
  %v7734 = vadd.f32 %v6461, %v7604
  %v7735 = vadd.f32 %v6462, %v7607
  %v7736 = vadd.f32 %v6463, %v7612
  %v7737 = vadd.f32 %v6464, %v7615
  %v7738 = vadd.f32 %v6465, %v7620
  %v7739 = vadd.f32 %v6466, %v7623
  %v7740 = vadd.f32 %v6467, %v7628
  %v7741 = vadd.f32 %v6468, %v7631
  %v7742 = vadd.f32 %v6469, %v7636
  %v7743 = vadd.f32 %v6470, %v7639
  %v7744 = vadd.f32 %v6471, %v7644
  %v7745 = vadd.f32 %v6472, %v7647
  %v7746 = vadd.f32 %v6473, %v7652
  %v7747 = vadd.f32 %v6474, %v7655
  %v7748 = vadd.f32 %v6475, %v7660
  %v7749 = vadd.f32 %v6476, %v7663
  %v7750 = vadd.f32 %v6477, %v7668
  %v7751 = vadd.f32 %v6478, %v7671
  %v7752 = vadd.f32 %v6479, %v7676
  %v7753 = vadd.f32 %v6480, %v7679
  %v7754 = vadd.f32 %v6481, %v7684
  %v7755 = vadd.f32 %v6482, %v7687
  %v7756 = vadd.f32 %v6483, %v7692
  %v7757 = vadd.f32 %v6484, %v7695
  %v7758 = vadd.f32 %v6485, %v7700
  %v7759 = vadd.f32 %v6486, %v7703
  %v7760 = vadd.f32 %v6487, %v7708
  %v7761 = vadd.f32 %v6488, %v7711
  %v7762 = vadd.f32 %v6489, %v7716
  %v7763 = vadd.f32 %v6490, %v7719
  %v7764 = vadd.f32 %v6491, %v7724
  %v7765 = vadd.f32 %v6492, %v7727
  %v7766 = vld [vmem:[#allocation3 + $0x10] sm:$0xf]
  %v7767 = vld [vmem:[#allocation3 + $0x14] sm:$0xf]
  %v7768 = vld [vmem:[#allocation3 + $0x18] sm:$0xf]
  %v7769 = vld [vmem:[#allocation3 + $0x1c] sm:$0xf]
  %v7770 = vld [vmem:[#allocation3 + $0x20] sm:$0xf]
  %v7771 = vld [vmem:[#allocation3 + $0x24] sm:$0xf]
  %v7772 = vld [vmem:[#allocation3 + $0x28] sm:$0xf]
  %v7773 = vld [vmem:[#allocation3 + $0x2c] sm:$0xf]
  %v7774 = vld [vmem:[#allocation3 + $0x30] sm:$0xf]
  %v7775 = vld [vmem:[#allocation3 + $0x34] sm:$0xf]
  %v7776 = vld [vmem:[#allocation3 + $0x38] sm:$0xf]
  %v7777 = vld [vmem:[#allocation3 + $0x3c] sm:$0xf]
  %v7778 = vld [vmem:[#allocation3 + $0x40] sm:$0xf]
  %v7779 = vld [vmem:[#allocation3 + $0x44] sm:$0xf]
  %v7780 = vld [vmem:[#allocation3 + $0x48] sm:$0xf]
  %v7781 = vld [vmem:[#allocation3 + $0x4c] sm:$0xf]
  %v7782 = vld [vmem:[#allocation3 + $0x50] sm:$0xf]
  %v7783 = vld [vmem:[#allocation3 + $0x54] sm:$0xf]
  %v7784 = vld [vmem:[#allocation3 + $0x58] sm:$0xf]
  %v7785 = vld [vmem:[#allocation3 + $0x5c] sm:$0xf]
  %v7786 = vld [vmem:[#allocation3 + $0x60] sm:$0xf]
  %v7787 = vld [vmem:[#allocation3 + $0x64] sm:$0xf]
  %v7788 = vld [vmem:[#allocation3 + $0x68] sm:$0xf]
  %v7789 = vld [vmem:[#allocation3 + $0x6c] sm:$0xf]
  %v7790 = vld [vmem:[#allocation3 + $0x70] sm:$0xf]
  %v7791 = vld [vmem:[#allocation3 + $0x74] sm:$0xf]
  %v7792 = vld [vmem:[#allocation3 + $0x78] sm:$0xf]
  %v7793 = vld [vmem:[#allocation3 + $0x7c] sm:$0xf]
  %v7794 = vld [vmem:[#allocation3 + $0x80] sm:$0xf]
  %v7795 = vld [vmem:[#allocation3 + $0x84] sm:$0xf]
  %v7796 = vld [vmem:[#allocation3 + $0x88] sm:$0xf]
  %v7797 = vld [vmem:[#allocation3 + $0x8c] sm:$0xf]
  %v7798 = vld [vmem:[#allocation3 + $0x90] sm:$0xf]
  %v7799 = vld [vmem:[#allocation3 + $0x94] sm:$0xf]
  %v7800 = vld [vmem:[#allocation3 + $0x98] sm:$0xf]
  %v7801 = vld [vmem:[#allocation3 + $0x9c] sm:$0xf]
  %v7802 = vld [vmem:[#allocation3 + $0xa0] sm:$0x1]
  %s7803 = scalar_lea.vmem %s3, 56
  %v7804 = vld [vmem:[%s7803] sm:$0xf]
  %v7805 = vld [vmem:[%s7803 + $0x4] sm:$0xf]
  %v7843 = vunpack.c.l.b16 %v7766
  %v7844 = vunpack.c.l.b16 %v7767
  %v7845 = vunpack.c.l.b16 %v7768
  %v7846 = vunpack.c.l.b16 %v7769
  %v7847 = vunpack.c.l.b16 %v7770
  %v7848 = vunpack.c.l.b16 %v7771
  %v7849 = vunpack.c.l.b16 %v7772
  %v7850 = vunpack.c.l.b16 %v7773
  %v7851 = vunpack.c.l.b16 %v7774
  %v7852 = vunpack.c.l.b16 %v7775
  %v7853 = vunpack.c.l.b16 %v7776
  %v7854 = vunpack.c.l.b16 %v7777
  %v7855 = vunpack.c.l.b16 %v7778
  %v7856 = vunpack.c.l.b16 %v7779
  %v7857 = vunpack.c.l.b16 %v7780
  %v7858 = vunpack.c.l.b16 %v7781
  %v7859 = vunpack.c.l.b16 %v7782
  %v7860 = vunpack.c.l.b16 %v7783
  %v7861 = vunpack.c.l.b16 %v7784
  %v7862 = vunpack.c.l.b16 %v7785
  %v7863 = vunpack.c.l.b16 %v7786
  %v7864 = vunpack.c.l.b16 %v7787
  %v7865 = vunpack.c.l.b16 %v7788
  %v7866 = vunpack.c.l.b16 %v7789
  %v7867 = vunpack.c.l.b16 %v7790
  %v7868 = vunpack.c.l.b16 %v7791
  %v7869 = vunpack.c.l.b16 %v7792
  %v7870 = vunpack.c.l.b16 %v7793
  %v7871 = vunpack.c.l.b16 %v7794
  %v7872 = vunpack.c.l.b16 %v7795
  %v7873 = vunpack.c.l.b16 %v7796
  %v7874 = vunpack.c.l.b16 %v7797
  %v7875 = vunpack.c.l.b16 %v7798
  %v7876 = vunpack.c.l.b16 %v7799
  %v7877 = vunpack.c.l.b16 %v7800
  %v7878 = vunpack.c.l.b16 %v7801
  %v7879 = vunpack.c.l.b16 %v7802
  %v7880 = vpack.c.b16 %v7844, %v7843
  %v7881 = vpack.c.b16 %v7846, %v7845
  %v7882 = vpack.c.b16 %v7848, %v7847
  %v7883 = vpack.c.b16 %v7850, %v7849
  %v7884 = vpack.c.b16 %v7852, %v7851
  %v7885 = vpack.c.b16 %v7854, %v7853
  %v7886 = vpack.c.b16 %v7856, %v7855
  %v7887 = vpack.c.b16 %v7858, %v7857
  %v7888 = vpack.c.b16 %v7860, %v7859
  %v7889 = vpack.c.b16 %v7862, %v7861
  %v7890 = vpack.c.b16 %v7864, %v7863
  %v7891 = vpack.c.b16 %v7866, %v7865
  %v7892 = vpack.c.b16 %v7868, %v7867
  %v7893 = vpack.c.b16 %v7870, %v7869
  %v7894 = vpack.c.b16 %v7872, %v7871
  %v7895 = vpack.c.b16 %v7874, %v7873
  %v7896 = vpack.c.b16 %v7876, %v7875
  %v7897 = vpack.c.b16 %v7878, %v7877
  %v7898 = vpack.c.b16 %v7879, %v7879
  %v7900 = vshrl.u32 %v7880, 16
  %v7902 = vshll.u32 %v7880, 16
  %v7904 = vrot.slane %v7902, 1
  %v7905 = vor.u32 %v7900, %v7904
  %v7907 = vshll.u32 %v7881, 16
  %v7909 = vrot.slane %v7907, 1
  %v7910 = vsel %vm2231, %v7905, %v7909
  %v7911 = vshrl.u32 %v7881, 16
  %v7913 = vor.u32 %v7911, %v7909
  %v7915 = vshll.u32 %v7882, 16
  %v7917 = vrot.slane %v7915, 1
  %v7918 = vsel %vm2231, %v7913, %v7917
  %v7919 = vshrl.u32 %v7882, 16
  %v7921 = vor.u32 %v7919, %v7917
  %v7923 = vshll.u32 %v7883, 16
  %v7925 = vrot.slane %v7923, 1
  %v7926 = vsel %vm2231, %v7921, %v7925
  %v7927 = vshrl.u32 %v7883, 16
  %v7929 = vor.u32 %v7927, %v7925
  %v7931 = vshll.u32 %v7884, 16
  %v7933 = vrot.slane %v7931, 1
  %v7934 = vsel %vm2231, %v7929, %v7933
  %v7935 = vshrl.u32 %v7884, 16
  %v7937 = vor.u32 %v7935, %v7933
  %v7939 = vshll.u32 %v7885, 16
  %v7941 = vrot.slane %v7939, 1
  %v7942 = vsel %vm2231, %v7937, %v7941
  %v7943 = vshrl.u32 %v7885, 16
  %v7945 = vor.u32 %v7943, %v7941
  %v7947 = vshll.u32 %v7886, 16
  %v7949 = vrot.slane %v7947, 1
  %v7950 = vsel %vm2231, %v7945, %v7949
  %v7951 = vshrl.u32 %v7886, 16
  %v7953 = vor.u32 %v7951, %v7949
  %v7955 = vshll.u32 %v7887, 16
  %v7957 = vrot.slane %v7955, 1
  %v7958 = vsel %vm2231, %v7953, %v7957
  %v7959 = vshrl.u32 %v7887, 16
  %v7961 = vor.u32 %v7959, %v7957
  %v7963 = vshll.u32 %v7888, 16
  %v7965 = vrot.slane %v7963, 1
  %v7966 = vsel %vm2231, %v7961, %v7965
  %v7967 = vshrl.u32 %v7888, 16
  %v7969 = vor.u32 %v7967, %v7965
  %v7971 = vshll.u32 %v7889, 16
  %v7973 = vrot.slane %v7971, 1
  %v7974 = vsel %vm2231, %v7969, %v7973
  %v7975 = vshrl.u32 %v7889, 16
  %v7977 = vor.u32 %v7975, %v7973
  %v7979 = vshll.u32 %v7890, 16
  %v7981 = vrot.slane %v7979, 1
  %v7982 = vsel %vm2231, %v7977, %v7981
  %v7983 = vshrl.u32 %v7890, 16
  %v7985 = vor.u32 %v7983, %v7981
  %v7987 = vshll.u32 %v7891, 16
  %v7989 = vrot.slane %v7987, 1
  %v7990 = vsel %vm2231, %v7985, %v7989
  %v7991 = vshrl.u32 %v7891, 16
  %v7993 = vor.u32 %v7991, %v7989
  %v7995 = vshll.u32 %v7892, 16
  %v7997 = vrot.slane %v7995, 1
  %v7998 = vsel %vm2231, %v7993, %v7997
  %v7999 = vshrl.u32 %v7892, 16
  %v8001 = vor.u32 %v7999, %v7997
  %v8003 = vshll.u32 %v7893, 16
  %v8005 = vrot.slane %v8003, 1
  %v8006 = vsel %vm2231, %v8001, %v8005
  %v8007 = vshrl.u32 %v7893, 16
  %v8009 = vor.u32 %v8007, %v8005
  %v8011 = vshll.u32 %v7894, 16
  %v8013 = vrot.slane %v8011, 1
  %v8014 = vsel %vm2231, %v8009, %v8013
  %v8015 = vshrl.u32 %v7894, 16
  %v8017 = vor.u32 %v8015, %v8013
  %v8019 = vshll.u32 %v7895, 16
  %v8021 = vrot.slane %v8019, 1
  %v8022 = vsel %vm2231, %v8017, %v8021
  %v8023 = vshrl.u32 %v7895, 16
  %v8025 = vor.u32 %v8023, %v8021
  %v8027 = vshll.u32 %v7896, 16
  %v8029 = vrot.slane %v8027, 1
  %v8030 = vsel %vm2231, %v8025, %v8029
  %v8031 = vshrl.u32 %v7896, 16
  %v8033 = vor.u32 %v8031, %v8029
  %v8035 = vshll.u32 %v7897, 16
  %v8037 = vrot.slane %v8035, 1
  %v8038 = vsel %vm2231, %v8033, %v8037
  %v8039 = vshrl.u32 %v7897, 16
  %v8041 = vor.u32 %v8039, %v8037
  %v8043 = vshll.u32 %v7898, 16
  %v8045 = vrot.slane %v8043, 1
  %v8046 = vsel %vm2231, %v8041, %v8045
  %v8049 = vunpack.c.l.b16 %v7804
  %v8050 = vunpack.c.l.b16 %v7805
  %v8051 = vpack.c.b16 %v8050, %v8049
  %v8054 = vsel %vm1675, %v7910, 0
  %v8057 = vsel %vm1675, %v7918, 0
  %v8060 = vsel %vm1675, %v7926, 0
  %v8063 = vsel %vm1675, %v7934, 0
  %v8066 = vsel %vm1675, %v7942, 0
  %v8069 = vsel %vm1675, %v7950, 0
  %v8072 = vsel %vm1675, %v7958, 0
  %v8075 = vsel %vm1675, %v7966, 0
  %v8078 = vsel %vm1675, %v7974, 0
  %v8081 = vsel %vm1675, %v7982, 0
  %v8084 = vsel %vm1675, %v7990, 0
  %v8087 = vsel %vm1675, %v7998, 0
  %v8090 = vsel %vm1675, %v8006, 0
  %v8093 = vsel %vm1675, %v8014, 0
  %v8096 = vsel %vm1675, %v8022, 0
  %v8099 = vsel %vm1675, %v8030, 0
  %v8102 = vsel %vm1675, %v8038, 0
  %v8105 = vsel %vm1675, %v8046, 0
  %8107 = vmatprep.subr.bf16.mxu0 0
  %8108 = vmatpush1.bf16.msra.mxu0 0
  %8109 = vmatprep.subr.bf16.mxu0 0
  %8110 = vmatpush1.bf16.msra.mxu0 0
  %8111 = vmatprep.subr.bf16.mxu0 0
  %8112 = vmatpush1.bf16.msra.mxu0 0
  %8113 = vmatprep.subr.bf16.mxu0 0
  %8114 = vmatpush1.bf16.msra.mxu0 0
  %8115 = vmatprep.subr.bf16.mxu0 0
  %8116 = vmatpush1.bf16.msra.mxu0 0
  %8117 = vmatprep.subr.bf16.mxu0 0
  %8118 = vmatpush1.bf16.msra.mxu0 0
  %8119 = vmatprep.subr.bf16.mxu0 0
  %8120 = vmatpush1.bf16.msra.mxu0 0
  %8121 = vmatprep.subr.bf16.mxu0 0
  %8122 = vmatpush1.bf16.msra.mxu0 %v8051
  %8123 = vmatprep.subr.bf16.mxu0 0
  %8124 = vmatpush2.bf16.msra.mxu0 0
  %8125 = vmatprep.subr.bf16.mxu0 0
  %8126 = vmatpush2.bf16.msra.mxu0 0
  %8127 = vmatprep.subr.bf16.mxu0 0
  %8128 = vmatpush2.bf16.msra.mxu0 0
  %8129 = vmatprep.subr.bf16.mxu0 0
  %8130 = vmatpush2.bf16.msra.mxu0 0
  %8131 = vmatprep.subr.bf16.mxu0 0
  %8132 = vmatpush2.bf16.msra.mxu0 0
  %8133 = vmatprep.subr.bf16.mxu0 0
  %8134 = vmatpush2.bf16.msra.mxu0 0
  %8135 = vmatprep.subr.bf16.mxu0 0
  %8136 = vmatpush2.bf16.msra.mxu0 0
  %8137 = vmatprep.subr.bf16.mxu0 0
  %8138 = vmatpush2.bf16.msra.mxu0 0
  %8139 = vmatprep.mubr.bf16.mxu0 0
  %8140 = vmatmul.mubr.bf16.gmra.mxu0 %v8054
  %v8141 = vpop.f32.mrf.mxu0
  %v8142 = vadd.f32 0.0, %v8141
  %v8143 = vpop.f32.mrf.mxu0
  %v8144 = vpop.f32.mrf.mxu0
  %v8145 = vadd.f32 0.0, %v8144
  %v8146 = vpop.f32.mrf.mxu0
  %8147 = vmatprep.mubr.bf16.mxu0 0
  %8148 = vmatmul.mubr.bf16.gmra.mxu0 %v8057
  %v8149 = vpop.f32.mrf.mxu0
  %v8150 = vadd.f32 0.0, %v8149
  %v8151 = vpop.f32.mrf.mxu0
  %v8152 = vpop.f32.mrf.mxu0
  %v8153 = vadd.f32 0.0, %v8152
  %v8154 = vpop.f32.mrf.mxu0
  %8155 = vmatprep.mubr.bf16.mxu0 0
  %8156 = vmatmul.mubr.bf16.gmra.mxu0 %v8060
  %v8157 = vpop.f32.mrf.mxu0
  %v8158 = vadd.f32 0.0, %v8157
  %v8159 = vpop.f32.mrf.mxu0
  %v8160 = vpop.f32.mrf.mxu0
  %v8161 = vadd.f32 0.0, %v8160
  %v8162 = vpop.f32.mrf.mxu0
  %8163 = vmatprep.mubr.bf16.mxu0 0
  %8164 = vmatmul.mubr.bf16.gmra.mxu0 %v8063
  %v8165 = vpop.f32.mrf.mxu0
  %v8166 = vadd.f32 0.0, %v8165
  %v8167 = vpop.f32.mrf.mxu0
  %v8168 = vpop.f32.mrf.mxu0
  %v8169 = vadd.f32 0.0, %v8168
  %v8170 = vpop.f32.mrf.mxu0
  %8171 = vmatprep.mubr.bf16.mxu0 0
  %8172 = vmatmul.mubr.bf16.gmra.mxu0 %v8066
  %v8173 = vpop.f32.mrf.mxu0
  %v8174 = vadd.f32 0.0, %v8173
  %v8175 = vpop.f32.mrf.mxu0
  %v8176 = vpop.f32.mrf.mxu0
  %v8177 = vadd.f32 0.0, %v8176
  %v8178 = vpop.f32.mrf.mxu0
  %8179 = vmatprep.mubr.bf16.mxu0 0
  %8180 = vmatmul.mubr.bf16.gmra.mxu0 %v8069
  %v8181 = vpop.f32.mrf.mxu0
  %v8182 = vadd.f32 0.0, %v8181
  %v8183 = vpop.f32.mrf.mxu0
  %v8184 = vpop.f32.mrf.mxu0
  %v8185 = vadd.f32 0.0, %v8184
  %v8186 = vpop.f32.mrf.mxu0
  %8187 = vmatprep.mubr.bf16.mxu0 0
  %8188 = vmatmul.mubr.bf16.gmra.mxu0 %v8072
  %v8189 = vpop.f32.mrf.mxu0
  %v8190 = vadd.f32 0.0, %v8189
  %v8191 = vpop.f32.mrf.mxu0
  %v8192 = vpop.f32.mrf.mxu0
  %v8193 = vadd.f32 0.0, %v8192
  %v8194 = vpop.f32.mrf.mxu0
  %8195 = vmatprep.mubr.bf16.mxu0 0
  %8196 = vmatmul.mubr.bf16.gmra.mxu0 %v8075
  %v8197 = vpop.f32.mrf.mxu0
  %v8198 = vadd.f32 0.0, %v8197
  %v8199 = vpop.f32.mrf.mxu0
  %v8200 = vpop.f32.mrf.mxu0
  %v8201 = vadd.f32 0.0, %v8200
  %v8202 = vpop.f32.mrf.mxu0
  %8203 = vmatprep.mubr.bf16.mxu0 0
  %8204 = vmatmul.mubr.bf16.gmra.mxu0 %v8078
  %v8205 = vpop.f32.mrf.mxu0
  %v8206 = vadd.f32 0.0, %v8205
  %v8207 = vpop.f32.mrf.mxu0
  %v8208 = vpop.f32.mrf.mxu0
  %v8209 = vadd.f32 0.0, %v8208
  %v8210 = vpop.f32.mrf.mxu0
  %8211 = vmatprep.mubr.bf16.mxu0 0
  %8212 = vmatmul.mubr.bf16.gmra.mxu0 %v8081
  %v8213 = vpop.f32.mrf.mxu0
  %v8214 = vadd.f32 0.0, %v8213
  %v8215 = vpop.f32.mrf.mxu0
  %v8216 = vpop.f32.mrf.mxu0
  %v8217 = vadd.f32 0.0, %v8216
  %v8218 = vpop.f32.mrf.mxu0
  %8219 = vmatprep.mubr.bf16.mxu0 0
  %8220 = vmatmul.mubr.bf16.gmra.mxu0 %v8084
  %v8221 = vpop.f32.mrf.mxu0
  %v8222 = vadd.f32 0.0, %v8221
  %v8223 = vpop.f32.mrf.mxu0
  %v8224 = vpop.f32.mrf.mxu0
  %v8225 = vadd.f32 0.0, %v8224
  %v8226 = vpop.f32.mrf.mxu0
  %8227 = vmatprep.mubr.bf16.mxu0 0
  %8228 = vmatmul.mubr.bf16.gmra.mxu0 %v8087
  %v8229 = vpop.f32.mrf.mxu0
  %v8230 = vadd.f32 0.0, %v8229
  %v8231 = vpop.f32.mrf.mxu0
  %v8232 = vpop.f32.mrf.mxu0
  %v8233 = vadd.f32 0.0, %v8232
  %v8234 = vpop.f32.mrf.mxu0
  %8235 = vmatprep.mubr.bf16.mxu0 0
  %8236 = vmatmul.mubr.bf16.gmra.mxu0 %v8090
  %v8237 = vpop.f32.mrf.mxu0
  %v8238 = vadd.f32 0.0, %v8237
  %v8239 = vpop.f32.mrf.mxu0
  %v8240 = vpop.f32.mrf.mxu0
  %v8241 = vadd.f32 0.0, %v8240
  %v8242 = vpop.f32.mrf.mxu0
  %8243 = vmatprep.mubr.bf16.mxu0 0
  %8244 = vmatmul.mubr.bf16.gmra.mxu0 %v8093
  %v8245 = vpop.f32.mrf.mxu0
  %v8246 = vadd.f32 0.0, %v8245
  %v8247 = vpop.f32.mrf.mxu0
  %v8248 = vpop.f32.mrf.mxu0
  %v8249 = vadd.f32 0.0, %v8248
  %v8250 = vpop.f32.mrf.mxu0
  %8251 = vmatprep.mubr.bf16.mxu0 0
  %8252 = vmatmul.mubr.bf16.gmra.mxu0 %v8096
  %v8253 = vpop.f32.mrf.mxu0
  %v8254 = vadd.f32 0.0, %v8253
  %v8255 = vpop.f32.mrf.mxu0
  %v8256 = vpop.f32.mrf.mxu0
  %v8257 = vadd.f32 0.0, %v8256
  %v8258 = vpop.f32.mrf.mxu0
  %8259 = vmatprep.mubr.bf16.mxu0 0
  %8260 = vmatmul.mubr.bf16.gmra.mxu0 %v8099
  %v8261 = vpop.f32.mrf.mxu0
  %v8262 = vadd.f32 0.0, %v8261
  %v8263 = vpop.f32.mrf.mxu0
  %v8264 = vpop.f32.mrf.mxu0
  %v8265 = vadd.f32 0.0, %v8264
  %v8266 = vpop.f32.mrf.mxu0
  %8267 = vmatprep.mubr.bf16.mxu0 0
  %8268 = vmatmul.mubr.bf16.gmra.mxu0 %v8102
  %v8269 = vpop.f32.mrf.mxu0
  %v8270 = vadd.f32 0.0, %v8269
  %v8271 = vpop.f32.mrf.mxu0
  %v8272 = vpop.f32.mrf.mxu0
  %v8273 = vadd.f32 0.0, %v8272
  %v8274 = vpop.f32.mrf.mxu0
  %8275 = vmatprep.mubr.bf16.mxu0 0
  %8276 = vmatmul.mubr.bf16.gmra.mxu0 %v8105
  %v8277 = vpop.f32.mrf.mxu0
  %v8278 = vadd.f32 0.0, %v8277
  %v8279 = vpop.f32.mrf.mxu0
  %v8280 = vpop.f32.mrf.mxu0
  %v8281 = vadd.f32 0.0, %v8280
  %v8282 = vpop.f32.mrf.mxu0
  %8283 = vdwg.mxu0
  %v8284 = vadd.f32 %v7011, %v8142
  %v8285 = vadd.f32 %v7012, %v8145
  %v8286 = vadd.f32 %v7013, %v8150
  %v8287 = vadd.f32 %v7014, %v8153
  %v8288 = vadd.f32 %v7015, %v8158
  %v8289 = vadd.f32 %v7016, %v8161
  %v8290 = vadd.f32 %v7017, %v8166
  %v8291 = vadd.f32 %v7018, %v8169
  %v8292 = vadd.f32 %v7019, %v8174
  %v8293 = vadd.f32 %v7020, %v8177
  %v8294 = vadd.f32 %v7021, %v8182
  %v8295 = vadd.f32 %v7022, %v8185
  %v8296 = vadd.f32 %v7023, %v8190
  %v8297 = vadd.f32 %v7024, %v8193
  %v8298 = vadd.f32 %v7025, %v8198
  %v8299 = vadd.f32 %v7026, %v8201
  %v8300 = vadd.f32 %v7027, %v8206
  %v8301 = vadd.f32 %v7028, %v8209
  %v8302 = vadd.f32 %v7029, %v8214
  %v8303 = vadd.f32 %v7030, %v8217
  %v8304 = vadd.f32 %v7031, %v8222
  %v8305 = vadd.f32 %v7032, %v8225
  %v8306 = vadd.f32 %v7033, %v8230
  %v8307 = vadd.f32 %v7034, %v8233
  %v8308 = vadd.f32 %v7035, %v8238
  %v8309 = vadd.f32 %v7036, %v8241
  %v8310 = vadd.f32 %v7037, %v8246
  %v8311 = vadd.f32 %v7038, %v8249
  %v8312 = vadd.f32 %v7039, %v8254
  %v8313 = vadd.f32 %v7040, %v8257
  %v8314 = vadd.f32 %v7041, %v8262
  %v8315 = vadd.f32 %v7042, %v8265
  %v8316 = vadd.f32 %v7043, %v8270
  %v8317 = vadd.f32 %v7044, %v8273
  %v8318 = vadd.f32 %v7045, %v8278
  %v8319 = vadd.f32 %v7046, %v8281
  %v8320 = vld [vmem:[#allocation3 + $0x10] sm:$0xe]
  %s8321 = scalar_lea.vmem %s3, 64
  %v8322 = vld [vmem:[%s8321] sm:$0xf]
  %v8323 = vld [vmem:[%s8321 + $0x4] sm:$0xf]
  %v8325 = vunpack.c.l.b16 %v8320
  %v8326 = vpack.c.b16 %v7844, %v8325
  %v8327 = vrot.slane %v8326, 1
  %v8328 = vrot.slane %v7881, 1
  %v8329 = vsel %vm2994, %v8327, %v8328
  %v8330 = vrot.slane %v7882, 1
  %v8331 = vsel %vm2994, %v8328, %v8330
  %v8332 = vrot.slane %v7883, 1
  %v8333 = vsel %vm2994, %v8330, %v8332
  %v8334 = vrot.slane %v7884, 1
  %v8335 = vsel %vm2994, %v8332, %v8334
  %v8336 = vrot.slane %v7885, 1
  %v8337 = vsel %vm2994, %v8334, %v8336
  %v8338 = vrot.slane %v7886, 1
  %v8339 = vsel %vm2994, %v8336, %v8338
  %v8340 = vrot.slane %v7887, 1
  %v8341 = vsel %vm2994, %v8338, %v8340
  %v8342 = vrot.slane %v7888, 1
  %v8343 = vsel %vm2994, %v8340, %v8342
  %v8344 = vrot.slane %v7889, 1
  %v8345 = vsel %vm2994, %v8342, %v8344
  %v8346 = vrot.slane %v7890, 1
  %v8347 = vsel %vm2994, %v8344, %v8346
  %v8348 = vrot.slane %v7891, 1
  %v8349 = vsel %vm2994, %v8346, %v8348
  %v8350 = vrot.slane %v7892, 1
  %v8351 = vsel %vm2994, %v8348, %v8350
  %v8352 = vrot.slane %v7893, 1
  %v8353 = vsel %vm2994, %v8350, %v8352
  %v8354 = vrot.slane %v7894, 1
  %v8355 = vsel %vm2994, %v8352, %v8354
  %v8356 = vrot.slane %v7895, 1
  %v8357 = vsel %vm2994, %v8354, %v8356
  %v8358 = vrot.slane %v7896, 1
  %v8359 = vsel %vm2994, %v8356, %v8358
  %v8360 = vrot.slane %v7897, 1
  %v8361 = vsel %vm2994, %v8358, %v8360
  %v8362 = vrot.slane %v7898, 1
  %v8363 = vsel %vm2994, %v8360, %v8362
  %v8366 = vunpack.c.l.b16 %v8322
  %v8367 = vunpack.c.l.b16 %v8323
  %v8368 = vpack.c.b16 %v8367, %v8366
  %v8371 = vsel %vm1675, %v8329, 0
  %v8374 = vsel %vm1675, %v8331, 0
  %v8377 = vsel %vm1675, %v8333, 0
  %v8380 = vsel %vm1675, %v8335, 0
  %v8383 = vsel %vm1675, %v8337, 0
  %v8386 = vsel %vm1675, %v8339, 0
  %v8389 = vsel %vm1675, %v8341, 0
  %v8392 = vsel %vm1675, %v8343, 0
  %v8395 = vsel %vm1675, %v8345, 0
  %v8398 = vsel %vm1675, %v8347, 0
  %v8401 = vsel %vm1675, %v8349, 0
  %v8404 = vsel %vm1675, %v8351, 0
  %v8407 = vsel %vm1675, %v8353, 0
  %v8410 = vsel %vm1675, %v8355, 0
  %v8413 = vsel %vm1675, %v8357, 0
  %v8416 = vsel %vm1675, %v8359, 0
  %v8419 = vsel %vm1675, %v8361, 0
  %v8422 = vsel %vm1675, %v8363, 0
  %8424 = vmatprep.subr.bf16.mxu0 0
  %8425 = vmatpush1.bf16.msra.mxu0 0
  %8426 = vmatprep.subr.bf16.mxu0 0
  %8427 = vmatpush1.bf16.msra.mxu0 0
  %8428 = vmatprep.subr.bf16.mxu0 0
  %8429 = vmatpush1.bf16.msra.mxu0 0
  %8430 = vmatprep.subr.bf16.mxu0 0
  %8431 = vmatpush1.bf16.msra.mxu0 0
  %8432 = vmatprep.subr.bf16.mxu0 0
  %8433 = vmatpush1.bf16.msra.mxu0 0
  %8434 = vmatprep.subr.bf16.mxu0 0
  %8435 = vmatpush1.bf16.msra.mxu0 0
  %8436 = vmatprep.subr.bf16.mxu0 0
  %8437 = vmatpush1.bf16.msra.mxu0 0
  %8438 = vmatprep.subr.bf16.mxu0 0
  %8439 = vmatpush1.bf16.msra.mxu0 %v8368
  %8440 = vmatprep.subr.bf16.mxu0 0
  %8441 = vmatpush2.bf16.msra.mxu0 0
  %8442 = vmatprep.subr.bf16.mxu0 0
  %8443 = vmatpush2.bf16.msra.mxu0 0
  %8444 = vmatprep.subr.bf16.mxu0 0
  %8445 = vmatpush2.bf16.msra.mxu0 0
  %8446 = vmatprep.subr.bf16.mxu0 0
  %8447 = vmatpush2.bf16.msra.mxu0 0
  %8448 = vmatprep.subr.bf16.mxu0 0
  %8449 = vmatpush2.bf16.msra.mxu0 0
  %8450 = vmatprep.subr.bf16.mxu0 0
  %8451 = vmatpush2.bf16.msra.mxu0 0
  %8452 = vmatprep.subr.bf16.mxu0 0
  %8453 = vmatpush2.bf16.msra.mxu0 0
  %8454 = vmatprep.subr.bf16.mxu0 0
  %8455 = vmatpush2.bf16.msra.mxu0 0
  %8456 = vmatprep.mubr.bf16.mxu0 0
  %8457 = vmatmul.mubr.bf16.gmra.mxu0 %v8371
  %v8458 = vpop.f32.mrf.mxu0
  %v8459 = vadd.f32 0.0, %v8458
  %v8460 = vpop.f32.mrf.mxu0
  %v8461 = vpop.f32.mrf.mxu0
  %v8462 = vadd.f32 0.0, %v8461
  %v8463 = vpop.f32.mrf.mxu0
  %8464 = vmatprep.mubr.bf16.mxu0 0
  %8465 = vmatmul.mubr.bf16.gmra.mxu0 %v8374
  %v8466 = vpop.f32.mrf.mxu0
  %v8467 = vadd.f32 0.0, %v8466
  %v8468 = vpop.f32.mrf.mxu0
  %v8469 = vpop.f32.mrf.mxu0
  %v8470 = vadd.f32 0.0, %v8469
  %v8471 = vpop.f32.mrf.mxu0
  %8472 = vmatprep.mubr.bf16.mxu0 0
  %8473 = vmatmul.mubr.bf16.gmra.mxu0 %v8377
  %v8474 = vpop.f32.mrf.mxu0
  %v8475 = vadd.f32 0.0, %v8474
  %v8476 = vpop.f32.mrf.mxu0
  %v8477 = vpop.f32.mrf.mxu0
  %v8478 = vadd.f32 0.0, %v8477
  %v8479 = vpop.f32.mrf.mxu0
  %8480 = vmatprep.mubr.bf16.mxu0 0
  %8481 = vmatmul.mubr.bf16.gmra.mxu0 %v8380
  %v8482 = vpop.f32.mrf.mxu0
  %v8483 = vadd.f32 0.0, %v8482
  %v8484 = vpop.f32.mrf.mxu0
  %v8485 = vpop.f32.mrf.mxu0
  %v8486 = vadd.f32 0.0, %v8485
  %v8487 = vpop.f32.mrf.mxu0
  %8488 = vmatprep.mubr.bf16.mxu0 0
  %8489 = vmatmul.mubr.bf16.gmra.mxu0 %v8383
  %v8490 = vpop.f32.mrf.mxu0
  %v8491 = vadd.f32 0.0, %v8490
  %v8492 = vpop.f32.mrf.mxu0
  %v8493 = vpop.f32.mrf.mxu0
  %v8494 = vadd.f32 0.0, %v8493
  %v8495 = vpop.f32.mrf.mxu0
  %8496 = vmatprep.mubr.bf16.mxu0 0
  %8497 = vmatmul.mubr.bf16.gmra.mxu0 %v8386
  %v8498 = vpop.f32.mrf.mxu0
  %v8499 = vadd.f32 0.0, %v8498
  %v8500 = vpop.f32.mrf.mxu0
  %v8501 = vpop.f32.mrf.mxu0
  %v8502 = vadd.f32 0.0, %v8501
  %v8503 = vpop.f32.mrf.mxu0
  %8504 = vmatprep.mubr.bf16.mxu0 0
  %8505 = vmatmul.mubr.bf16.gmra.mxu0 %v8389
  %v8506 = vpop.f32.mrf.mxu0
  %v8507 = vadd.f32 0.0, %v8506
  %v8508 = vpop.f32.mrf.mxu0
  %v8509 = vpop.f32.mrf.mxu0
  %v8510 = vadd.f32 0.0, %v8509
  %v8511 = vpop.f32.mrf.mxu0
  %8512 = vmatprep.mubr.bf16.mxu0 0
  %8513 = vmatmul.mubr.bf16.gmra.mxu0 %v8392
  %v8514 = vpop.f32.mrf.mxu0
  %v8515 = vadd.f32 0.0, %v8514
  %v8516 = vpop.f32.mrf.mxu0
  %v8517 = vpop.f32.mrf.mxu0
  %v8518 = vadd.f32 0.0, %v8517
  %v8519 = vpop.f32.mrf.mxu0
  %8520 = vmatprep.mubr.bf16.mxu0 0
  %8521 = vmatmul.mubr.bf16.gmra.mxu0 %v8395
  %v8522 = vpop.f32.mrf.mxu0
  %v8523 = vadd.f32 0.0, %v8522
  %v8524 = vpop.f32.mrf.mxu0
  %v8525 = vpop.f32.mrf.mxu0
  %v8526 = vadd.f32 0.0, %v8525
  %v8527 = vpop.f32.mrf.mxu0
  %8528 = vmatprep.mubr.bf16.mxu0 0
  %8529 = vmatmul.mubr.bf16.gmra.mxu0 %v8398
  %v8530 = vpop.f32.mrf.mxu0
  %v8531 = vadd.f32 0.0, %v8530
  %v8532 = vpop.f32.mrf.mxu0
  %v8533 = vpop.f32.mrf.mxu0
  %v8534 = vadd.f32 0.0, %v8533
  %v8535 = vpop.f32.mrf.mxu0
  %8536 = vmatprep.mubr.bf16.mxu0 0
  %8537 = vmatmul.mubr.bf16.gmra.mxu0 %v8401
  %v8538 = vpop.f32.mrf.mxu0
  %v8539 = vadd.f32 0.0, %v8538
  %v8540 = vpop.f32.mrf.mxu0
  %v8541 = vpop.f32.mrf.mxu0
  %v8542 = vadd.f32 0.0, %v8541
  %v8543 = vpop.f32.mrf.mxu0
  %8544 = vmatprep.mubr.bf16.mxu0 0
  %8545 = vmatmul.mubr.bf16.gmra.mxu0 %v8404
  %v8546 = vpop.f32.mrf.mxu0
  %v8547 = vadd.f32 0.0, %v8546
  %v8548 = vpop.f32.mrf.mxu0
  %v8549 = vpop.f32.mrf.mxu0
  %v8550 = vadd.f32 0.0, %v8549
  %v8551 = vpop.f32.mrf.mxu0
  %8552 = vmatprep.mubr.bf16.mxu0 0
  %8553 = vmatmul.mubr.bf16.gmra.mxu0 %v8407
  %v8554 = vpop.f32.mrf.mxu0
  %v8555 = vadd.f32 0.0, %v8554
  %v8556 = vpop.f32.mrf.mxu0
  %v8557 = vpop.f32.mrf.mxu0
  %v8558 = vadd.f32 0.0, %v8557
  %v8559 = vpop.f32.mrf.mxu0
  %8560 = vmatprep.mubr.bf16.mxu0 0
  %8561 = vmatmul.mubr.bf16.gmra.mxu0 %v8410
  %v8562 = vpop.f32.mrf.mxu0
  %v8563 = vadd.f32 0.0, %v8562
  %v8564 = vpop.f32.mrf.mxu0
  %v8565 = vpop.f32.mrf.mxu0
  %v8566 = vadd.f32 0.0, %v8565
  %v8567 = vpop.f32.mrf.mxu0
  %8568 = vmatprep.mubr.bf16.mxu0 0
  %8569 = vmatmul.mubr.bf16.gmra.mxu0 %v8413
  %v8570 = vpop.f32.mrf.mxu0
  %v8571 = vadd.f32 0.0, %v8570
  %v8572 = vpop.f32.mrf.mxu0
  %v8573 = vpop.f32.mrf.mxu0
  %v8574 = vadd.f32 0.0, %v8573
  %v8575 = vpop.f32.mrf.mxu0
  %8576 = vmatprep.mubr.bf16.mxu0 0
  %8577 = vmatmul.mubr.bf16.gmra.mxu0 %v8416
  %v8578 = vpop.f32.mrf.mxu0
  %v8579 = vadd.f32 0.0, %v8578
  %v8580 = vpop.f32.mrf.mxu0
  %v8581 = vpop.f32.mrf.mxu0
  %v8582 = vadd.f32 0.0, %v8581
  %v8583 = vpop.f32.mrf.mxu0
  %8584 = vmatprep.mubr.bf16.mxu0 0
  %8585 = vmatmul.mubr.bf16.gmra.mxu0 %v8419
  %v8586 = vpop.f32.mrf.mxu0
  %v8587 = vadd.f32 0.0, %v8586
  %v8588 = vpop.f32.mrf.mxu0
  %v8589 = vpop.f32.mrf.mxu0
  %v8590 = vadd.f32 0.0, %v8589
  %v8591 = vpop.f32.mrf.mxu0
  %8592 = vmatprep.mubr.bf16.mxu0 0
  %8593 = vmatmul.mubr.bf16.gmra.mxu0 %v8422
  %v8594 = vpop.f32.mrf.mxu0
  %v8595 = vadd.f32 0.0, %v8594
  %v8596 = vpop.f32.mrf.mxu0
  %v8597 = vpop.f32.mrf.mxu0
  %v8598 = vadd.f32 0.0, %v8597
  %v8599 = vpop.f32.mrf.mxu0
  %8600 = vdwg.mxu0
  %v8601 = vadd.f32 %v7328, %v8459
  %v8602 = vadd.f32 %v7329, %v8462
  %v8603 = vadd.f32 %v7330, %v8467
  %v8604 = vadd.f32 %v7331, %v8470
  %v8605 = vadd.f32 %v7332, %v8475
  %v8606 = vadd.f32 %v7333, %v8478
  %v8607 = vadd.f32 %v7334, %v8483
  %v8608 = vadd.f32 %v7335, %v8486
  %v8609 = vadd.f32 %v7336, %v8491
  %v8610 = vadd.f32 %v7337, %v8494
  %v8611 = vadd.f32 %v7338, %v8499
  %v8612 = vadd.f32 %v7339, %v8502
  %v8613 = vadd.f32 %v7340, %v8507
  %v8614 = vadd.f32 %v7341, %v8510
  %v8615 = vadd.f32 %v7342, %v8515
  %v8616 = vadd.f32 %v7343, %v8518
  %v8617 = vadd.f32 %v7344, %v8523
  %v8618 = vadd.f32 %v7345, %v8526
  %v8619 = vadd.f32 %v7346, %v8531
  %v8620 = vadd.f32 %v7347, %v8534
  %v8621 = vadd.f32 %v7348, %v8539
  %v8622 = vadd.f32 %v7349, %v8542
  %v8623 = vadd.f32 %v7350, %v8547
  %v8624 = vadd.f32 %v7351, %v8550
  %v8625 = vadd.f32 %v7352, %v8555
  %v8626 = vadd.f32 %v7353, %v8558
  %v8627 = vadd.f32 %v7354, %v8563
  %v8628 = vadd.f32 %v7355, %v8566
  %v8629 = vadd.f32 %v7356, %v8571
  %v8630 = vadd.f32 %v7357, %v8574
  %v8631 = vadd.f32 %v7358, %v8579
  %v8632 = vadd.f32 %v7359, %v8582
  %v8633 = vadd.f32 %v7360, %v8587
  %v8634 = vadd.f32 %v7361, %v8590
  %v8635 = vadd.f32 %v7362, %v8595
  %v8636 = vadd.f32 %v7363, %v8598
  %v8637 = vmul.f32 %v568, %v7730
  %v8638 = vmul.f32 %v569, %v7731
  %v8639 = vmul.f32 %v570, %v7732
  %v8640 = vmul.f32 %v571, %v7733
  %v8641 = vmul.f32 %v572, %v7734
  %v8642 = vmul.f32 %v573, %v7735
  %v8643 = vmul.f32 %v574, %v7736
  %v8644 = vmul.f32 %v575, %v7737
  %v8645 = vmul.f32 %v576, %v7738
  %v8646 = vmul.f32 %v577, %v7739
  %v8647 = vmul.f32 %v578, %v7740
  %v8648 = vmul.f32 %v579, %v7741
  %v8649 = vmul.f32 %v580, %v7742
  %v8650 = vmul.f32 %v581, %v7743
  %v8651 = vmul.f32 %v582, %v7744
  %v8652 = vmul.f32 %v583, %v7745
  %v8653 = vmul.f32 %v584, %v7746
  %v8654 = vmul.f32 %v585, %v7747
  %v8655 = vmul.f32 %v586, %v7748
  %v8656 = vmul.f32 %v587, %v7749
  %v8657 = vmul.f32 %v588, %v7750
  %v8658 = vmul.f32 %v589, %v7751
  %v8659 = vmul.f32 %v590, %v7752
  %v8660 = vmul.f32 %v591, %v7753
  %v8661 = vmul.f32 %v592, %v7754
  %v8662 = vmul.f32 %v593, %v7755
  %v8663 = vmul.f32 %v594, %v7756
  %v8664 = vmul.f32 %v595, %v7757
  %v8665 = vmul.f32 %v596, %v7758
  %v8666 = vmul.f32 %v597, %v7759
  %v8667 = vmul.f32 %v598, %v7760
  %v8668 = vmul.f32 %v599, %v7761
  %v8669 = vmul.f32 %v600, %v7762
  %v8670 = vmul.f32 %v601, %v7763
  %v8671 = vmul.f32 %v602, %v7764
  %v8672 = vmul.f32 %v603, %v7765
  %v8673 = vadd.f32 %v8284, %v8637
  %v8674 = vadd.f32 %v8285, %v8638
  %v8675 = vadd.f32 %v8286, %v8639
  %v8676 = vadd.f32 %v8287, %v8640
  %v8677 = vadd.f32 %v8288, %v8641
  %v8678 = vadd.f32 %v8289, %v8642
  %v8679 = vadd.f32 %v8290, %v8643
  %v8680 = vadd.f32 %v8291, %v8644
  %v8681 = vadd.f32 %v8292, %v8645
  %v8682 = vadd.f32 %v8293, %v8646
  %v8683 = vadd.f32 %v8294, %v8647
  %v8684 = vadd.f32 %v8295, %v8648
  %v8685 = vadd.f32 %v8296, %v8649
  %v8686 = vadd.f32 %v8297, %v8650
  %v8687 = vadd.f32 %v8298, %v8651
  %v8688 = vadd.f32 %v8299, %v8652
  %v8689 = vadd.f32 %v8300, %v8653
  %v8690 = vadd.f32 %v8301, %v8654
  %v8691 = vadd.f32 %v8302, %v8655
  %v8692 = vadd.f32 %v8303, %v8656
  %v8693 = vadd.f32 %v8304, %v8657
  %v8694 = vadd.f32 %v8305, %v8658
  %v8695 = vadd.f32 %v8306, %v8659
  %v8696 = vadd.f32 %v8307, %v8660
  %v8697 = vadd.f32 %v8308, %v8661
  %v8698 = vadd.f32 %v8309, %v8662
  %v8699 = vadd.f32 %v8310, %v8663
  %v8700 = vadd.f32 %v8311, %v8664
  %v8701 = vadd.f32 %v8312, %v8665
  %v8702 = vadd.f32 %v8313, %v8666
  %v8703 = vadd.f32 %v8314, %v8667
  %v8704 = vadd.f32 %v8315, %v8668
  %v8705 = vadd.f32 %v8316, %v8669
  %v8706 = vadd.f32 %v8317, %v8670
  %v8707 = vadd.f32 %v8318, %v8671
  %v8708 = vadd.f32 %v8319, %v8672
  %v8709 = vmul.f32 %v676, %v8601
  %v8710 = vmul.f32 %v677, %v8602
  %v8711 = vmul.f32 %v678, %v8603
  %v8712 = vmul.f32 %v679, %v8604
  %v8713 = vmul.f32 %v680, %v8605
  %v8714 = vmul.f32 %v681, %v8606
  %v8715 = vmul.f32 %v682, %v8607
  %v8716 = vmul.f32 %v683, %v8608
  %v8717 = vmul.f32 %v684, %v8609
  %v8718 = vmul.f32 %v685, %v8610
  %v8719 = vmul.f32 %v686, %v8611
  %v8720 = vmul.f32 %v687, %v8612
  %v8721 = vmul.f32 %v688, %v8613
  %v8722 = vmul.f32 %v689, %v8614
  %v8723 = vmul.f32 %v690, %v8615
  %v8724 = vmul.f32 %v691, %v8616
  %v8725 = vmul.f32 %v692, %v8617
  %v8726 = vmul.f32 %v693, %v8618
  %v8727 = vmul.f32 %v694, %v8619
  %v8728 = vmul.f32 %v695, %v8620
  %v8729 = vmul.f32 %v696, %v8621
  %v8730 = vmul.f32 %v697, %v8622
  %v8731 = vmul.f32 %v698, %v8623
  %v8732 = vmul.f32 %v699, %v8624
  %v8733 = vmul.f32 %v700, %v8625
  %v8734 = vmul.f32 %v701, %v8626
  %v8735 = vmul.f32 %v702, %v8627
  %v8736 = vmul.f32 %v703, %v8628
  %v8737 = vmul.f32 %v704, %v8629
  %v8738 = vmul.f32 %v705, %v8630
  %v8739 = vmul.f32 %v706, %v8631
  %v8740 = vmul.f32 %v707, %v8632
  %v8741 = vmul.f32 %v708, %v8633
  %v8742 = vmul.f32 %v709, %v8634
  %v8743 = vmul.f32 %v710, %v8635
  %v8744 = vmul.f32 %v711, %v8636
  %v8745 = vadd.f32 %v8673, %v8709
  %v8746 = vadd.f32 %v8674, %v8710
  %v8747 = vadd.f32 %v8675, %v8711
  %v8748 = vadd.f32 %v8676, %v8712
  %v8749 = vadd.f32 %v8677, %v8713
  %v8750 = vadd.f32 %v8678, %v8714
  %v8751 = vadd.f32 %v8679, %v8715
  %v8752 = vadd.f32 %v8680, %v8716
  %v8753 = vadd.f32 %v8681, %v8717
  %v8754 = vadd.f32 %v8682, %v8718
  %v8755 = vadd.f32 %v8683, %v8719
  %v8756 = vadd.f32 %v8684, %v8720
  %v8757 = vadd.f32 %v8685, %v8721
  %v8758 = vadd.f32 %v8686, %v8722
  %v8759 = vadd.f32 %v8687, %v8723
  %v8760 = vadd.f32 %v8688, %v8724
  %v8761 = vadd.f32 %v8689, %v8725
  %v8762 = vadd.f32 %v8690, %v8726
  %v8763 = vadd.f32 %v8691, %v8727
  %v8764 = vadd.f32 %v8692, %v8728
  %v8765 = vadd.f32 %v8693, %v8729
  %v8766 = vadd.f32 %v8694, %v8730
  %v8767 = vadd.f32 %v8695, %v8731
  %v8768 = vadd.f32 %v8696, %v8732
  %v8769 = vadd.f32 %v8697, %v8733
  %v8770 = vadd.f32 %v8698, %v8734
  %v8771 = vadd.f32 %v8699, %v8735
  %v8772 = vadd.f32 %v8700, %v8736
  %v8773 = vadd.f32 %v8701, %v8737
  %v8774 = vadd.f32 %v8702, %v8738
  %v8775 = vadd.f32 %v8703, %v8739
  %v8776 = vadd.f32 %v8704, %v8740
  %v8777 = vadd.f32 %v8705, %v8741
  %v8778 = vadd.f32 %v8706, %v8742
  %v8779 = vadd.f32 %v8707, %v8743
  %v8780 = vadd.f32 %v8708, %v8744
  %v8781 = vld [vmem:[%s4] sm:$0x1]
  %v8783 = vlaneseq
  %v8784 = vshrl.u32 %v8783, 7
  %v8785 = vsub.s32 0, %v8784
  %v8786 = vrot.slane %v8781, %v8785
  %v8788 = vadd.f32 %v8745, %v8786
  %v8789 = vadd.f32 %v8746, %v8786
  %v8790 = vadd.f32 %v8747, %v8786
  %v8791 = vadd.f32 %v8748, %v8786
  %v8792 = vadd.f32 %v8749, %v8786
  %v8793 = vadd.f32 %v8750, %v8786
  %v8794 = vadd.f32 %v8751, %v8786
  %v8795 = vadd.f32 %v8752, %v8786
  %v8796 = vadd.f32 %v8753, %v8786
  %v8797 = vadd.f32 %v8754, %v8786
  %v8798 = vadd.f32 %v8755, %v8786
  %v8799 = vadd.f32 %v8756, %v8786
  %v8800 = vadd.f32 %v8757, %v8786
  %v8801 = vadd.f32 %v8758, %v8786
  %v8802 = vadd.f32 %v8759, %v8786
  %v8803 = vadd.f32 %v8760, %v8786
  %v8804 = vadd.f32 %v8761, %v8786
  %v8805 = vadd.f32 %v8762, %v8786
  %v8806 = vadd.f32 %v8763, %v8786
  %v8807 = vadd.f32 %v8764, %v8786
  %v8808 = vadd.f32 %v8765, %v8786
  %v8809 = vadd.f32 %v8766, %v8786
  %v8810 = vadd.f32 %v8767, %v8786
  %v8811 = vadd.f32 %v8768, %v8786
  %v8812 = vadd.f32 %v8769, %v8786
  %v8813 = vadd.f32 %v8770, %v8786
  %v8814 = vadd.f32 %v8771, %v8786
  %v8815 = vadd.f32 %v8772, %v8786
  %v8816 = vadd.f32 %v8773, %v8786
  %v8817 = vadd.f32 %v8774, %v8786
  %v8818 = vadd.f32 %v8775, %v8786
  %v8819 = vadd.f32 %v8776, %v8786
  %v8820 = vadd.f32 %v8777, %v8786
  %v8821 = vadd.f32 %v8778, %v8786
  %v8822 = vadd.f32 %v8779, %v8786
  %v8823 = vadd.f32 %v8780, %v8786
  %v8824 = vmax.f32 %v8788, 0.0
  %v8825 = vmax.f32 %v8789, 0.0
  %v8826 = vmax.f32 %v8790, 0.0
  %v8827 = vmax.f32 %v8791, 0.0
  %v8828 = vmax.f32 %v8792, 0.0
  %v8829 = vmax.f32 %v8793, 0.0
  %v8830 = vmax.f32 %v8794, 0.0
  %v8831 = vmax.f32 %v8795, 0.0
  %v8832 = vmax.f32 %v8796, 0.0
  %v8833 = vmax.f32 %v8797, 0.0
  %v8834 = vmax.f32 %v8798, 0.0
  %v8835 = vmax.f32 %v8799, 0.0
  %v8836 = vmax.f32 %v8800, 0.0
  %v8837 = vmax.f32 %v8801, 0.0
  %v8838 = vmax.f32 %v8802, 0.0
  %v8839 = vmax.f32 %v8803, 0.0
  %v8840 = vmax.f32 %v8804, 0.0
  %v8841 = vmax.f32 %v8805, 0.0
  %v8842 = vmax.f32 %v8806, 0.0
  %v8843 = vmax.f32 %v8807, 0.0
  %v8844 = vmax.f32 %v8808, 0.0
  %v8845 = vmax.f32 %v8809, 0.0
  %v8846 = vmax.f32 %v8810, 0.0
  %v8847 = vmax.f32 %v8811, 0.0
  %v8848 = vmax.f32 %v8812, 0.0
  %v8849 = vmax.f32 %v8813, 0.0
  %v8850 = vmax.f32 %v8814, 0.0
  %v8851 = vmax.f32 %v8815, 0.0
  %v8852 = vmax.f32 %v8816, 0.0
  %v8853 = vmax.f32 %v8817, 0.0
  %v8854 = vmax.f32 %v8818, 0.0
  %v8855 = vmax.f32 %v8819, 0.0
  %v8856 = vmax.f32 %v8820, 0.0
  %v8857 = vmax.f32 %v8821, 0.0
  %v8858 = vmax.f32 %v8822, 0.0
  %v8859 = vmax.f32 %v8823, 0.0
  %v8860 = vpack.c.bf16 %v8825, %v8824
  %v8861 = vpack.c.bf16 %v8827, %v8826
  %v8862 = vpack.c.bf16 %v8829, %v8828
  %v8863 = vpack.c.bf16 %v8831, %v8830
  %v8864 = vpack.c.bf16 %v8833, %v8832
  %v8865 = vpack.c.bf16 %v8835, %v8834
  %v8866 = vpack.c.bf16 %v8837, %v8836
  %v8867 = vpack.c.bf16 %v8839, %v8838
  %v8868 = vpack.c.bf16 %v8841, %v8840
  %v8869 = vpack.c.bf16 %v8843, %v8842
  %v8870 = vpack.c.bf16 %v8845, %v8844
  %v8871 = vpack.c.bf16 %v8847, %v8846
  %v8872 = vpack.c.bf16 %v8849, %v8848
  %v8873 = vpack.c.bf16 %v8851, %v8850
  %v8874 = vpack.c.bf16 %v8853, %v8852
  %v8875 = vpack.c.bf16 %v8855, %v8854
  %v8876 = vpack.c.bf16 %v8857, %v8856
  %v8877 = vpack.c.bf16 %v8859, %v8858
  %vm8878 = vcmask 253952
  %vm8879 = vmand %vm8878, %vm744
  %v8880 = vld [vmem:[#allocation4] sm:$0x1]
  %v8881 = vsel %vm8879, 0, %v8880
  %8882 = vst [vmem:[#allocation4] sm:$0x1] %v8881
  %vm8883 = vmand %vm8878, %vm1068
  %v8884 = vld [vmem:[#allocation4 + $0x90] sm:$0x1]
  %v8885 = vsel %vm8883, 0, %v8884
  %8886 = vst [vmem:[#allocation4 + $0x90] sm:$0x1] %v8885
  %v8905 = vunpack.c.l.b16 %v8860
  %v8906 = vunpack.c.h.b16 %v8860
  %v8907 = vunpack.c.l.b16 %v8861
  %v8908 = vunpack.c.h.b16 %v8861
  %v8909 = vunpack.c.l.b16 %v8862
  %v8910 = vunpack.c.h.b16 %v8862
  %v8911 = vunpack.c.l.b16 %v8863
  %v8912 = vunpack.c.h.b16 %v8863
  %v8913 = vunpack.c.l.b16 %v8864
  %v8914 = vunpack.c.h.b16 %v8864
  %v8915 = vunpack.c.l.b16 %v8865
  %v8916 = vunpack.c.h.b16 %v8865
  %v8917 = vunpack.c.l.b16 %v8866
  %v8918 = vunpack.c.h.b16 %v8866
  %v8919 = vunpack.c.l.b16 %v8867
  %v8920 = vunpack.c.h.b16 %v8867
  %v8921 = vunpack.c.l.b16 %v8868
  %v8922 = vunpack.c.h.b16 %v8868
  %v8923 = vunpack.c.l.b16 %v8869
  %v8924 = vunpack.c.h.b16 %v8869
  %v8925 = vunpack.c.l.b16 %v8870
  %v8926 = vunpack.c.h.b16 %v8870
  %v8927 = vunpack.c.l.b16 %v8871
  %v8928 = vunpack.c.h.b16 %v8871
  %v8929 = vunpack.c.l.b16 %v8872
  %v8930 = vunpack.c.h.b16 %v8872
  %v8931 = vunpack.c.l.b16 %v8873
  %v8932 = vunpack.c.h.b16 %v8873
  %v8933 = vunpack.c.l.b16 %v8874
  %v8934 = vunpack.c.h.b16 %v8874
  %v8935 = vunpack.c.l.b16 %v8875
  %v8936 = vunpack.c.h.b16 %v8875
  %v8937 = vunpack.c.l.b16 %v8876
  %v8938 = vunpack.c.h.b16 %v8876
  %v8939 = vunpack.c.l.b16 %v8877
  %v8940 = vunpack.c.h.b16 %v8877
  %v8941 = vpack.c.b16 %v8905, %v8905
  %v8942 = vpack.c.b16 %v8906, %v8906
  %v8943 = vpack.c.b16 %v8907, %v8907
  %v8944 = vpack.c.b16 %v8908, %v8908
  %v8945 = vpack.c.b16 %v8909, %v8909
  %v8946 = vpack.c.b16 %v8910, %v8910
  %v8947 = vpack.c.b16 %v8911, %v8911
  %v8948 = vpack.c.b16 %v8912, %v8912
  %v8949 = vpack.c.b16 %v8913, %v8913
  %v8950 = vpack.c.b16 %v8914, %v8914
  %v8951 = vpack.c.b16 %v8915, %v8915
  %v8952 = vpack.c.b16 %v8916, %v8916
  %v8953 = vpack.c.b16 %v8917, %v8917
  %v8954 = vpack.c.b16 %v8918, %v8918
  %v8955 = vpack.c.b16 %v8919, %v8919
  %v8956 = vpack.c.b16 %v8920, %v8920
  %v8957 = vpack.c.b16 %v8921, %v8921
  %v8958 = vpack.c.b16 %v8922, %v8922
  %v8959 = vpack.c.b16 %v8923, %v8923
  %v8960 = vpack.c.b16 %v8924, %v8924
  %v8961 = vpack.c.b16 %v8925, %v8925
  %v8962 = vpack.c.b16 %v8926, %v8926
  %v8963 = vpack.c.b16 %v8927, %v8927
  %v8964 = vpack.c.b16 %v8928, %v8928
  %v8965 = vpack.c.b16 %v8929, %v8929
  %v8966 = vpack.c.b16 %v8930, %v8930
  %v8967 = vpack.c.b16 %v8931, %v8931
  %v8968 = vpack.c.b16 %v8932, %v8932
  %v8969 = vpack.c.b16 %v8933, %v8933
  %v8970 = vpack.c.b16 %v8934, %v8934
  %v8971 = vpack.c.b16 %v8935, %v8935
  %v8972 = vpack.c.b16 %v8936, %v8936
  %v8973 = vpack.c.b16 %v8937, %v8937
  %v8974 = vpack.c.b16 %v8938, %v8938
  %v8975 = vpack.c.b16 %v8939, %v8939
  %v8976 = vpack.c.b16 %v8940, %v8940
  %v8978 = vshrl.u32 %v8941, 16
  %v8980 = vrot.slane %v8978, 7
  %v8981 = vshll.u32 %v8941, 16
  %v8983 = vor.u32 %v8980, %v8981
  %v8984 = vrot.slane %v8980, 4
  %v8986 = vshrl.u32 %v8942, 16
  %v8988 = vrot.slane %v8986, 7
  %v8989 = vshll.u32 %v8942, 16
  %v8991 = vor.u32 %v8988, %v8989
  %v8992 = vsel %vm746, %v8984, %v8991
  %v8993 = vrot.slane %v8988, 4
  %v8995 = vshrl.u32 %v8943, 16
  %v8997 = vrot.slane %v8995, 7
  %v8998 = vshll.u32 %v8943, 16
  %v9000 = vor.u32 %v8997, %v8998
  %v9001 = vsel %vm746, %v8993, %v9000
  %v9002 = vrot.slane %v8997, 4
  %v9004 = vshrl.u32 %v8944, 16
  %v9006 = vrot.slane %v9004, 7
  %v9007 = vshll.u32 %v8944, 16
  %v9009 = vor.u32 %v9006, %v9007
  %v9010 = vsel %vm746, %v9002, %v9009
  %v9011 = vrot.slane %v9006, 4
  %v9013 = vshrl.u32 %v8945, 16
  %v9015 = vrot.slane %v9013, 7
  %v9016 = vshll.u32 %v8945, 16
  %v9018 = vor.u32 %v9015, %v9016
  %v9019 = vsel %vm746, %v9011, %v9018
  %v9020 = vrot.slane %v9015, 4
  %v9022 = vshrl.u32 %v8946, 16
  %v9024 = vrot.slane %v9022, 7
  %v9025 = vshll.u32 %v8946, 16
  %v9027 = vor.u32 %v9024, %v9025
  %v9028 = vsel %vm746, %v9020, %v9027
  %v9029 = vrot.slane %v9024, 4
  %v9031 = vshrl.u32 %v8947, 16
  %v9033 = vrot.slane %v9031, 7
  %v9034 = vshll.u32 %v8947, 16
  %v9036 = vor.u32 %v9033, %v9034
  %v9037 = vsel %vm746, %v9029, %v9036
  %v9038 = vrot.slane %v9033, 4
  %v9040 = vshrl.u32 %v8948, 16
  %v9042 = vrot.slane %v9040, 7
  %v9043 = vshll.u32 %v8948, 16
  %v9045 = vor.u32 %v9042, %v9043
  %v9046 = vsel %vm746, %v9038, %v9045
  %v9047 = vrot.slane %v9042, 4
  %v9049 = vshrl.u32 %v8949, 16
  %v9051 = vrot.slane %v9049, 7
  %v9052 = vshll.u32 %v8949, 16
  %v9054 = vor.u32 %v9051, %v9052
  %v9055 = vsel %vm746, %v9047, %v9054
  %v9056 = vrot.slane %v9051, 4
  %v9058 = vshrl.u32 %v8950, 16
  %v9060 = vrot.slane %v9058, 7
  %v9061 = vshll.u32 %v8950, 16
  %v9063 = vor.u32 %v9060, %v9061
  %v9064 = vsel %vm746, %v9056, %v9063
  %v9065 = vrot.slane %v9060, 4
  %v9067 = vshrl.u32 %v8951, 16
  %v9069 = vrot.slane %v9067, 7
  %v9070 = vshll.u32 %v8951, 16
  %v9072 = vor.u32 %v9069, %v9070
  %v9073 = vsel %vm746, %v9065, %v9072
  %v9074 = vrot.slane %v9069, 4
  %v9076 = vshrl.u32 %v8952, 16
  %v9078 = vrot.slane %v9076, 7
  %v9079 = vshll.u32 %v8952, 16
  %v9081 = vor.u32 %v9078, %v9079
  %v9082 = vsel %vm746, %v9074, %v9081
  %v9083 = vrot.slane %v9078, 4
  %v9085 = vshrl.u32 %v8953, 16
  %v9087 = vrot.slane %v9085, 7
  %v9088 = vshll.u32 %v8953, 16
  %v9090 = vor.u32 %v9087, %v9088
  %v9091 = vsel %vm746, %v9083, %v9090
  %v9092 = vrot.slane %v9087, 4
  %v9094 = vshrl.u32 %v8954, 16
  %v9096 = vrot.slane %v9094, 7
  %v9097 = vshll.u32 %v8954, 16
  %v9099 = vor.u32 %v9096, %v9097
  %v9100 = vsel %vm746, %v9092, %v9099
  %v9101 = vrot.slane %v9096, 4
  %v9103 = vshrl.u32 %v8955, 16
  %v9105 = vrot.slane %v9103, 7
  %v9106 = vshll.u32 %v8955, 16
  %v9108 = vor.u32 %v9105, %v9106
  %v9109 = vsel %vm746, %v9101, %v9108
  %v9110 = vrot.slane %v9105, 4
  %v9112 = vshrl.u32 %v8956, 16
  %v9114 = vrot.slane %v9112, 7
  %v9115 = vshll.u32 %v8956, 16
  %v9117 = vor.u32 %v9114, %v9115
  %v9118 = vsel %vm746, %v9110, %v9117
  %v9119 = vrot.slane %v9114, 4
  %v9121 = vshrl.u32 %v8957, 16
  %v9123 = vrot.slane %v9121, 7
  %v9124 = vshll.u32 %v8957, 16
  %v9126 = vor.u32 %v9123, %v9124
  %v9127 = vsel %vm746, %v9119, %v9126
  %v9128 = vrot.slane %v9123, 4
  %v9130 = vshrl.u32 %v8958, 16
  %v9132 = vrot.slane %v9130, 7
  %v9133 = vshll.u32 %v8958, 16
  %v9135 = vor.u32 %v9132, %v9133
  %v9136 = vsel %vm746, %v9128, %v9135
  %v9137 = vrot.slane %v9132, 4
  %v9139 = vshrl.u32 %v8959, 16
  %v9141 = vrot.slane %v9139, 7
  %v9142 = vshll.u32 %v8959, 16
  %v9144 = vor.u32 %v9141, %v9142
  %v9145 = vsel %vm746, %v9137, %v9144
  %v9146 = vrot.slane %v9141, 4
  %v9148 = vshrl.u32 %v8960, 16
  %v9150 = vrot.slane %v9148, 7
  %v9151 = vshll.u32 %v8960, 16
  %v9153 = vor.u32 %v9150, %v9151
  %v9154 = vsel %vm746, %v9146, %v9153
  %v9155 = vrot.slane %v9150, 4
  %v9157 = vshrl.u32 %v8961, 16
  %v9159 = vrot.slane %v9157, 7
  %v9160 = vshll.u32 %v8961, 16
  %v9162 = vor.u32 %v9159, %v9160
  %v9163 = vsel %vm746, %v9155, %v9162
  %v9164 = vrot.slane %v9159, 4
  %v9166 = vshrl.u32 %v8962, 16
  %v9168 = vrot.slane %v9166, 7
  %v9169 = vshll.u32 %v8962, 16
  %v9171 = vor.u32 %v9168, %v9169
  %v9172 = vsel %vm746, %v9164, %v9171
  %v9173 = vrot.slane %v9168, 4
  %v9175 = vshrl.u32 %v8963, 16
  %v9177 = vrot.slane %v9175, 7
  %v9178 = vshll.u32 %v8963, 16
  %v9180 = vor.u32 %v9177, %v9178
  %v9181 = vsel %vm746, %v9173, %v9180
  %v9182 = vrot.slane %v9177, 4
  %v9184 = vshrl.u32 %v8964, 16
  %v9186 = vrot.slane %v9184, 7
  %v9187 = vshll.u32 %v8964, 16
  %v9189 = vor.u32 %v9186, %v9187
  %v9190 = vsel %vm746, %v9182, %v9189
  %v9191 = vrot.slane %v9186, 4
  %v9193 = vshrl.u32 %v8965, 16
  %v9195 = vrot.slane %v9193, 7
  %v9196 = vshll.u32 %v8965, 16
  %v9198 = vor.u32 %v9195, %v9196
  %v9199 = vsel %vm746, %v9191, %v9198
  %v9200 = vrot.slane %v9195, 4
  %v9202 = vshrl.u32 %v8966, 16
  %v9204 = vrot.slane %v9202, 7
  %v9205 = vshll.u32 %v8966, 16
  %v9207 = vor.u32 %v9204, %v9205
  %v9208 = vsel %vm746, %v9200, %v9207
  %v9209 = vrot.slane %v9204, 4
  %v9211 = vshrl.u32 %v8967, 16
  %v9213 = vrot.slane %v9211, 7
  %v9214 = vshll.u32 %v8967, 16
  %v9216 = vor.u32 %v9213, %v9214
  %v9217 = vsel %vm746, %v9209, %v9216
  %v9218 = vrot.slane %v9213, 4
  %v9220 = vshrl.u32 %v8968, 16
  %v9222 = vrot.slane %v9220, 7
  %v9223 = vshll.u32 %v8968, 16
  %v9225 = vor.u32 %v9222, %v9223
  %v9226 = vsel %vm746, %v9218, %v9225
  %v9227 = vrot.slane %v9222, 4
  %v9229 = vshrl.u32 %v8969, 16
  %v9231 = vrot.slane %v9229, 7
  %v9232 = vshll.u32 %v8969, 16
  %v9234 = vor.u32 %v9231, %v9232
  %v9235 = vsel %vm746, %v9227, %v9234
  %v9236 = vrot.slane %v9231, 4
  %v9238 = vshrl.u32 %v8970, 16
  %v9240 = vrot.slane %v9238, 7
  %v9241 = vshll.u32 %v8970, 16
  %v9243 = vor.u32 %v9240, %v9241
  %v9244 = vsel %vm746, %v9236, %v9243
  %v9245 = vrot.slane %v9240, 4
  %v9247 = vshrl.u32 %v8971, 16
  %v9249 = vrot.slane %v9247, 7
  %v9250 = vshll.u32 %v8971, 16
  %v9252 = vor.u32 %v9249, %v9250
  %v9253 = vsel %vm746, %v9245, %v9252
  %v9254 = vrot.slane %v9249, 4
  %v9256 = vshrl.u32 %v8972, 16
  %v9258 = vrot.slane %v9256, 7
  %v9259 = vshll.u32 %v8972, 16
  %v9261 = vor.u32 %v9258, %v9259
  %v9262 = vsel %vm746, %v9254, %v9261
  %v9263 = vrot.slane %v9258, 4
  %v9265 = vshrl.u32 %v8973, 16
  %v9267 = vrot.slane %v9265, 7
  %v9268 = vshll.u32 %v8973, 16
  %v9270 = vor.u32 %v9267, %v9268
  %v9271 = vsel %vm746, %v9263, %v9270
  %v9272 = vrot.slane %v9267, 4
  %v9274 = vshrl.u32 %v8974, 16
  %v9276 = vrot.slane %v9274, 7
  %v9277 = vshll.u32 %v8974, 16
  %v9279 = vor.u32 %v9276, %v9277
  %v9280 = vsel %vm746, %v9272, %v9279
  %v9281 = vrot.slane %v9276, 4
  %v9283 = vshrl.u32 %v8975, 16
  %v9285 = vrot.slane %v9283, 7
  %v9286 = vshll.u32 %v8975, 16
  %v9288 = vor.u32 %v9285, %v9286
  %v9289 = vsel %vm746, %v9281, %v9288
  %v9290 = vrot.slane %v9285, 4
  %v9292 = vshrl.u32 %v8976, 16
  %v9294 = vrot.slane %v9292, 7
  %v9295 = vshll.u32 %v8976, 16
  %v9297 = vor.u32 %v9294, %v9295
  %v9298 = vsel %vm746, %v9290, %v9297
  %v9299 = vrot.slane %v9294, 4
  %vm9337 = vcmask 257024
  %vm9338 = vmand %vm9337, %vm1068
  %v9339 = vld [vmem:[#allocation4] sm:$0xf]
  %v9340 = vsel %vm9338, %v8983, %v9339
  %9341 = vst [vmem:[#allocation4] sm:$0xf] %v9340
  %vm9342 = vcmask 257024
  %9343 = vst.msk [vmem:[#allocation4 + $0x4] sm:$0xf] %vm9342, %v8992
  %9344 = vst.msk [vmem:[#allocation4 + $0x8] sm:$0xf] %vm9342, %v9001
  %9345 = vst.msk [vmem:[#allocation4 + $0xc] sm:$0xf] %vm9342, %v9010
  %9346 = vst.msk [vmem:[#allocation4 + $0x10] sm:$0xf] %vm9342, %v9019
  %9347 = vst.msk [vmem:[#allocation4 + $0x14] sm:$0xf] %vm9342, %v9028
  %9348 = vst.msk [vmem:[#allocation4 + $0x18] sm:$0xf] %vm9342, %v9037
  %9349 = vst.msk [vmem:[#allocation4 + $0x1c] sm:$0xf] %vm9342, %v9046
  %9350 = vst.msk [vmem:[#allocation4 + $0x20] sm:$0xf] %vm9342, %v9055
  %9351 = vst.msk [vmem:[#allocation4 + $0x24] sm:$0xf] %vm9342, %v9064
  %9352 = vst.msk [vmem:[#allocation4 + $0x28] sm:$0xf] %vm9342, %v9073
  %9353 = vst.msk [vmem:[#allocation4 + $0x2c] sm:$0xf] %vm9342, %v9082
  %9354 = vst.msk [vmem:[#allocation4 + $0x30] sm:$0xf] %vm9342, %v9091
  %9355 = vst.msk [vmem:[#allocation4 + $0x34] sm:$0xf] %vm9342, %v9100
  %9356 = vst.msk [vmem:[#allocation4 + $0x38] sm:$0xf] %vm9342, %v9109
  %9357 = vst.msk [vmem:[#allocation4 + $0x3c] sm:$0xf] %vm9342, %v9118
  %9358 = vst.msk [vmem:[#allocation4 + $0x40] sm:$0xf] %vm9342, %v9127
  %9359 = vst.msk [vmem:[#allocation4 + $0x44] sm:$0xf] %vm9342, %v9136
  %9360 = vst.msk [vmem:[#allocation4 + $0x48] sm:$0xf] %vm9342, %v9145
  %9361 = vst.msk [vmem:[#allocation4 + $0x4c] sm:$0xf] %vm9342, %v9154
  %9362 = vst.msk [vmem:[#allocation4 + $0x50] sm:$0xf] %vm9342, %v9163
  %9363 = vst.msk [vmem:[#allocation4 + $0x54] sm:$0xf] %vm9342, %v9172
  %9364 = vst.msk [vmem:[#allocation4 + $0x58] sm:$0xf] %vm9342, %v9181
  %9365 = vst.msk [vmem:[#allocation4 + $0x5c] sm:$0xf] %vm9342, %v9190
  %9366 = vst.msk [vmem:[#allocation4 + $0x60] sm:$0xf] %vm9342, %v9199
  %9367 = vst.msk [vmem:[#allocation4 + $0x64] sm:$0xf] %vm9342, %v9208
  %9368 = vst.msk [vmem:[#allocation4 + $0x68] sm:$0xf] %vm9342, %v9217
  %9369 = vst.msk [vmem:[#allocation4 + $0x6c] sm:$0xf] %vm9342, %v9226
  %9370 = vst.msk [vmem:[#allocation4 + $0x70] sm:$0xf] %vm9342, %v9235
  %9371 = vst.msk [vmem:[#allocation4 + $0x74] sm:$0xf] %vm9342, %v9244
  %9372 = vst.msk [vmem:[#allocation4 + $0x78] sm:$0xf] %vm9342, %v9253
  %9373 = vst.msk [vmem:[#allocation4 + $0x7c] sm:$0xf] %vm9342, %v9262
  %9374 = vst.msk [vmem:[#allocation4 + $0x80] sm:$0xf] %vm9342, %v9271
  %9375 = vst.msk [vmem:[#allocation4 + $0x84] sm:$0xf] %vm9342, %v9280
  %9376 = vst.msk [vmem:[#allocation4 + $0x88] sm:$0xf] %vm9342, %v9289
  %9377 = vst.msk [vmem:[#allocation4 + $0x8c] sm:$0xf] %vm9342, %v9298
  %v9378 = vld [vmem:[#allocation4 + $0x90] sm:$0x1]
  %v9379 = vsel %vm8879, %v9299, %v9378
  %9380 = vst [vmem:[#allocation4 + $0x90] sm:$0x1] %v9379
  %v9381 = vld [vmem:[#allocation4] sm:$0xf]
  %v9382 = vsel %vm9338, 0, %v9381
  %9383 = vst [vmem:[#allocation4] sm:$0xf] %v9382
  %9384 = vst.msk [vmem:[#allocation4 + $0x4] sm:$0xf] %vm9342, 0
  %v9385 = vld [vmem:[#allocation4 + $0x8] sm:$0x1]
  %v9386 = vsel %vm8879, 0, %v9385
  %9387 = vst [vmem:[#allocation4 + $0x8] sm:$0x1] %v9386
  %v9388 = vld [vmem:[#allocation4 + $0x88] sm:$0xf]
  %v9389 = vsel %vm9338, 0, %v9388
  %9390 = vst [vmem:[#allocation4 + $0x88] sm:$0xf] %v9389
  %9391 = vst.msk [vmem:[#allocation4 + $0x8c] sm:$0xf] %vm9342, 0
  %v9392 = vld [vmem:[#allocation4 + $0x90] sm:$0x1]
  %v9393 = vsel %vm8879, 0, %v9392
  %9394 = vst [vmem:[#allocation4 + $0x90] sm:$0x1] %v9393
  %v9395 = vld [vmem:[#allocation4] sm:$0xf]
  %v9396 = vld [vmem:[#allocation4 + $0x4] sm:$0xf]
  %v9397 = vld [vmem:[#allocation4 + $0x8] sm:$0xf]
  %v9398 = vld [vmem:[#allocation4 + $0xc] sm:$0xf]
  %v9399 = vld [vmem:[#allocation4 + $0x10] sm:$0xf]
  %v9400 = vld [vmem:[#allocation4 + $0x14] sm:$0xf]
  %v9401 = vld [vmem:[#allocation4 + $0x18] sm:$0xf]
  %v9402 = vld [vmem:[#allocation4 + $0x1c] sm:$0xf]
  %v9403 = vld [vmem:[#allocation4 + $0x20] sm:$0xf]
  %v9404 = vld [vmem:[#allocation4 + $0x24] sm:$0xf]
  %v9405 = vld [vmem:[#allocation4 + $0x28] sm:$0xf]
  %v9406 = vld [vmem:[#allocation4 + $0x2c] sm:$0xf]
  %v9407 = vld [vmem:[#allocation4 + $0x30] sm:$0xf]
  %v9408 = vld [vmem:[#allocation4 + $0x34] sm:$0xf]
  %v9409 = vld [vmem:[#allocation4 + $0x38] sm:$0xf]
  %v9410 = vld [vmem:[#allocation4 + $0x3c] sm:$0xf]
  %v9411 = vld [vmem:[#allocation4 + $0x40] sm:$0xf]
  %v9412 = vld [vmem:[#allocation4 + $0x44] sm:$0xf]
  %v9413 = vld [vmem:[#allocation4 + $0x48] sm:$0xf]
  %v9414 = vld [vmem:[#allocation4 + $0x4c] sm:$0xf]
  %v9415 = vld [vmem:[#allocation4 + $0x50] sm:$0xf]
  %v9416 = vld [vmem:[#allocation4 + $0x54] sm:$0xf]
  %v9417 = vld [vmem:[#allocation4 + $0x58] sm:$0xf]
  %v9418 = vld [vmem:[#allocation4 + $0x5c] sm:$0xf]
  %v9419 = vld [vmem:[#allocation4 + $0x60] sm:$0xf]
  %v9420 = vld [vmem:[#allocation4 + $0x64] sm:$0xf]
  %v9421 = vld [vmem:[#allocation4 + $0x68] sm:$0xf]
  %v9422 = vld [vmem:[#allocation4 + $0x6c] sm:$0xf]
  %v9423 = vld [vmem:[#allocation4 + $0x70] sm:$0xf]
  %v9424 = vld [vmem:[#allocation4 + $0x74] sm:$0xf]
  %v9425 = vld [vmem:[#allocation4 + $0x78] sm:$0xf]
  %v9426 = vld [vmem:[#allocation4 + $0x7c] sm:$0xf]
  %v9427 = vld [vmem:[%s5] sm:$0xf]
  %v9428 = vld [vmem:[%s5 + $0x4] sm:$0xf]
  %v9429 = vld [vmem:[%s5 + $0x8] sm:$0xf]
  %v9430 = vld [vmem:[%s5 + $0xc] sm:$0xf]
  %v9431 = vld [vmem:[#allocation4 + $0x80] sm:$0x1]
  %s9432 = scalar_lea.vmem %s5, 16
  %v9433 = vld [vmem:[%s9432] sm:$0xf]
  %v9434 = vld [vmem:[%s9432 + $0x4] sm:$0xf]
  %v9435 = vld [vmem:[%s9432 + $0x8] sm:$0xf]
  %v9436 = vld [vmem:[%s9432 + $0xc] sm:$0xf]
  %v9437 = vld [vmem:[#allocation4] sm:$0xe]
  %s9438 = scalar_lea.vmem %s5, 32
  %v9439 = vld [vmem:[%s9438] sm:$0xf]
  %v9440 = vld [vmem:[%s9438 + $0x4] sm:$0xf]
  %v9441 = vld [vmem:[%s9438 + $0x8] sm:$0xf]
  %v9442 = vld [vmem:[%s9438 + $0xc] sm:$0xf]
  %v9443 = vld [vmem:[#allocation4 + $0x80] sm:$0xf]
  %v9444 = vld [vmem:[#allocation4 + $0x84] sm:$0xf]
  %s9445 = scalar_lea.vmem %s5, 48
  %v9446 = vld [vmem:[%s9445] sm:$0xf]
  %v9447 = vld [vmem:[%s9445 + $0x4] sm:$0xf]
  %v9448 = vld [vmem:[%s9445 + $0x8] sm:$0xf]
  %v9449 = vld [vmem:[%s9445 + $0xc] sm:$0xf]
  %v9482 = vunpack.c.l.b16 %v9397
  %v9483 = vunpack.c.l.b16 %v9398
  %v9484 = vunpack.c.l.b16 %v9399
  %v9485 = vunpack.c.l.b16 %v9400
  %v9486 = vunpack.c.l.b16 %v9401
  %v9487 = vunpack.c.l.b16 %v9402
  %v9488 = vunpack.c.l.b16 %v9403
  %v9489 = vunpack.c.l.b16 %v9404
  %v9490 = vunpack.c.l.b16 %v9405
  %v9491 = vunpack.c.l.b16 %v9406
  %v9492 = vunpack.c.l.b16 %v9407
  %v9493 = vunpack.c.l.b16 %v9408
  %v9494 = vunpack.c.l.b16 %v9409
  %v9495 = vunpack.c.l.b16 %v9410
  %v9496 = vunpack.c.l.b16 %v9411
  %v9497 = vunpack.c.l.b16 %v9412
  %v9498 = vunpack.c.l.b16 %v9413
  %v9499 = vunpack.c.l.b16 %v9414
  %v9500 = vunpack.c.l.b16 %v9415
  %v9501 = vunpack.c.l.b16 %v9416
  %v9502 = vunpack.c.l.b16 %v9417
  %v9503 = vunpack.c.l.b16 %v9418
  %v9504 = vunpack.c.l.b16 %v9419
  %v9505 = vunpack.c.l.b16 %v9420
  %v9506 = vunpack.c.l.b16 %v9421
  %v9507 = vunpack.c.l.b16 %v9422
  %v9508 = vunpack.c.l.b16 %v9423
  %v9509 = vunpack.c.l.b16 %v9424
  %v9510 = vunpack.c.l.b16 %v9425
  %v9511 = vunpack.c.l.b16 %v9426
  %v9512 = vunpack.c.l.b16 %v9443
  %v9513 = vunpack.c.l.b16 %v9444
  %v9514 = vpack.c.b16 %v9483, %v9482
  %v9515 = vpack.c.b16 %v9485, %v9484
  %v9516 = vpack.c.b16 %v9487, %v9486
  %v9517 = vpack.c.b16 %v9489, %v9488
  %v9518 = vpack.c.b16 %v9491, %v9490
  %v9519 = vpack.c.b16 %v9493, %v9492
  %v9520 = vpack.c.b16 %v9495, %v9494
  %v9521 = vpack.c.b16 %v9497, %v9496
  %v9522 = vpack.c.b16 %v9499, %v9498
  %v9523 = vpack.c.b16 %v9501, %v9500
  %v9524 = vpack.c.b16 %v9503, %v9502
  %v9525 = vpack.c.b16 %v9505, %v9504
  %v9526 = vpack.c.b16 %v9507, %v9506
  %v9527 = vpack.c.b16 %v9509, %v9508
  %v9528 = vpack.c.b16 %v9511, %v9510
  %v9529 = vpack.c.b16 %v9513, %v9512
  %v9534 = vunpack.c.l.b16 %v9446
  %v9535 = vunpack.c.l.b16 %v9447
  %v9536 = vunpack.c.l.b16 %v9448
  %v9537 = vunpack.c.l.b16 %v9449
  %v9538 = vpack.c.b16 %v9535, %v9534
  %v9539 = vpack.c.b16 %v9537, %v9536
  %vm9542 = vcmask 261120
  %v9544 = vsel %vm9542, %v9514, 0
  %v9547 = vsel %vm9542, %v9515, 0
  %v9550 = vsel %vm9542, %v9516, 0
  %v9553 = vsel %vm9542, %v9517, 0
  %v9556 = vsel %vm9542, %v9518, 0
  %v9559 = vsel %vm9542, %v9519, 0
  %v9562 = vsel %vm9542, %v9520, 0
  %v9565 = vsel %vm9542, %v9521, 0
  %v9568 = vsel %vm9542, %v9522, 0
  %v9571 = vsel %vm9542, %v9523, 0
  %v9574 = vsel %vm9542, %v9524, 0
  %v9577 = vsel %vm9542, %v9525, 0
  %v9580 = vsel %vm9542, %v9526, 0
  %v9583 = vsel %vm9542, %v9527, 0
  %v9586 = vsel %vm9542, %v9528, 0
  %v9589 = vsel %vm9542, %v9529, 0
  %9591 = vmatprep.subr.bf16.mxu0 0
  %9592 = vmatpush1.bf16.msra.mxu0 0
  %9593 = vmatprep.subr.bf16.mxu0 0
  %9594 = vmatpush1.bf16.msra.mxu0 0
  %9595 = vmatprep.subr.bf16.mxu0 0
  %9596 = vmatpush1.bf16.msra.mxu0 0
  %9597 = vmatprep.subr.bf16.mxu0 0
  %9598 = vmatpush1.bf16.msra.mxu0 0
  %9599 = vmatprep.subr.bf16.mxu0 0
  %9600 = vmatpush1.bf16.msra.mxu0 0
  %9601 = vmatprep.subr.bf16.mxu0 0
  %9602 = vmatpush1.bf16.msra.mxu0 0
  %9603 = vmatprep.subr.bf16.mxu0 0
  %9604 = vmatpush1.bf16.msra.mxu0 %v9539
  %9605 = vmatprep.subr.bf16.mxu0 0
  %9606 = vmatpush1.bf16.msra.mxu0 %v9538
  %9607 = vmatprep.subr.bf16.mxu0 0
  %9608 = vmatpush2.bf16.msra.mxu0 0
  %9609 = vmatprep.subr.bf16.mxu0 0
  %9610 = vmatpush2.bf16.msra.mxu0 0
  %9611 = vmatprep.subr.bf16.mxu0 0
  %9612 = vmatpush2.bf16.msra.mxu0 0
  %9613 = vmatprep.subr.bf16.mxu0 0
  %9614 = vmatpush2.bf16.msra.mxu0 0
  %9615 = vmatprep.subr.bf16.mxu0 0
  %9616 = vmatpush2.bf16.msra.mxu0 0
  %9617 = vmatprep.subr.bf16.mxu0 0
  %9618 = vmatpush2.bf16.msra.mxu0 0
  %9619 = vmatprep.subr.bf16.mxu0 0
  %9620 = vmatpush2.bf16.msra.mxu0 0
  %9621 = vmatprep.subr.bf16.mxu0 0
  %9622 = vmatpush2.bf16.msra.mxu0 0
  %9623 = vmatprep.mubr.bf16.mxu0 0
  %9624 = vmatmul.mubr.bf16.gmra.mxu0 %v9544
  %v9625 = vpop.f32.mrf.mxu0
  %v9626 = vadd.f32 0.0, %v9625
  %v9627 = vpop.f32.mrf.mxu0
  %v9628 = vpop.f32.mrf.mxu0
  %v9629 = vadd.f32 0.0, %v9628
  %v9630 = vpop.f32.mrf.mxu0
  %9631 = vmatprep.mubr.bf16.mxu0 0
  %9632 = vmatmul.mubr.bf16.gmra.mxu0 %v9547
  %v9633 = vpop.f32.mrf.mxu0
  %v9634 = vadd.f32 0.0, %v9633
  %v9635 = vpop.f32.mrf.mxu0
  %v9636 = vpop.f32.mrf.mxu0
  %v9637 = vadd.f32 0.0, %v9636
  %v9638 = vpop.f32.mrf.mxu0
  %9639 = vmatprep.mubr.bf16.mxu0 0
  %9640 = vmatmul.mubr.bf16.gmra.mxu0 %v9550
  %v9641 = vpop.f32.mrf.mxu0
  %v9642 = vadd.f32 0.0, %v9641
  %v9643 = vpop.f32.mrf.mxu0
  %v9644 = vpop.f32.mrf.mxu0
  %v9645 = vadd.f32 0.0, %v9644
  %v9646 = vpop.f32.mrf.mxu0
  %9647 = vmatprep.mubr.bf16.mxu0 0
  %9648 = vmatmul.mubr.bf16.gmra.mxu0 %v9553
  %v9649 = vpop.f32.mrf.mxu0
  %v9650 = vadd.f32 0.0, %v9649
  %v9651 = vpop.f32.mrf.mxu0
  %v9652 = vpop.f32.mrf.mxu0
  %v9653 = vadd.f32 0.0, %v9652
  %v9654 = vpop.f32.mrf.mxu0
  %9655 = vmatprep.mubr.bf16.mxu0 0
  %9656 = vmatmul.mubr.bf16.gmra.mxu0 %v9556
  %v9657 = vpop.f32.mrf.mxu0
  %v9658 = vadd.f32 0.0, %v9657
  %v9659 = vpop.f32.mrf.mxu0
  %v9660 = vpop.f32.mrf.mxu0
  %v9661 = vadd.f32 0.0, %v9660
  %v9662 = vpop.f32.mrf.mxu0
  %9663 = vmatprep.mubr.bf16.mxu0 0
  %9664 = vmatmul.mubr.bf16.gmra.mxu0 %v9559
  %v9665 = vpop.f32.mrf.mxu0
  %v9666 = vadd.f32 0.0, %v9665
  %v9667 = vpop.f32.mrf.mxu0
  %v9668 = vpop.f32.mrf.mxu0
  %v9669 = vadd.f32 0.0, %v9668
  %v9670 = vpop.f32.mrf.mxu0
  %9671 = vmatprep.mubr.bf16.mxu0 0
  %9672 = vmatmul.mubr.bf16.gmra.mxu0 %v9562
  %v9673 = vpop.f32.mrf.mxu0
  %v9674 = vadd.f32 0.0, %v9673
  %v9675 = vpop.f32.mrf.mxu0
  %v9676 = vpop.f32.mrf.mxu0
  %v9677 = vadd.f32 0.0, %v9676
  %v9678 = vpop.f32.mrf.mxu0
  %9679 = vmatprep.mubr.bf16.mxu0 0
  %9680 = vmatmul.mubr.bf16.gmra.mxu0 %v9565
  %v9681 = vpop.f32.mrf.mxu0
  %v9682 = vadd.f32 0.0, %v9681
  %v9683 = vpop.f32.mrf.mxu0
  %v9684 = vpop.f32.mrf.mxu0
  %v9685 = vadd.f32 0.0, %v9684
  %v9686 = vpop.f32.mrf.mxu0
  %9687 = vmatprep.mubr.bf16.mxu0 0
  %9688 = vmatmul.mubr.bf16.gmra.mxu0 %v9568
  %v9689 = vpop.f32.mrf.mxu0
  %v9690 = vadd.f32 0.0, %v9689
  %v9691 = vpop.f32.mrf.mxu0
  %v9692 = vpop.f32.mrf.mxu0
  %v9693 = vadd.f32 0.0, %v9692
  %v9694 = vpop.f32.mrf.mxu0
  %9695 = vmatprep.mubr.bf16.mxu0 0
  %9696 = vmatmul.mubr.bf16.gmra.mxu0 %v9571
  %v9697 = vpop.f32.mrf.mxu0
  %v9698 = vadd.f32 0.0, %v9697
  %v9699 = vpop.f32.mrf.mxu0
  %v9700 = vpop.f32.mrf.mxu0
  %v9701 = vadd.f32 0.0, %v9700
  %v9702 = vpop.f32.mrf.mxu0
  %9703 = vmatprep.mubr.bf16.mxu0 0
  %9704 = vmatmul.mubr.bf16.gmra.mxu0 %v9574
  %v9705 = vpop.f32.mrf.mxu0
  %v9706 = vadd.f32 0.0, %v9705
  %v9707 = vpop.f32.mrf.mxu0
  %v9708 = vpop.f32.mrf.mxu0
  %v9709 = vadd.f32 0.0, %v9708
  %v9710 = vpop.f32.mrf.mxu0
  %9711 = vmatprep.mubr.bf16.mxu0 0
  %9712 = vmatmul.mubr.bf16.gmra.mxu0 %v9577
  %v9713 = vpop.f32.mrf.mxu0
  %v9714 = vadd.f32 0.0, %v9713
  %v9715 = vpop.f32.mrf.mxu0
  %v9716 = vpop.f32.mrf.mxu0
  %v9717 = vadd.f32 0.0, %v9716
  %v9718 = vpop.f32.mrf.mxu0
  %9719 = vmatprep.mubr.bf16.mxu0 0
  %9720 = vmatmul.mubr.bf16.gmra.mxu0 %v9580
  %v9721 = vpop.f32.mrf.mxu0
  %v9722 = vadd.f32 0.0, %v9721
  %v9723 = vpop.f32.mrf.mxu0
  %v9724 = vpop.f32.mrf.mxu0
  %v9725 = vadd.f32 0.0, %v9724
  %v9726 = vpop.f32.mrf.mxu0
  %9727 = vmatprep.mubr.bf16.mxu0 0
  %9728 = vmatmul.mubr.bf16.gmra.mxu0 %v9583
  %v9729 = vpop.f32.mrf.mxu0
  %v9730 = vadd.f32 0.0, %v9729
  %v9731 = vpop.f32.mrf.mxu0
  %v9732 = vpop.f32.mrf.mxu0
  %v9733 = vadd.f32 0.0, %v9732
  %v9734 = vpop.f32.mrf.mxu0
  %9735 = vmatprep.mubr.bf16.mxu0 0
  %9736 = vmatmul.mubr.bf16.gmra.mxu0 %v9586
  %v9737 = vpop.f32.mrf.mxu0
  %v9738 = vadd.f32 0.0, %v9737
  %v9739 = vpop.f32.mrf.mxu0
  %v9740 = vpop.f32.mrf.mxu0
  %v9741 = vadd.f32 0.0, %v9740
  %v9742 = vpop.f32.mrf.mxu0
  %9743 = vmatprep.mubr.bf16.mxu0 0
  %9744 = vmatmul.mubr.bf16.gmra.mxu0 %v9589
  %v9745 = vpop.f32.mrf.mxu0
  %v9746 = vadd.f32 0.0, %v9745
  %v9747 = vpop.f32.mrf.mxu0
  %v9748 = vpop.f32.mrf.mxu0
  %v9749 = vadd.f32 0.0, %v9748
  %v9750 = vpop.f32.mrf.mxu0
  %9751 = vdwg.mxu0
  %v9754 = vunpack.c.l.b16 %v9395
  %v9755 = vunpack.c.l.b16 %v9396
  %v9756 = vpack.c.b16 %v9755, %v9754
  %v9761 = vunpack.c.l.b16 %v9427
  %v9762 = vunpack.c.l.b16 %v9428
  %v9763 = vunpack.c.l.b16 %v9429
  %v9764 = vunpack.c.l.b16 %v9430
  %v9765 = vpack.c.b16 %v9762, %v9761
  %v9766 = vpack.c.b16 %v9764, %v9763
  %v9770 = vsel %vm9542, %v9756, 0
  %9772 = vmatprep.subr.bf16.mxu0 0
  %9773 = vmatpush1.bf16.msra.mxu0 0
  %9774 = vmatprep.subr.bf16.mxu0 0
  %9775 = vmatpush1.bf16.msra.mxu0 0
  %9776 = vmatprep.subr.bf16.mxu0 0
  %9777 = vmatpush1.bf16.msra.mxu0 0
  %9778 = vmatprep.subr.bf16.mxu0 0
  %9779 = vmatpush1.bf16.msra.mxu0 0
  %9780 = vmatprep.subr.bf16.mxu0 0
  %9781 = vmatpush1.bf16.msra.mxu0 0
  %9782 = vmatprep.subr.bf16.mxu0 0
  %9783 = vmatpush1.bf16.msra.mxu0 0
  %9784 = vmatprep.subr.bf16.mxu0 0
  %9785 = vmatpush1.bf16.msra.mxu0 %v9766
  %9786 = vmatprep.subr.bf16.mxu0 0
  %9787 = vmatpush1.bf16.msra.mxu0 %v9765
  %9788 = vmatprep.subr.bf16.mxu0 0
  %9789 = vmatpush2.bf16.msra.mxu0 0
  %9790 = vmatprep.subr.bf16.mxu0 0
  %9791 = vmatpush2.bf16.msra.mxu0 0
  %9792 = vmatprep.subr.bf16.mxu0 0
  %9793 = vmatpush2.bf16.msra.mxu0 0
  %9794 = vmatprep.subr.bf16.mxu0 0
  %9795 = vmatpush2.bf16.msra.mxu0 0
  %9796 = vmatprep.subr.bf16.mxu0 0
  %9797 = vmatpush2.bf16.msra.mxu0 0
  %9798 = vmatprep.subr.bf16.mxu0 0
  %9799 = vmatpush2.bf16.msra.mxu0 0
  %9800 = vmatprep.subr.bf16.mxu0 0
  %9801 = vmatpush2.bf16.msra.mxu0 0
  %9802 = vmatprep.subr.bf16.mxu0 0
  %9803 = vmatpush2.bf16.msra.mxu0 0
  %9804 = vmatprep.mubr.bf16.mxu0 0
  %9805 = vmatmul.mubr.bf16.gmra.mxu0 %v9770
  %v9806 = vpop.f32.mrf.mxu0
  %v9807 = vadd.f32 %v9626, %v9806
  %v9808 = vpop.f32.mrf.mxu0
  %v9809 = vpop.f32.mrf.mxu0
  %v9810 = vadd.f32 %v9629, %v9809
  %v9811 = vpop.f32.mrf.mxu0
  %9812 = vmatprep.mubr.bf16.mxu0 0
  %9813 = vmatmul.mubr.bf16.gmra.mxu0 %v9544
  %v9814 = vpop.f32.mrf.mxu0
  %v9815 = vadd.f32 %v9634, %v9814
  %v9816 = vpop.f32.mrf.mxu0
  %v9817 = vpop.f32.mrf.mxu0
  %v9818 = vadd.f32 %v9637, %v9817
  %v9819 = vpop.f32.mrf.mxu0
  %9820 = vmatprep.mubr.bf16.mxu0 0
  %9821 = vmatmul.mubr.bf16.gmra.mxu0 %v9547
  %v9822 = vpop.f32.mrf.mxu0
  %v9823 = vadd.f32 %v9642, %v9822
  %v9824 = vpop.f32.mrf.mxu0
  %v9825 = vpop.f32.mrf.mxu0
  %v9826 = vadd.f32 %v9645, %v9825
  %v9827 = vpop.f32.mrf.mxu0
  %9828 = vmatprep.mubr.bf16.mxu0 0
  %9829 = vmatmul.mubr.bf16.gmra.mxu0 %v9550
  %v9830 = vpop.f32.mrf.mxu0
  %v9831 = vadd.f32 %v9650, %v9830
  %v9832 = vpop.f32.mrf.mxu0
  %v9833 = vpop.f32.mrf.mxu0
  %v9834 = vadd.f32 %v9653, %v9833
  %v9835 = vpop.f32.mrf.mxu0
  %9836 = vmatprep.mubr.bf16.mxu0 0
  %9837 = vmatmul.mubr.bf16.gmra.mxu0 %v9553
  %v9838 = vpop.f32.mrf.mxu0
  %v9839 = vadd.f32 %v9658, %v9838
  %v9840 = vpop.f32.mrf.mxu0
  %v9841 = vpop.f32.mrf.mxu0
  %v9842 = vadd.f32 %v9661, %v9841
  %v9843 = vpop.f32.mrf.mxu0
  %9844 = vmatprep.mubr.bf16.mxu0 0
  %9845 = vmatmul.mubr.bf16.gmra.mxu0 %v9556
  %v9846 = vpop.f32.mrf.mxu0
  %v9847 = vadd.f32 %v9666, %v9846
  %v9848 = vpop.f32.mrf.mxu0
  %v9849 = vpop.f32.mrf.mxu0
  %v9850 = vadd.f32 %v9669, %v9849
  %v9851 = vpop.f32.mrf.mxu0
  %9852 = vmatprep.mubr.bf16.mxu0 0
  %9853 = vmatmul.mubr.bf16.gmra.mxu0 %v9559
  %v9854 = vpop.f32.mrf.mxu0
  %v9855 = vadd.f32 %v9674, %v9854
  %v9856 = vpop.f32.mrf.mxu0
  %v9857 = vpop.f32.mrf.mxu0
  %v9858 = vadd.f32 %v9677, %v9857
  %v9859 = vpop.f32.mrf.mxu0
  %9860 = vmatprep.mubr.bf16.mxu0 0
  %9861 = vmatmul.mubr.bf16.gmra.mxu0 %v9562
  %v9862 = vpop.f32.mrf.mxu0
  %v9863 = vadd.f32 %v9682, %v9862
  %v9864 = vpop.f32.mrf.mxu0
  %v9865 = vpop.f32.mrf.mxu0
  %v9866 = vadd.f32 %v9685, %v9865
  %v9867 = vpop.f32.mrf.mxu0
  %9868 = vmatprep.mubr.bf16.mxu0 0
  %9869 = vmatmul.mubr.bf16.gmra.mxu0 %v9565
  %v9870 = vpop.f32.mrf.mxu0
  %v9871 = vadd.f32 %v9690, %v9870
  %v9872 = vpop.f32.mrf.mxu0
  %v9873 = vpop.f32.mrf.mxu0
  %v9874 = vadd.f32 %v9693, %v9873
  %v9875 = vpop.f32.mrf.mxu0
  %9876 = vmatprep.mubr.bf16.mxu0 0
  %9877 = vmatmul.mubr.bf16.gmra.mxu0 %v9568
  %v9878 = vpop.f32.mrf.mxu0
  %v9879 = vadd.f32 %v9698, %v9878
  %v9880 = vpop.f32.mrf.mxu0
  %v9881 = vpop.f32.mrf.mxu0
  %v9882 = vadd.f32 %v9701, %v9881
  %v9883 = vpop.f32.mrf.mxu0
  %9884 = vmatprep.mubr.bf16.mxu0 0
  %9885 = vmatmul.mubr.bf16.gmra.mxu0 %v9571
  %v9886 = vpop.f32.mrf.mxu0
  %v9887 = vadd.f32 %v9706, %v9886
  %v9888 = vpop.f32.mrf.mxu0
  %v9889 = vpop.f32.mrf.mxu0
  %v9890 = vadd.f32 %v9709, %v9889
  %v9891 = vpop.f32.mrf.mxu0
  %9892 = vmatprep.mubr.bf16.mxu0 0
  %9893 = vmatmul.mubr.bf16.gmra.mxu0 %v9574
  %v9894 = vpop.f32.mrf.mxu0
  %v9895 = vadd.f32 %v9714, %v9894
  %v9896 = vpop.f32.mrf.mxu0
  %v9897 = vpop.f32.mrf.mxu0
  %v9898 = vadd.f32 %v9717, %v9897
  %v9899 = vpop.f32.mrf.mxu0
  %9900 = vmatprep.mubr.bf16.mxu0 0
  %9901 = vmatmul.mubr.bf16.gmra.mxu0 %v9577
  %v9902 = vpop.f32.mrf.mxu0
  %v9903 = vadd.f32 %v9722, %v9902
  %v9904 = vpop.f32.mrf.mxu0
  %v9905 = vpop.f32.mrf.mxu0
  %v9906 = vadd.f32 %v9725, %v9905
  %v9907 = vpop.f32.mrf.mxu0
  %9908 = vmatprep.mubr.bf16.mxu0 0
  %9909 = vmatmul.mubr.bf16.gmra.mxu0 %v9580
  %v9910 = vpop.f32.mrf.mxu0
  %v9911 = vadd.f32 %v9730, %v9910
  %v9912 = vpop.f32.mrf.mxu0
  %v9913 = vpop.f32.mrf.mxu0
  %v9914 = vadd.f32 %v9733, %v9913
  %v9915 = vpop.f32.mrf.mxu0
  %9916 = vmatprep.mubr.bf16.mxu0 0
  %9917 = vmatmul.mubr.bf16.gmra.mxu0 %v9583
  %v9918 = vpop.f32.mrf.mxu0
  %v9919 = vadd.f32 %v9738, %v9918
  %v9920 = vpop.f32.mrf.mxu0
  %v9921 = vpop.f32.mrf.mxu0
  %v9922 = vadd.f32 %v9741, %v9921
  %v9923 = vpop.f32.mrf.mxu0
  %9924 = vmatprep.mubr.bf16.mxu0 0
  %9925 = vmatmul.mubr.bf16.gmra.mxu0 %v9586
  %v9926 = vpop.f32.mrf.mxu0
  %v9927 = vadd.f32 %v9746, %v9926
  %v9928 = vpop.f32.mrf.mxu0
  %v9929 = vpop.f32.mrf.mxu0
  %v9930 = vadd.f32 %v9749, %v9929
  %v9931 = vpop.f32.mrf.mxu0
  %9932 = vdwg.mxu0
  %v9933 = vld [vmem:[#allocation4 + $0x8] sm:$0xf]
  %v9934 = vld [vmem:[#allocation4 + $0xc] sm:$0xf]
  %v9935 = vld [vmem:[#allocation4 + $0x10] sm:$0xf]
  %v9936 = vld [vmem:[#allocation4 + $0x14] sm:$0xf]
  %v9937 = vld [vmem:[#allocation4 + $0x18] sm:$0xf]
  %v9938 = vld [vmem:[#allocation4 + $0x1c] sm:$0xf]
  %v9939 = vld [vmem:[#allocation4 + $0x20] sm:$0xf]
  %v9940 = vld [vmem:[#allocation4 + $0x24] sm:$0xf]
  %v9941 = vld [vmem:[#allocation4 + $0x28] sm:$0xf]
  %v9942 = vld [vmem:[#allocation4 + $0x2c] sm:$0xf]
  %v9943 = vld [vmem:[#allocation4 + $0x30] sm:$0xf]
  %v9944 = vld [vmem:[#allocation4 + $0x34] sm:$0xf]
  %v9945 = vld [vmem:[#allocation4 + $0x38] sm:$0xf]
  %v9946 = vld [vmem:[#allocation4 + $0x3c] sm:$0xf]
  %v9947 = vld [vmem:[#allocation4 + $0x40] sm:$0xf]
  %v9948 = vld [vmem:[#allocation4 + $0x44] sm:$0xf]
  %v9949 = vld [vmem:[#allocation4 + $0x48] sm:$0xf]
  %v9950 = vld [vmem:[#allocation4 + $0x4c] sm:$0xf]
  %v9951 = vld [vmem:[#allocation4 + $0x50] sm:$0xf]
  %v9952 = vld [vmem:[#allocation4 + $0x54] sm:$0xf]
  %v9953 = vld [vmem:[#allocation4 + $0x58] sm:$0xf]
  %v9954 = vld [vmem:[#allocation4 + $0x5c] sm:$0xf]
  %v9955 = vld [vmem:[#allocation4 + $0x60] sm:$0xf]
  %v9956 = vld [vmem:[#allocation4 + $0x64] sm:$0xf]
  %v9957 = vld [vmem:[#allocation4 + $0x68] sm:$0xf]
  %v9958 = vld [vmem:[#allocation4 + $0x6c] sm:$0xf]
  %v9959 = vld [vmem:[#allocation4 + $0x70] sm:$0xf]
  %v9960 = vld [vmem:[#allocation4 + $0x74] sm:$0xf]
  %v9961 = vld [vmem:[#allocation4 + $0x78] sm:$0xf]
  %v9962 = vld [vmem:[#allocation4 + $0x7c] sm:$0xf]
  %v9963 = vld [vmem:[#allocation4 + $0x80] sm:$0xf]
  %v9964 = vld [vmem:[#allocation4 + $0x84] sm:$0xf]
  %v9965 = vld [vmem:[#allocation4 + $0x88] sm:$0x1]
  %s9966 = scalar_lea.vmem %s5, 64
  %v9967 = vld [vmem:[%s9966] sm:$0xf]
  %v9968 = vld [vmem:[%s9966 + $0x4] sm:$0xf]
  %v9969 = vld [vmem:[%s9966 + $0x8] sm:$0xf]
  %v9970 = vld [vmem:[%s9966 + $0xc] sm:$0xf]
  %v10004 = vunpack.c.l.b16 %v9933
  %v10005 = vunpack.c.l.b16 %v9934
  %v10006 = vunpack.c.l.b16 %v9935
  %v10007 = vunpack.c.l.b16 %v9936
  %v10008 = vunpack.c.l.b16 %v9937
  %v10009 = vunpack.c.l.b16 %v9938
  %v10010 = vunpack.c.l.b16 %v9939
  %v10011 = vunpack.c.l.b16 %v9940
  %v10012 = vunpack.c.l.b16 %v9941
  %v10013 = vunpack.c.l.b16 %v9942
  %v10014 = vunpack.c.l.b16 %v9943
  %v10015 = vunpack.c.l.b16 %v9944
  %v10016 = vunpack.c.l.b16 %v9945
  %v10017 = vunpack.c.l.b16 %v9946
  %v10018 = vunpack.c.l.b16 %v9947
  %v10019 = vunpack.c.l.b16 %v9948
  %v10020 = vunpack.c.l.b16 %v9949
  %v10021 = vunpack.c.l.b16 %v9950
  %v10022 = vunpack.c.l.b16 %v9951
  %v10023 = vunpack.c.l.b16 %v9952
  %v10024 = vunpack.c.l.b16 %v9953
  %v10025 = vunpack.c.l.b16 %v9954
  %v10026 = vunpack.c.l.b16 %v9955
  %v10027 = vunpack.c.l.b16 %v9956
  %v10028 = vunpack.c.l.b16 %v9957
  %v10029 = vunpack.c.l.b16 %v9958
  %v10030 = vunpack.c.l.b16 %v9959
  %v10031 = vunpack.c.l.b16 %v9960
  %v10032 = vunpack.c.l.b16 %v9961
  %v10033 = vunpack.c.l.b16 %v9962
  %v10034 = vunpack.c.l.b16 %v9963
  %v10035 = vunpack.c.l.b16 %v9964
  %v10036 = vunpack.c.l.b16 %v9965
  %v10037 = vpack.c.b16 %v10005, %v10004
  %v10038 = vpack.c.b16 %v10007, %v10006
  %v10039 = vpack.c.b16 %v10009, %v10008
  %v10040 = vpack.c.b16 %v10011, %v10010
  %v10041 = vpack.c.b16 %v10013, %v10012
  %v10042 = vpack.c.b16 %v10015, %v10014
  %v10043 = vpack.c.b16 %v10017, %v10016
  %v10044 = vpack.c.b16 %v10019, %v10018
  %v10045 = vpack.c.b16 %v10021, %v10020
  %v10046 = vpack.c.b16 %v10023, %v10022
  %v10047 = vpack.c.b16 %v10025, %v10024
  %v10048 = vpack.c.b16 %v10027, %v10026
  %v10049 = vpack.c.b16 %v10029, %v10028
  %v10050 = vpack.c.b16 %v10031, %v10030
  %v10051 = vpack.c.b16 %v10033, %v10032
  %v10052 = vpack.c.b16 %v10035, %v10034
  %v10053 = vpack.c.b16 %v10036, %v10036
  %v10055 = vshrl.u32 %v10037, 16
  %v10057 = vshll.u32 %v10037, 16
  %v10059 = vrot.slane %v10057, 1
  %v10060 = vor.u32 %v10055, %v10059
  %v10062 = vshll.u32 %v10038, 16
  %v10064 = vrot.slane %v10062, 1
  %v10065 = vsel %vm2231, %v10060, %v10064
  %v10066 = vshrl.u32 %v10038, 16
  %v10068 = vor.u32 %v10066, %v10064
  %v10070 = vshll.u32 %v10039, 16
  %v10072 = vrot.slane %v10070, 1
  %v10073 = vsel %vm2231, %v10068, %v10072
  %v10074 = vshrl.u32 %v10039, 16
  %v10076 = vor.u32 %v10074, %v10072
  %v10078 = vshll.u32 %v10040, 16
  %v10080 = vrot.slane %v10078, 1
  %v10081 = vsel %vm2231, %v10076, %v10080
  %v10082 = vshrl.u32 %v10040, 16
  %v10084 = vor.u32 %v10082, %v10080
  %v10086 = vshll.u32 %v10041, 16
  %v10088 = vrot.slane %v10086, 1
  %v10089 = vsel %vm2231, %v10084, %v10088
  %v10090 = vshrl.u32 %v10041, 16
  %v10092 = vor.u32 %v10090, %v10088
  %v10094 = vshll.u32 %v10042, 16
  %v10096 = vrot.slane %v10094, 1
  %v10097 = vsel %vm2231, %v10092, %v10096
  %v10098 = vshrl.u32 %v10042, 16
  %v10100 = vor.u32 %v10098, %v10096
  %v10102 = vshll.u32 %v10043, 16
  %v10104 = vrot.slane %v10102, 1
  %v10105 = vsel %vm2231, %v10100, %v10104
  %v10106 = vshrl.u32 %v10043, 16
  %v10108 = vor.u32 %v10106, %v10104
  %v10110 = vshll.u32 %v10044, 16
  %v10112 = vrot.slane %v10110, 1
  %v10113 = vsel %vm2231, %v10108, %v10112
  %v10114 = vshrl.u32 %v10044, 16
  %v10116 = vor.u32 %v10114, %v10112
  %v10118 = vshll.u32 %v10045, 16
  %v10120 = vrot.slane %v10118, 1
  %v10121 = vsel %vm2231, %v10116, %v10120
  %v10122 = vshrl.u32 %v10045, 16
  %v10124 = vor.u32 %v10122, %v10120
  %v10126 = vshll.u32 %v10046, 16
  %v10128 = vrot.slane %v10126, 1
  %v10129 = vsel %vm2231, %v10124, %v10128
  %v10130 = vshrl.u32 %v10046, 16
  %v10132 = vor.u32 %v10130, %v10128
  %v10134 = vshll.u32 %v10047, 16
  %v10136 = vrot.slane %v10134, 1
  %v10137 = vsel %vm2231, %v10132, %v10136
  %v10138 = vshrl.u32 %v10047, 16
  %v10140 = vor.u32 %v10138, %v10136
  %v10142 = vshll.u32 %v10048, 16
  %v10144 = vrot.slane %v10142, 1
  %v10145 = vsel %vm2231, %v10140, %v10144
  %v10146 = vshrl.u32 %v10048, 16
  %v10148 = vor.u32 %v10146, %v10144
  %v10150 = vshll.u32 %v10049, 16
  %v10152 = vrot.slane %v10150, 1
  %v10153 = vsel %vm2231, %v10148, %v10152
  %v10154 = vshrl.u32 %v10049, 16
  %v10156 = vor.u32 %v10154, %v10152
  %v10158 = vshll.u32 %v10050, 16
  %v10160 = vrot.slane %v10158, 1
  %v10161 = vsel %vm2231, %v10156, %v10160
  %v10162 = vshrl.u32 %v10050, 16
  %v10164 = vor.u32 %v10162, %v10160
  %v10166 = vshll.u32 %v10051, 16
  %v10168 = vrot.slane %v10166, 1
  %v10169 = vsel %vm2231, %v10164, %v10168
  %v10170 = vshrl.u32 %v10051, 16
  %v10172 = vor.u32 %v10170, %v10168
  %v10174 = vshll.u32 %v10052, 16
  %v10176 = vrot.slane %v10174, 1
  %v10177 = vsel %vm2231, %v10172, %v10176
  %v10178 = vshrl.u32 %v10052, 16
  %v10180 = vor.u32 %v10178, %v10176
  %v10182 = vshll.u32 %v10053, 16
  %v10184 = vrot.slane %v10182, 1
  %v10185 = vsel %vm2231, %v10180, %v10184
  %v10190 = vunpack.c.l.b16 %v9967
  %v10191 = vunpack.c.l.b16 %v9968
  %v10192 = vunpack.c.l.b16 %v9969
  %v10193 = vunpack.c.l.b16 %v9970
  %v10194 = vpack.c.b16 %v10191, %v10190
  %v10195 = vpack.c.b16 %v10193, %v10192
  %v10199 = vsel %vm9542, %v10065, 0
  %v10202 = vsel %vm9542, %v10073, 0
  %v10205 = vsel %vm9542, %v10081, 0
  %v10208 = vsel %vm9542, %v10089, 0
  %v10211 = vsel %vm9542, %v10097, 0
  %v10214 = vsel %vm9542, %v10105, 0
  %v10217 = vsel %vm9542, %v10113, 0
  %v10220 = vsel %vm9542, %v10121, 0
  %v10223 = vsel %vm9542, %v10129, 0
  %v10226 = vsel %vm9542, %v10137, 0
  %v10229 = vsel %vm9542, %v10145, 0
  %v10232 = vsel %vm9542, %v10153, 0
  %v10235 = vsel %vm9542, %v10161, 0
  %v10238 = vsel %vm9542, %v10169, 0
  %v10241 = vsel %vm9542, %v10177, 0
  %v10244 = vsel %vm9542, %v10185, 0
  %10246 = vmatprep.subr.bf16.mxu0 0
  %10247 = vmatpush1.bf16.msra.mxu0 0
  %10248 = vmatprep.subr.bf16.mxu0 0
  %10249 = vmatpush1.bf16.msra.mxu0 0
  %10250 = vmatprep.subr.bf16.mxu0 0
  %10251 = vmatpush1.bf16.msra.mxu0 0
  %10252 = vmatprep.subr.bf16.mxu0 0
  %10253 = vmatpush1.bf16.msra.mxu0 0
  %10254 = vmatprep.subr.bf16.mxu0 0
  %10255 = vmatpush1.bf16.msra.mxu0 0
  %10256 = vmatprep.subr.bf16.mxu0 0
  %10257 = vmatpush1.bf16.msra.mxu0 0
  %10258 = vmatprep.subr.bf16.mxu0 0
  %10259 = vmatpush1.bf16.msra.mxu0 %v10195
  %10260 = vmatprep.subr.bf16.mxu0 0
  %10261 = vmatpush1.bf16.msra.mxu0 %v10194
  %10262 = vmatprep.subr.bf16.mxu0 0
  %10263 = vmatpush2.bf16.msra.mxu0 0
  %10264 = vmatprep.subr.bf16.mxu0 0
  %10265 = vmatpush2.bf16.msra.mxu0 0
  %10266 = vmatprep.subr.bf16.mxu0 0
  %10267 = vmatpush2.bf16.msra.mxu0 0
  %10268 = vmatprep.subr.bf16.mxu0 0
  %10269 = vmatpush2.bf16.msra.mxu0 0
  %10270 = vmatprep.subr.bf16.mxu0 0
  %10271 = vmatpush2.bf16.msra.mxu0 0
  %10272 = vmatprep.subr.bf16.mxu0 0
  %10273 = vmatpush2.bf16.msra.mxu0 0
  %10274 = vmatprep.subr.bf16.mxu0 0
  %10275 = vmatpush2.bf16.msra.mxu0 0
  %10276 = vmatprep.subr.bf16.mxu0 0
  %10277 = vmatpush2.bf16.msra.mxu0 0
  %10278 = vmatprep.mubr.bf16.mxu0 0
  %10279 = vmatmul.mubr.bf16.gmra.mxu0 %v10199
  %v10280 = vpop.f32.mrf.mxu0
  %v10281 = vadd.f32 0.0, %v10280
  %v10282 = vpop.f32.mrf.mxu0
  %v10283 = vpop.f32.mrf.mxu0
  %v10284 = vadd.f32 0.0, %v10283
  %v10285 = vpop.f32.mrf.mxu0
  %10286 = vmatprep.mubr.bf16.mxu0 0
  %10287 = vmatmul.mubr.bf16.gmra.mxu0 %v10202
  %v10288 = vpop.f32.mrf.mxu0
  %v10289 = vadd.f32 0.0, %v10288
  %v10290 = vpop.f32.mrf.mxu0
  %v10291 = vpop.f32.mrf.mxu0
  %v10292 = vadd.f32 0.0, %v10291
  %v10293 = vpop.f32.mrf.mxu0
  %10294 = vmatprep.mubr.bf16.mxu0 0
  %10295 = vmatmul.mubr.bf16.gmra.mxu0 %v10205
  %v10296 = vpop.f32.mrf.mxu0
  %v10297 = vadd.f32 0.0, %v10296
  %v10298 = vpop.f32.mrf.mxu0
  %v10299 = vpop.f32.mrf.mxu0
  %v10300 = vadd.f32 0.0, %v10299
  %v10301 = vpop.f32.mrf.mxu0
  %10302 = vmatprep.mubr.bf16.mxu0 0
  %10303 = vmatmul.mubr.bf16.gmra.mxu0 %v10208
  %v10304 = vpop.f32.mrf.mxu0
  %v10305 = vadd.f32 0.0, %v10304
  %v10306 = vpop.f32.mrf.mxu0
  %v10307 = vpop.f32.mrf.mxu0
  %v10308 = vadd.f32 0.0, %v10307
  %v10309 = vpop.f32.mrf.mxu0
  %10310 = vmatprep.mubr.bf16.mxu0 0
  %10311 = vmatmul.mubr.bf16.gmra.mxu0 %v10211
  %v10312 = vpop.f32.mrf.mxu0
  %v10313 = vadd.f32 0.0, %v10312
  %v10314 = vpop.f32.mrf.mxu0
  %v10315 = vpop.f32.mrf.mxu0
  %v10316 = vadd.f32 0.0, %v10315
  %v10317 = vpop.f32.mrf.mxu0
  %10318 = vmatprep.mubr.bf16.mxu0 0
  %10319 = vmatmul.mubr.bf16.gmra.mxu0 %v10214
  %v10320 = vpop.f32.mrf.mxu0
  %v10321 = vadd.f32 0.0, %v10320
  %v10322 = vpop.f32.mrf.mxu0
  %v10323 = vpop.f32.mrf.mxu0
  %v10324 = vadd.f32 0.0, %v10323
  %v10325 = vpop.f32.mrf.mxu0
  %10326 = vmatprep.mubr.bf16.mxu0 0
  %10327 = vmatmul.mubr.bf16.gmra.mxu0 %v10217
  %v10328 = vpop.f32.mrf.mxu0
  %v10329 = vadd.f32 0.0, %v10328
  %v10330 = vpop.f32.mrf.mxu0
  %v10331 = vpop.f32.mrf.mxu0
  %v10332 = vadd.f32 0.0, %v10331
  %v10333 = vpop.f32.mrf.mxu0
  %10334 = vmatprep.mubr.bf16.mxu0 0
  %10335 = vmatmul.mubr.bf16.gmra.mxu0 %v10220
  %v10336 = vpop.f32.mrf.mxu0
  %v10337 = vadd.f32 0.0, %v10336
  %v10338 = vpop.f32.mrf.mxu0
  %v10339 = vpop.f32.mrf.mxu0
  %v10340 = vadd.f32 0.0, %v10339
  %v10341 = vpop.f32.mrf.mxu0
  %10342 = vmatprep.mubr.bf16.mxu0 0
  %10343 = vmatmul.mubr.bf16.gmra.mxu0 %v10223
  %v10344 = vpop.f32.mrf.mxu0
  %v10345 = vadd.f32 0.0, %v10344
  %v10346 = vpop.f32.mrf.mxu0
  %v10347 = vpop.f32.mrf.mxu0
  %v10348 = vadd.f32 0.0, %v10347
  %v10349 = vpop.f32.mrf.mxu0
  %10350 = vmatprep.mubr.bf16.mxu0 0
  %10351 = vmatmul.mubr.bf16.gmra.mxu0 %v10226
  %v10352 = vpop.f32.mrf.mxu0
  %v10353 = vadd.f32 0.0, %v10352
  %v10354 = vpop.f32.mrf.mxu0
  %v10355 = vpop.f32.mrf.mxu0
  %v10356 = vadd.f32 0.0, %v10355
  %v10357 = vpop.f32.mrf.mxu0
  %10358 = vmatprep.mubr.bf16.mxu0 0
  %10359 = vmatmul.mubr.bf16.gmra.mxu0 %v10229
  %v10360 = vpop.f32.mrf.mxu0
  %v10361 = vadd.f32 0.0, %v10360
  %v10362 = vpop.f32.mrf.mxu0
  %v10363 = vpop.f32.mrf.mxu0
  %v10364 = vadd.f32 0.0, %v10363
  %v10365 = vpop.f32.mrf.mxu0
  %10366 = vmatprep.mubr.bf16.mxu0 0
  %10367 = vmatmul.mubr.bf16.gmra.mxu0 %v10232
  %v10368 = vpop.f32.mrf.mxu0
  %v10369 = vadd.f32 0.0, %v10368
  %v10370 = vpop.f32.mrf.mxu0
  %v10371 = vpop.f32.mrf.mxu0
  %v10372 = vadd.f32 0.0, %v10371
  %v10373 = vpop.f32.mrf.mxu0
  %10374 = vmatprep.mubr.bf16.mxu0 0
  %10375 = vmatmul.mubr.bf16.gmra.mxu0 %v10235
  %v10376 = vpop.f32.mrf.mxu0
  %v10377 = vadd.f32 0.0, %v10376
  %v10378 = vpop.f32.mrf.mxu0
  %v10379 = vpop.f32.mrf.mxu0
  %v10380 = vadd.f32 0.0, %v10379
  %v10381 = vpop.f32.mrf.mxu0
  %10382 = vmatprep.mubr.bf16.mxu0 0
  %10383 = vmatmul.mubr.bf16.gmra.mxu0 %v10238
  %v10384 = vpop.f32.mrf.mxu0
  %v10385 = vadd.f32 0.0, %v10384
  %v10386 = vpop.f32.mrf.mxu0
  %v10387 = vpop.f32.mrf.mxu0
  %v10388 = vadd.f32 0.0, %v10387
  %v10389 = vpop.f32.mrf.mxu0
  %10390 = vmatprep.mubr.bf16.mxu0 0
  %10391 = vmatmul.mubr.bf16.gmra.mxu0 %v10241
  %v10392 = vpop.f32.mrf.mxu0
  %v10393 = vadd.f32 0.0, %v10392
  %v10394 = vpop.f32.mrf.mxu0
  %v10395 = vpop.f32.mrf.mxu0
  %v10396 = vadd.f32 0.0, %v10395
  %v10397 = vpop.f32.mrf.mxu0
  %10398 = vmatprep.mubr.bf16.mxu0 0
  %10399 = vmatmul.mubr.bf16.gmra.mxu0 %v10244
  %v10400 = vpop.f32.mrf.mxu0
  %v10401 = vadd.f32 0.0, %v10400
  %v10402 = vpop.f32.mrf.mxu0
  %v10403 = vpop.f32.mrf.mxu0
  %v10404 = vadd.f32 0.0, %v10403
  %v10405 = vpop.f32.mrf.mxu0
  %10406 = vdwg.mxu0
  %v10408 = vunpack.c.l.b16 %v9431
  %v10409 = vpack.c.b16 %v10408, %v10408
  %v10410 = vshrl.u32 %v9756, 16
  %v10412 = vshll.u32 %v9756, 16
  %v10414 = vrot.slane %v10412, 1
  %v10415 = vor.u32 %v10410, %v10414
  %v10416 = vshll.u32 %v9514, 16
  %v10418 = vrot.slane %v10416, 1
  %v10419 = vsel %vm2231, %v10415, %v10418
  %v10420 = vshrl.u32 %v9514, 16
  %v10422 = vor.u32 %v10420, %v10418
  %v10423 = vshll.u32 %v9515, 16
  %v10425 = vrot.slane %v10423, 1
  %v10426 = vsel %vm2231, %v10422, %v10425
  %v10427 = vshrl.u32 %v9515, 16
  %v10429 = vor.u32 %v10427, %v10425
  %v10430 = vshll.u32 %v9516, 16
  %v10432 = vrot.slane %v10430, 1
  %v10433 = vsel %vm2231, %v10429, %v10432
  %v10434 = vshrl.u32 %v9516, 16
  %v10436 = vor.u32 %v10434, %v10432
  %v10437 = vshll.u32 %v9517, 16
  %v10439 = vrot.slane %v10437, 1
  %v10440 = vsel %vm2231, %v10436, %v10439
  %v10441 = vshrl.u32 %v9517, 16
  %v10443 = vor.u32 %v10441, %v10439
  %v10444 = vshll.u32 %v9518, 16
  %v10446 = vrot.slane %v10444, 1
  %v10447 = vsel %vm2231, %v10443, %v10446
  %v10448 = vshrl.u32 %v9518, 16
  %v10450 = vor.u32 %v10448, %v10446
  %v10451 = vshll.u32 %v9519, 16
  %v10453 = vrot.slane %v10451, 1
  %v10454 = vsel %vm2231, %v10450, %v10453
  %v10455 = vshrl.u32 %v9519, 16
  %v10457 = vor.u32 %v10455, %v10453
  %v10458 = vshll.u32 %v9520, 16
  %v10460 = vrot.slane %v10458, 1
  %v10461 = vsel %vm2231, %v10457, %v10460
  %v10462 = vshrl.u32 %v9520, 16
  %v10464 = vor.u32 %v10462, %v10460
  %v10465 = vshll.u32 %v9521, 16
  %v10467 = vrot.slane %v10465, 1
  %v10468 = vsel %vm2231, %v10464, %v10467
  %v10469 = vshrl.u32 %v9521, 16
  %v10471 = vor.u32 %v10469, %v10467
  %v10472 = vshll.u32 %v9522, 16
  %v10474 = vrot.slane %v10472, 1
  %v10475 = vsel %vm2231, %v10471, %v10474
  %v10476 = vshrl.u32 %v9522, 16
  %v10478 = vor.u32 %v10476, %v10474
  %v10479 = vshll.u32 %v9523, 16
  %v10481 = vrot.slane %v10479, 1
  %v10482 = vsel %vm2231, %v10478, %v10481
  %v10483 = vshrl.u32 %v9523, 16
  %v10485 = vor.u32 %v10483, %v10481
  %v10486 = vshll.u32 %v9524, 16
  %v10488 = vrot.slane %v10486, 1
  %v10489 = vsel %vm2231, %v10485, %v10488
  %v10490 = vshrl.u32 %v9524, 16
  %v10492 = vor.u32 %v10490, %v10488
  %v10493 = vshll.u32 %v9525, 16
  %v10495 = vrot.slane %v10493, 1
  %v10496 = vsel %vm2231, %v10492, %v10495
  %v10497 = vshrl.u32 %v9525, 16
  %v10499 = vor.u32 %v10497, %v10495
  %v10500 = vshll.u32 %v9526, 16
  %v10502 = vrot.slane %v10500, 1
  %v10503 = vsel %vm2231, %v10499, %v10502
  %v10504 = vshrl.u32 %v9526, 16
  %v10506 = vor.u32 %v10504, %v10502
  %v10507 = vshll.u32 %v9527, 16
  %v10509 = vrot.slane %v10507, 1
  %v10510 = vsel %vm2231, %v10506, %v10509
  %v10511 = vshrl.u32 %v9527, 16
  %v10513 = vor.u32 %v10511, %v10509
  %v10514 = vshll.u32 %v9528, 16
  %v10516 = vrot.slane %v10514, 1
  %v10517 = vsel %vm2231, %v10513, %v10516
  %v10518 = vshrl.u32 %v9528, 16
  %v10520 = vor.u32 %v10518, %v10516
  %v10522 = vshll.u32 %v10409, 16
  %v10524 = vrot.slane %v10522, 1
  %v10525 = vsel %vm2231, %v10520, %v10524
  %v10530 = vunpack.c.l.b16 %v9433
  %v10531 = vunpack.c.l.b16 %v9434
  %v10532 = vunpack.c.l.b16 %v9435
  %v10533 = vunpack.c.l.b16 %v9436
  %v10534 = vpack.c.b16 %v10531, %v10530
  %v10535 = vpack.c.b16 %v10533, %v10532
  %v10539 = vsel %vm9542, %v10419, 0
  %v10542 = vsel %vm9542, %v10426, 0
  %v10545 = vsel %vm9542, %v10433, 0
  %v10548 = vsel %vm9542, %v10440, 0
  %v10551 = vsel %vm9542, %v10447, 0
  %v10554 = vsel %vm9542, %v10454, 0
  %v10557 = vsel %vm9542, %v10461, 0
  %v10560 = vsel %vm9542, %v10468, 0
  %v10563 = vsel %vm9542, %v10475, 0
  %v10566 = vsel %vm9542, %v10482, 0
  %v10569 = vsel %vm9542, %v10489, 0
  %v10572 = vsel %vm9542, %v10496, 0
  %v10575 = vsel %vm9542, %v10503, 0
  %v10578 = vsel %vm9542, %v10510, 0
  %v10581 = vsel %vm9542, %v10517, 0
  %v10584 = vsel %vm9542, %v10525, 0
  %10586 = vmatprep.subr.bf16.mxu0 0
  %10587 = vmatpush1.bf16.msra.mxu0 0
  %10588 = vmatprep.subr.bf16.mxu0 0
  %10589 = vmatpush1.bf16.msra.mxu0 0
  %10590 = vmatprep.subr.bf16.mxu0 0
  %10591 = vmatpush1.bf16.msra.mxu0 0
  %10592 = vmatprep.subr.bf16.mxu0 0
  %10593 = vmatpush1.bf16.msra.mxu0 0
  %10594 = vmatprep.subr.bf16.mxu0 0
  %10595 = vmatpush1.bf16.msra.mxu0 0
  %10596 = vmatprep.subr.bf16.mxu0 0
  %10597 = vmatpush1.bf16.msra.mxu0 0
  %10598 = vmatprep.subr.bf16.mxu0 0
  %10599 = vmatpush1.bf16.msra.mxu0 %v10535
  %10600 = vmatprep.subr.bf16.mxu0 0
  %10601 = vmatpush1.bf16.msra.mxu0 %v10534
  %10602 = vmatprep.subr.bf16.mxu0 0
  %10603 = vmatpush2.bf16.msra.mxu0 0
  %10604 = vmatprep.subr.bf16.mxu0 0
  %10605 = vmatpush2.bf16.msra.mxu0 0
  %10606 = vmatprep.subr.bf16.mxu0 0
  %10607 = vmatpush2.bf16.msra.mxu0 0
  %10608 = vmatprep.subr.bf16.mxu0 0
  %10609 = vmatpush2.bf16.msra.mxu0 0
  %10610 = vmatprep.subr.bf16.mxu0 0
  %10611 = vmatpush2.bf16.msra.mxu0 0
  %10612 = vmatprep.subr.bf16.mxu0 0
  %10613 = vmatpush2.bf16.msra.mxu0 0
  %10614 = vmatprep.subr.bf16.mxu0 0
  %10615 = vmatpush2.bf16.msra.mxu0 0
  %10616 = vmatprep.subr.bf16.mxu0 0
  %10617 = vmatpush2.bf16.msra.mxu0 0
  %10618 = vmatprep.mubr.bf16.mxu0 0
  %10619 = vmatmul.mubr.bf16.gmra.mxu0 %v10539
  %v10620 = vpop.f32.mrf.mxu0
  %v10621 = vadd.f32 %v10281, %v10620
  %v10622 = vpop.f32.mrf.mxu0
  %v10623 = vpop.f32.mrf.mxu0
  %v10624 = vadd.f32 %v10284, %v10623
  %v10625 = vpop.f32.mrf.mxu0
  %10626 = vmatprep.mubr.bf16.mxu0 0
  %10627 = vmatmul.mubr.bf16.gmra.mxu0 %v10542
  %v10628 = vpop.f32.mrf.mxu0
  %v10629 = vadd.f32 %v10289, %v10628
  %v10630 = vpop.f32.mrf.mxu0
  %v10631 = vpop.f32.mrf.mxu0
  %v10632 = vadd.f32 %v10292, %v10631
  %v10633 = vpop.f32.mrf.mxu0
  %10634 = vmatprep.mubr.bf16.mxu0 0
  %10635 = vmatmul.mubr.bf16.gmra.mxu0 %v10545
  %v10636 = vpop.f32.mrf.mxu0
  %v10637 = vadd.f32 %v10297, %v10636
  %v10638 = vpop.f32.mrf.mxu0
  %v10639 = vpop.f32.mrf.mxu0
  %v10640 = vadd.f32 %v10300, %v10639
  %v10641 = vpop.f32.mrf.mxu0
  %10642 = vmatprep.mubr.bf16.mxu0 0
  %10643 = vmatmul.mubr.bf16.gmra.mxu0 %v10548
  %v10644 = vpop.f32.mrf.mxu0
  %v10645 = vadd.f32 %v10305, %v10644
  %v10646 = vpop.f32.mrf.mxu0
  %v10647 = vpop.f32.mrf.mxu0
  %v10648 = vadd.f32 %v10308, %v10647
  %v10649 = vpop.f32.mrf.mxu0
  %10650 = vmatprep.mubr.bf16.mxu0 0
  %10651 = vmatmul.mubr.bf16.gmra.mxu0 %v10551
  %v10652 = vpop.f32.mrf.mxu0
  %v10653 = vadd.f32 %v10313, %v10652
  %v10654 = vpop.f32.mrf.mxu0
  %v10655 = vpop.f32.mrf.mxu0
  %v10656 = vadd.f32 %v10316, %v10655
  %v10657 = vpop.f32.mrf.mxu0
  %10658 = vmatprep.mubr.bf16.mxu0 0
  %10659 = vmatmul.mubr.bf16.gmra.mxu0 %v10554
  %v10660 = vpop.f32.mrf.mxu0
  %v10661 = vadd.f32 %v10321, %v10660
  %v10662 = vpop.f32.mrf.mxu0
  %v10663 = vpop.f32.mrf.mxu0
  %v10664 = vadd.f32 %v10324, %v10663
  %v10665 = vpop.f32.mrf.mxu0
  %10666 = vmatprep.mubr.bf16.mxu0 0
  %10667 = vmatmul.mubr.bf16.gmra.mxu0 %v10557
  %v10668 = vpop.f32.mrf.mxu0
  %v10669 = vadd.f32 %v10329, %v10668
  %v10670 = vpop.f32.mrf.mxu0
  %v10671 = vpop.f32.mrf.mxu0
  %v10672 = vadd.f32 %v10332, %v10671
  %v10673 = vpop.f32.mrf.mxu0
  %10674 = vmatprep.mubr.bf16.mxu0 0
  %10675 = vmatmul.mubr.bf16.gmra.mxu0 %v10560
  %v10676 = vpop.f32.mrf.mxu0
  %v10677 = vadd.f32 %v10337, %v10676
  %v10678 = vpop.f32.mrf.mxu0
  %v10679 = vpop.f32.mrf.mxu0
  %v10680 = vadd.f32 %v10340, %v10679
  %v10681 = vpop.f32.mrf.mxu0
  %10682 = vmatprep.mubr.bf16.mxu0 0
  %10683 = vmatmul.mubr.bf16.gmra.mxu0 %v10563
  %v10684 = vpop.f32.mrf.mxu0
  %v10685 = vadd.f32 %v10345, %v10684
  %v10686 = vpop.f32.mrf.mxu0
  %v10687 = vpop.f32.mrf.mxu0
  %v10688 = vadd.f32 %v10348, %v10687
  %v10689 = vpop.f32.mrf.mxu0
  %10690 = vmatprep.mubr.bf16.mxu0 0
  %10691 = vmatmul.mubr.bf16.gmra.mxu0 %v10566
  %v10692 = vpop.f32.mrf.mxu0
  %v10693 = vadd.f32 %v10353, %v10692
  %v10694 = vpop.f32.mrf.mxu0
  %v10695 = vpop.f32.mrf.mxu0
  %v10696 = vadd.f32 %v10356, %v10695
  %v10697 = vpop.f32.mrf.mxu0
  %10698 = vmatprep.mubr.bf16.mxu0 0
  %10699 = vmatmul.mubr.bf16.gmra.mxu0 %v10569
  %v10700 = vpop.f32.mrf.mxu0
  %v10701 = vadd.f32 %v10361, %v10700
  %v10702 = vpop.f32.mrf.mxu0
  %v10703 = vpop.f32.mrf.mxu0
  %v10704 = vadd.f32 %v10364, %v10703
  %v10705 = vpop.f32.mrf.mxu0
  %10706 = vmatprep.mubr.bf16.mxu0 0
  %10707 = vmatmul.mubr.bf16.gmra.mxu0 %v10572
  %v10708 = vpop.f32.mrf.mxu0
  %v10709 = vadd.f32 %v10369, %v10708
  %v10710 = vpop.f32.mrf.mxu0
  %v10711 = vpop.f32.mrf.mxu0
  %v10712 = vadd.f32 %v10372, %v10711
  %v10713 = vpop.f32.mrf.mxu0
  %10714 = vmatprep.mubr.bf16.mxu0 0
  %10715 = vmatmul.mubr.bf16.gmra.mxu0 %v10575
  %v10716 = vpop.f32.mrf.mxu0
  %v10717 = vadd.f32 %v10377, %v10716
  %v10718 = vpop.f32.mrf.mxu0
  %v10719 = vpop.f32.mrf.mxu0
  %v10720 = vadd.f32 %v10380, %v10719
  %v10721 = vpop.f32.mrf.mxu0
  %10722 = vmatprep.mubr.bf16.mxu0 0
  %10723 = vmatmul.mubr.bf16.gmra.mxu0 %v10578
  %v10724 = vpop.f32.mrf.mxu0
  %v10725 = vadd.f32 %v10385, %v10724
  %v10726 = vpop.f32.mrf.mxu0
  %v10727 = vpop.f32.mrf.mxu0
  %v10728 = vadd.f32 %v10388, %v10727
  %v10729 = vpop.f32.mrf.mxu0
  %10730 = vmatprep.mubr.bf16.mxu0 0
  %10731 = vmatmul.mubr.bf16.gmra.mxu0 %v10581
  %v10732 = vpop.f32.mrf.mxu0
  %v10733 = vadd.f32 %v10393, %v10732
  %v10734 = vpop.f32.mrf.mxu0
  %v10735 = vpop.f32.mrf.mxu0
  %v10736 = vadd.f32 %v10396, %v10735
  %v10737 = vpop.f32.mrf.mxu0
  %10738 = vmatprep.mubr.bf16.mxu0 0
  %10739 = vmatmul.mubr.bf16.gmra.mxu0 %v10584
  %v10740 = vpop.f32.mrf.mxu0
  %v10741 = vadd.f32 %v10401, %v10740
  %v10742 = vpop.f32.mrf.mxu0
  %v10743 = vpop.f32.mrf.mxu0
  %v10744 = vadd.f32 %v10404, %v10743
  %v10745 = vpop.f32.mrf.mxu0
  %10746 = vdwg.mxu0
  %v10747 = vld [vmem:[#allocation4 + $0x8] sm:$0xe]
  %s10748 = scalar_lea.vmem %s5, 80
  %v10749 = vld [vmem:[%s10748] sm:$0xf]
  %v10750 = vld [vmem:[%s10748 + $0x4] sm:$0xf]
  %v10751 = vld [vmem:[%s10748 + $0x8] sm:$0xf]
  %v10752 = vld [vmem:[%s10748 + $0xc] sm:$0xf]
  %v10754 = vunpack.c.l.b16 %v10747
  %v10755 = vpack.c.b16 %v10005, %v10754
  %v10756 = vrot.slane %v10755, 1
  %v10757 = vrot.slane %v10038, 1
  %v10758 = vsel %vm2994, %v10756, %v10757
  %v10759 = vrot.slane %v10039, 1
  %v10760 = vsel %vm2994, %v10757, %v10759
  %v10761 = vrot.slane %v10040, 1
  %v10762 = vsel %vm2994, %v10759, %v10761
  %v10763 = vrot.slane %v10041, 1
  %v10764 = vsel %vm2994, %v10761, %v10763
  %v10765 = vrot.slane %v10042, 1
  %v10766 = vsel %vm2994, %v10763, %v10765
  %v10767 = vrot.slane %v10043, 1
  %v10768 = vsel %vm2994, %v10765, %v10767
  %v10769 = vrot.slane %v10044, 1
  %v10770 = vsel %vm2994, %v10767, %v10769
  %v10771 = vrot.slane %v10045, 1
  %v10772 = vsel %vm2994, %v10769, %v10771
  %v10773 = vrot.slane %v10046, 1
  %v10774 = vsel %vm2994, %v10771, %v10773
  %v10775 = vrot.slane %v10047, 1
  %v10776 = vsel %vm2994, %v10773, %v10775
  %v10777 = vrot.slane %v10048, 1
  %v10778 = vsel %vm2994, %v10775, %v10777
  %v10779 = vrot.slane %v10049, 1
  %v10780 = vsel %vm2994, %v10777, %v10779
  %v10781 = vrot.slane %v10050, 1
  %v10782 = vsel %vm2994, %v10779, %v10781
  %v10783 = vrot.slane %v10051, 1
  %v10784 = vsel %vm2994, %v10781, %v10783
  %v10785 = vrot.slane %v10052, 1
  %v10786 = vsel %vm2994, %v10783, %v10785
  %v10787 = vrot.slane %v10053, 1
  %v10788 = vsel %vm2994, %v10785, %v10787
  %v10793 = vunpack.c.l.b16 %v10749
  %v10794 = vunpack.c.l.b16 %v10750
  %v10795 = vunpack.c.l.b16 %v10751
  %v10796 = vunpack.c.l.b16 %v10752
  %v10797 = vpack.c.b16 %v10794, %v10793
  %v10798 = vpack.c.b16 %v10796, %v10795
  %v10802 = vsel %vm9542, %v10758, 0
  %v10805 = vsel %vm9542, %v10760, 0
  %v10808 = vsel %vm9542, %v10762, 0
  %v10811 = vsel %vm9542, %v10764, 0
  %v10814 = vsel %vm9542, %v10766, 0
  %v10817 = vsel %vm9542, %v10768, 0
  %v10820 = vsel %vm9542, %v10770, 0
  %v10823 = vsel %vm9542, %v10772, 0
  %v10826 = vsel %vm9542, %v10774, 0
  %v10829 = vsel %vm9542, %v10776, 0
  %v10832 = vsel %vm9542, %v10778, 0
  %v10835 = vsel %vm9542, %v10780, 0
  %v10838 = vsel %vm9542, %v10782, 0
  %v10841 = vsel %vm9542, %v10784, 0
  %v10844 = vsel %vm9542, %v10786, 0
  %v10847 = vsel %vm9542, %v10788, 0
  %10849 = vmatprep.subr.bf16.mxu0 0
  %10850 = vmatpush1.bf16.msra.mxu0 0
  %10851 = vmatprep.subr.bf16.mxu0 0
  %10852 = vmatpush1.bf16.msra.mxu0 0
  %10853 = vmatprep.subr.bf16.mxu0 0
  %10854 = vmatpush1.bf16.msra.mxu0 0
  %10855 = vmatprep.subr.bf16.mxu0 0
  %10856 = vmatpush1.bf16.msra.mxu0 0
  %10857 = vmatprep.subr.bf16.mxu0 0
  %10858 = vmatpush1.bf16.msra.mxu0 0
  %10859 = vmatprep.subr.bf16.mxu0 0
  %10860 = vmatpush1.bf16.msra.mxu0 0
  %10861 = vmatprep.subr.bf16.mxu0 0
  %10862 = vmatpush1.bf16.msra.mxu0 %v10798
  %10863 = vmatprep.subr.bf16.mxu0 0
  %10864 = vmatpush1.bf16.msra.mxu0 %v10797
  %10865 = vmatprep.subr.bf16.mxu0 0
  %10866 = vmatpush2.bf16.msra.mxu0 0
  %10867 = vmatprep.subr.bf16.mxu0 0
  %10868 = vmatpush2.bf16.msra.mxu0 0
  %10869 = vmatprep.subr.bf16.mxu0 0
  %10870 = vmatpush2.bf16.msra.mxu0 0
  %10871 = vmatprep.subr.bf16.mxu0 0
  %10872 = vmatpush2.bf16.msra.mxu0 0
  %10873 = vmatprep.subr.bf16.mxu0 0
  %10874 = vmatpush2.bf16.msra.mxu0 0
  %10875 = vmatprep.subr.bf16.mxu0 0
  %10876 = vmatpush2.bf16.msra.mxu0 0
  %10877 = vmatprep.subr.bf16.mxu0 0
  %10878 = vmatpush2.bf16.msra.mxu0 0
  %10879 = vmatprep.subr.bf16.mxu0 0
  %10880 = vmatpush2.bf16.msra.mxu0 0
  %10881 = vmatprep.mubr.bf16.mxu0 0
  %10882 = vmatmul.mubr.bf16.gmra.mxu0 %v10802
  %v10883 = vpop.f32.mrf.mxu0
  %v10884 = vadd.f32 0.0, %v10883
  %v10885 = vpop.f32.mrf.mxu0
  %v10886 = vpop.f32.mrf.mxu0
  %v10887 = vadd.f32 0.0, %v10886
  %v10888 = vpop.f32.mrf.mxu0
  %10889 = vmatprep.mubr.bf16.mxu0 0
  %10890 = vmatmul.mubr.bf16.gmra.mxu0 %v10805
  %v10891 = vpop.f32.mrf.mxu0
  %v10892 = vadd.f32 0.0, %v10891
  %v10893 = vpop.f32.mrf.mxu0
  %v10894 = vpop.f32.mrf.mxu0
  %v10895 = vadd.f32 0.0, %v10894
  %v10896 = vpop.f32.mrf.mxu0
  %10897 = vmatprep.mubr.bf16.mxu0 0
  %10898 = vmatmul.mubr.bf16.gmra.mxu0 %v10808
  %v10899 = vpop.f32.mrf.mxu0
  %v10900 = vadd.f32 0.0, %v10899
  %v10901 = vpop.f32.mrf.mxu0
  %v10902 = vpop.f32.mrf.mxu0
  %v10903 = vadd.f32 0.0, %v10902
  %v10904 = vpop.f32.mrf.mxu0
  %10905 = vmatprep.mubr.bf16.mxu0 0
  %10906 = vmatmul.mubr.bf16.gmra.mxu0 %v10811
  %v10907 = vpop.f32.mrf.mxu0
  %v10908 = vadd.f32 0.0, %v10907
  %v10909 = vpop.f32.mrf.mxu0
  %v10910 = vpop.f32.mrf.mxu0
  %v10911 = vadd.f32 0.0, %v10910
  %v10912 = vpop.f32.mrf.mxu0
  %10913 = vmatprep.mubr.bf16.mxu0 0
  %10914 = vmatmul.mubr.bf16.gmra.mxu0 %v10814
  %v10915 = vpop.f32.mrf.mxu0
  %v10916 = vadd.f32 0.0, %v10915
  %v10917 = vpop.f32.mrf.mxu0
  %v10918 = vpop.f32.mrf.mxu0
  %v10919 = vadd.f32 0.0, %v10918
  %v10920 = vpop.f32.mrf.mxu0
  %10921 = vmatprep.mubr.bf16.mxu0 0
  %10922 = vmatmul.mubr.bf16.gmra.mxu0 %v10817
  %v10923 = vpop.f32.mrf.mxu0
  %v10924 = vadd.f32 0.0, %v10923
  %v10925 = vpop.f32.mrf.mxu0
  %v10926 = vpop.f32.mrf.mxu0
  %v10927 = vadd.f32 0.0, %v10926
  %v10928 = vpop.f32.mrf.mxu0
  %10929 = vmatprep.mubr.bf16.mxu0 0
  %10930 = vmatmul.mubr.bf16.gmra.mxu0 %v10820
  %v10931 = vpop.f32.mrf.mxu0
  %v10932 = vadd.f32 0.0, %v10931
  %v10933 = vpop.f32.mrf.mxu0
  %v10934 = vpop.f32.mrf.mxu0
  %v10935 = vadd.f32 0.0, %v10934
  %v10936 = vpop.f32.mrf.mxu0
  %10937 = vmatprep.mubr.bf16.mxu0 0
  %10938 = vmatmul.mubr.bf16.gmra.mxu0 %v10823
  %v10939 = vpop.f32.mrf.mxu0
  %v10940 = vadd.f32 0.0, %v10939
  %v10941 = vpop.f32.mrf.mxu0
  %v10942 = vpop.f32.mrf.mxu0
  %v10943 = vadd.f32 0.0, %v10942
  %v10944 = vpop.f32.mrf.mxu0
  %10945 = vmatprep.mubr.bf16.mxu0 0
  %10946 = vmatmul.mubr.bf16.gmra.mxu0 %v10826
  %v10947 = vpop.f32.mrf.mxu0
  %v10948 = vadd.f32 0.0, %v10947
  %v10949 = vpop.f32.mrf.mxu0
  %v10950 = vpop.f32.mrf.mxu0
  %v10951 = vadd.f32 0.0, %v10950
  %v10952 = vpop.f32.mrf.mxu0
  %10953 = vmatprep.mubr.bf16.mxu0 0
  %10954 = vmatmul.mubr.bf16.gmra.mxu0 %v10829
  %v10955 = vpop.f32.mrf.mxu0
  %v10956 = vadd.f32 0.0, %v10955
  %v10957 = vpop.f32.mrf.mxu0
  %v10958 = vpop.f32.mrf.mxu0
  %v10959 = vadd.f32 0.0, %v10958
  %v10960 = vpop.f32.mrf.mxu0
  %10961 = vmatprep.mubr.bf16.mxu0 0
  %10962 = vmatmul.mubr.bf16.gmra.mxu0 %v10832
  %v10963 = vpop.f32.mrf.mxu0
  %v10964 = vadd.f32 0.0, %v10963
  %v10965 = vpop.f32.mrf.mxu0
  %v10966 = vpop.f32.mrf.mxu0
  %v10967 = vadd.f32 0.0, %v10966
  %v10968 = vpop.f32.mrf.mxu0
  %10969 = vmatprep.mubr.bf16.mxu0 0
  %10970 = vmatmul.mubr.bf16.gmra.mxu0 %v10835
  %v10971 = vpop.f32.mrf.mxu0
  %v10972 = vadd.f32 0.0, %v10971
  %v10973 = vpop.f32.mrf.mxu0
  %v10974 = vpop.f32.mrf.mxu0
  %v10975 = vadd.f32 0.0, %v10974
  %v10976 = vpop.f32.mrf.mxu0
  %10977 = vmatprep.mubr.bf16.mxu0 0
  %10978 = vmatmul.mubr.bf16.gmra.mxu0 %v10838
  %v10979 = vpop.f32.mrf.mxu0
  %v10980 = vadd.f32 0.0, %v10979
  %v10981 = vpop.f32.mrf.mxu0
  %v10982 = vpop.f32.mrf.mxu0
  %v10983 = vadd.f32 0.0, %v10982
  %v10984 = vpop.f32.mrf.mxu0
  %10985 = vmatprep.mubr.bf16.mxu0 0
  %10986 = vmatmul.mubr.bf16.gmra.mxu0 %v10841
  %v10987 = vpop.f32.mrf.mxu0
  %v10988 = vadd.f32 0.0, %v10987
  %v10989 = vpop.f32.mrf.mxu0
  %v10990 = vpop.f32.mrf.mxu0
  %v10991 = vadd.f32 0.0, %v10990
  %v10992 = vpop.f32.mrf.mxu0
  %10993 = vmatprep.mubr.bf16.mxu0 0
  %10994 = vmatmul.mubr.bf16.gmra.mxu0 %v10844
  %v10995 = vpop.f32.mrf.mxu0
  %v10996 = vadd.f32 0.0, %v10995
  %v10997 = vpop.f32.mrf.mxu0
  %v10998 = vpop.f32.mrf.mxu0
  %v10999 = vadd.f32 0.0, %v10998
  %v11000 = vpop.f32.mrf.mxu0
  %11001 = vmatprep.mubr.bf16.mxu0 0
  %11002 = vmatmul.mubr.bf16.gmra.mxu0 %v10847
  %v11003 = vpop.f32.mrf.mxu0
  %v11004 = vadd.f32 0.0, %v11003
  %v11005 = vpop.f32.mrf.mxu0
  %v11006 = vpop.f32.mrf.mxu0
  %v11007 = vadd.f32 0.0, %v11006
  %v11008 = vpop.f32.mrf.mxu0
  %11009 = vdwg.mxu0
  %v11011 = vunpack.c.l.b16 %v9437
  %v11012 = vpack.c.b16 %v9755, %v11011
  %v11013 = vrot.slane %v11012, 1
  %v11014 = vrot.slane %v9514, 1
  %v11015 = vsel %vm2994, %v11013, %v11014
  %v11016 = vrot.slane %v9515, 1
  %v11017 = vsel %vm2994, %v11014, %v11016
  %v11018 = vrot.slane %v9516, 1
  %v11019 = vsel %vm2994, %v11016, %v11018
  %v11020 = vrot.slane %v9517, 1
  %v11021 = vsel %vm2994, %v11018, %v11020
  %v11022 = vrot.slane %v9518, 1
  %v11023 = vsel %vm2994, %v11020, %v11022
  %v11024 = vrot.slane %v9519, 1
  %v11025 = vsel %vm2994, %v11022, %v11024
  %v11026 = vrot.slane %v9520, 1
  %v11027 = vsel %vm2994, %v11024, %v11026
  %v11028 = vrot.slane %v9521, 1
  %v11029 = vsel %vm2994, %v11026, %v11028
  %v11030 = vrot.slane %v9522, 1
  %v11031 = vsel %vm2994, %v11028, %v11030
  %v11032 = vrot.slane %v9523, 1
  %v11033 = vsel %vm2994, %v11030, %v11032
  %v11034 = vrot.slane %v9524, 1
  %v11035 = vsel %vm2994, %v11032, %v11034
  %v11036 = vrot.slane %v9525, 1
  %v11037 = vsel %vm2994, %v11034, %v11036
  %v11038 = vrot.slane %v9526, 1
  %v11039 = vsel %vm2994, %v11036, %v11038
  %v11040 = vrot.slane %v9527, 1
  %v11041 = vsel %vm2994, %v11038, %v11040
  %v11042 = vrot.slane %v9528, 1
  %v11043 = vsel %vm2994, %v11040, %v11042
  %v11044 = vrot.slane %v10409, 1
  %v11045 = vsel %vm2994, %v11042, %v11044
  %v11050 = vunpack.c.l.b16 %v9439
  %v11051 = vunpack.c.l.b16 %v9440
  %v11052 = vunpack.c.l.b16 %v9441
  %v11053 = vunpack.c.l.b16 %v9442
  %v11054 = vpack.c.b16 %v11051, %v11050
  %v11055 = vpack.c.b16 %v11053, %v11052
  %v11059 = vsel %vm9542, %v11015, 0
  %v11062 = vsel %vm9542, %v11017, 0
  %v11065 = vsel %vm9542, %v11019, 0
  %v11068 = vsel %vm9542, %v11021, 0
  %v11071 = vsel %vm9542, %v11023, 0
  %v11074 = vsel %vm9542, %v11025, 0
  %v11077 = vsel %vm9542, %v11027, 0
  %v11080 = vsel %vm9542, %v11029, 0
  %v11083 = vsel %vm9542, %v11031, 0
  %v11086 = vsel %vm9542, %v11033, 0
  %v11089 = vsel %vm9542, %v11035, 0
  %v11092 = vsel %vm9542, %v11037, 0
  %v11095 = vsel %vm9542, %v11039, 0
  %v11098 = vsel %vm9542, %v11041, 0
  %v11101 = vsel %vm9542, %v11043, 0
  %v11104 = vsel %vm9542, %v11045, 0
  %11106 = vmatprep.subr.bf16.mxu0 0
  %11107 = vmatpush1.bf16.msra.mxu0 0
  %11108 = vmatprep.subr.bf16.mxu0 0
  %11109 = vmatpush1.bf16.msra.mxu0 0
  %11110 = vmatprep.subr.bf16.mxu0 0
  %11111 = vmatpush1.bf16.msra.mxu0 0
  %11112 = vmatprep.subr.bf16.mxu0 0
  %11113 = vmatpush1.bf16.msra.mxu0 0
  %11114 = vmatprep.subr.bf16.mxu0 0
  %11115 = vmatpush1.bf16.msra.mxu0 0
  %11116 = vmatprep.subr.bf16.mxu0 0
  %11117 = vmatpush1.bf16.msra.mxu0 0
  %11118 = vmatprep.subr.bf16.mxu0 0
  %11119 = vmatpush1.bf16.msra.mxu0 %v11055
  %11120 = vmatprep.subr.bf16.mxu0 0
  %11121 = vmatpush1.bf16.msra.mxu0 %v11054
  %11122 = vmatprep.subr.bf16.mxu0 0
  %11123 = vmatpush2.bf16.msra.mxu0 0
  %11124 = vmatprep.subr.bf16.mxu0 0
  %11125 = vmatpush2.bf16.msra.mxu0 0
  %11126 = vmatprep.subr.bf16.mxu0 0
  %11127 = vmatpush2.bf16.msra.mxu0 0
  %11128 = vmatprep.subr.bf16.mxu0 0
  %11129 = vmatpush2.bf16.msra.mxu0 0
  %11130 = vmatprep.subr.bf16.mxu0 0
  %11131 = vmatpush2.bf16.msra.mxu0 0
  %11132 = vmatprep.subr.bf16.mxu0 0
  %11133 = vmatpush2.bf16.msra.mxu0 0
  %11134 = vmatprep.subr.bf16.mxu0 0
  %11135 = vmatpush2.bf16.msra.mxu0 0
  %11136 = vmatprep.subr.bf16.mxu0 0
  %11137 = vmatpush2.bf16.msra.mxu0 0
  %11138 = vmatprep.mubr.bf16.mxu0 0
  %11139 = vmatmul.mubr.bf16.gmra.mxu0 %v11059
  %v11140 = vpop.f32.mrf.mxu0
  %v11141 = vadd.f32 %v10884, %v11140
  %v11142 = vpop.f32.mrf.mxu0
  %v11143 = vpop.f32.mrf.mxu0
  %v11144 = vadd.f32 %v10887, %v11143
  %v11145 = vpop.f32.mrf.mxu0
  %11146 = vmatprep.mubr.bf16.mxu0 0
  %11147 = vmatmul.mubr.bf16.gmra.mxu0 %v11062
  %v11148 = vpop.f32.mrf.mxu0
  %v11149 = vadd.f32 %v10892, %v11148
  %v11150 = vpop.f32.mrf.mxu0
  %v11151 = vpop.f32.mrf.mxu0
  %v11152 = vadd.f32 %v10895, %v11151
  %v11153 = vpop.f32.mrf.mxu0
  %11154 = vmatprep.mubr.bf16.mxu0 0
  %11155 = vmatmul.mubr.bf16.gmra.mxu0 %v11065
  %v11156 = vpop.f32.mrf.mxu0
  %v11157 = vadd.f32 %v10900, %v11156
  %v11158 = vpop.f32.mrf.mxu0
  %v11159 = vpop.f32.mrf.mxu0
  %v11160 = vadd.f32 %v10903, %v11159
  %v11161 = vpop.f32.mrf.mxu0
  %11162 = vmatprep.mubr.bf16.mxu0 0
  %11163 = vmatmul.mubr.bf16.gmra.mxu0 %v11068
  %v11164 = vpop.f32.mrf.mxu0
  %v11165 = vadd.f32 %v10908, %v11164
  %v11166 = vpop.f32.mrf.mxu0
  %v11167 = vpop.f32.mrf.mxu0
  %v11168 = vadd.f32 %v10911, %v11167
  %v11169 = vpop.f32.mrf.mxu0
  %11170 = vmatprep.mubr.bf16.mxu0 0
  %11171 = vmatmul.mubr.bf16.gmra.mxu0 %v11071
  %v11172 = vpop.f32.mrf.mxu0
  %v11173 = vadd.f32 %v10916, %v11172
  %v11174 = vpop.f32.mrf.mxu0
  %v11175 = vpop.f32.mrf.mxu0
  %v11176 = vadd.f32 %v10919, %v11175
  %v11177 = vpop.f32.mrf.mxu0
  %11178 = vmatprep.mubr.bf16.mxu0 0
  %11179 = vmatmul.mubr.bf16.gmra.mxu0 %v11074
  %v11180 = vpop.f32.mrf.mxu0
  %v11181 = vadd.f32 %v10924, %v11180
  %v11182 = vpop.f32.mrf.mxu0
  %v11183 = vpop.f32.mrf.mxu0
  %v11184 = vadd.f32 %v10927, %v11183
  %v11185 = vpop.f32.mrf.mxu0
  %11186 = vmatprep.mubr.bf16.mxu0 0
  %11187 = vmatmul.mubr.bf16.gmra.mxu0 %v11077
  %v11188 = vpop.f32.mrf.mxu0
  %v11189 = vadd.f32 %v10932, %v11188
  %v11190 = vpop.f32.mrf.mxu0
  %v11191 = vpop.f32.mrf.mxu0
  %v11192 = vadd.f32 %v10935, %v11191
  %v11193 = vpop.f32.mrf.mxu0
  %11194 = vmatprep.mubr.bf16.mxu0 0
  %11195 = vmatmul.mubr.bf16.gmra.mxu0 %v11080
  %v11196 = vpop.f32.mrf.mxu0
  %v11197 = vadd.f32 %v10940, %v11196
  %v11198 = vpop.f32.mrf.mxu0
  %v11199 = vpop.f32.mrf.mxu0
  %v11200 = vadd.f32 %v10943, %v11199
  %v11201 = vpop.f32.mrf.mxu0
  %11202 = vmatprep.mubr.bf16.mxu0 0
  %11203 = vmatmul.mubr.bf16.gmra.mxu0 %v11083
  %v11204 = vpop.f32.mrf.mxu0
  %v11205 = vadd.f32 %v10948, %v11204
  %v11206 = vpop.f32.mrf.mxu0
  %v11207 = vpop.f32.mrf.mxu0
  %v11208 = vadd.f32 %v10951, %v11207
  %v11209 = vpop.f32.mrf.mxu0
  %11210 = vmatprep.mubr.bf16.mxu0 0
  %11211 = vmatmul.mubr.bf16.gmra.mxu0 %v11086
  %v11212 = vpop.f32.mrf.mxu0
  %v11213 = vadd.f32 %v10956, %v11212
  %v11214 = vpop.f32.mrf.mxu0
  %v11215 = vpop.f32.mrf.mxu0
  %v11216 = vadd.f32 %v10959, %v11215
  %v11217 = vpop.f32.mrf.mxu0
  %11218 = vmatprep.mubr.bf16.mxu0 0
  %11219 = vmatmul.mubr.bf16.gmra.mxu0 %v11089
  %v11220 = vpop.f32.mrf.mxu0
  %v11221 = vadd.f32 %v10964, %v11220
  %v11222 = vpop.f32.mrf.mxu0
  %v11223 = vpop.f32.mrf.mxu0
  %v11224 = vadd.f32 %v10967, %v11223
  %v11225 = vpop.f32.mrf.mxu0
  %11226 = vmatprep.mubr.bf16.mxu0 0
  %11227 = vmatmul.mubr.bf16.gmra.mxu0 %v11092
  %v11228 = vpop.f32.mrf.mxu0
  %v11229 = vadd.f32 %v10972, %v11228
  %v11230 = vpop.f32.mrf.mxu0
  %v11231 = vpop.f32.mrf.mxu0
  %v11232 = vadd.f32 %v10975, %v11231
  %v11233 = vpop.f32.mrf.mxu0
  %11234 = vmatprep.mubr.bf16.mxu0 0
  %11235 = vmatmul.mubr.bf16.gmra.mxu0 %v11095
  %v11236 = vpop.f32.mrf.mxu0
  %v11237 = vadd.f32 %v10980, %v11236
  %v11238 = vpop.f32.mrf.mxu0
  %v11239 = vpop.f32.mrf.mxu0
  %v11240 = vadd.f32 %v10983, %v11239
  %v11241 = vpop.f32.mrf.mxu0
  %11242 = vmatprep.mubr.bf16.mxu0 0
  %11243 = vmatmul.mubr.bf16.gmra.mxu0 %v11098
  %v11244 = vpop.f32.mrf.mxu0
  %v11245 = vadd.f32 %v10988, %v11244
  %v11246 = vpop.f32.mrf.mxu0
  %v11247 = vpop.f32.mrf.mxu0
  %v11248 = vadd.f32 %v10991, %v11247
  %v11249 = vpop.f32.mrf.mxu0
  %11250 = vmatprep.mubr.bf16.mxu0 0
  %11251 = vmatmul.mubr.bf16.gmra.mxu0 %v11101
  %v11252 = vpop.f32.mrf.mxu0
  %v11253 = vadd.f32 %v10996, %v11252
  %v11254 = vpop.f32.mrf.mxu0
  %v11255 = vpop.f32.mrf.mxu0
  %v11256 = vadd.f32 %v10999, %v11255
  %v11257 = vpop.f32.mrf.mxu0
  %11258 = vmatprep.mubr.bf16.mxu0 0
  %11259 = vmatmul.mubr.bf16.gmra.mxu0 %v11104
  %v11260 = vpop.f32.mrf.mxu0
  %v11261 = vadd.f32 %v11004, %v11260
  %v11262 = vpop.f32.mrf.mxu0
  %v11263 = vpop.f32.mrf.mxu0
  %v11264 = vadd.f32 %v11007, %v11263
  %v11265 = vpop.f32.mrf.mxu0
  %11266 = vdwg.mxu0
  %v11267 = vld [vmem:[#allocation4 + $0x10] sm:$0xf]
  %v11268 = vld [vmem:[#allocation4 + $0x14] sm:$0xf]
  %v11269 = vld [vmem:[#allocation4 + $0x18] sm:$0xf]
  %v11270 = vld [vmem:[#allocation4 + $0x1c] sm:$0xf]
  %v11271 = vld [vmem:[#allocation4 + $0x20] sm:$0xf]
  %v11272 = vld [vmem:[#allocation4 + $0x24] sm:$0xf]
  %v11273 = vld [vmem:[#allocation4 + $0x28] sm:$0xf]
  %v11274 = vld [vmem:[#allocation4 + $0x2c] sm:$0xf]
  %v11275 = vld [vmem:[#allocation4 + $0x30] sm:$0xf]
  %v11276 = vld [vmem:[#allocation4 + $0x34] sm:$0xf]
  %v11277 = vld [vmem:[#allocation4 + $0x38] sm:$0xf]
  %v11278 = vld [vmem:[#allocation4 + $0x3c] sm:$0xf]
  %v11279 = vld [vmem:[#allocation4 + $0x40] sm:$0xf]
  %v11280 = vld [vmem:[#allocation4 + $0x44] sm:$0xf]
  %v11281 = vld [vmem:[#allocation4 + $0x48] sm:$0xf]
  %v11282 = vld [vmem:[#allocation4 + $0x4c] sm:$0xf]
  %v11283 = vld [vmem:[#allocation4 + $0x50] sm:$0xf]
  %v11284 = vld [vmem:[#allocation4 + $0x54] sm:$0xf]
  %v11285 = vld [vmem:[#allocation4 + $0x58] sm:$0xf]
  %v11286 = vld [vmem:[#allocation4 + $0x5c] sm:$0xf]
  %v11287 = vld [vmem:[#allocation4 + $0x60] sm:$0xf]
  %v11288 = vld [vmem:[#allocation4 + $0x64] sm:$0xf]
  %v11289 = vld [vmem:[#allocation4 + $0x68] sm:$0xf]
  %v11290 = vld [vmem:[#allocation4 + $0x6c] sm:$0xf]
  %v11291 = vld [vmem:[#allocation4 + $0x70] sm:$0xf]
  %v11292 = vld [vmem:[#allocation4 + $0x74] sm:$0xf]
  %v11293 = vld [vmem:[#allocation4 + $0x78] sm:$0xf]
  %v11294 = vld [vmem:[#allocation4 + $0x7c] sm:$0xf]
  %v11295 = vld [vmem:[#allocation4 + $0x80] sm:$0xf]
  %v11296 = vld [vmem:[#allocation4 + $0x84] sm:$0xf]
  %v11297 = vld [vmem:[#allocation4 + $0x88] sm:$0xf]
  %v11298 = vld [vmem:[#allocation4 + $0x8c] sm:$0xf]
  %s11299 = scalar_lea.vmem %s5, 96
  %v11300 = vld [vmem:[%s11299] sm:$0xf]
  %v11301 = vld [vmem:[%s11299 + $0x4] sm:$0xf]
  %v11302 = vld [vmem:[%s11299 + $0x8] sm:$0xf]
  %v11303 = vld [vmem:[%s11299 + $0xc] sm:$0xf]
  %v11336 = vunpack.c.l.b16 %v11267
  %v11337 = vunpack.c.l.b16 %v11268
  %v11338 = vunpack.c.l.b16 %v11269
  %v11339 = vunpack.c.l.b16 %v11270
  %v11340 = vunpack.c.l.b16 %v11271
  %v11341 = vunpack.c.l.b16 %v11272
  %v11342 = vunpack.c.l.b16 %v11273
  %v11343 = vunpack.c.l.b16 %v11274
  %v11344 = vunpack.c.l.b16 %v11275
  %v11345 = vunpack.c.l.b16 %v11276
  %v11346 = vunpack.c.l.b16 %v11277
  %v11347 = vunpack.c.l.b16 %v11278
  %v11348 = vunpack.c.l.b16 %v11279
  %v11349 = vunpack.c.l.b16 %v11280
  %v11350 = vunpack.c.l.b16 %v11281
  %v11351 = vunpack.c.l.b16 %v11282
  %v11352 = vunpack.c.l.b16 %v11283
  %v11353 = vunpack.c.l.b16 %v11284
  %v11354 = vunpack.c.l.b16 %v11285
  %v11355 = vunpack.c.l.b16 %v11286
  %v11356 = vunpack.c.l.b16 %v11287
  %v11357 = vunpack.c.l.b16 %v11288
  %v11358 = vunpack.c.l.b16 %v11289
  %v11359 = vunpack.c.l.b16 %v11290
  %v11360 = vunpack.c.l.b16 %v11291
  %v11361 = vunpack.c.l.b16 %v11292
  %v11362 = vunpack.c.l.b16 %v11293
  %v11363 = vunpack.c.l.b16 %v11294
  %v11364 = vunpack.c.l.b16 %v11295
  %v11365 = vunpack.c.l.b16 %v11296
  %v11366 = vunpack.c.l.b16 %v11297
  %v11367 = vunpack.c.l.b16 %v11298
  %v11368 = vpack.c.b16 %v11337, %v11336
  %v11369 = vpack.c.b16 %v11339, %v11338
  %v11370 = vpack.c.b16 %v11341, %v11340
  %v11371 = vpack.c.b16 %v11343, %v11342
  %v11372 = vpack.c.b16 %v11345, %v11344
  %v11373 = vpack.c.b16 %v11347, %v11346
  %v11374 = vpack.c.b16 %v11349, %v11348
  %v11375 = vpack.c.b16 %v11351, %v11350
  %v11376 = vpack.c.b16 %v11353, %v11352
  %v11377 = vpack.c.b16 %v11355, %v11354
  %v11378 = vpack.c.b16 %v11357, %v11356
  %v11379 = vpack.c.b16 %v11359, %v11358
  %v11380 = vpack.c.b16 %v11361, %v11360
  %v11381 = vpack.c.b16 %v11363, %v11362
  %v11382 = vpack.c.b16 %v11365, %v11364
  %v11383 = vpack.c.b16 %v11367, %v11366
  %v11388 = vunpack.c.l.b16 %v11300
  %v11389 = vunpack.c.l.b16 %v11301
  %v11390 = vunpack.c.l.b16 %v11302
  %v11391 = vunpack.c.l.b16 %v11303
  %v11392 = vpack.c.b16 %v11389, %v11388
  %v11393 = vpack.c.b16 %v11391, %v11390
  %v11397 = vsel %vm9542, %v11368, 0
  %v11400 = vsel %vm9542, %v11369, 0
  %v11403 = vsel %vm9542, %v11370, 0
  %v11406 = vsel %vm9542, %v11371, 0
  %v11409 = vsel %vm9542, %v11372, 0
  %v11412 = vsel %vm9542, %v11373, 0
  %v11415 = vsel %vm9542, %v11374, 0
  %v11418 = vsel %vm9542, %v11375, 0
  %v11421 = vsel %vm9542, %v11376, 0
  %v11424 = vsel %vm9542, %v11377, 0
  %v11427 = vsel %vm9542, %v11378, 0
  %v11430 = vsel %vm9542, %v11379, 0
  %v11433 = vsel %vm9542, %v11380, 0
  %v11436 = vsel %vm9542, %v11381, 0
  %v11439 = vsel %vm9542, %v11382, 0
  %v11442 = vsel %vm9542, %v11383, 0
  %11444 = vmatprep.subr.bf16.mxu0 0
  %11445 = vmatpush1.bf16.msra.mxu0 0
  %11446 = vmatprep.subr.bf16.mxu0 0
  %11447 = vmatpush1.bf16.msra.mxu0 0
  %11448 = vmatprep.subr.bf16.mxu0 0
  %11449 = vmatpush1.bf16.msra.mxu0 0
  %11450 = vmatprep.subr.bf16.mxu0 0
  %11451 = vmatpush1.bf16.msra.mxu0 0
  %11452 = vmatprep.subr.bf16.mxu0 0
  %11453 = vmatpush1.bf16.msra.mxu0 0
  %11454 = vmatprep.subr.bf16.mxu0 0
  %11455 = vmatpush1.bf16.msra.mxu0 0
  %11456 = vmatprep.subr.bf16.mxu0 0
  %11457 = vmatpush1.bf16.msra.mxu0 %v11393
  %11458 = vmatprep.subr.bf16.mxu0 0
  %11459 = vmatpush1.bf16.msra.mxu0 %v11392
  %11460 = vmatprep.subr.bf16.mxu0 0
  %11461 = vmatpush2.bf16.msra.mxu0 0
  %11462 = vmatprep.subr.bf16.mxu0 0
  %11463 = vmatpush2.bf16.msra.mxu0 0
  %11464 = vmatprep.subr.bf16.mxu0 0
  %11465 = vmatpush2.bf16.msra.mxu0 0
  %11466 = vmatprep.subr.bf16.mxu0 0
  %11467 = vmatpush2.bf16.msra.mxu0 0
  %11468 = vmatprep.subr.bf16.mxu0 0
  %11469 = vmatpush2.bf16.msra.mxu0 0
  %11470 = vmatprep.subr.bf16.mxu0 0
  %11471 = vmatpush2.bf16.msra.mxu0 0
  %11472 = vmatprep.subr.bf16.mxu0 0
  %11473 = vmatpush2.bf16.msra.mxu0 0
  %11474 = vmatprep.subr.bf16.mxu0 0
  %11475 = vmatpush2.bf16.msra.mxu0 0
  %11476 = vmatprep.mubr.bf16.mxu0 0
  %11477 = vmatmul.mubr.bf16.gmra.mxu0 %v11397
  %v11478 = vpop.f32.mrf.mxu0
  %v11479 = vadd.f32 0.0, %v11478
  %v11480 = vpop.f32.mrf.mxu0
  %v11481 = vpop.f32.mrf.mxu0
  %v11482 = vadd.f32 0.0, %v11481
  %v11483 = vpop.f32.mrf.mxu0
  %11484 = vmatprep.mubr.bf16.mxu0 0
  %11485 = vmatmul.mubr.bf16.gmra.mxu0 %v11400
  %v11486 = vpop.f32.mrf.mxu0
  %v11487 = vadd.f32 0.0, %v11486
  %v11488 = vpop.f32.mrf.mxu0
  %v11489 = vpop.f32.mrf.mxu0
  %v11490 = vadd.f32 0.0, %v11489
  %v11491 = vpop.f32.mrf.mxu0
  %11492 = vmatprep.mubr.bf16.mxu0 0
  %11493 = vmatmul.mubr.bf16.gmra.mxu0 %v11403
  %v11494 = vpop.f32.mrf.mxu0
  %v11495 = vadd.f32 0.0, %v11494
  %v11496 = vpop.f32.mrf.mxu0
  %v11497 = vpop.f32.mrf.mxu0
  %v11498 = vadd.f32 0.0, %v11497
  %v11499 = vpop.f32.mrf.mxu0
  %11500 = vmatprep.mubr.bf16.mxu0 0
  %11501 = vmatmul.mubr.bf16.gmra.mxu0 %v11406
  %v11502 = vpop.f32.mrf.mxu0
  %v11503 = vadd.f32 0.0, %v11502
  %v11504 = vpop.f32.mrf.mxu0
  %v11505 = vpop.f32.mrf.mxu0
  %v11506 = vadd.f32 0.0, %v11505
  %v11507 = vpop.f32.mrf.mxu0
  %11508 = vmatprep.mubr.bf16.mxu0 0
  %11509 = vmatmul.mubr.bf16.gmra.mxu0 %v11409
  %v11510 = vpop.f32.mrf.mxu0
  %v11511 = vadd.f32 0.0, %v11510
  %v11512 = vpop.f32.mrf.mxu0
  %v11513 = vpop.f32.mrf.mxu0
  %v11514 = vadd.f32 0.0, %v11513
  %v11515 = vpop.f32.mrf.mxu0
  %11516 = vmatprep.mubr.bf16.mxu0 0
  %11517 = vmatmul.mubr.bf16.gmra.mxu0 %v11412
  %v11518 = vpop.f32.mrf.mxu0
  %v11519 = vadd.f32 0.0, %v11518
  %v11520 = vpop.f32.mrf.mxu0
  %v11521 = vpop.f32.mrf.mxu0
  %v11522 = vadd.f32 0.0, %v11521
  %v11523 = vpop.f32.mrf.mxu0
  %11524 = vmatprep.mubr.bf16.mxu0 0
  %11525 = vmatmul.mubr.bf16.gmra.mxu0 %v11415
  %v11526 = vpop.f32.mrf.mxu0
  %v11527 = vadd.f32 0.0, %v11526
  %v11528 = vpop.f32.mrf.mxu0
  %v11529 = vpop.f32.mrf.mxu0
  %v11530 = vadd.f32 0.0, %v11529
  %v11531 = vpop.f32.mrf.mxu0
  %11532 = vmatprep.mubr.bf16.mxu0 0
  %11533 = vmatmul.mubr.bf16.gmra.mxu0 %v11418
  %v11534 = vpop.f32.mrf.mxu0
  %v11535 = vadd.f32 0.0, %v11534
  %v11536 = vpop.f32.mrf.mxu0
  %v11537 = vpop.f32.mrf.mxu0
  %v11538 = vadd.f32 0.0, %v11537
  %v11539 = vpop.f32.mrf.mxu0
  %11540 = vmatprep.mubr.bf16.mxu0 0
  %11541 = vmatmul.mubr.bf16.gmra.mxu0 %v11421
  %v11542 = vpop.f32.mrf.mxu0
  %v11543 = vadd.f32 0.0, %v11542
  %v11544 = vpop.f32.mrf.mxu0
  %v11545 = vpop.f32.mrf.mxu0
  %v11546 = vadd.f32 0.0, %v11545
  %v11547 = vpop.f32.mrf.mxu0
  %11548 = vmatprep.mubr.bf16.mxu0 0
  %11549 = vmatmul.mubr.bf16.gmra.mxu0 %v11424
  %v11550 = vpop.f32.mrf.mxu0
  %v11551 = vadd.f32 0.0, %v11550
  %v11552 = vpop.f32.mrf.mxu0
  %v11553 = vpop.f32.mrf.mxu0
  %v11554 = vadd.f32 0.0, %v11553
  %v11555 = vpop.f32.mrf.mxu0
  %11556 = vmatprep.mubr.bf16.mxu0 0
  %11557 = vmatmul.mubr.bf16.gmra.mxu0 %v11427
  %v11558 = vpop.f32.mrf.mxu0
  %v11559 = vadd.f32 0.0, %v11558
  %v11560 = vpop.f32.mrf.mxu0
  %v11561 = vpop.f32.mrf.mxu0
  %v11562 = vadd.f32 0.0, %v11561
  %v11563 = vpop.f32.mrf.mxu0
  %11564 = vmatprep.mubr.bf16.mxu0 0
  %11565 = vmatmul.mubr.bf16.gmra.mxu0 %v11430
  %v11566 = vpop.f32.mrf.mxu0
  %v11567 = vadd.f32 0.0, %v11566
  %v11568 = vpop.f32.mrf.mxu0
  %v11569 = vpop.f32.mrf.mxu0
  %v11570 = vadd.f32 0.0, %v11569
  %v11571 = vpop.f32.mrf.mxu0
  %11572 = vmatprep.mubr.bf16.mxu0 0
  %11573 = vmatmul.mubr.bf16.gmra.mxu0 %v11433
  %v11574 = vpop.f32.mrf.mxu0
  %v11575 = vadd.f32 0.0, %v11574
  %v11576 = vpop.f32.mrf.mxu0
  %v11577 = vpop.f32.mrf.mxu0
  %v11578 = vadd.f32 0.0, %v11577
  %v11579 = vpop.f32.mrf.mxu0
  %11580 = vmatprep.mubr.bf16.mxu0 0
  %11581 = vmatmul.mubr.bf16.gmra.mxu0 %v11436
  %v11582 = vpop.f32.mrf.mxu0
  %v11583 = vadd.f32 0.0, %v11582
  %v11584 = vpop.f32.mrf.mxu0
  %v11585 = vpop.f32.mrf.mxu0
  %v11586 = vadd.f32 0.0, %v11585
  %v11587 = vpop.f32.mrf.mxu0
  %11588 = vmatprep.mubr.bf16.mxu0 0
  %11589 = vmatmul.mubr.bf16.gmra.mxu0 %v11439
  %v11590 = vpop.f32.mrf.mxu0
  %v11591 = vadd.f32 0.0, %v11590
  %v11592 = vpop.f32.mrf.mxu0
  %v11593 = vpop.f32.mrf.mxu0
  %v11594 = vadd.f32 0.0, %v11593
  %v11595 = vpop.f32.mrf.mxu0
  %11596 = vmatprep.mubr.bf16.mxu0 0
  %11597 = vmatmul.mubr.bf16.gmra.mxu0 %v11442
  %v11598 = vpop.f32.mrf.mxu0
  %v11599 = vadd.f32 0.0, %v11598
  %v11600 = vpop.f32.mrf.mxu0
  %v11601 = vpop.f32.mrf.mxu0
  %v11602 = vadd.f32 0.0, %v11601
  %v11603 = vpop.f32.mrf.mxu0
  %11604 = vdwg.mxu0
  %v11605 = vadd.f32 %v9807, %v11479
  %v11606 = vadd.f32 %v9810, %v11482
  %v11607 = vadd.f32 %v9815, %v11487
  %v11608 = vadd.f32 %v9818, %v11490
  %v11609 = vadd.f32 %v9823, %v11495
  %v11610 = vadd.f32 %v9826, %v11498
  %v11611 = vadd.f32 %v9831, %v11503
  %v11612 = vadd.f32 %v9834, %v11506
  %v11613 = vadd.f32 %v9839, %v11511
  %v11614 = vadd.f32 %v9842, %v11514
  %v11615 = vadd.f32 %v9847, %v11519
  %v11616 = vadd.f32 %v9850, %v11522
  %v11617 = vadd.f32 %v9855, %v11527
  %v11618 = vadd.f32 %v9858, %v11530
  %v11619 = vadd.f32 %v9863, %v11535
  %v11620 = vadd.f32 %v9866, %v11538
  %v11621 = vadd.f32 %v9871, %v11543
  %v11622 = vadd.f32 %v9874, %v11546
  %v11623 = vadd.f32 %v9879, %v11551
  %v11624 = vadd.f32 %v9882, %v11554
  %v11625 = vadd.f32 %v9887, %v11559
  %v11626 = vadd.f32 %v9890, %v11562
  %v11627 = vadd.f32 %v9895, %v11567
  %v11628 = vadd.f32 %v9898, %v11570
  %v11629 = vadd.f32 %v9903, %v11575
  %v11630 = vadd.f32 %v9906, %v11578
  %v11631 = vadd.f32 %v9911, %v11583
  %v11632 = vadd.f32 %v9914, %v11586
  %v11633 = vadd.f32 %v9919, %v11591
  %v11634 = vadd.f32 %v9922, %v11594
  %v11635 = vadd.f32 %v9927, %v11599
  %v11636 = vadd.f32 %v9930, %v11602
  %v11637 = vld [vmem:[#allocation4 + $0x10] sm:$0xf]
  %v11638 = vld [vmem:[#allocation4 + $0x14] sm:$0xf]
  %v11639 = vld [vmem:[#allocation4 + $0x18] sm:$0xf]
  %v11640 = vld [vmem:[#allocation4 + $0x1c] sm:$0xf]
  %v11641 = vld [vmem:[#allocation4 + $0x20] sm:$0xf]
  %v11642 = vld [vmem:[#allocation4 + $0x24] sm:$0xf]
  %v11643 = vld [vmem:[#allocation4 + $0x28] sm:$0xf]
  %v11644 = vld [vmem:[#allocation4 + $0x2c] sm:$0xf]
  %v11645 = vld [vmem:[#allocation4 + $0x30] sm:$0xf]
  %v11646 = vld [vmem:[#allocation4 + $0x34] sm:$0xf]
  %v11647 = vld [vmem:[#allocation4 + $0x38] sm:$0xf]
  %v11648 = vld [vmem:[#allocation4 + $0x3c] sm:$0xf]
  %v11649 = vld [vmem:[#allocation4 + $0x40] sm:$0xf]
  %v11650 = vld [vmem:[#allocation4 + $0x44] sm:$0xf]
  %v11651 = vld [vmem:[#allocation4 + $0x48] sm:$0xf]
  %v11652 = vld [vmem:[#allocation4 + $0x4c] sm:$0xf]
  %v11653 = vld [vmem:[#allocation4 + $0x50] sm:$0xf]
  %v11654 = vld [vmem:[#allocation4 + $0x54] sm:$0xf]
  %v11655 = vld [vmem:[#allocation4 + $0x58] sm:$0xf]
  %v11656 = vld [vmem:[#allocation4 + $0x5c] sm:$0xf]
  %v11657 = vld [vmem:[#allocation4 + $0x60] sm:$0xf]
  %v11658 = vld [vmem:[#allocation4 + $0x64] sm:$0xf]
  %v11659 = vld [vmem:[#allocation4 + $0x68] sm:$0xf]
  %v11660 = vld [vmem:[#allocation4 + $0x6c] sm:$0xf]
  %v11661 = vld [vmem:[#allocation4 + $0x70] sm:$0xf]
  %v11662 = vld [vmem:[#allocation4 + $0x74] sm:$0xf]
  %v11663 = vld [vmem:[#allocation4 + $0x78] sm:$0xf]
  %v11664 = vld [vmem:[#allocation4 + $0x7c] sm:$0xf]
  %v11665 = vld [vmem:[#allocation4 + $0x80] sm:$0xf]
  %v11666 = vld [vmem:[#allocation4 + $0x84] sm:$0xf]
  %v11667 = vld [vmem:[#allocation4 + $0x88] sm:$0xf]
  %v11668 = vld [vmem:[#allocation4 + $0x8c] sm:$0xf]
  %v11669 = vld [vmem:[#allocation4 + $0x90] sm:$0x1]
  %s11670 = scalar_lea.vmem %s5, 112
  %v11671 = vld [vmem:[%s11670] sm:$0xf]
  %v11672 = vld [vmem:[%s11670 + $0x4] sm:$0xf]
  %v11673 = vld [vmem:[%s11670 + $0x8] sm:$0xf]
  %v11674 = vld [vmem:[%s11670 + $0xc] sm:$0xf]
  %v11708 = vunpack.c.l.b16 %v11637
  %v11709 = vunpack.c.l.b16 %v11638
  %v11710 = vunpack.c.l.b16 %v11639
  %v11711 = vunpack.c.l.b16 %v11640
  %v11712 = vunpack.c.l.b16 %v11641
  %v11713 = vunpack.c.l.b16 %v11642
  %v11714 = vunpack.c.l.b16 %v11643
  %v11715 = vunpack.c.l.b16 %v11644
  %v11716 = vunpack.c.l.b16 %v11645
  %v11717 = vunpack.c.l.b16 %v11646
  %v11718 = vunpack.c.l.b16 %v11647
  %v11719 = vunpack.c.l.b16 %v11648
  %v11720 = vunpack.c.l.b16 %v11649
  %v11721 = vunpack.c.l.b16 %v11650
  %v11722 = vunpack.c.l.b16 %v11651
  %v11723 = vunpack.c.l.b16 %v11652
  %v11724 = vunpack.c.l.b16 %v11653
  %v11725 = vunpack.c.l.b16 %v11654
  %v11726 = vunpack.c.l.b16 %v11655
  %v11727 = vunpack.c.l.b16 %v11656
  %v11728 = vunpack.c.l.b16 %v11657
  %v11729 = vunpack.c.l.b16 %v11658
  %v11730 = vunpack.c.l.b16 %v11659
  %v11731 = vunpack.c.l.b16 %v11660
  %v11732 = vunpack.c.l.b16 %v11661
  %v11733 = vunpack.c.l.b16 %v11662
  %v11734 = vunpack.c.l.b16 %v11663
  %v11735 = vunpack.c.l.b16 %v11664
  %v11736 = vunpack.c.l.b16 %v11665
  %v11737 = vunpack.c.l.b16 %v11666
  %v11738 = vunpack.c.l.b16 %v11667
  %v11739 = vunpack.c.l.b16 %v11668
  %v11740 = vunpack.c.l.b16 %v11669
  %v11741 = vpack.c.b16 %v11709, %v11708
  %v11742 = vpack.c.b16 %v11711, %v11710
  %v11743 = vpack.c.b16 %v11713, %v11712
  %v11744 = vpack.c.b16 %v11715, %v11714
  %v11745 = vpack.c.b16 %v11717, %v11716
  %v11746 = vpack.c.b16 %v11719, %v11718
  %v11747 = vpack.c.b16 %v11721, %v11720
  %v11748 = vpack.c.b16 %v11723, %v11722
  %v11749 = vpack.c.b16 %v11725, %v11724
  %v11750 = vpack.c.b16 %v11727, %v11726
  %v11751 = vpack.c.b16 %v11729, %v11728
  %v11752 = vpack.c.b16 %v11731, %v11730
  %v11753 = vpack.c.b16 %v11733, %v11732
  %v11754 = vpack.c.b16 %v11735, %v11734
  %v11755 = vpack.c.b16 %v11737, %v11736
  %v11756 = vpack.c.b16 %v11739, %v11738
  %v11757 = vpack.c.b16 %v11740, %v11740
  %v11759 = vshrl.u32 %v11741, 16
  %v11761 = vshll.u32 %v11741, 16
  %v11763 = vrot.slane %v11761, 1
  %v11764 = vor.u32 %v11759, %v11763
  %v11766 = vshll.u32 %v11742, 16
  %v11768 = vrot.slane %v11766, 1
  %v11769 = vsel %vm2231, %v11764, %v11768
  %v11770 = vshrl.u32 %v11742, 16
  %v11772 = vor.u32 %v11770, %v11768
  %v11774 = vshll.u32 %v11743, 16
  %v11776 = vrot.slane %v11774, 1
  %v11777 = vsel %vm2231, %v11772, %v11776
  %v11778 = vshrl.u32 %v11743, 16
  %v11780 = vor.u32 %v11778, %v11776
  %v11782 = vshll.u32 %v11744, 16
  %v11784 = vrot.slane %v11782, 1
  %v11785 = vsel %vm2231, %v11780, %v11784
  %v11786 = vshrl.u32 %v11744, 16
  %v11788 = vor.u32 %v11786, %v11784
  %v11790 = vshll.u32 %v11745, 16
  %v11792 = vrot.slane %v11790, 1
  %v11793 = vsel %vm2231, %v11788, %v11792
  %v11794 = vshrl.u32 %v11745, 16
  %v11796 = vor.u32 %v11794, %v11792
  %v11798 = vshll.u32 %v11746, 16
  %v11800 = vrot.slane %v11798, 1
  %v11801 = vsel %vm2231, %v11796, %v11800
  %v11802 = vshrl.u32 %v11746, 16
  %v11804 = vor.u32 %v11802, %v11800
  %v11806 = vshll.u32 %v11747, 16
  %v11808 = vrot.slane %v11806, 1
  %v11809 = vsel %vm2231, %v11804, %v11808
  %v11810 = vshrl.u32 %v11747, 16
  %v11812 = vor.u32 %v11810, %v11808
  %v11814 = vshll.u32 %v11748, 16
  %v11816 = vrot.slane %v11814, 1
  %v11817 = vsel %vm2231, %v11812, %v11816
  %v11818 = vshrl.u32 %v11748, 16
  %v11820 = vor.u32 %v11818, %v11816
  %v11822 = vshll.u32 %v11749, 16
  %v11824 = vrot.slane %v11822, 1
  %v11825 = vsel %vm2231, %v11820, %v11824
  %v11826 = vshrl.u32 %v11749, 16
  %v11828 = vor.u32 %v11826, %v11824
  %v11830 = vshll.u32 %v11750, 16
  %v11832 = vrot.slane %v11830, 1
  %v11833 = vsel %vm2231, %v11828, %v11832
  %v11834 = vshrl.u32 %v11750, 16
  %v11836 = vor.u32 %v11834, %v11832
  %v11838 = vshll.u32 %v11751, 16
  %v11840 = vrot.slane %v11838, 1
  %v11841 = vsel %vm2231, %v11836, %v11840
  %v11842 = vshrl.u32 %v11751, 16
  %v11844 = vor.u32 %v11842, %v11840
  %v11846 = vshll.u32 %v11752, 16
  %v11848 = vrot.slane %v11846, 1
  %v11849 = vsel %vm2231, %v11844, %v11848
  %v11850 = vshrl.u32 %v11752, 16
  %v11852 = vor.u32 %v11850, %v11848
  %v11854 = vshll.u32 %v11753, 16
  %v11856 = vrot.slane %v11854, 1
  %v11857 = vsel %vm2231, %v11852, %v11856
  %v11858 = vshrl.u32 %v11753, 16
  %v11860 = vor.u32 %v11858, %v11856
  %v11862 = vshll.u32 %v11754, 16
  %v11864 = vrot.slane %v11862, 1
  %v11865 = vsel %vm2231, %v11860, %v11864
  %v11866 = vshrl.u32 %v11754, 16
  %v11868 = vor.u32 %v11866, %v11864
  %v11870 = vshll.u32 %v11755, 16
  %v11872 = vrot.slane %v11870, 1
  %v11873 = vsel %vm2231, %v11868, %v11872
  %v11874 = vshrl.u32 %v11755, 16
  %v11876 = vor.u32 %v11874, %v11872
  %v11878 = vshll.u32 %v11756, 16
  %v11880 = vrot.slane %v11878, 1
  %v11881 = vsel %vm2231, %v11876, %v11880
  %v11882 = vshrl.u32 %v11756, 16
  %v11884 = vor.u32 %v11882, %v11880
  %v11886 = vshll.u32 %v11757, 16
  %v11888 = vrot.slane %v11886, 1
  %v11889 = vsel %vm2231, %v11884, %v11888
  %v11894 = vunpack.c.l.b16 %v11671
  %v11895 = vunpack.c.l.b16 %v11672
  %v11896 = vunpack.c.l.b16 %v11673
  %v11897 = vunpack.c.l.b16 %v11674
  %v11898 = vpack.c.b16 %v11895, %v11894
  %v11899 = vpack.c.b16 %v11897, %v11896
  %v11903 = vsel %vm9542, %v11769, 0
  %v11906 = vsel %vm9542, %v11777, 0
  %v11909 = vsel %vm9542, %v11785, 0
  %v11912 = vsel %vm9542, %v11793, 0
  %v11915 = vsel %vm9542, %v11801, 0
  %v11918 = vsel %vm9542, %v11809, 0
  %v11921 = vsel %vm9542, %v11817, 0
  %v11924 = vsel %vm9542, %v11825, 0
  %v11927 = vsel %vm9542, %v11833, 0
  %v11930 = vsel %vm9542, %v11841, 0
  %v11933 = vsel %vm9542, %v11849, 0
  %v11936 = vsel %vm9542, %v11857, 0
  %v11939 = vsel %vm9542, %v11865, 0
  %v11942 = vsel %vm9542, %v11873, 0
  %v11945 = vsel %vm9542, %v11881, 0
  %v11948 = vsel %vm9542, %v11889, 0
  %11950 = vmatprep.subr.bf16.mxu0 0
  %11951 = vmatpush1.bf16.msra.mxu0 0
  %11952 = vmatprep.subr.bf16.mxu0 0
  %11953 = vmatpush1.bf16.msra.mxu0 0
  %11954 = vmatprep.subr.bf16.mxu0 0
  %11955 = vmatpush1.bf16.msra.mxu0 0
  %11956 = vmatprep.subr.bf16.mxu0 0
  %11957 = vmatpush1.bf16.msra.mxu0 0
  %11958 = vmatprep.subr.bf16.mxu0 0
  %11959 = vmatpush1.bf16.msra.mxu0 0
  %11960 = vmatprep.subr.bf16.mxu0 0
  %11961 = vmatpush1.bf16.msra.mxu0 0
  %11962 = vmatprep.subr.bf16.mxu0 0
  %11963 = vmatpush1.bf16.msra.mxu0 %v11899
  %11964 = vmatprep.subr.bf16.mxu0 0
  %11965 = vmatpush1.bf16.msra.mxu0 %v11898
  %11966 = vmatprep.subr.bf16.mxu0 0
  %11967 = vmatpush2.bf16.msra.mxu0 0
  %11968 = vmatprep.subr.bf16.mxu0 0
  %11969 = vmatpush2.bf16.msra.mxu0 0
  %11970 = vmatprep.subr.bf16.mxu0 0
  %11971 = vmatpush2.bf16.msra.mxu0 0
  %11972 = vmatprep.subr.bf16.mxu0 0
  %11973 = vmatpush2.bf16.msra.mxu0 0
  %11974 = vmatprep.subr.bf16.mxu0 0
  %11975 = vmatpush2.bf16.msra.mxu0 0
  %11976 = vmatprep.subr.bf16.mxu0 0
  %11977 = vmatpush2.bf16.msra.mxu0 0
  %11978 = vmatprep.subr.bf16.mxu0 0
  %11979 = vmatpush2.bf16.msra.mxu0 0
  %11980 = vmatprep.subr.bf16.mxu0 0
  %11981 = vmatpush2.bf16.msra.mxu0 0
  %11982 = vmatprep.mubr.bf16.mxu0 0
  %11983 = vmatmul.mubr.bf16.gmra.mxu0 %v11903
  %v11984 = vpop.f32.mrf.mxu0
  %v11985 = vadd.f32 0.0, %v11984
  %v11986 = vpop.f32.mrf.mxu0
  %v11987 = vpop.f32.mrf.mxu0
  %v11988 = vadd.f32 0.0, %v11987
  %v11989 = vpop.f32.mrf.mxu0
  %11990 = vmatprep.mubr.bf16.mxu0 0
  %11991 = vmatmul.mubr.bf16.gmra.mxu0 %v11906
  %v11992 = vpop.f32.mrf.mxu0
  %v11993 = vadd.f32 0.0, %v11992
  %v11994 = vpop.f32.mrf.mxu0
  %v11995 = vpop.f32.mrf.mxu0
  %v11996 = vadd.f32 0.0, %v11995
  %v11997 = vpop.f32.mrf.mxu0
  %11998 = vmatprep.mubr.bf16.mxu0 0
  %11999 = vmatmul.mubr.bf16.gmra.mxu0 %v11909
  %v12000 = vpop.f32.mrf.mxu0
  %v12001 = vadd.f32 0.0, %v12000
  %v12002 = vpop.f32.mrf.mxu0
  %v12003 = vpop.f32.mrf.mxu0
  %v12004 = vadd.f32 0.0, %v12003
  %v12005 = vpop.f32.mrf.mxu0
  %12006 = vmatprep.mubr.bf16.mxu0 0
  %12007 = vmatmul.mubr.bf16.gmra.mxu0 %v11912
  %v12008 = vpop.f32.mrf.mxu0
  %v12009 = vadd.f32 0.0, %v12008
  %v12010 = vpop.f32.mrf.mxu0
  %v12011 = vpop.f32.mrf.mxu0
  %v12012 = vadd.f32 0.0, %v12011
  %v12013 = vpop.f32.mrf.mxu0
  %12014 = vmatprep.mubr.bf16.mxu0 0
  %12015 = vmatmul.mubr.bf16.gmra.mxu0 %v11915
  %v12016 = vpop.f32.mrf.mxu0
  %v12017 = vadd.f32 0.0, %v12016
  %v12018 = vpop.f32.mrf.mxu0
  %v12019 = vpop.f32.mrf.mxu0
  %v12020 = vadd.f32 0.0, %v12019
  %v12021 = vpop.f32.mrf.mxu0
  %12022 = vmatprep.mubr.bf16.mxu0 0
  %12023 = vmatmul.mubr.bf16.gmra.mxu0 %v11918
  %v12024 = vpop.f32.mrf.mxu0
  %v12025 = vadd.f32 0.0, %v12024
  %v12026 = vpop.f32.mrf.mxu0
  %v12027 = vpop.f32.mrf.mxu0
  %v12028 = vadd.f32 0.0, %v12027
  %v12029 = vpop.f32.mrf.mxu0
  %12030 = vmatprep.mubr.bf16.mxu0 0
  %12031 = vmatmul.mubr.bf16.gmra.mxu0 %v11921
  %v12032 = vpop.f32.mrf.mxu0
  %v12033 = vadd.f32 0.0, %v12032
  %v12034 = vpop.f32.mrf.mxu0
  %v12035 = vpop.f32.mrf.mxu0
  %v12036 = vadd.f32 0.0, %v12035
  %v12037 = vpop.f32.mrf.mxu0
  %12038 = vmatprep.mubr.bf16.mxu0 0
  %12039 = vmatmul.mubr.bf16.gmra.mxu0 %v11924
  %v12040 = vpop.f32.mrf.mxu0
  %v12041 = vadd.f32 0.0, %v12040
  %v12042 = vpop.f32.mrf.mxu0
  %v12043 = vpop.f32.mrf.mxu0
  %v12044 = vadd.f32 0.0, %v12043
  %v12045 = vpop.f32.mrf.mxu0
  %12046 = vmatprep.mubr.bf16.mxu0 0
  %12047 = vmatmul.mubr.bf16.gmra.mxu0 %v11927
  %v12048 = vpop.f32.mrf.mxu0
  %v12049 = vadd.f32 0.0, %v12048
  %v12050 = vpop.f32.mrf.mxu0
  %v12051 = vpop.f32.mrf.mxu0
  %v12052 = vadd.f32 0.0, %v12051
  %v12053 = vpop.f32.mrf.mxu0
  %12054 = vmatprep.mubr.bf16.mxu0 0
  %12055 = vmatmul.mubr.bf16.gmra.mxu0 %v11930
  %v12056 = vpop.f32.mrf.mxu0
  %v12057 = vadd.f32 0.0, %v12056
  %v12058 = vpop.f32.mrf.mxu0
  %v12059 = vpop.f32.mrf.mxu0
  %v12060 = vadd.f32 0.0, %v12059
  %v12061 = vpop.f32.mrf.mxu0
  %12062 = vmatprep.mubr.bf16.mxu0 0
  %12063 = vmatmul.mubr.bf16.gmra.mxu0 %v11933
  %v12064 = vpop.f32.mrf.mxu0
  %v12065 = vadd.f32 0.0, %v12064
  %v12066 = vpop.f32.mrf.mxu0
  %v12067 = vpop.f32.mrf.mxu0
  %v12068 = vadd.f32 0.0, %v12067
  %v12069 = vpop.f32.mrf.mxu0
  %12070 = vmatprep.mubr.bf16.mxu0 0
  %12071 = vmatmul.mubr.bf16.gmra.mxu0 %v11936
  %v12072 = vpop.f32.mrf.mxu0
  %v12073 = vadd.f32 0.0, %v12072
  %v12074 = vpop.f32.mrf.mxu0
  %v12075 = vpop.f32.mrf.mxu0
  %v12076 = vadd.f32 0.0, %v12075
  %v12077 = vpop.f32.mrf.mxu0
  %12078 = vmatprep.mubr.bf16.mxu0 0
  %12079 = vmatmul.mubr.bf16.gmra.mxu0 %v11939
  %v12080 = vpop.f32.mrf.mxu0
  %v12081 = vadd.f32 0.0, %v12080
  %v12082 = vpop.f32.mrf.mxu0
  %v12083 = vpop.f32.mrf.mxu0
  %v12084 = vadd.f32 0.0, %v12083
  %v12085 = vpop.f32.mrf.mxu0
  %12086 = vmatprep.mubr.bf16.mxu0 0
  %12087 = vmatmul.mubr.bf16.gmra.mxu0 %v11942
  %v12088 = vpop.f32.mrf.mxu0
  %v12089 = vadd.f32 0.0, %v12088
  %v12090 = vpop.f32.mrf.mxu0
  %v12091 = vpop.f32.mrf.mxu0
  %v12092 = vadd.f32 0.0, %v12091
  %v12093 = vpop.f32.mrf.mxu0
  %12094 = vmatprep.mubr.bf16.mxu0 0
  %12095 = vmatmul.mubr.bf16.gmra.mxu0 %v11945
  %v12096 = vpop.f32.mrf.mxu0
  %v12097 = vadd.f32 0.0, %v12096
  %v12098 = vpop.f32.mrf.mxu0
  %v12099 = vpop.f32.mrf.mxu0
  %v12100 = vadd.f32 0.0, %v12099
  %v12101 = vpop.f32.mrf.mxu0
  %12102 = vmatprep.mubr.bf16.mxu0 0
  %12103 = vmatmul.mubr.bf16.gmra.mxu0 %v11948
  %v12104 = vpop.f32.mrf.mxu0
  %v12105 = vadd.f32 0.0, %v12104
  %v12106 = vpop.f32.mrf.mxu0
  %v12107 = vpop.f32.mrf.mxu0
  %v12108 = vadd.f32 0.0, %v12107
  %v12109 = vpop.f32.mrf.mxu0
  %12110 = vdwg.mxu0
  %v12111 = vadd.f32 %v10621, %v11985
  %v12112 = vadd.f32 %v10624, %v11988
  %v12113 = vadd.f32 %v10629, %v11993
  %v12114 = vadd.f32 %v10632, %v11996
  %v12115 = vadd.f32 %v10637, %v12001
  %v12116 = vadd.f32 %v10640, %v12004
  %v12117 = vadd.f32 %v10645, %v12009
  %v12118 = vadd.f32 %v10648, %v12012
  %v12119 = vadd.f32 %v10653, %v12017
  %v12120 = vadd.f32 %v10656, %v12020
  %v12121 = vadd.f32 %v10661, %v12025
  %v12122 = vadd.f32 %v10664, %v12028
  %v12123 = vadd.f32 %v10669, %v12033
  %v12124 = vadd.f32 %v10672, %v12036
  %v12125 = vadd.f32 %v10677, %v12041
  %v12126 = vadd.f32 %v10680, %v12044
  %v12127 = vadd.f32 %v10685, %v12049
  %v12128 = vadd.f32 %v10688, %v12052
  %v12129 = vadd.f32 %v10693, %v12057
  %v12130 = vadd.f32 %v10696, %v12060
  %v12131 = vadd.f32 %v10701, %v12065
  %v12132 = vadd.f32 %v10704, %v12068
  %v12133 = vadd.f32 %v10709, %v12073
  %v12134 = vadd.f32 %v10712, %v12076
  %v12135 = vadd.f32 %v10717, %v12081
  %v12136 = vadd.f32 %v10720, %v12084
  %v12137 = vadd.f32 %v10725, %v12089
  %v12138 = vadd.f32 %v10728, %v12092
  %v12139 = vadd.f32 %v10733, %v12097
  %v12140 = vadd.f32 %v10736, %v12100
  %v12141 = vadd.f32 %v10741, %v12105
  %v12142 = vadd.f32 %v10744, %v12108
  %v12143 = vld [vmem:[#allocation4 + $0x10] sm:$0xe]
  %s12144 = scalar_lea.vmem %s5, 128
  %v12145 = vld [vmem:[%s12144] sm:$0xf]
  %v12146 = vld [vmem:[%s12144 + $0x4] sm:$0xf]
  %v12147 = vld [vmem:[%s12144 + $0x8] sm:$0xf]
  %v12148 = vld [vmem:[%s12144 + $0xc] sm:$0xf]
  %v12150 = vunpack.c.l.b16 %v12143
  %v12151 = vpack.c.b16 %v11709, %v12150
  %v12152 = vrot.slane %v12151, 1
  %v12153 = vrot.slane %v11742, 1
  %v12154 = vsel %vm2994, %v12152, %v12153
  %v12155 = vrot.slane %v11743, 1
  %v12156 = vsel %vm2994, %v12153, %v12155
  %v12157 = vrot.slane %v11744, 1
  %v12158 = vsel %vm2994, %v12155, %v12157
  %v12159 = vrot.slane %v11745, 1
  %v12160 = vsel %vm2994, %v12157, %v12159
  %v12161 = vrot.slane %v11746, 1
  %v12162 = vsel %vm2994, %v12159, %v12161
  %v12163 = vrot.slane %v11747, 1
  %v12164 = vsel %vm2994, %v12161, %v12163
  %v12165 = vrot.slane %v11748, 1
  %v12166 = vsel %vm2994, %v12163, %v12165
  %v12167 = vrot.slane %v11749, 1
  %v12168 = vsel %vm2994, %v12165, %v12167
  %v12169 = vrot.slane %v11750, 1
  %v12170 = vsel %vm2994, %v12167, %v12169
  %v12171 = vrot.slane %v11751, 1
  %v12172 = vsel %vm2994, %v12169, %v12171
  %v12173 = vrot.slane %v11752, 1
  %v12174 = vsel %vm2994, %v12171, %v12173
  %v12175 = vrot.slane %v11753, 1
  %v12176 = vsel %vm2994, %v12173, %v12175
  %v12177 = vrot.slane %v11754, 1
  %v12178 = vsel %vm2994, %v12175, %v12177
  %v12179 = vrot.slane %v11755, 1
  %v12180 = vsel %vm2994, %v12177, %v12179
  %v12181 = vrot.slane %v11756, 1
  %v12182 = vsel %vm2994, %v12179, %v12181
  %v12183 = vrot.slane %v11757, 1
  %v12184 = vsel %vm2994, %v12181, %v12183
  %v12189 = vunpack.c.l.b16 %v12145
  %v12190 = vunpack.c.l.b16 %v12146
  %v12191 = vunpack.c.l.b16 %v12147
  %v12192 = vunpack.c.l.b16 %v12148
  %v12193 = vpack.c.b16 %v12190, %v12189
  %v12194 = vpack.c.b16 %v12192, %v12191
  %v12198 = vsel %vm9542, %v12154, 0
  %v12201 = vsel %vm9542, %v12156, 0
  %v12204 = vsel %vm9542, %v12158, 0
  %v12207 = vsel %vm9542, %v12160, 0
  %v12210 = vsel %vm9542, %v12162, 0
  %v12213 = vsel %vm9542, %v12164, 0
  %v12216 = vsel %vm9542, %v12166, 0
  %v12219 = vsel %vm9542, %v12168, 0
  %v12222 = vsel %vm9542, %v12170, 0
  %v12225 = vsel %vm9542, %v12172, 0
  %v12228 = vsel %vm9542, %v12174, 0
  %v12231 = vsel %vm9542, %v12176, 0
  %v12234 = vsel %vm9542, %v12178, 0
  %v12237 = vsel %vm9542, %v12180, 0
  %v12240 = vsel %vm9542, %v12182, 0
  %v12243 = vsel %vm9542, %v12184, 0
  %12245 = vmatprep.subr.bf16.mxu0 0
  %12246 = vmatpush1.bf16.msra.mxu0 0
  %12247 = vmatprep.subr.bf16.mxu0 0
  %12248 = vmatpush1.bf16.msra.mxu0 0
  %12249 = vmatprep.subr.bf16.mxu0 0
  %12250 = vmatpush1.bf16.msra.mxu0 0
  %12251 = vmatprep.subr.bf16.mxu0 0
  %12252 = vmatpush1.bf16.msra.mxu0 0
  %12253 = vmatprep.subr.bf16.mxu0 0
  %12254 = vmatpush1.bf16.msra.mxu0 0
  %12255 = vmatprep.subr.bf16.mxu0 0
  %12256 = vmatpush1.bf16.msra.mxu0 0
  %12257 = vmatprep.subr.bf16.mxu0 0
  %12258 = vmatpush1.bf16.msra.mxu0 %v12194
  %12259 = vmatprep.subr.bf16.mxu0 0
  %12260 = vmatpush1.bf16.msra.mxu0 %v12193
  %12261 = vmatprep.subr.bf16.mxu0 0
  %12262 = vmatpush2.bf16.msra.mxu0 0
  %12263 = vmatprep.subr.bf16.mxu0 0
  %12264 = vmatpush2.bf16.msra.mxu0 0
  %12265 = vmatprep.subr.bf16.mxu0 0
  %12266 = vmatpush2.bf16.msra.mxu0 0
  %12267 = vmatprep.subr.bf16.mxu0 0
  %12268 = vmatpush2.bf16.msra.mxu0 0
  %12269 = vmatprep.subr.bf16.mxu0 0
  %12270 = vmatpush2.bf16.msra.mxu0 0
  %12271 = vmatprep.subr.bf16.mxu0 0
  %12272 = vmatpush2.bf16.msra.mxu0 0
  %12273 = vmatprep.subr.bf16.mxu0 0
  %12274 = vmatpush2.bf16.msra.mxu0 0
  %12275 = vmatprep.subr.bf16.mxu0 0
  %12276 = vmatpush2.bf16.msra.mxu0 0
  %12277 = vmatprep.mubr.bf16.mxu0 0
  %12278 = vmatmul.mubr.bf16.gmra.mxu0 %v12198
  %v12279 = vpop.f32.mrf.mxu0
  %v12280 = vadd.f32 0.0, %v12279
  %v12281 = vpop.f32.mrf.mxu0
  %v12282 = vpop.f32.mrf.mxu0
  %v12283 = vadd.f32 0.0, %v12282
  %v12284 = vpop.f32.mrf.mxu0
  %12285 = vmatprep.mubr.bf16.mxu0 0
  %12286 = vmatmul.mubr.bf16.gmra.mxu0 %v12201
  %v12287 = vpop.f32.mrf.mxu0
  %v12288 = vadd.f32 0.0, %v12287
  %v12289 = vpop.f32.mrf.mxu0
  %v12290 = vpop.f32.mrf.mxu0
  %v12291 = vadd.f32 0.0, %v12290
  %v12292 = vpop.f32.mrf.mxu0
  %12293 = vmatprep.mubr.bf16.mxu0 0
  %12294 = vmatmul.mubr.bf16.gmra.mxu0 %v12204
  %v12295 = vpop.f32.mrf.mxu0
  %v12296 = vadd.f32 0.0, %v12295
  %v12297 = vpop.f32.mrf.mxu0
  %v12298 = vpop.f32.mrf.mxu0
  %v12299 = vadd.f32 0.0, %v12298
  %v12300 = vpop.f32.mrf.mxu0
  %12301 = vmatprep.mubr.bf16.mxu0 0
  %12302 = vmatmul.mubr.bf16.gmra.mxu0 %v12207
  %v12303 = vpop.f32.mrf.mxu0
  %v12304 = vadd.f32 0.0, %v12303
  %v12305 = vpop.f32.mrf.mxu0
  %v12306 = vpop.f32.mrf.mxu0
  %v12307 = vadd.f32 0.0, %v12306
  %v12308 = vpop.f32.mrf.mxu0
  %12309 = vmatprep.mubr.bf16.mxu0 0
  %12310 = vmatmul.mubr.bf16.gmra.mxu0 %v12210
  %v12311 = vpop.f32.mrf.mxu0
  %v12312 = vadd.f32 0.0, %v12311
  %v12313 = vpop.f32.mrf.mxu0
  %v12314 = vpop.f32.mrf.mxu0
  %v12315 = vadd.f32 0.0, %v12314
  %v12316 = vpop.f32.mrf.mxu0
  %12317 = vmatprep.mubr.bf16.mxu0 0
  %12318 = vmatmul.mubr.bf16.gmra.mxu0 %v12213
  %v12319 = vpop.f32.mrf.mxu0
  %v12320 = vadd.f32 0.0, %v12319
  %v12321 = vpop.f32.mrf.mxu0
  %v12322 = vpop.f32.mrf.mxu0
  %v12323 = vadd.f32 0.0, %v12322
  %v12324 = vpop.f32.mrf.mxu0
  %12325 = vmatprep.mubr.bf16.mxu0 0
  %12326 = vmatmul.mubr.bf16.gmra.mxu0 %v12216
  %v12327 = vpop.f32.mrf.mxu0
  %v12328 = vadd.f32 0.0, %v12327
  %v12329 = vpop.f32.mrf.mxu0
  %v12330 = vpop.f32.mrf.mxu0
  %v12331 = vadd.f32 0.0, %v12330
  %v12332 = vpop.f32.mrf.mxu0
  %12333 = vmatprep.mubr.bf16.mxu0 0
  %12334 = vmatmul.mubr.bf16.gmra.mxu0 %v12219
  %v12335 = vpop.f32.mrf.mxu0
  %v12336 = vadd.f32 0.0, %v12335
  %v12337 = vpop.f32.mrf.mxu0
  %v12338 = vpop.f32.mrf.mxu0
  %v12339 = vadd.f32 0.0, %v12338
  %v12340 = vpop.f32.mrf.mxu0
  %12341 = vmatprep.mubr.bf16.mxu0 0
  %12342 = vmatmul.mubr.bf16.gmra.mxu0 %v12222
  %v12343 = vpop.f32.mrf.mxu0
  %v12344 = vadd.f32 0.0, %v12343
  %v12345 = vpop.f32.mrf.mxu0
  %v12346 = vpop.f32.mrf.mxu0
  %v12347 = vadd.f32 0.0, %v12346
  %v12348 = vpop.f32.mrf.mxu0
  %12349 = vmatprep.mubr.bf16.mxu0 0
  %12350 = vmatmul.mubr.bf16.gmra.mxu0 %v12225
  %v12351 = vpop.f32.mrf.mxu0
  %v12352 = vadd.f32 0.0, %v12351
  %v12353 = vpop.f32.mrf.mxu0
  %v12354 = vpop.f32.mrf.mxu0
  %v12355 = vadd.f32 0.0, %v12354
  %v12356 = vpop.f32.mrf.mxu0
  %12357 = vmatprep.mubr.bf16.mxu0 0
  %12358 = vmatmul.mubr.bf16.gmra.mxu0 %v12228
  %v12359 = vpop.f32.mrf.mxu0
  %v12360 = vadd.f32 0.0, %v12359
  %v12361 = vpop.f32.mrf.mxu0
  %v12362 = vpop.f32.mrf.mxu0
  %v12363 = vadd.f32 0.0, %v12362
  %v12364 = vpop.f32.mrf.mxu0
  %12365 = vmatprep.mubr.bf16.mxu0 0
  %12366 = vmatmul.mubr.bf16.gmra.mxu0 %v12231
  %v12367 = vpop.f32.mrf.mxu0
  %v12368 = vadd.f32 0.0, %v12367
  %v12369 = vpop.f32.mrf.mxu0
  %v12370 = vpop.f32.mrf.mxu0
  %v12371 = vadd.f32 0.0, %v12370
  %v12372 = vpop.f32.mrf.mxu0
  %12373 = vmatprep.mubr.bf16.mxu0 0
  %12374 = vmatmul.mubr.bf16.gmra.mxu0 %v12234
  %v12375 = vpop.f32.mrf.mxu0
  %v12376 = vadd.f32 0.0, %v12375
  %v12377 = vpop.f32.mrf.mxu0
  %v12378 = vpop.f32.mrf.mxu0
  %v12379 = vadd.f32 0.0, %v12378
  %v12380 = vpop.f32.mrf.mxu0
  %12381 = vmatprep.mubr.bf16.mxu0 0
  %12382 = vmatmul.mubr.bf16.gmra.mxu0 %v12237
  %v12383 = vpop.f32.mrf.mxu0
  %v12384 = vadd.f32 0.0, %v12383
  %v12385 = vpop.f32.mrf.mxu0
  %v12386 = vpop.f32.mrf.mxu0
  %v12387 = vadd.f32 0.0, %v12386
  %v12388 = vpop.f32.mrf.mxu0
  %12389 = vmatprep.mubr.bf16.mxu0 0
  %12390 = vmatmul.mubr.bf16.gmra.mxu0 %v12240
  %v12391 = vpop.f32.mrf.mxu0
  %v12392 = vadd.f32 0.0, %v12391
  %v12393 = vpop.f32.mrf.mxu0
  %v12394 = vpop.f32.mrf.mxu0
  %v12395 = vadd.f32 0.0, %v12394
  %v12396 = vpop.f32.mrf.mxu0
  %12397 = vmatprep.mubr.bf16.mxu0 0
  %12398 = vmatmul.mubr.bf16.gmra.mxu0 %v12243
  %v12399 = vpop.f32.mrf.mxu0
  %v12400 = vadd.f32 0.0, %v12399
  %v12401 = vpop.f32.mrf.mxu0
  %v12402 = vpop.f32.mrf.mxu0
  %v12403 = vadd.f32 0.0, %v12402
  %v12404 = vpop.f32.mrf.mxu0
  %12405 = vdwg.mxu0
  %v12406 = vadd.f32 %v11141, %v12280
  %v12407 = vadd.f32 %v11144, %v12283
  %v12408 = vadd.f32 %v11149, %v12288
  %v12409 = vadd.f32 %v11152, %v12291
  %v12410 = vadd.f32 %v11157, %v12296
  %v12411 = vadd.f32 %v11160, %v12299
  %v12412 = vadd.f32 %v11165, %v12304
  %v12413 = vadd.f32 %v11168, %v12307
  %v12414 = vadd.f32 %v11173, %v12312
  %v12415 = vadd.f32 %v11176, %v12315
  %v12416 = vadd.f32 %v11181, %v12320
  %v12417 = vadd.f32 %v11184, %v12323
  %v12418 = vadd.f32 %v11189, %v12328
  %v12419 = vadd.f32 %v11192, %v12331
  %v12420 = vadd.f32 %v11197, %v12336
  %v12421 = vadd.f32 %v11200, %v12339
  %v12422 = vadd.f32 %v11205, %v12344
  %v12423 = vadd.f32 %v11208, %v12347
  %v12424 = vadd.f32 %v11213, %v12352
  %v12425 = vadd.f32 %v11216, %v12355
  %v12426 = vadd.f32 %v11221, %v12360
  %v12427 = vadd.f32 %v11224, %v12363
  %v12428 = vadd.f32 %v11229, %v12368
  %v12429 = vadd.f32 %v11232, %v12371
  %v12430 = vadd.f32 %v11237, %v12376
  %v12431 = vadd.f32 %v11240, %v12379
  %v12432 = vadd.f32 %v11245, %v12384
  %v12433 = vadd.f32 %v11248, %v12387
  %v12434 = vadd.f32 %v11253, %v12392
  %v12435 = vadd.f32 %v11256, %v12395
  %v12436 = vadd.f32 %v11261, %v12400
  %v12437 = vadd.f32 %v11264, %v12403
  %v12438 = vmul.f32 %v568, %v11605
  %v12439 = vmul.f32 %v569, %v11606
  %v12440 = vmul.f32 %v570, %v11607
  %v12441 = vmul.f32 %v571, %v11608
  %v12442 = vmul.f32 %v572, %v11609
  %v12443 = vmul.f32 %v573, %v11610
  %v12444 = vmul.f32 %v574, %v11611
  %v12445 = vmul.f32 %v575, %v11612
  %v12446 = vmul.f32 %v576, %v11613
  %v12447 = vmul.f32 %v577, %v11614
  %v12448 = vmul.f32 %v578, %v11615
  %v12449 = vmul.f32 %v579, %v11616
  %v12450 = vmul.f32 %v580, %v11617
  %v12451 = vmul.f32 %v581, %v11618
  %v12452 = vmul.f32 %v582, %v11619
  %v12453 = vmul.f32 %v583, %v11620
  %v12454 = vmul.f32 %v584, %v11621
  %v12455 = vmul.f32 %v585, %v11622
  %v12456 = vmul.f32 %v586, %v11623
  %v12457 = vmul.f32 %v587, %v11624
  %v12458 = vmul.f32 %v588, %v11625
  %v12459 = vmul.f32 %v589, %v11626
  %v12460 = vmul.f32 %v590, %v11627
  %v12461 = vmul.f32 %v591, %v11628
  %v12462 = vmul.f32 %v592, %v11629
  %v12463 = vmul.f32 %v593, %v11630
  %v12464 = vmul.f32 %v594, %v11631
  %v12465 = vmul.f32 %v595, %v11632
  %v12466 = vmul.f32 %v596, %v11633
  %v12467 = vmul.f32 %v597, %v11634
  %v12468 = vmul.f32 %v598, %v11635
  %v12469 = vmul.f32 %v599, %v11636
  %v12470 = vadd.f32 %v12111, %v12438
  %v12471 = vadd.f32 %v12112, %v12439
  %v12472 = vadd.f32 %v12113, %v12440
  %v12473 = vadd.f32 %v12114, %v12441
  %v12474 = vadd.f32 %v12115, %v12442
  %v12475 = vadd.f32 %v12116, %v12443
  %v12476 = vadd.f32 %v12117, %v12444
  %v12477 = vadd.f32 %v12118, %v12445
  %v12478 = vadd.f32 %v12119, %v12446
  %v12479 = vadd.f32 %v12120, %v12447
  %v12480 = vadd.f32 %v12121, %v12448
  %v12481 = vadd.f32 %v12122, %v12449
  %v12482 = vadd.f32 %v12123, %v12450
  %v12483 = vadd.f32 %v12124, %v12451
  %v12484 = vadd.f32 %v12125, %v12452
  %v12485 = vadd.f32 %v12126, %v12453
  %v12486 = vadd.f32 %v12127, %v12454
  %v12487 = vadd.f32 %v12128, %v12455
  %v12488 = vadd.f32 %v12129, %v12456
  %v12489 = vadd.f32 %v12130, %v12457
  %v12490 = vadd.f32 %v12131, %v12458
  %v12491 = vadd.f32 %v12132, %v12459
  %v12492 = vadd.f32 %v12133, %v12460
  %v12493 = vadd.f32 %v12134, %v12461
  %v12494 = vadd.f32 %v12135, %v12462
  %v12495 = vadd.f32 %v12136, %v12463
  %v12496 = vadd.f32 %v12137, %v12464
  %v12497 = vadd.f32 %v12138, %v12465
  %v12498 = vadd.f32 %v12139, %v12466
  %v12499 = vadd.f32 %v12140, %v12467
  %v12500 = vadd.f32 %v12141, %v12468
  %v12501 = vadd.f32 %v12142, %v12469
  %v12502 = vmul.f32 %v676, %v12406
  %v12503 = vmul.f32 %v677, %v12407
  %v12504 = vmul.f32 %v678, %v12408
  %v12505 = vmul.f32 %v679, %v12409
  %v12506 = vmul.f32 %v680, %v12410
  %v12507 = vmul.f32 %v681, %v12411
  %v12508 = vmul.f32 %v682, %v12412
  %v12509 = vmul.f32 %v683, %v12413
  %v12510 = vmul.f32 %v684, %v12414
  %v12511 = vmul.f32 %v685, %v12415
  %v12512 = vmul.f32 %v686, %v12416
  %v12513 = vmul.f32 %v687, %v12417
  %v12514 = vmul.f32 %v688, %v12418
  %v12515 = vmul.f32 %v689, %v12419
  %v12516 = vmul.f32 %v690, %v12420
  %v12517 = vmul.f32 %v691, %v12421
  %v12518 = vmul.f32 %v692, %v12422
  %v12519 = vmul.f32 %v693, %v12423
  %v12520 = vmul.f32 %v694, %v12424
  %v12521 = vmul.f32 %v695, %v12425
  %v12522 = vmul.f32 %v696, %v12426
  %v12523 = vmul.f32 %v697, %v12427
  %v12524 = vmul.f32 %v698, %v12428
  %v12525 = vmul.f32 %v699, %v12429
  %v12526 = vmul.f32 %v700, %v12430
  %v12527 = vmul.f32 %v701, %v12431
  %v12528 = vmul.f32 %v702, %v12432
  %v12529 = vmul.f32 %v703, %v12433
  %v12530 = vmul.f32 %v704, %v12434
  %v12531 = vmul.f32 %v705, %v12435
  %v12532 = vmul.f32 %v706, %v12436
  %v12533 = vmul.f32 %v707, %v12437
  %v12534 = vadd.f32 %v12470, %v12502
  %v12535 = vadd.f32 %v12471, %v12503
  %v12536 = vadd.f32 %v12472, %v12504
  %v12537 = vadd.f32 %v12473, %v12505
  %v12538 = vadd.f32 %v12474, %v12506
  %v12539 = vadd.f32 %v12475, %v12507
  %v12540 = vadd.f32 %v12476, %v12508
  %v12541 = vadd.f32 %v12477, %v12509
  %v12542 = vadd.f32 %v12478, %v12510
  %v12543 = vadd.f32 %v12479, %v12511
  %v12544 = vadd.f32 %v12480, %v12512
  %v12545 = vadd.f32 %v12481, %v12513
  %v12546 = vadd.f32 %v12482, %v12514
  %v12547 = vadd.f32 %v12483, %v12515
  %v12548 = vadd.f32 %v12484, %v12516
  %v12549 = vadd.f32 %v12485, %v12517
  %v12550 = vadd.f32 %v12486, %v12518
  %v12551 = vadd.f32 %v12487, %v12519
  %v12552 = vadd.f32 %v12488, %v12520
  %v12553 = vadd.f32 %v12489, %v12521
  %v12554 = vadd.f32 %v12490, %v12522
  %v12555 = vadd.f32 %v12491, %v12523
  %v12556 = vadd.f32 %v12492, %v12524
  %v12557 = vadd.f32 %v12493, %v12525
  %v12558 = vadd.f32 %v12494, %v12526
  %v12559 = vadd.f32 %v12495, %v12527
  %v12560 = vadd.f32 %v12496, %v12528
  %v12561 = vadd.f32 %v12497, %v12529
  %v12562 = vadd.f32 %v12498, %v12530
  %v12563 = vadd.f32 %v12499, %v12531
  %v12564 = vadd.f32 %v12500, %v12532
  %v12565 = vadd.f32 %v12501, %v12533
  %v12566 = vld [vmem:[%s6] sm:$0x1]
  %v12568 = vlaneseq
  %v12569 = vshrl.u32 %v12568, 7
  %v12570 = vsub.s32 0, %v12569
  %v12571 = vrot.slane %v12566, %v12570
  %v12573 = vadd.f32 %v12534, %v12571
  %v12574 = vadd.f32 %v12535, %v12571
  %v12575 = vadd.f32 %v12536, %v12571
  %v12576 = vadd.f32 %v12537, %v12571
  %v12577 = vadd.f32 %v12538, %v12571
  %v12578 = vadd.f32 %v12539, %v12571
  %v12579 = vadd.f32 %v12540, %v12571
  %v12580 = vadd.f32 %v12541, %v12571
  %v12581 = vadd.f32 %v12542, %v12571
  %v12582 = vadd.f32 %v12543, %v12571
  %v12583 = vadd.f32 %v12544, %v12571
  %v12584 = vadd.f32 %v12545, %v12571
  %v12585 = vadd.f32 %v12546, %v12571
  %v12586 = vadd.f32 %v12547, %v12571
  %v12587 = vadd.f32 %v12548, %v12571
  %v12588 = vadd.f32 %v12549, %v12571
  %v12589 = vadd.f32 %v12550, %v12571
  %v12590 = vadd.f32 %v12551, %v12571
  %v12591 = vadd.f32 %v12552, %v12571
  %v12592 = vadd.f32 %v12553, %v12571
  %v12593 = vadd.f32 %v12554, %v12571
  %v12594 = vadd.f32 %v12555, %v12571
  %v12595 = vadd.f32 %v12556, %v12571
  %v12596 = vadd.f32 %v12557, %v12571
  %v12597 = vadd.f32 %v12558, %v12571
  %v12598 = vadd.f32 %v12559, %v12571
  %v12599 = vadd.f32 %v12560, %v12571
  %v12600 = vadd.f32 %v12561, %v12571
  %v12601 = vadd.f32 %v12562, %v12571
  %v12602 = vadd.f32 %v12563, %v12571
  %v12603 = vadd.f32 %v12564, %v12571
  %v12604 = vadd.f32 %v12565, %v12571
  %v12605 = vmax.f32 %v12573, 0.0
  %v12606 = vmax.f32 %v12574, 0.0
  %v12607 = vmax.f32 %v12575, 0.0
  %v12608 = vmax.f32 %v12576, 0.0
  %v12609 = vmax.f32 %v12577, 0.0
  %v12610 = vmax.f32 %v12578, 0.0
  %v12611 = vmax.f32 %v12579, 0.0
  %v12612 = vmax.f32 %v12580, 0.0
  %v12613 = vmax.f32 %v12581, 0.0
  %v12614 = vmax.f32 %v12582, 0.0
  %v12615 = vmax.f32 %v12583, 0.0
  %v12616 = vmax.f32 %v12584, 0.0
  %v12617 = vmax.f32 %v12585, 0.0
  %v12618 = vmax.f32 %v12586, 0.0
  %v12619 = vmax.f32 %v12587, 0.0
  %v12620 = vmax.f32 %v12588, 0.0
  %v12621 = vmax.f32 %v12589, 0.0
  %v12622 = vmax.f32 %v12590, 0.0
  %v12623 = vmax.f32 %v12591, 0.0
  %v12624 = vmax.f32 %v12592, 0.0
  %v12625 = vmax.f32 %v12593, 0.0
  %v12626 = vmax.f32 %v12594, 0.0
  %v12627 = vmax.f32 %v12595, 0.0
  %v12628 = vmax.f32 %v12596, 0.0
  %v12629 = vmax.f32 %v12597, 0.0
  %v12630 = vmax.f32 %v12598, 0.0
  %v12631 = vmax.f32 %v12599, 0.0
  %v12632 = vmax.f32 %v12600, 0.0
  %v12633 = vmax.f32 %v12601, 0.0
  %v12634 = vmax.f32 %v12602, 0.0
  %v12635 = vmax.f32 %v12603, 0.0
  %v12636 = vmax.f32 %v12604, 0.0
  %v12637 = vpack.c.bf16 %v12606, %v12605
  %v12638 = vpack.c.bf16 %v12608, %v12607
  %v12639 = vpack.c.bf16 %v12610, %v12609
  %v12640 = vpack.c.bf16 %v12612, %v12611
  %v12641 = vpack.c.bf16 %v12614, %v12613
  %v12642 = vpack.c.bf16 %v12616, %v12615
  %v12643 = vpack.c.bf16 %v12618, %v12617
  %v12644 = vpack.c.bf16 %v12620, %v12619
  %v12645 = vpack.c.bf16 %v12622, %v12621
  %v12646 = vpack.c.bf16 %v12624, %v12623
  %v12647 = vpack.c.bf16 %v12626, %v12625
  %v12648 = vpack.c.bf16 %v12628, %v12627
  %v12649 = vpack.c.bf16 %v12630, %v12629
  %v12650 = vpack.c.bf16 %v12632, %v12631
  %v12651 = vpack.c.bf16 %v12634, %v12633
  %v12652 = vpack.c.bf16 %v12636, %v12635
  %v12669 = vunpack.c.l.b16 %v12637
  %v12670 = vunpack.c.h.b16 %v12637
  %v12671 = vunpack.c.l.b16 %v12638
  %v12672 = vunpack.c.h.b16 %v12638
  %v12673 = vunpack.c.l.b16 %v12639
  %v12674 = vunpack.c.h.b16 %v12639
  %v12675 = vunpack.c.l.b16 %v12640
  %v12676 = vunpack.c.h.b16 %v12640
  %v12677 = vunpack.c.l.b16 %v12641
  %v12678 = vunpack.c.h.b16 %v12641
  %v12679 = vunpack.c.l.b16 %v12642
  %v12680 = vunpack.c.h.b16 %v12642
  %v12681 = vunpack.c.l.b16 %v12643
  %v12682 = vunpack.c.h.b16 %v12643
  %v12683 = vunpack.c.l.b16 %v12644
  %v12684 = vunpack.c.h.b16 %v12644
  %v12685 = vunpack.c.l.b16 %v12645
  %v12686 = vunpack.c.h.b16 %v12645
  %v12687 = vunpack.c.l.b16 %v12646
  %v12688 = vunpack.c.h.b16 %v12646
  %v12689 = vunpack.c.l.b16 %v12647
  %v12690 = vunpack.c.h.b16 %v12647
  %v12691 = vunpack.c.l.b16 %v12648
  %v12692 = vunpack.c.h.b16 %v12648
  %v12693 = vunpack.c.l.b16 %v12649
  %v12694 = vunpack.c.h.b16 %v12649
  %v12695 = vunpack.c.l.b16 %v12650
  %v12696 = vunpack.c.h.b16 %v12650
  %v12697 = vunpack.c.l.b16 %v12651
  %v12698 = vunpack.c.h.b16 %v12651
  %v12699 = vunpack.c.l.b16 %v12652
  %v12700 = vunpack.c.h.b16 %v12652
  %v12701 = vpack.c.b16 %v12669, %v12669
  %v12702 = vpack.c.b16 %v12670, %v12670
  %v12703 = vpack.c.b16 %v12671, %v12671
  %v12704 = vpack.c.b16 %v12672, %v12672
  %v12705 = vpack.c.b16 %v12673, %v12673
  %v12706 = vpack.c.b16 %v12674, %v12674
  %v12707 = vpack.c.b16 %v12675, %v12675
  %v12708 = vpack.c.b16 %v12676, %v12676
  %v12709 = vpack.c.b16 %v12677, %v12677
  %v12710 = vpack.c.b16 %v12678, %v12678
  %v12711 = vpack.c.b16 %v12679, %v12679
  %v12712 = vpack.c.b16 %v12680, %v12680
  %v12713 = vpack.c.b16 %v12681, %v12681
  %v12714 = vpack.c.b16 %v12682, %v12682
  %v12715 = vpack.c.b16 %v12683, %v12683
  %v12716 = vpack.c.b16 %v12684, %v12684
  %v12717 = vpack.c.b16 %v12685, %v12685
  %v12718 = vpack.c.b16 %v12686, %v12686
  %v12719 = vpack.c.b16 %v12687, %v12687
  %v12720 = vpack.c.b16 %v12688, %v12688
  %v12721 = vpack.c.b16 %v12689, %v12689
  %v12722 = vpack.c.b16 %v12690, %v12690
  %v12723 = vpack.c.b16 %v12691, %v12691
  %v12724 = vpack.c.b16 %v12692, %v12692
  %v12725 = vpack.c.b16 %v12693, %v12693
  %v12726 = vpack.c.b16 %v12694, %v12694
  %v12727 = vpack.c.b16 %v12695, %v12695
  %v12728 = vpack.c.b16 %v12696, %v12696
  %v12729 = vpack.c.b16 %v12697, %v12697
  %v12730 = vpack.c.b16 %v12698, %v12698
  %v12731 = vpack.c.b16 %v12699, %v12699
  %v12732 = vpack.c.b16 %v12700, %v12700
  %12765 = vst.msk [vmem:[%s7] sm:$0xf] %vm9342, %v12701
  %12766 = vst.msk [vmem:[%s7 + $0x4] sm:$0xf] %vm9342, %v12702
  %12767 = vst.msk [vmem:[%s7 + $0x8] sm:$0xf] %vm9342, %v12703
  %12768 = vst.msk [vmem:[%s7 + $0xc] sm:$0xf] %vm9342, %v12704
  %12769 = vst.msk [vmem:[%s7 + $0x10] sm:$0xf] %vm9342, %v12705
  %12770 = vst.msk [vmem:[%s7 + $0x14] sm:$0xf] %vm9342, %v12706
  %12771 = vst.msk [vmem:[%s7 + $0x18] sm:$0xf] %vm9342, %v12707
  %12772 = vst.msk [vmem:[%s7 + $0x1c] sm:$0xf] %vm9342, %v12708
  %12773 = vst.msk [vmem:[%s7 + $0x20] sm:$0xf] %vm9342, %v12709
  %12774 = vst.msk [vmem:[%s7 + $0x24] sm:$0xf] %vm9342, %v12710
  %12775 = vst.msk [vmem:[%s7 + $0x28] sm:$0xf] %vm9342, %v12711
  %12776 = vst.msk [vmem:[%s7 + $0x2c] sm:$0xf] %vm9342, %v12712
  %12777 = vst.msk [vmem:[%s7 + $0x30] sm:$0xf] %vm9342, %v12713
  %12778 = vst.msk [vmem:[%s7 + $0x34] sm:$0xf] %vm9342, %v12714
  %12779 = vst.msk [vmem:[%s7 + $0x38] sm:$0xf] %vm9342, %v12715
  %12780 = vst.msk [vmem:[%s7 + $0x3c] sm:$0xf] %vm9342, %v12716
  %12781 = vst.msk [vmem:[%s7 + $0x40] sm:$0xf] %vm9342, %v12717
  %12782 = vst.msk [vmem:[%s7 + $0x44] sm:$0xf] %vm9342, %v12718
  %12783 = vst.msk [vmem:[%s7 + $0x48] sm:$0xf] %vm9342, %v12719
  %12784 = vst.msk [vmem:[%s7 + $0x4c] sm:$0xf] %vm9342, %v12720
  %12785 = vst.msk [vmem:[%s7 + $0x50] sm:$0xf] %vm9342, %v12721
  %12786 = vst.msk [vmem:[%s7 + $0x54] sm:$0xf] %vm9342, %v12722
  %12787 = vst.msk [vmem:[%s7 + $0x58] sm:$0xf] %vm9342, %v12723
  %12788 = vst.msk [vmem:[%s7 + $0x5c] sm:$0xf] %vm9342, %v12724
  %12789 = vst.msk [vmem:[%s7 + $0x60] sm:$0xf] %vm9342, %v12725
  %12790 = vst.msk [vmem:[%s7 + $0x64] sm:$0xf] %vm9342, %v12726
  %12791 = vst.msk [vmem:[%s7 + $0x68] sm:$0xf] %vm9342, %v12727
  %12792 = vst.msk [vmem:[%s7 + $0x6c] sm:$0xf] %vm9342, %v12728
  %12793 = vst.msk [vmem:[%s7 + $0x70] sm:$0xf] %vm9342, %v12729
  %12794 = vst.msk [vmem:[%s7 + $0x74] sm:$0xf] %vm9342, %v12730
  %12795 = vst.msk [vmem:[%s7 + $0x78] sm:$0xf] %vm9342, %v12731
  %12796 = vst.msk [vmem:[%s7 + $0x7c] sm:$0xf] %vm9342, %v12732
  // Predicated region
  $region30: #{tpu_custom_call.1} parent=0 // pred_check
    _
  $region31: #{tpu_custom_call.1} parent=0 // pred_check_branch
    %12798 = sbr.rel (0) target = $region33
  $region32: #{tpu_custom_call.1} parent=0 // pred_region
    _
  $region33: #{tpu_custom_call.1} parent=0 // pred_fallthru
    _
  // Predicated region
  $region34: #{tpu_custom_call.1} parent=0 // pred_check
    _
  $region35: #{tpu_custom_call.1} parent=0 // pred_check_branch
    %12800 = sbr.rel (0) target = $region37
  $region36: #{tpu_custom_call.1} parent=0 // pred_region
    _
  $region37: #{tpu_custom_call.1} parent=0 // pred_fallthru
    _

</llo_original>
